<compile_context>
chip_gen: v6e
topology: v6e:2x2x1
jax: 0.10.0
libtpu: 0.0.40
codegen_flags: <defaults>
</compile_context>

<pallas_src>
import functools
import math

import jax
import jax.numpy as jnp
from jax.experimental import pallas as pl
from jax.experimental.pallas import tpu as pltpu

_LN_EPS = 1e-5


# ---------------------------------------------------------------------------
# Kernel
# ---------------------------------------------------------------------------
def critic_kernel(
    x_ref,            # (TM, 1 + 2I + 1)   fused [B | u | t | 1] rows
    wemb_ref,         # (1 + 2I + 1, 450)  block-diag embed weights (+bias row)
    w1_ref, p1_ref,   # (450, 360), (3, 360)  rows = [bias; gamma; beta]
    w2_ref, p2_ref,   # (360, 180), (3, 180)
    w3_ref, p3_ref,   # (180,  90), (3,  90)
    w4_ref, p4_ref,   # ( 90,  45), (3,  45)
    wh_ref,           # (1, 45)            head weight (transposed row)
    bh_ref,           # (1, 1)             head bias
    out_ref,          # (TM, 1)
):
    f32 = jnp.float32

    # Fused embeddings: relu([B|u|t|1] @ blockdiag(WB,Wu,Wt ; bias row)) is
    # exactly concat([relu(B@WB+bB), relu(u@Wu+bu), relu(t@Wt+bt)], axis=-1).
    emb = jnp.maximum(
        jnp.dot(x_ref[...], wemb_ref[...], preferred_element_type=f32), 0.0)

    def linear_ln_relu(h, w_ref, p_ref):
        z = jnp.dot(h, w_ref[...], preferred_element_type=f32) + p_ref[0:1, :]
        mean = jnp.mean(z, axis=-1, keepdims=True)
        zc = z - mean
        var = jnp.mean(zc * zc, axis=-1, keepdims=True)      # biased, like torch
        zn = zc * jax.lax.rsqrt(var + _LN_EPS)
        return jnp.maximum(zn * p_ref[1:2, :] + p_ref[2:3, :], 0.0)

    h = linear_ln_relu(emb, w1_ref, p1_ref)
    h = linear_ln_relu(h, w2_ref, p2_ref)
    h = linear_ln_relu(h, w3_ref, p3_ref)
    h = linear_ln_relu(h, w4_ref, p4_ref)

    # Head: (TM,45)x(45,)->(TM,1) as VPU multiply + lane reduction instead of
    # a 1-lane-wide MXU matmul.
    out_ref[...] = (
        jnp.sum(h * wh_ref[...], axis=-1, keepdims=True) + bh_ref[...]
    ).astype(out_ref.dtype)


# ---------------------------------------------------------------------------
# Parameters (xavier_uniform weights, zero biases; LayerNorm weight=1 bias=0).
# Note: `embed_sel` exists in the torch __init__ but is unused in forward.
# ---------------------------------------------------------------------------
def xavier_uniform(key, fan_in, fan_out):
    bound = math.sqrt(6.0 / (fan_in + fan_out))
    # produced directly in (in, out) layout == transpose of torch's (out, in)
    return jax.random.uniform(key, (fan_in, fan_out), dtype=jnp.float32,
                              minval=-bound, maxval=bound)


def make_params(key, num_items, e_B=150, e_u=150, e_t=150, hidden=360):
    dims = [e_t + e_B + e_u, hidden, hidden // 2, hidden // 4, hidden // 8]
    keys = jax.random.split(key, 16)
    p = {}
    p["wB"] = xavier_uniform(keys[0], 1, e_B)
    p["bB"] = jnp.zeros((1, e_B), jnp.float32)
    p["wu"] = xavier_uniform(keys[1], num_items, e_u)
    p["bu"] = jnp.zeros((1, e_u), jnp.float32)
    p["wt"] = xavier_uniform(keys[2], num_items, e_t)
    p["bt"] = jnp.zeros((1, e_t), jnp.float32)
    for i, (d_in, d_out) in enumerate(zip(dims[:-1], dims[1:]), start=1):
        p[f"w{i}"] = xavier_uniform(keys[2 + i], d_in, d_out)
        p[f"b{i}"] = jnp.zeros((1, d_out), jnp.float32)
        p[f"g{i}"] = jnp.ones((1, d_out), jnp.float32)    # LayerNorm weight
        p[f"be{i}"] = jnp.zeros((1, d_out), jnp.float32)  # LayerNorm bias
    p["wh"] = xavier_uniform(keys[10], dims[-1], 1)
    p["bh"] = jnp.zeros((1, 1), jnp.float32)
    return p


def fuse_params(p):
    """Pack torch-layout params into the kernel's fused argument tuple."""
    wB, wu, wt = p["wB"], p["wu"], p["wt"]
    e_B, e_u, e_t = wB.shape[1], wu.shape[1], wt.shape[1]
    n_u, n_t = wu.shape[0], wt.shape[0]
    d_in = 1 + n_u + n_t + 1           # + ones column row for the embed biases
    d_emb = e_B + e_u + e_t

    wemb = jnp.zeros((d_in, d_emb), jnp.float32)
    wemb = wemb.at[0:1, 0:e_B].set(wB)
    wemb = wemb.at[1:1 + n_u, e_B:e_B + e_u].set(wu)
    wemb = wemb.at[1 + n_u:1 + n_u + n_t, e_B + e_u:].set(wt)
    wemb = wemb.at[d_in - 1, 0:e_B].set(p["bB"][0])
    wemb = wemb.at[d_in - 1, e_B:e_B + e_u].set(p["bu"][0])
    wemb = wemb.at[d_in - 1, e_B + e_u:].set(p["bt"][0])

    args = [wemb]
    for i in range(1, 5):
        args.append(p[f"w{i}"])
        args.append(jnp.concatenate(
            [p[f"b{i}"], p[f"g{i}"], p[f"be{i}"]], axis=0))   # (3, d_out)
    args.append(p["wh"].T)             # (1, 45)
    args.append(p["bh"])               # (1, 1)
    return tuple(args)


# ---------------------------------------------------------------------------
# Wrapper
# ---------------------------------------------------------------------------
@functools.partial(jax.jit, static_argnames=("block_rows",))
def critic_forward(B, u, t, fused, *, block_rows=512):
    assert block_rows % 8 == 0
    n = B.shape[0]
    x = jnp.concatenate(
        [B, u, t, jnp.ones((n, 1), jnp.float32)], axis=1).astype(jnp.float32)

    n_tiles = pl.cdiv(n, block_rows)
    n_pad = n_tiles * block_rows
    if n_pad != n:
        x = jnp.pad(x, ((0, n_pad - n), (0, 0)))    # padded rows are harmless
    d_x = x.shape[1]

    def resident(a):    # whole array, constant block index -> stays in VMEM
        return pl.BlockSpec(a.shape, lambda i: (0, 0))

    in_specs = [pl.BlockSpec((block_rows, d_x), lambda i: (i, 0))]
    in_specs += [resident(a) for a in fused]

    out = pl.pallas_call(
        critic_kernel,
        out_shape=jax.ShapeDtypeStruct((n_pad, 1), jnp.float32),
        grid_spec=pltpu.PrefetchScalarGridSpec(
            num_scalar_prefetch=0,
            grid=(n_tiles,),
            in_specs=in_specs,
            out_specs=pl.BlockSpec((block_rows, 1), lambda i: (i, 0)),
        ),
        compiler_params=pltpu.CompilerParams(
            dimension_semantics=("parallel",)),
    )(x, *fused)
    return out[:n, 0]                   # squeeze(-1): (N,)


# pure-JAX reference for correctness checking
def critic_reference(B, u, t, p):
    def lin(x, w, b):
        return x @ w + b

    def ln(z, g, be, eps=_LN_EPS):
        m = jnp.mean(z, axis=-1, keepdims=True)
        v = jnp.mean((z - m) ** 2, axis=-1, keepdims=True)
        return (z - m) / jnp.sqrt(v + eps) * g + be

    B_emb = jax.nn.relu(lin(B, p["wB"], p["bB"]))
    u_emb = jax.nn.relu(lin(u, p["wu"], p["bu"]))
    t_emb = jax.nn.relu(lin(t, p["wt"], p["bt"]))
    h = jnp.concatenate([B_emb, u_emb, t_emb], axis=1)
    for i in range(1, 5):
        h = jax.nn.relu(ln(lin(h, p[f"w{i}"], p[f"b{i}"]),
                           p[f"g{i}"], p[f"be{i}"]))
    return lin(h, p["wh"], p["bh"])[:, 0]


if __name__ == "__main__":
    batch = 300          # deliberately NOT a multiple of the tile (ragged tile)
    num_items = 16
    block_rows = 256     # multi-step grid + padding path exercised

    key = jax.random.PRNGKey(0)
    k_param, k_B, k_u, k_t = jax.random.split(key, 4)

    params = make_params(k_param, num_items)
    fused = fuse_params(params)

    B = jax.random.uniform(k_B, (batch, 1), dtype=jnp.float32)
    u = jax.random.uniform(k_u, (batch, num_items), dtype=jnp.float32)
    t = jax.random.uniform(k_t, (batch, num_items), dtype=jnp.float32)

    out = critic_forward(B, u, t, fused, block_rows=block_rows)
    out = jax.block_until_ready(out)

    ref = critic_reference(B, u, t, params)
    assert out.shape == (batch,)
    assert bool(jnp.all(jnp.isfinite(out)))
    assert bool(jnp.allclose(out, ref, atol=1e-4, rtol=1e-4)), \
        float(jnp.max(jnp.abs(out - ref)))

    print("KERNEL_OK")
</pallas_src>

<mosaic_0001>
module attributes {stable_mosaic.version = 11 : i64} {
  func.func @critic_kernel(%arg0: i32, %arg1: memref<256x34xf32, #tpu.memory_space<vmem>>, %arg2: memref<34x450xf32, #tpu.memory_space<vmem>>, %arg3: memref<450x360xf32, #tpu.memory_space<vmem>>, %arg4: memref<3x360xf32, #tpu.memory_space<vmem>>, %arg5: memref<360x180xf32, #tpu.memory_space<vmem>>, %arg6: memref<3x180xf32, #tpu.memory_space<vmem>>, %arg7: memref<180x90xf32, #tpu.memory_space<vmem>>, %arg8: memref<3x90xf32, #tpu.memory_space<vmem>>, %arg9: memref<90x45xf32, #tpu.memory_space<vmem>>, %arg10: memref<3x45xf32, #tpu.memory_space<vmem>>, %arg11: memref<1x45xf32, #tpu.memory_space<vmem>>, %arg12: memref<1x1xf32, #tpu.memory_space<vmem>>, %arg13: memref<256x1xf32, #tpu.memory_space<vmem>>) attributes {dimension_semantics = [#tpu.dimension_semantics<parallel>], iteration_bounds = array<i64: 2>, scalar_prefetch = 0 : i64, scratch_operands = 0 : i64, tpu.core_type = #tpu.core_type<tc>, window_params = [{transform_indices = @transform_0, window_bounds = array<i64: 256, 34>}, {pipeline_mode = #tpu.pipeline_mode<synchronous>, transform_indices = @transform_1, window_bounds = array<i64: 34, 450>}, {pipeline_mode = #tpu.pipeline_mode<synchronous>, transform_indices = @transform_2, window_bounds = array<i64: 450, 360>}, {pipeline_mode = #tpu.pipeline_mode<synchronous>, transform_indices = @transform_3, window_bounds = array<i64: 3, 360>}, {pipeline_mode = #tpu.pipeline_mode<synchronous>, transform_indices = @transform_4, window_bounds = array<i64: 360, 180>}, {pipeline_mode = #tpu.pipeline_mode<synchronous>, transform_indices = @transform_5, window_bounds = array<i64: 3, 180>}, {pipeline_mode = #tpu.pipeline_mode<synchronous>, transform_indices = @transform_6, window_bounds = array<i64: 180, 90>}, {pipeline_mode = #tpu.pipeline_mode<synchronous>, transform_indices = @transform_7, window_bounds = array<i64: 3, 90>}, {pipeline_mode = #tpu.pipeline_mode<synchronous>, transform_indices = @transform_8, window_bounds = array<i64: 90, 45>}, {pipeline_mode = #tpu.pipeline_mode<synchronous>, transform_indices = @transform_9, window_bounds = array<i64: 3, 45>}, {pipeline_mode = #tpu.pipeline_mode<synchronous>, transform_indices = @transform_10, window_bounds = array<i64: 1, 45>}, {pipeline_mode = #tpu.pipeline_mode<synchronous>, transform_indices = @transform_11, window_bounds = array<i64: 1, 1>}, {transform_indices = @transform_12, window_bounds = array<i64: 256, 1>}]} {
    %c0 = arith.constant 0 : index
    %c0_0 = arith.constant 0 : index
    %0 = vector.load %arg1[%c0, %c0_0] : memref<256x34xf32, #tpu.memory_space<vmem>>, vector<256x34xf32>
    %c0_1 = arith.constant 0 : index
    %c0_2 = arith.constant 0 : index
    %1 = vector.load %arg2[%c0_1, %c0_2] : memref<34x450xf32, #tpu.memory_space<vmem>>, vector<34x450xf32>
    %cst = arith.constant dense<0.000000e+00> : vector<256x450xf32>
    %2 = tpu.matmul %0, %1, %cst {dimension_numbers = #tpu.dot_dimension_numbers<[1], [0], [0], [1], [0, 0, 1, 1], [], []>} : vector<256x34xf32>, vector<34x450xf32>, vector<256x450xf32> -> vector<256x450xf32>
    %cst_3 = arith.constant 0.000000e+00 : f32
    %3 = vector.broadcast %cst_3 : f32 to vector<256x450xf32>
    %4 = arith.maximumf %2, %3 : vector<256x450xf32>
    %c0_4 = arith.constant 0 : index
    %c0_5 = arith.constant 0 : index
    %5 = vector.load %arg3[%c0_4, %c0_5] : memref<450x360xf32, #tpu.memory_space<vmem>>, vector<450x360xf32>
    %cst_6 = arith.constant dense<0.000000e+00> : vector<256x360xf32>
    %6 = tpu.matmul %4, %5, %cst_6 {dimension_numbers = #tpu.dot_dimension_numbers<[1], [0], [0], [1], [0, 0, 1, 1], [], []>} : vector<256x450xf32>, vector<450x360xf32>, vector<256x360xf32> -> vector<256x360xf32>
    %c0_7 = arith.constant 0 : index
    %c0_8 = arith.constant 0 : index
    %7 = vector.load %arg4[%c0_7, %c0_8] : memref<3x360xf32, #tpu.memory_space<vmem>>, vector<1x360xf32>
    %8 = vector.broadcast %7 : vector<1x360xf32> to vector<256x360xf32>
    %9 = arith.addf %6, %8 : vector<256x360xf32>
    %cst_9 = arith.constant dense<0.000000e+00> : vector<256xf32>
    %10 = vector.multi_reduction <add>, %9, %cst_9 [1] : vector<256x360xf32> to vector<256xf32>
    %11 = vector.shape_cast %10 : vector<256xf32> to vector<256x1xf32>
    %cst_10 = arith.constant 3.600000e+02 : f32
    %12 = vector.broadcast %cst_10 : f32 to vector<256x1xf32>
    %13 = arith.divf %11, %12 : vector<256x1xf32>
    %14 = vector.broadcast %13 : vector<256x1xf32> to vector<256x360xf32>
    %15 = arith.subf %9, %14 : vector<256x360xf32>
    %16 = arith.mulf %15, %15 : vector<256x360xf32>
    %cst_11 = arith.constant dense<0.000000e+00> : vector<256xf32>
    %17 = vector.multi_reduction <add>, %16, %cst_11 [1] : vector<256x360xf32> to vector<256xf32>
    %18 = vector.shape_cast %17 : vector<256xf32> to vector<256x1xf32>
    %cst_12 = arith.constant 3.600000e+02 : f32
    %19 = vector.broadcast %cst_12 : f32 to vector<256x1xf32>
    %20 = arith.divf %18, %19 : vector<256x1xf32>
    %cst_13 = arith.constant 9.99999974E-6 : f32
    %21 = vector.broadcast %cst_13 : f32 to vector<256x1xf32>
    %22 = arith.addf %20, %21 : vector<256x1xf32>
    %23 = math.rsqrt %22 : vector<256x1xf32>
    %24 = vector.broadcast %23 : vector<256x1xf32> to vector<256x360xf32>
    %25 = arith.mulf %15, %24 : vector<256x360xf32>
    %c1 = arith.constant 1 : index
    %c0_14 = arith.constant 0 : index
    %26 = vector.load %arg4[%c1, %c0_14] : memref<3x360xf32, #tpu.memory_space<vmem>>, vector<1x360xf32>
    %27 = vector.broadcast %26 : vector<1x360xf32> to vector<256x360xf32>
    %28 = arith.mulf %25, %27 : vector<256x360xf32>
    %c2 = arith.constant 2 : index
    %c0_15 = arith.constant 0 : index
    %29 = vector.load %arg4[%c2, %c0_15] : memref<3x360xf32, #tpu.memory_space<vmem>>, vector<1x360xf32>
    %30 = vector.broadcast %29 : vector<1x360xf32> to vector<256x360xf32>
    %31 = arith.addf %28, %30 : vector<256x360xf32>
    %cst_16 = arith.constant 0.000000e+00 : f32
    %32 = vector.broadcast %cst_16 : f32 to vector<256x360xf32>
    %33 = arith.maximumf %31, %32 : vector<256x360xf32>
    %c0_17 = arith.constant 0 : index
    %c0_18 = arith.constant 0 : index
    %34 = vector.load %arg5[%c0_17, %c0_18] : memref<360x180xf32, #tpu.memory_space<vmem>>, vector<360x180xf32>
    %cst_19 = arith.constant dense<0.000000e+00> : vector<256x180xf32>
    %35 = tpu.matmul %33, %34, %cst_19 {dimension_numbers = #tpu.dot_dimension_numbers<[1], [0], [0], [1], [0, 0, 1, 1], [], []>} : vector<256x360xf32>, vector<360x180xf32>, vector<256x180xf32> -> vector<256x180xf32>
    %c0_20 = arith.constant 0 : index
    %c0_21 = arith.constant 0 : index
    %36 = vector.load %arg6[%c0_20, %c0_21] : memref<3x180xf32, #tpu.memory_space<vmem>>, vector<1x180xf32>
    %37 = vector.broadcast %36 : vector<1x180xf32> to vector<256x180xf32>
    %38 = arith.addf %35, %37 : vector<256x180xf32>
    %cst_22 = arith.constant dense<0.000000e+00> : vector<256xf32>
    %39 = vector.multi_reduction <add>, %38, %cst_22 [1] : vector<256x180xf32> to vector<256xf32>
    %40 = vector.shape_cast %39 : vector<256xf32> to vector<256x1xf32>
    %cst_23 = arith.constant 1.800000e+02 : f32
    %41 = vector.broadcast %cst_23 : f32 to vector<256x1xf32>
    %42 = arith.divf %40, %41 : vector<256x1xf32>
    %43 = vector.broadcast %42 : vector<256x1xf32> to vector<256x180xf32>
    %44 = arith.subf %38, %43 : vector<256x180xf32>
    %45 = arith.mulf %44, %44 : vector<256x180xf32>
    %cst_24 = arith.constant dense<0.000000e+00> : vector<256xf32>
    %46 = vector.multi_reduction <add>, %45, %cst_24 [1] : vector<256x180xf32> to vector<256xf32>
    %47 = vector.shape_cast %46 : vector<256xf32> to vector<256x1xf32>
    %cst_25 = arith.constant 1.800000e+02 : f32
    %48 = vector.broadcast %cst_25 : f32 to vector<256x1xf32>
    %49 = arith.divf %47, %48 : vector<256x1xf32>
    %cst_26 = arith.constant 9.99999974E-6 : f32
    %50 = vector.broadcast %cst_26 : f32 to vector<256x1xf32>
    %51 = arith.addf %49, %50 : vector<256x1xf32>
    %52 = math.rsqrt %51 : vector<256x1xf32>
    %53 = vector.broadcast %52 : vector<256x1xf32> to vector<256x180xf32>
    %54 = arith.mulf %44, %53 : vector<256x180xf32>
    %c1_27 = arith.constant 1 : index
    %c0_28 = arith.constant 0 : index
    %55 = vector.load %arg6[%c1_27, %c0_28] : memref<3x180xf32, #tpu.memory_space<vmem>>, vector<1x180xf32>
    %56 = vector.broadcast %55 : vector<1x180xf32> to vector<256x180xf32>
    %57 = arith.mulf %54, %56 : vector<256x180xf32>
    %c2_29 = arith.constant 2 : index
    %c0_30 = arith.constant 0 : index
    %58 = vector.load %arg6[%c2_29, %c0_30] : memref<3x180xf32, #tpu.memory_space<vmem>>, vector<1x180xf32>
    %59 = vector.broadcast %58 : vector<1x180xf32> to vector<256x180xf32>
    %60 = arith.addf %57, %59 : vector<256x180xf32>
    %cst_31 = arith.constant 0.000000e+00 : f32
    %61 = vector.broadcast %cst_31 : f32 to vector<256x180xf32>
    %62 = arith.maximumf %60, %61 : vector<256x180xf32>
    %c0_32 = arith.constant 0 : index
    %c0_33 = arith.constant 0 : index
    %63 = vector.load %arg7[%c0_32, %c0_33] : memref<180x90xf32, #tpu.memory_space<vmem>>, vector<180x90xf32>
    %cst_34 = arith.constant dense<0.000000e+00> : vector<256x90xf32>
    %64 = tpu.matmul %62, %63, %cst_34 {dimension_numbers = #tpu.dot_dimension_numbers<[1], [0], [0], [1], [0, 0, 1, 1], [], []>} : vector<256x180xf32>, vector<180x90xf32>, vector<256x90xf32> -> vector<256x90xf32>
    %c0_35 = arith.constant 0 : index
    %c0_36 = arith.constant 0 : index
    %65 = vector.load %arg8[%c0_35, %c0_36] : memref<3x90xf32, #tpu.memory_space<vmem>>, vector<1x90xf32>
    %66 = vector.broadcast %65 : vector<1x90xf32> to vector<256x90xf32>
    %67 = arith.addf %64, %66 : vector<256x90xf32>
    %cst_37 = arith.constant dense<0.000000e+00> : vector<256xf32>
    %68 = vector.multi_reduction <add>, %67, %cst_37 [1] : vector<256x90xf32> to vector<256xf32>
    %69 = vector.shape_cast %68 : vector<256xf32> to vector<256x1xf32>
    %cst_38 = arith.constant 9.000000e+01 : f32
    %70 = vector.broadcast %cst_38 : f32 to vector<256x1xf32>
    %71 = arith.divf %69, %70 : vector<256x1xf32>
    %72 = vector.broadcast %71 : vector<256x1xf32> to vector<256x90xf32>
    %73 = arith.subf %67, %72 : vector<256x90xf32>
    %74 = arith.mulf %73, %73 : vector<256x90xf32>
    %cst_39 = arith.constant dense<0.000000e+00> : vector<256xf32>
    %75 = vector.multi_reduction <add>, %74, %cst_39 [1] : vector<256x90xf32> to vector<256xf32>
    %76 = vector.shape_cast %75 : vector<256xf32> to vector<256x1xf32>
    %cst_40 = arith.constant 9.000000e+01 : f32
    %77 = vector.broadcast %cst_40 : f32 to vector<256x1xf32>
    %78 = arith.divf %76, %77 : vector<256x1xf32>
    %cst_41 = arith.constant 9.99999974E-6 : f32
    %79 = vector.broadcast %cst_41 : f32 to vector<256x1xf32>
    %80 = arith.addf %78, %79 : vector<256x1xf32>
    %81 = math.rsqrt %80 : vector<256x1xf32>
    %82 = vector.broadcast %81 : vector<256x1xf32> to vector<256x90xf32>
    %83 = arith.mulf %73, %82 : vector<256x90xf32>
    %c1_42 = arith.constant 1 : index
    %c0_43 = arith.constant 0 : index
    %84 = vector.load %arg8[%c1_42, %c0_43] : memref<3x90xf32, #tpu.memory_space<vmem>>, vector<1x90xf32>
    %85 = vector.broadcast %84 : vector<1x90xf32> to vector<256x90xf32>
    %86 = arith.mulf %83, %85 : vector<256x90xf32>
    %c2_44 = arith.constant 2 : index
    %c0_45 = arith.constant 0 : index
    %87 = vector.load %arg8[%c2_44, %c0_45] : memref<3x90xf32, #tpu.memory_space<vmem>>, vector<1x90xf32>
    %88 = vector.broadcast %87 : vector<1x90xf32> to vector<256x90xf32>
    %89 = arith.addf %86, %88 : vector<256x90xf32>
    %cst_46 = arith.constant 0.000000e+00 : f32
    %90 = vector.broadcast %cst_46 : f32 to vector<256x90xf32>
    %91 = arith.maximumf %89, %90 : vector<256x90xf32>
    %c0_47 = arith.constant 0 : index
    %c0_48 = arith.constant 0 : index
    %92 = vector.load %arg9[%c0_47, %c0_48] : memref<90x45xf32, #tpu.memory_space<vmem>>, vector<90x45xf32>
    %cst_49 = arith.constant dense<0.000000e+00> : vector<256x45xf32>
    %93 = tpu.matmul %91, %92, %cst_49 {dimension_numbers = #tpu.dot_dimension_numbers<[1], [0], [0], [1], [0, 0, 1, 1], [], []>} : vector<256x90xf32>, vector<90x45xf32>, vector<256x45xf32> -> vector<256x45xf32>
    %c0_50 = arith.constant 0 : index
    %c0_51 = arith.constant 0 : index
    %94 = vector.load %arg10[%c0_50, %c0_51] : memref<3x45xf32, #tpu.memory_space<vmem>>, vector<1x45xf32>
    %95 = vector.broadcast %94 : vector<1x45xf32> to vector<256x45xf32>
    %96 = arith.addf %93, %95 : vector<256x45xf32>
    %cst_52 = arith.constant dense<0.000000e+00> : vector<256xf32>
    %97 = vector.multi_reduction <add>, %96, %cst_52 [1] : vector<256x45xf32> to vector<256xf32>
    %98 = vector.shape_cast %97 : vector<256xf32> to vector<256x1xf32>
    %cst_53 = arith.constant 4.500000e+01 : f32
    %99 = vector.broadcast %cst_53 : f32 to vector<256x1xf32>
    %100 = arith.divf %98, %99 : vector<256x1xf32>
    %101 = vector.broadcast %100 : vector<256x1xf32> to vector<256x45xf32>
    %102 = arith.subf %96, %101 : vector<256x45xf32>
    %103 = arith.mulf %102, %102 : vector<256x45xf32>
    %cst_54 = arith.constant dense<0.000000e+00> : vector<256xf32>
    %104 = vector.multi_reduction <add>, %103, %cst_54 [1] : vector<256x45xf32> to vector<256xf32>
    %105 = vector.shape_cast %104 : vector<256xf32> to vector<256x1xf32>
    %cst_55 = arith.constant 4.500000e+01 : f32
    %106 = vector.broadcast %cst_55 : f32 to vector<256x1xf32>
    %107 = arith.divf %105, %106 : vector<256x1xf32>
    %cst_56 = arith.constant 9.99999974E-6 : f32
    %108 = vector.broadcast %cst_56 : f32 to vector<256x1xf32>
    %109 = arith.addf %107, %108 : vector<256x1xf32>
    %110 = math.rsqrt %109 : vector<256x1xf32>
    %111 = vector.broadcast %110 : vector<256x1xf32> to vector<256x45xf32>
    %112 = arith.mulf %102, %111 : vector<256x45xf32>
    %c1_57 = arith.constant 1 : index
    %c0_58 = arith.constant 0 : index
    %113 = vector.load %arg10[%c1_57, %c0_58] : memref<3x45xf32, #tpu.memory_space<vmem>>, vector<1x45xf32>
    %114 = vector.broadcast %113 : vector<1x45xf32> to vector<256x45xf32>
    %115 = arith.mulf %112, %114 : vector<256x45xf32>
    %c2_59 = arith.constant 2 : index
    %c0_60 = arith.constant 0 : index
    %116 = vector.load %arg10[%c2_59, %c0_60] : memref<3x45xf32, #tpu.memory_space<vmem>>, vector<1x45xf32>
    %117 = vector.broadcast %116 : vector<1x45xf32> to vector<256x45xf32>
    %118 = arith.addf %115, %117 : vector<256x45xf32>
    %cst_61 = arith.constant 0.000000e+00 : f32
    %119 = vector.broadcast %cst_61 : f32 to vector<256x45xf32>
    %120 = arith.maximumf %118, %119 : vector<256x45xf32>
    %c0_62 = arith.constant 0 : index
    %c0_63 = arith.constant 0 : index
    %121 = vector.load %arg11[%c0_62, %c0_63] : memref<1x45xf32, #tpu.memory_space<vmem>>, vector<1x45xf32>
    %122 = vector.broadcast %121 : vector<1x45xf32> to vector<256x45xf32>
    %123 = arith.mulf %120, %122 : vector<256x45xf32>
    %cst_64 = arith.constant dense<0.000000e+00> : vector<256xf32>
    %124 = vector.multi_reduction <add>, %123, %cst_64 [1] : vector<256x45xf32> to vector<256xf32>
    %125 = vector.shape_cast %124 : vector<256xf32> to vector<256x1xf32>
    %c0_65 = arith.constant 0 : index
    %c0_66 = arith.constant 0 : index
    %126 = vector.load %arg12[%c0_65, %c0_66] : memref<1x1xf32, #tpu.memory_space<vmem>>, vector<1x1xf32>
    %127 = vector.broadcast %126 : vector<1x1xf32> to vector<256x1xf32>
    %128 = arith.addf %125, %127 : vector<256x1xf32>
    %c0_67 = arith.constant 0 : index
    %c0_68 = arith.constant 0 : index
    %129 = vector.load %arg13[%c0_67, %c0_68] : memref<256x1xf32, #tpu.memory_space<vmem>>, vector<256x1xf32>
    tpu.vector_store %arg13[%c0_67, %c0_68], %128 {strides = array<i32>} : memref<256x1xf32, #tpu.memory_space<vmem>>, vector<256x1xf32>,
    return
  }
  func.func @transform_0(%arg0: i32) -> (i32, i32) {
    %c0_i32 = arith.constant 0 : i32
    %c0_i32_0 = arith.constant 0 : i32
    return %arg0, %c0_i32 : i32, i32
  }
  func.func @transform_1(%arg0: i32) -> (i32, i32) {
    %c0_i32 = arith.constant 0 : i32
    %c0_i32_0 = arith.constant 0 : i32
    %c0_i32_1 = arith.constant 0 : i32
    return %c0_i32, %c0_i32_0 : i32, i32
  }
  func.func @transform_2(%arg0: i32) -> (i32, i32) {
    %c0_i32 = arith.constant 0 : i32
    %c0_i32_0 = arith.constant 0 : i32
    %c0_i32_1 = arith.constant 0 : i32
    return %c0_i32, %c0_i32_0 : i32, i32
  }
  func.func @transform_3(%arg0: i32) -> (i32, i32) {
    %c0_i32 = arith.constant 0 : i32
    %c0_i32_0 = arith.constant 0 : i32
    %c0_i32_1 = arith.constant 0 : i32
    return %c0_i32, %c0_i32_0 : i32, i32
  }
  func.func @transform_4(%arg0: i32) -> (i32, i32) {
    %c0_i32 = arith.constant 0 : i32
    %c0_i32_0 = arith.constant 0 : i32
    %c0_i32_1 = arith.constant 0 : i32
    return %c0_i32, %c0_i32_0 : i32, i32
  }
  func.func @transform_5(%arg0: i32) -> (i32, i32) {
    %c0_i32 = arith.constant 0 : i32
    %c0_i32_0 = arith.constant 0 : i32
    %c0_i32_1 = arith.constant 0 : i32
    return %c0_i32, %c0_i32_0 : i32, i32
  }
  func.func @transform_6(%arg0: i32) -> (i32, i32) {
    %c0_i32 = arith.constant 0 : i32
    %c0_i32_0 = arith.constant 0 : i32
    %c0_i32_1 = arith.constant 0 : i32
    return %c0_i32, %c0_i32_0 : i32, i32
  }
  func.func @transform_7(%arg0: i32) -> (i32, i32) {
    %c0_i32 = arith.constant 0 : i32
    %c0_i32_0 = arith.constant 0 : i32
    %c0_i32_1 = arith.constant 0 : i32
    return %c0_i32, %c0_i32_0 : i32, i32
  }
  func.func @transform_8(%arg0: i32) -> (i32, i32) {
    %c0_i32 = arith.constant 0 : i32
    %c0_i32_0 = arith.constant 0 : i32
    %c0_i32_1 = arith.constant 0 : i32
    return %c0_i32, %c0_i32_0 : i32, i32
  }
  func.func @transform_9(%arg0: i32) -> (i32, i32) {
    %c0_i32 = arith.constant 0 : i32
    %c0_i32_0 = arith.constant 0 : i32
    %c0_i32_1 = arith.constant 0 : i32
    return %c0_i32, %c0_i32_0 : i32, i32
  }
  func.func @transform_10(%arg0: i32) -> (i32, i32) {
    %c0_i32 = arith.constant 0 : i32
    %c0_i32_0 = arith.constant 0 : i32
    %c0_i32_1 = arith.constant 0 : i32
    return %c0_i32, %c0_i32_0 : i32, i32
  }
  func.func @transform_11(%arg0: i32) -> (i32, i32) {
    %c0_i32 = arith.constant 0 : i32
    %c0_i32_0 = arith.constant 0 : i32
    %c0_i32_1 = arith.constant 0 : i32
    return %c0_i32, %c0_i32_0 : i32, i32
  }
  func.func @transform_12(%arg0: i32) -> (i32, i32) {
    %c0_i32 = arith.constant 0 : i32
    %c0_i32_0 = arith.constant 0 : i32
    return %arg0, %c0_i32 : i32, i32
  }
}

</mosaic_0001>

<llo_original>
// kernel: critic_forward.1
$region0: #{critic_forward.1}
  #allocation0 [shape = 'u32[]', space=smem, size = 0x4, offset = 0x4, fixed_abs, tag = 'smem constant byte address 0x4 - core index']
  #allocation1 [shape = 'u32[144,128]{1,0:T(1,128)}', space=vmem, size = 0x12000, scoped, tag = 'internal scratch']
  #allocation2 [shape = 'f32[1,1]{1,0:T(1,128)S(1)}', space=vmem, size = 0x200, scoped, tag = 'scoped memory for critic_forward.1']
  %s0 = inlined_call_operand.vmem [shape: f32[512,34], index: 0, kind: input, shape index: {}]
  %s1 = inlined_call_operand.vmem [shape: f32[34,450], index: 1, kind: input, shape index: {}]
  %s2 = inlined_call_operand.vmem [shape: f32[450,360], index: 2, kind: input, shape index: {}]
  %s3 = inlined_call_operand.vmem [shape: f32[3,360], index: 3, kind: input, shape index: {}]
  %s4 = inlined_call_operand.vmem [shape: f32[360,180], index: 4, kind: input, shape index: {}]
  %s5 = inlined_call_operand.vmem [shape: f32[3,180], index: 5, kind: input, shape index: {}]
  %s6 = inlined_call_operand.vmem [shape: f32[180,90], index: 6, kind: input, shape index: {}]
  %s7 = inlined_call_operand.vmem [shape: f32[3,90], index: 7, kind: input, shape index: {}]
  %s8 = inlined_call_operand.vmem [shape: f32[90,45], index: 8, kind: input, shape index: {}]
  %s9 = inlined_call_operand.vmem [shape: f32[3,45], index: 9, kind: input, shape index: {}]
  %s10 = inlined_call_operand.vmem [shape: f32[1,45], index: 10, kind: input, shape index: {}]
  %s11 = inlined_call_operand.<no memory space> [shape: f32[1,1], index: 11, kind: input, shape index: {}]
  %s12 = inlined_call_operand.vmem [shape: f32[512,1], index: 12, kind: output, shape index: {}]
  %s13 = sld [smem:[#allocation0]]
  $region81: #{critic_forward.1} parent=0
    _
  %s15 = ssub.s32 1, %s13
  %s16 = scalar_select 0, %s15, %s13
  %v17 = vstv %s11
  %18 = vst [vmem:[#allocation2] sm:$0x1] %v17
  loop: start=0, step=1, limit=4
  $region2: #{critic_forward.1} parent=0 // loop_pre_header
    _
  $region3: #{critic_forward.1} parent=0 // loop_header
    %s20 = sphi 0, %s24
    %p21 = scmp.ge.s32.totalorder %s20, 4
    %s30 = sphi 0, %s32
    %s33 = sphi 0, %s30
    %s34 = sphi 0, %s33
    %s50 = sphi 0, %s34
    %s54 = sphi 0, %s54
    %s56 = sphi 0, %s54
    %s57 = sphi 0, %s56
    %s71 = sphi 0, %s57
    %s75 = sphi 0, %s75
    %s77 = sphi 0, %s75
    %s78 = sphi 0, %s77
    %s92 = sphi 0, %s78
    %s96 = sphi 0, %s96
    %s98 = sphi 0, %s96
    %s99 = sphi 0, %s98
    %s113 = sphi 0, %s99
    %s117 = sphi 0, %s117
    %s119 = sphi 0, %s117
    %s120 = sphi 0, %s119
    %s134 = sphi 0, %s120
    %s138 = sphi 0, %s138
    %s140 = sphi 0, %s138
    %s141 = sphi 0, %s140
    %s155 = sphi 0, %s141
    %s159 = sphi 0, %s159
    %s161 = sphi 0, %s159
    %s162 = sphi 0, %s161
    %s176 = sphi 0, %s162
    %s180 = sphi 0, %s180
    %s182 = sphi 0, %s180
    %s183 = sphi 0, %s182
    %s197 = sphi 0, %s183
    %s201 = sphi 0, %s201
    %s203 = sphi 0, %s201
    %s204 = sphi 0, %s203
    %s218 = sphi 0, %s204
    %s222 = sphi 0, %s222
    %s224 = sphi 0, %s222
    %s225 = sphi 0, %s224
    %s239 = sphi 0, %s225
    %s243 = sphi 0, %s243
    %s245 = sphi 0, %s243
    %s246 = sphi 0, %s245
    %s260 = sphi 0, %s246
    %s264 = sphi 0, %s264
    %s266 = sphi 0, %s264
    %s267 = sphi 0, %s266
    %s281 = sphi 0, %s267
    %s287 = sphi 0, %s289
    %s290 = sphi 0, %s287
    %s291 = sphi 0, %s290
    %s307 = sphi 0, %s291
  $region4: #{critic_forward.1} parent=0 // loop_header_branch
    %23 = sbr.rel (%p21) target = $region8
  $region5: #{critic_forward.1} parent=0 // loop_body
    %s25 = ssub.s32 %s20, 1
    %s26 = ssub.s32 %s20, 2
    %s27 = sadd.s32 %s20, 1
    %s28 = ssub.s32 %s20, %s27
    %p29 = scmp.eq.s32.totalorder %s28, 0
    %s31 = sadd.s32 %s30, 1
    %s32 = scalar_select %p29, %s30, %s31
    %p35 = pneg %p29
    %p36 = scmp.eq.s32.totalorder %s20, 1
    %p37 = por %p35, %p36
    %p38 = scmp.ne.s32.totalorder %s30, %s33
    %p39 = scmp.eq.s32.totalorder %s20, 0
    %p40 = por %p38, %p39
    %p41 = scmp.ne.s32.totalorder %s30, %s33
    %p42 = scmp.eq.s32.totalorder %s25, 1
    %p43 = por %p41, %p42
    %p44 = scmp.ne.s32.totalorder %s33, %s34
    %p45 = scmp.eq.s32.totalorder %s25, 0
    %p46 = por %p44, %p45
    %p47 = scmp.ne.s32.totalorder %s33, %s34
    %p48 = scmp.eq.s32.totalorder %s26, 1
    %p49 = por %p47, %p48
    %p51 = scmp.ne.s32.totalorder %s34, %s50
    %p52 = scmp.eq.s32.totalorder %s26, 0
    %p53 = por %p51, %p52
    %s55 = sadd.s32 %s54, 1
    %p58 = scmp.eq.s32.totalorder %s20, 1
    %p59 = scmp.ne.s32.totalorder %s54, %s56
    %p60 = scmp.eq.s32.totalorder %s20, 0
    %p61 = por %p59, %p60
    %p62 = scmp.ne.s32.totalorder %s54, %s56
    %p63 = scmp.eq.s32.totalorder %s25, 1
    %p64 = por %p62, %p63
    %p65 = scmp.ne.s32.totalorder %s56, %s57
    %p66 = scmp.eq.s32.totalorder %s25, 0
    %p67 = por %p65, %p66
    %p68 = scmp.ne.s32.totalorder %s56, %s57
    %p69 = scmp.eq.s32.totalorder %s26, 1
    %p70 = por %p68, %p69
    %p72 = scmp.ne.s32.totalorder %s57, %s71
    %p73 = scmp.eq.s32.totalorder %s26, 0
    %p74 = por %p72, %p73
    %s76 = sadd.s32 %s75, 1
    %p79 = scmp.eq.s32.totalorder %s20, 1
    %p80 = scmp.ne.s32.totalorder %s75, %s77
    %p81 = scmp.eq.s32.totalorder %s20, 0
    %p82 = por %p80, %p81
    %p83 = scmp.ne.s32.totalorder %s75, %s77
    %p84 = scmp.eq.s32.totalorder %s25, 1
    %p85 = por %p83, %p84
    %p86 = scmp.ne.s32.totalorder %s77, %s78
    %p87 = scmp.eq.s32.totalorder %s25, 0
    %p88 = por %p86, %p87
    %p89 = scmp.ne.s32.totalorder %s77, %s78
    %p90 = scmp.eq.s32.totalorder %s26, 1
    %p91 = por %p89, %p90
    %p93 = scmp.ne.s32.totalorder %s78, %s92
    %p94 = scmp.eq.s32.totalorder %s26, 0
    %p95 = por %p93, %p94
    %s97 = sadd.s32 %s96, 1
    %p100 = scmp.eq.s32.totalorder %s20, 1
    %p101 = scmp.ne.s32.totalorder %s96, %s98
    %p102 = scmp.eq.s32.totalorder %s20, 0
    %p103 = por %p101, %p102
    %p104 = scmp.ne.s32.totalorder %s96, %s98
    %p105 = scmp.eq.s32.totalorder %s25, 1
    %p106 = por %p104, %p105
    %p107 = scmp.ne.s32.totalorder %s98, %s99
    %p108 = scmp.eq.s32.totalorder %s25, 0
    %p109 = por %p107, %p108
    %p110 = scmp.ne.s32.totalorder %s98, %s99
    %p111 = scmp.eq.s32.totalorder %s26, 1
    %p112 = por %p110, %p111
    %p114 = scmp.ne.s32.totalorder %s99, %s113
    %p115 = scmp.eq.s32.totalorder %s26, 0
    %p116 = por %p114, %p115
    %s118 = sadd.s32 %s117, 1
    %p121 = scmp.eq.s32.totalorder %s20, 1
    %p122 = scmp.ne.s32.totalorder %s117, %s119
    %p123 = scmp.eq.s32.totalorder %s20, 0
    %p124 = por %p122, %p123
    %p125 = scmp.ne.s32.totalorder %s117, %s119
    %p126 = scmp.eq.s32.totalorder %s25, 1
    %p127 = por %p125, %p126
    %p128 = scmp.ne.s32.totalorder %s119, %s120
    %p129 = scmp.eq.s32.totalorder %s25, 0
    %p130 = por %p128, %p129
    %p131 = scmp.ne.s32.totalorder %s119, %s120
    %p132 = scmp.eq.s32.totalorder %s26, 1
    %p133 = por %p131, %p132
    %p135 = scmp.ne.s32.totalorder %s120, %s134
    %p136 = scmp.eq.s32.totalorder %s26, 0
    %p137 = por %p135, %p136
    %s139 = sadd.s32 %s138, 1
    %p142 = scmp.eq.s32.totalorder %s20, 1
    %p143 = scmp.ne.s32.totalorder %s138, %s140
    %p144 = scmp.eq.s32.totalorder %s20, 0
    %p145 = por %p143, %p144
    %p146 = scmp.ne.s32.totalorder %s138, %s140
    %p147 = scmp.eq.s32.totalorder %s25, 1
    %p148 = por %p146, %p147
    %p149 = scmp.ne.s32.totalorder %s140, %s141
    %p150 = scmp.eq.s32.totalorder %s25, 0
    %p151 = por %p149, %p150
    %p152 = scmp.ne.s32.totalorder %s140, %s141
    %p153 = scmp.eq.s32.totalorder %s26, 1
    %p154 = por %p152, %p153
    %p156 = scmp.ne.s32.totalorder %s141, %s155
    %p157 = scmp.eq.s32.totalorder %s26, 0
    %p158 = por %p156, %p157
    %s160 = sadd.s32 %s159, 1
    %p163 = scmp.eq.s32.totalorder %s20, 1
    %p164 = scmp.ne.s32.totalorder %s159, %s161
    %p165 = scmp.eq.s32.totalorder %s20, 0
    %p166 = por %p164, %p165
    %p167 = scmp.ne.s32.totalorder %s159, %s161
    %p168 = scmp.eq.s32.totalorder %s25, 1
    %p169 = por %p167, %p168
    %p170 = scmp.ne.s32.totalorder %s161, %s162
    %p171 = scmp.eq.s32.totalorder %s25, 0
    %p172 = por %p170, %p171
    %p173 = scmp.ne.s32.totalorder %s161, %s162
    %p174 = scmp.eq.s32.totalorder %s26, 1
    %p175 = por %p173, %p174
    %p177 = scmp.ne.s32.totalorder %s162, %s176
    %p178 = scmp.eq.s32.totalorder %s26, 0
    %p179 = por %p177, %p178
    %s181 = sadd.s32 %s180, 1
    %p184 = scmp.eq.s32.totalorder %s20, 1
    %p185 = scmp.ne.s32.totalorder %s180, %s182
    %p186 = scmp.eq.s32.totalorder %s20, 0
    %p187 = por %p185, %p186
    %p188 = scmp.ne.s32.totalorder %s180, %s182
    %p189 = scmp.eq.s32.totalorder %s25, 1
    %p190 = por %p188, %p189
    %p191 = scmp.ne.s32.totalorder %s182, %s183
    %p192 = scmp.eq.s32.totalorder %s25, 0
    %p193 = por %p191, %p192
    %p194 = scmp.ne.s32.totalorder %s182, %s183
    %p195 = scmp.eq.s32.totalorder %s26, 1
    %p196 = por %p194, %p195
    %p198 = scmp.ne.s32.totalorder %s183, %s197
    %p199 = scmp.eq.s32.totalorder %s26, 0
    %p200 = por %p198, %p199
    %s202 = sadd.s32 %s201, 1
    %p205 = scmp.eq.s32.totalorder %s20, 1
    %p206 = scmp.ne.s32.totalorder %s201, %s203
    %p207 = scmp.eq.s32.totalorder %s20, 0
    %p208 = por %p206, %p207
    %p209 = scmp.ne.s32.totalorder %s201, %s203
    %p210 = scmp.eq.s32.totalorder %s25, 1
    %p211 = por %p209, %p210
    %p212 = scmp.ne.s32.totalorder %s203, %s204
    %p213 = scmp.eq.s32.totalorder %s25, 0
    %p214 = por %p212, %p213
    %p215 = scmp.ne.s32.totalorder %s203, %s204
    %p216 = scmp.eq.s32.totalorder %s26, 1
    %p217 = por %p215, %p216
    %p219 = scmp.ne.s32.totalorder %s204, %s218
    %p220 = scmp.eq.s32.totalorder %s26, 0
    %p221 = por %p219, %p220
    %s223 = sadd.s32 %s222, 1
    %p226 = scmp.eq.s32.totalorder %s20, 1
    %p227 = scmp.ne.s32.totalorder %s222, %s224
    %p228 = scmp.eq.s32.totalorder %s20, 0
    %p229 = por %p227, %p228
    %p230 = scmp.ne.s32.totalorder %s222, %s224
    %p231 = scmp.eq.s32.totalorder %s25, 1
    %p232 = por %p230, %p231
    %p233 = scmp.ne.s32.totalorder %s224, %s225
    %p234 = scmp.eq.s32.totalorder %s25, 0
    %p235 = por %p233, %p234
    %p236 = scmp.ne.s32.totalorder %s224, %s225
    %p237 = scmp.eq.s32.totalorder %s26, 1
    %p238 = por %p236, %p237
    %p240 = scmp.ne.s32.totalorder %s225, %s239
    %p241 = scmp.eq.s32.totalorder %s26, 0
    %p242 = por %p240, %p241
    %s244 = sadd.s32 %s243, 1
    %p247 = scmp.eq.s32.totalorder %s20, 1
    %p248 = scmp.ne.s32.totalorder %s243, %s245
    %p249 = scmp.eq.s32.totalorder %s20, 0
    %p250 = por %p248, %p249
    %p251 = scmp.ne.s32.totalorder %s243, %s245
    %p252 = scmp.eq.s32.totalorder %s25, 1
    %p253 = por %p251, %p252
    %p254 = scmp.ne.s32.totalorder %s245, %s246
    %p255 = scmp.eq.s32.totalorder %s25, 0
    %p256 = por %p254, %p255
    %p257 = scmp.ne.s32.totalorder %s245, %s246
    %p258 = scmp.eq.s32.totalorder %s26, 1
    %p259 = por %p257, %p258
    %p261 = scmp.ne.s32.totalorder %s246, %s260
    %p262 = scmp.eq.s32.totalorder %s26, 0
    %p263 = por %p261, %p262
    %s265 = sadd.s32 %s264, 1
    %p268 = scmp.eq.s32.totalorder %s20, 1
    %p269 = scmp.ne.s32.totalorder %s264, %s266
    %p270 = scmp.eq.s32.totalorder %s20, 0
    %p271 = por %p269, %p270
    %p272 = scmp.ne.s32.totalorder %s264, %s266
    %p273 = scmp.eq.s32.totalorder %s25, 1
    %p274 = por %p272, %p273
    %p275 = scmp.ne.s32.totalorder %s266, %s267
    %p276 = scmp.eq.s32.totalorder %s25, 0
    %p277 = por %p275, %p276
    %p278 = scmp.ne.s32.totalorder %s266, %s267
    %p279 = scmp.eq.s32.totalorder %s26, 1
    %p280 = por %p278, %p279
    %p282 = scmp.ne.s32.totalorder %s267, %s281
    %p283 = scmp.eq.s32.totalorder %s26, 0
    %p284 = por %p282, %p283
    %s285 = ssub.s32 %s20, %s27
    %p286 = scmp.eq.s32.totalorder %s285, 0
    %s288 = sadd.s32 %s287, 1
    %s289 = scalar_select %p286, %s287, %s288
    %p292 = pneg %p286
    %p293 = scmp.eq.s32.totalorder %s20, 1
    %p294 = por %p292, %p293
    %p295 = scmp.ne.s32.totalorder %s287, %s290
    %p296 = scmp.eq.s32.totalorder %s20, 0
    %p297 = por %p295, %p296
    %p298 = scmp.ne.s32.totalorder %s287, %s290
    %p299 = scmp.eq.s32.totalorder %s25, 1
    %p300 = por %p298, %p299
    %p301 = scmp.ne.s32.totalorder %s290, %s291
    %p302 = scmp.eq.s32.totalorder %s25, 0
    %p303 = por %p301, %p302
    %p304 = scmp.ne.s32.totalorder %s290, %s291
    %p305 = scmp.eq.s32.totalorder %s26, 1
    %p306 = por %p304, %p305
    %p308 = scmp.ne.s32.totalorder %s291, %s307
    %p309 = scmp.eq.s32.totalorder %s26, 0
    %p310 = por %p308, %p309
    %p311 = scmp.le.s32.totalorder 1, %s20
    %p312 = scmp.lt.s32.totalorder %s20, 3
    %p313 = pnand %p311, %p312
    %p314 = pneg %p313
    // Predicated region
    $region9: #{critic_forward.1} parent=5 // pred_check
      _
    $region10: #{critic_forward.1} parent=5 // pred_check_branch
      %316 = sbr.rel (%p313) target = $region12
    $region11: #{critic_forward.1} parent=5 // pred_region
      %s317 = ssub.s32 %s20, 1
      // Predicated region
      $region13: #{critic_forward.1} parent=11 // pred_check
        %p318 = pneg %p67
      $region14: #{critic_forward.1} parent=11 // pred_check_branch
        %320 = sbr.rel (%p318) target = $region16
      $region15: #{critic_forward.1} parent=11 // pred_region
        _
      $region16: #{critic_forward.1} parent=11 // pred_fallthru
        _
      // Predicated region
      $region17: #{critic_forward.1} parent=11 // pred_check
        %p321 = pneg %p88
      $region18: #{critic_forward.1} parent=11 // pred_check_branch
        %323 = sbr.rel (%p321) target = $region20
      $region19: #{critic_forward.1} parent=11 // pred_region
        _
      $region20: #{critic_forward.1} parent=11 // pred_fallthru
        _
      // Predicated region
      $region21: #{critic_forward.1} parent=11 // pred_check
        %p324 = pneg %p109
      $region22: #{critic_forward.1} parent=11 // pred_check_branch
        %326 = sbr.rel (%p324) target = $region24
      $region23: #{critic_forward.1} parent=11 // pred_region
        _
      $region24: #{critic_forward.1} parent=11 // pred_fallthru
        _
      // Predicated region
      $region25: #{critic_forward.1} parent=11 // pred_check
        %p327 = pneg %p130
      $region26: #{critic_forward.1} parent=11 // pred_check_branch
        %329 = sbr.rel (%p327) target = $region28
      $region27: #{critic_forward.1} parent=11 // pred_region
        _
      $region28: #{critic_forward.1} parent=11 // pred_fallthru
        _
      // Predicated region
      $region29: #{critic_forward.1} parent=11 // pred_check
        %p330 = pneg %p151
      $region30: #{critic_forward.1} parent=11 // pred_check_branch
        %332 = sbr.rel (%p330) target = $region32
      $region31: #{critic_forward.1} parent=11 // pred_region
        _
      $region32: #{critic_forward.1} parent=11 // pred_fallthru
        _
      // Predicated region
      $region33: #{critic_forward.1} parent=11 // pred_check
        %p333 = pneg %p172
      $region34: #{critic_forward.1} parent=11 // pred_check_branch
        %335 = sbr.rel (%p333) target = $region36
      $region35: #{critic_forward.1} parent=11 // pred_region
        _
      $region36: #{critic_forward.1} parent=11 // pred_fallthru
        _
      // Predicated region
      $region37: #{critic_forward.1} parent=11 // pred_check
        %p336 = pneg %p193
      $region38: #{critic_forward.1} parent=11 // pred_check_branch
        %338 = sbr.rel (%p336) target = $region40
      $region39: #{critic_forward.1} parent=11 // pred_region
        _
      $region40: #{critic_forward.1} parent=11 // pred_fallthru
        _
      // Predicated region
      $region41: #{critic_forward.1} parent=11 // pred_check
        %p339 = pneg %p214
      $region42: #{critic_forward.1} parent=11 // pred_check_branch
        %341 = sbr.rel (%p339) target = $region44
      $region43: #{critic_forward.1} parent=11 // pred_region
        _
      $region44: #{critic_forward.1} parent=11 // pred_fallthru
        _
      // Predicated region
      $region45: #{critic_forward.1} parent=11 // pred_check
        %p342 = pneg %p235
      $region46: #{critic_forward.1} parent=11 // pred_check_branch
        %344 = sbr.rel (%p342) target = $region48
      $region47: #{critic_forward.1} parent=11 // pred_region
        _
      $region48: #{critic_forward.1} parent=11 // pred_fallthru
        _
      // Predicated region
      $region49: #{critic_forward.1} parent=11 // pred_check
        %p345 = pneg %p256
      $region50: #{critic_forward.1} parent=11 // pred_check_branch
        %347 = sbr.rel (%p345) target = $region52
      $region51: #{critic_forward.1} parent=11 // pred_region
        _
      $region52: #{critic_forward.1} parent=11 // pred_fallthru
        _
      // Predicated region
      $region53: #{critic_forward.1} parent=11 // pred_check
        %p348 = pneg %p277
      $region54: #{critic_forward.1} parent=11 // pred_check_branch
        %350 = sbr.rel (%p348) target = $region56
      $region55: #{critic_forward.1} parent=11 // pred_region
        _
      $region56: #{critic_forward.1} parent=11 // pred_fallthru
        _
    $region12: #{critic_forward.1} parent=5 // pred_fallthru
      _
    %p351 = scmp.lt.s32.totalorder %s20, 2
    // Predicated region
    $region57: #{critic_forward.1} parent=5 // pred_check
      %p352 = pneg %p351
    $region58: #{critic_forward.1} parent=5 // pred_check_branch
      %354 = sbr.rel (%p352) target = $region60
    $region59: #{critic_forward.1} parent=5 // pred_region
      // Predicated region
      $region61: #{critic_forward.1} parent=59 // pred_check
        %p355 = pneg %p40
      $region62: #{critic_forward.1} parent=59 // pred_check_branch
        %357 = sbr.rel (%p355) target = $region64
      $region63: #{critic_forward.1} parent=59 // pred_region
        %s358 = smul.u32 32, %s20
        %p359 = scmp.lt.s32.totalorder %s358, 63
        %s360 = scalar_select %p359, %s358, 63
        %s361 = smul.addr %s360, 8
        %s362 = scalar_lea.vmem %s0, %s361
        %s363 = smul.u32 32, %s20
      $region64: #{critic_forward.1} parent=59 // pred_fallthru
        _
    $region60: #{critic_forward.1} parent=5 // pred_fallthru
      _
    %p364 = scmp.le.s32.totalorder 1, %s20
    %p365 = scmp.lt.s32.totalorder %s20, 3
    %p366 = pnand %p364, %p365
    %p367 = pneg %p366
    // Predicated region
    $region65: #{critic_forward.1} parent=5 // pred_check
      _
    $region66: #{critic_forward.1} parent=5 // pred_check_branch
      %369 = sbr.rel (%p366) target = $region68
    $region67: #{critic_forward.1} parent=5 // pred_region
      %s370 = ssub.s32 %s20, 1
      %s371 = smul.u32 32, %s25
      %p372 = scmp.lt.s32.totalorder %s371, 63
      %s373 = scalar_select %p372, %s371, 63
      %s374 = smul.addr %s373, 8
      %s375 = scalar_lea.vmem %s0, %s374
      %p376 = pneg %p46
      %p377 = pneg %p43
      %p378 = pneg %p67
      %p379 = pneg %p64
      %p380 = pneg %p88
      %p381 = pneg %p85
      %p382 = pneg %p109
      %p383 = pneg %p106
      %p384 = pneg %p130
      %p385 = pneg %p127
      %p386 = pneg %p151
      %p387 = pneg %p148
      %p388 = pneg %p172
      %p389 = pneg %p169
      %p390 = pneg %p193
      %p391 = pneg %p190
      %p392 = pneg %p214
      %p393 = pneg %p211
      %p394 = pneg %p235
      %p395 = pneg %p232
      %p396 = pneg %p256
      %p397 = pneg %p253
      %p398 = pneg %p277
      %p399 = pneg %p274
      %p400 = pneg %p303
      %p401 = pneg %p300
      %s402 = smul.u32 32, %s25
      %p403 = scmp.lt.s32.totalorder %s402, 63
      %s404 = scalar_select %p403, %s402, 63
      %s405 = smul.addr %s404, 8
      %s406 = scalar_lea.vmem %s12, %s405
      %s407 = smul.u32 32, %s25
      %p408 = scmp.lt.s32.totalorder %s407, 63
      %s409 = scalar_select %p408, %s407, 63
      %s410 = smul.addr %s409, 8
      %s411 = scalar_lea.vmem %s0, %s410
      %s412 = smul.u32 32, %s25
      %s413 = smul.u32 32, %s25
      %p414 = scmp.lt.s32.totalorder %s413, 63
      %s415 = scalar_select %p414, %s413, 63
      %s416 = smul.addr %s415, 8
      %s417 = scalar_lea.vmem %s12, %s416
      %s418 = smul.u32 32, %s25
      %v419 = vld [vmem:[%s411] sm:$0xff]
      %v420 = vld [vmem:[%s411 + $0x8] sm:$0xff]
      %v421 = vld [vmem:[%s411 + $0x10] sm:$0xff]
      %v422 = vld [vmem:[%s411 + $0x18] sm:$0xff]
      %v423 = vld [vmem:[%s411 + $0x20] sm:$0xff]
      %v424 = vld [vmem:[%s411 + $0x28] sm:$0xff]
      %v425 = vld [vmem:[%s411 + $0x30] sm:$0xff]
      %v426 = vld [vmem:[%s411 + $0x38] sm:$0xff]
      %v427 = vld [vmem:[%s411 + $0x40] sm:$0xff]
      %v428 = vld [vmem:[%s411 + $0x48] sm:$0xff]
      %v429 = vld [vmem:[%s411 + $0x50] sm:$0xff]
      %v430 = vld [vmem:[%s411 + $0x58] sm:$0xff]
      %v431 = vld [vmem:[%s411 + $0x60] sm:$0xff]
      %v432 = vld [vmem:[%s411 + $0x68] sm:$0xff]
      %v433 = vld [vmem:[%s411 + $0x70] sm:$0xff]
      %v434 = vld [vmem:[%s411 + $0x78] sm:$0xff]
      %v435 = vld [vmem:[%s411 + $0x80] sm:$0xff]
      %v436 = vld [vmem:[%s411 + $0x88] sm:$0xff]
      %v437 = vld [vmem:[%s411 + $0x90] sm:$0xff]
      %v438 = vld [vmem:[%s411 + $0x98] sm:$0xff]
      %v439 = vld [vmem:[%s411 + $0xa0] sm:$0xff]
      %v440 = vld [vmem:[%s411 + $0xa8] sm:$0xff]
      %v441 = vld [vmem:[%s411 + $0xb0] sm:$0xff]
      %v442 = vld [vmem:[%s411 + $0xb8] sm:$0xff]
      %v443 = vld [vmem:[%s411 + $0xc0] sm:$0xff]
      %v444 = vld [vmem:[%s411 + $0xc8] sm:$0xff]
      %v445 = vld [vmem:[%s411 + $0xd0] sm:$0xff]
      %v446 = vld [vmem:[%s411 + $0xd8] sm:$0xff]
      %v447 = vld [vmem:[%s411 + $0xe0] sm:$0xff]
      %v448 = vld [vmem:[%s411 + $0xe8] sm:$0xff]
      %v449 = vld [vmem:[%s411 + $0xf0] sm:$0xff]
      %v450 = vld [vmem:[%s411 + $0xf8] sm:$0xff]
      %v451 = vld [vmem:[%s1] sm:$0xff]
      %v452 = vld [vmem:[%s1 + $0x8] sm:$0xff]
      %v453 = vld [vmem:[%s1 + $0x10] sm:$0xff]
      %v454 = vld [vmem:[%s1 + $0x18] sm:$0xff]
      %v455 = vld [vmem:[%s1 + $0x20] sm:$0xff]
      %v456 = vld [vmem:[%s1 + $0x28] sm:$0xff]
      %v457 = vld [vmem:[%s1 + $0x30] sm:$0xff]
      %v458 = vld [vmem:[%s1 + $0x38] sm:$0xff]
      %v459 = vld [vmem:[%s1 + $0x40] sm:$0xff]
      %v460 = vld [vmem:[%s1 + $0x48] sm:$0xff]
      %v461 = vld [vmem:[%s1 + $0x50] sm:$0xff]
      %v462 = vld [vmem:[%s1 + $0x58] sm:$0xff]
      %v463 = vld [vmem:[%s1 + $0x60] sm:$0xff]
      %v464 = vld [vmem:[%s1 + $0x68] sm:$0xff]
      %v465 = vld [vmem:[%s1 + $0x70] sm:$0xff]
      %v466 = vld [vmem:[%s1 + $0x78] sm:$0xff]
      %v467 = vld [vmem:[%s1 + $0x80] sm:$0x3]
      %v468 = vld [vmem:[%s1 + $0x88] sm:$0x3]
      %v469 = vld [vmem:[%s1 + $0x90] sm:$0x3]
      %v470 = vld [vmem:[%s1 + $0x98] sm:$0x3]
      %vm471 = vcmask 277504
      %v473 = vsel %vm471, %v419, 0
      %v476 = vsel %vm471, %v420, 0
      %v479 = vsel %vm471, %v421, 0
      %v482 = vsel %vm471, %v422, 0
      %v485 = vsel %vm471, %v423, 0
      %v488 = vsel %vm471, %v424, 0
      %v491 = vsel %vm471, %v425, 0
      %v494 = vsel %vm471, %v426, 0
      %v497 = vsel %vm471, %v427, 0
      %v500 = vsel %vm471, %v428, 0
      %v503 = vsel %vm471, %v429, 0
      %v506 = vsel %vm471, %v430, 0
      %v509 = vsel %vm471, %v431, 0
      %v512 = vsel %vm471, %v432, 0
      %v515 = vsel %vm471, %v433, 0
      %v518 = vsel %vm471, %v434, 0
      %v521 = vsel %vm471, %v435, 0
      %v524 = vsel %vm471, %v436, 0
      %v527 = vsel %vm471, %v437, 0
      %v530 = vsel %vm471, %v438, 0
      %v533 = vsel %vm471, %v439, 0
      %v536 = vsel %vm471, %v440, 0
      %v539 = vsel %vm471, %v441, 0
      %v542 = vsel %vm471, %v442, 0
      %v545 = vsel %vm471, %v443, 0
      %v548 = vsel %vm471, %v444, 0
      %v551 = vsel %vm471, %v445, 0
      %v554 = vsel %vm471, %v446, 0
      %v557 = vsel %vm471, %v447, 0
      %v560 = vsel %vm471, %v448, 0
      %v563 = vsel %vm471, %v449, 0
      %v566 = vsel %vm471, %v450, 0
      %vm568 = vcmask 1041408
      %v570 = vsel %vm568, %v467, 0
      %v573 = vsel %vm568, %v468, 0
      %v576 = vsel %vm568, %v469, 0
      %v579 = vsel %vm568, %v470, 0
      %581 = vmatprep.subr.mxu0 0.0
      %582 = vmatpush1.msra.mxu0 0.0
      %583 = vmatprep.subr.mxu0 0.0
      %584 = vmatpush1.msra.mxu0 0.0
      %585 = vmatprep.subr.mxu0 0.0
      %586 = vmatpush1.msra.mxu0 0.0
      %587 = vmatprep.subr.mxu0 0.0
      %588 = vmatpush1.msra.mxu0 0.0
      %589 = vmatprep.subr.mxu0 0.0
      %590 = vmatpush1.msra.mxu0 0.0
      %591 = vmatprep.subr.mxu0 0.0
      %592 = vmatpush1.msra.mxu0 0.0
      %593 = vmatprep.subr.mxu0 0.0
      %594 = vmatpush1.msra.mxu0 0.0
      %595 = vmatprep.subr.mxu0 0.0
      %596 = vmatpush1.msra.mxu0 0.0
      %597 = vmatprep.subr.mxu0 0.0
      %598 = vmatpush1.msra.mxu0 0.0
      %599 = vmatprep.subr.mxu0 0.0
      %600 = vmatpush1.msra.mxu0 0.0
      %601 = vmatprep.subr.mxu0 0.0
      %602 = vmatpush1.msra.mxu0 0.0
      %603 = vmatprep.subr.mxu0 %v573
      %604 = vmatpush1.msra.mxu0 %v570
      %605 = vmatprep.subr.mxu0 %v464
      %606 = vmatpush1.msra.mxu0 %v463
      %607 = vmatprep.subr.mxu0 %v460
      %608 = vmatpush1.msra.mxu0 %v459
      %609 = vmatprep.subr.mxu0 %v456
      %610 = vmatpush1.msra.mxu0 %v455
      %611 = vmatprep.subr.mxu0 %v452
      %612 = vmatpush1.msra.mxu0 %v451
      %613 = vmatprep.subr.mxu0 0.0
      %614 = vmatpush2.msra.mxu0 0.0
      %615 = vmatprep.subr.mxu0 0.0
      %616 = vmatpush2.msra.mxu0 0.0
      %617 = vmatprep.subr.mxu0 0.0
      %618 = vmatpush2.msra.mxu0 0.0
      %619 = vmatprep.subr.mxu0 0.0
      %620 = vmatpush2.msra.mxu0 0.0
      %621 = vmatprep.subr.mxu0 0.0
      %622 = vmatpush2.msra.mxu0 0.0
      %623 = vmatprep.subr.mxu0 0.0
      %624 = vmatpush2.msra.mxu0 0.0
      %625 = vmatprep.subr.mxu0 0.0
      %626 = vmatpush2.msra.mxu0 0.0
      %627 = vmatprep.subr.mxu0 0.0
      %628 = vmatpush2.msra.mxu0 0.0
      %629 = vmatprep.subr.mxu0 0.0
      %630 = vmatpush2.msra.mxu0 0.0
      %631 = vmatprep.subr.mxu0 0.0
      %632 = vmatpush2.msra.mxu0 0.0
      %633 = vmatprep.subr.mxu0 0.0
      %634 = vmatpush2.msra.mxu0 0.0
      %635 = vmatprep.subr.mxu0 0.0
      %636 = vmatpush2.msra.mxu0 0.0
      %637 = vmatprep.subr.mxu0 0.0
      %638 = vmatpush2.msra.mxu0 0.0
      %639 = vmatprep.subr.mxu0 0.0
      %640 = vmatpush2.msra.mxu0 0.0
      %641 = vmatprep.subr.mxu0 0.0
      %642 = vmatpush2.msra.mxu0 0.0
      %643 = vmatprep.subr.mxu0 0.0
      %644 = vmatpush2.msra.mxu0 0.0
      %645 = vmatprep.mubr.f32.mxu0 0.0
      %646 = vmatmul.mubr.f32.gmra.mxu0 %v473
      %v647 = vpop.f32.mrf.mxu0
      %v648 = vadd.f32 0.0, %v647
      %v649 = vpop.f32.mrf.mxu0
      %v650 = vadd.f32 0.0, %v649
      %651 = vmatprep.mubr.f32.mxu0 0.0
      %652 = vmatmul.mubr.f32.gmra.mxu0 %v476
      %v653 = vpop.f32.mrf.mxu0
      %v654 = vadd.f32 0.0, %v653
      %v655 = vpop.f32.mrf.mxu0
      %v656 = vadd.f32 0.0, %v655
      %657 = vmatprep.mubr.f32.mxu0 0.0
      %658 = vmatmul.mubr.f32.gmra.mxu0 %v479
      %v659 = vpop.f32.mrf.mxu0
      %v660 = vadd.f32 0.0, %v659
      %v661 = vpop.f32.mrf.mxu0
      %v662 = vadd.f32 0.0, %v661
      %663 = vmatprep.mubr.f32.mxu0 0.0
      %664 = vmatmul.mubr.f32.gmra.mxu0 %v482
      %v665 = vpop.f32.mrf.mxu0
      %v666 = vadd.f32 0.0, %v665
      %v667 = vpop.f32.mrf.mxu0
      %v668 = vadd.f32 0.0, %v667
      %669 = vmatprep.mubr.f32.mxu0 0.0
      %670 = vmatmul.mubr.f32.gmra.mxu0 %v485
      %v671 = vpop.f32.mrf.mxu0
      %v672 = vadd.f32 0.0, %v671
      %v673 = vpop.f32.mrf.mxu0
      %v674 = vadd.f32 0.0, %v673
      %675 = vmatprep.mubr.f32.mxu0 0.0
      %676 = vmatmul.mubr.f32.gmra.mxu0 %v488
      %v677 = vpop.f32.mrf.mxu0
      %v678 = vadd.f32 0.0, %v677
      %v679 = vpop.f32.mrf.mxu0
      %v680 = vadd.f32 0.0, %v679
      %681 = vmatprep.mubr.f32.mxu0 0.0
      %682 = vmatmul.mubr.f32.gmra.mxu0 %v491
      %v683 = vpop.f32.mrf.mxu0
      %v684 = vadd.f32 0.0, %v683
      %v685 = vpop.f32.mrf.mxu0
      %v686 = vadd.f32 0.0, %v685
      %687 = vmatprep.mubr.f32.mxu0 0.0
      %688 = vmatmul.mubr.f32.gmra.mxu0 %v494
      %v689 = vpop.f32.mrf.mxu0
      %v690 = vadd.f32 0.0, %v689
      %v691 = vpop.f32.mrf.mxu0
      %v692 = vadd.f32 0.0, %v691
      %693 = vmatprep.mubr.f32.mxu0 0.0
      %694 = vmatmul.mubr.f32.gmra.mxu0 %v497
      %v695 = vpop.f32.mrf.mxu0
      %v696 = vadd.f32 0.0, %v695
      %v697 = vpop.f32.mrf.mxu0
      %v698 = vadd.f32 0.0, %v697
      %699 = vmatprep.mubr.f32.mxu0 0.0
      %700 = vmatmul.mubr.f32.gmra.mxu0 %v500
      %v701 = vpop.f32.mrf.mxu0
      %v702 = vadd.f32 0.0, %v701
      %v703 = vpop.f32.mrf.mxu0
      %v704 = vadd.f32 0.0, %v703
      %705 = vmatprep.mubr.f32.mxu0 0.0
      %706 = vmatmul.mubr.f32.gmra.mxu0 %v503
      %v707 = vpop.f32.mrf.mxu0
      %v708 = vadd.f32 0.0, %v707
      %v709 = vpop.f32.mrf.mxu0
      %v710 = vadd.f32 0.0, %v709
      %711 = vmatprep.mubr.f32.mxu0 0.0
      %712 = vmatmul.mubr.f32.gmra.mxu0 %v506
      %v713 = vpop.f32.mrf.mxu0
      %v714 = vadd.f32 0.0, %v713
      %v715 = vpop.f32.mrf.mxu0
      %v716 = vadd.f32 0.0, %v715
      %717 = vmatprep.mubr.f32.mxu0 0.0
      %718 = vmatmul.mubr.f32.gmra.mxu0 %v509
      %v719 = vpop.f32.mrf.mxu0
      %v720 = vadd.f32 0.0, %v719
      %v721 = vpop.f32.mrf.mxu0
      %v722 = vadd.f32 0.0, %v721
      %723 = vmatprep.mubr.f32.mxu0 0.0
      %724 = vmatmul.mubr.f32.gmra.mxu0 %v512
      %v725 = vpop.f32.mrf.mxu0
      %v726 = vadd.f32 0.0, %v725
      %v727 = vpop.f32.mrf.mxu0
      %v728 = vadd.f32 0.0, %v727
      %729 = vmatprep.mubr.f32.mxu0 0.0
      %730 = vmatmul.mubr.f32.gmra.mxu0 %v515
      %v731 = vpop.f32.mrf.mxu0
      %v732 = vadd.f32 0.0, %v731
      %v733 = vpop.f32.mrf.mxu0
      %v734 = vadd.f32 0.0, %v733
      %735 = vmatprep.mubr.f32.mxu0 0.0
      %736 = vmatmul.mubr.f32.gmra.mxu0 %v518
      %v737 = vpop.f32.mrf.mxu0
      %v738 = vadd.f32 0.0, %v737
      %v739 = vpop.f32.mrf.mxu0
      %v740 = vadd.f32 0.0, %v739
      %741 = vmatprep.mubr.f32.mxu0 0.0
      %742 = vmatmul.mubr.f32.gmra.mxu0 %v521
      %v743 = vpop.f32.mrf.mxu0
      %v744 = vadd.f32 0.0, %v743
      %v745 = vpop.f32.mrf.mxu0
      %v746 = vadd.f32 0.0, %v745
      %747 = vmatprep.mubr.f32.mxu0 0.0
      %748 = vmatmul.mubr.f32.gmra.mxu0 %v524
      %v749 = vpop.f32.mrf.mxu0
      %v750 = vadd.f32 0.0, %v749
      %v751 = vpop.f32.mrf.mxu0
      %v752 = vadd.f32 0.0, %v751
      %753 = vmatprep.mubr.f32.mxu0 0.0
      %754 = vmatmul.mubr.f32.gmra.mxu0 %v527
      %v755 = vpop.f32.mrf.mxu0
      %v756 = vadd.f32 0.0, %v755
      %v757 = vpop.f32.mrf.mxu0
      %v758 = vadd.f32 0.0, %v757
      %759 = vmatprep.mubr.f32.mxu0 0.0
      %760 = vmatmul.mubr.f32.gmra.mxu0 %v530
      %v761 = vpop.f32.mrf.mxu0
      %v762 = vadd.f32 0.0, %v761
      %v763 = vpop.f32.mrf.mxu0
      %v764 = vadd.f32 0.0, %v763
      %765 = vmatprep.mubr.f32.mxu0 0.0
      %766 = vmatmul.mubr.f32.gmra.mxu0 %v533
      %v767 = vpop.f32.mrf.mxu0
      %v768 = vadd.f32 0.0, %v767
      %v769 = vpop.f32.mrf.mxu0
      %v770 = vadd.f32 0.0, %v769
      %771 = vmatprep.mubr.f32.mxu0 0.0
      %772 = vmatmul.mubr.f32.gmra.mxu0 %v536
      %v773 = vpop.f32.mrf.mxu0
      %v774 = vadd.f32 0.0, %v773
      %v775 = vpop.f32.mrf.mxu0
      %v776 = vadd.f32 0.0, %v775
      %777 = vmatprep.mubr.f32.mxu0 0.0
      %778 = vmatmul.mubr.f32.gmra.mxu0 %v539
      %v779 = vpop.f32.mrf.mxu0
      %v780 = vadd.f32 0.0, %v779
      %v781 = vpop.f32.mrf.mxu0
      %v782 = vadd.f32 0.0, %v781
      %783 = vmatprep.mubr.f32.mxu0 0.0
      %784 = vmatmul.mubr.f32.gmra.mxu0 %v542
      %v785 = vpop.f32.mrf.mxu0
      %v786 = vadd.f32 0.0, %v785
      %v787 = vpop.f32.mrf.mxu0
      %v788 = vadd.f32 0.0, %v787
      %789 = vmatprep.mubr.f32.mxu0 0.0
      %790 = vmatmul.mubr.f32.gmra.mxu0 %v545
      %v791 = vpop.f32.mrf.mxu0
      %v792 = vadd.f32 0.0, %v791
      %v793 = vpop.f32.mrf.mxu0
      %v794 = vadd.f32 0.0, %v793
      %795 = vmatprep.mubr.f32.mxu0 0.0
      %796 = vmatmul.mubr.f32.gmra.mxu0 %v548
      %v797 = vpop.f32.mrf.mxu0
      %v798 = vadd.f32 0.0, %v797
      %v799 = vpop.f32.mrf.mxu0
      %v800 = vadd.f32 0.0, %v799
      %801 = vmatprep.mubr.f32.mxu0 0.0
      %802 = vmatmul.mubr.f32.gmra.mxu0 %v551
      %v803 = vpop.f32.mrf.mxu0
      %v804 = vadd.f32 0.0, %v803
      %v805 = vpop.f32.mrf.mxu0
      %v806 = vadd.f32 0.0, %v805
      %807 = vmatprep.mubr.f32.mxu0 0.0
      %808 = vmatmul.mubr.f32.gmra.mxu0 %v554
      %v809 = vpop.f32.mrf.mxu0
      %v810 = vadd.f32 0.0, %v809
      %v811 = vpop.f32.mrf.mxu0
      %v812 = vadd.f32 0.0, %v811
      %813 = vmatprep.mubr.f32.mxu0 0.0
      %814 = vmatmul.mubr.f32.gmra.mxu0 %v557
      %v815 = vpop.f32.mrf.mxu0
      %v816 = vadd.f32 0.0, %v815
      %v817 = vpop.f32.mrf.mxu0
      %v818 = vadd.f32 0.0, %v817
      %819 = vmatprep.mubr.f32.mxu0 0.0
      %820 = vmatmul.mubr.f32.gmra.mxu0 %v560
      %v821 = vpop.f32.mrf.mxu0
      %v822 = vadd.f32 0.0, %v821
      %v823 = vpop.f32.mrf.mxu0
      %v824 = vadd.f32 0.0, %v823
      %825 = vmatprep.mubr.f32.mxu0 0.0
      %826 = vmatmul.mubr.f32.gmra.mxu0 %v563
      %v827 = vpop.f32.mrf.mxu0
      %v828 = vadd.f32 0.0, %v827
      %v829 = vpop.f32.mrf.mxu0
      %v830 = vadd.f32 0.0, %v829
      %831 = vmatprep.mubr.f32.mxu0 0.0
      %832 = vmatmul.mubr.f32.gmra.mxu0 %v566
      %v833 = vpop.f32.mrf.mxu0
      %v834 = vadd.f32 0.0, %v833
      %v835 = vpop.f32.mrf.mxu0
      %v836 = vadd.f32 0.0, %v835
      %837 = vdwg.mxu0
      %838 = vmatprep.subr.mxu0 0.0
      %839 = vmatpush1.msra.mxu0 0.0
      %840 = vmatprep.subr.mxu0 0.0
      %841 = vmatpush1.msra.mxu0 0.0
      %842 = vmatprep.subr.mxu0 0.0
      %843 = vmatpush1.msra.mxu0 0.0
      %844 = vmatprep.subr.mxu0 0.0
      %845 = vmatpush1.msra.mxu0 0.0
      %846 = vmatprep.subr.mxu0 0.0
      %847 = vmatpush1.msra.mxu0 0.0
      %848 = vmatprep.subr.mxu0 0.0
      %849 = vmatpush1.msra.mxu0 0.0
      %850 = vmatprep.subr.mxu0 0.0
      %851 = vmatpush1.msra.mxu0 0.0
      %852 = vmatprep.subr.mxu0 0.0
      %853 = vmatpush1.msra.mxu0 0.0
      %854 = vmatprep.subr.mxu0 0.0
      %855 = vmatpush1.msra.mxu0 0.0
      %856 = vmatprep.subr.mxu0 0.0
      %857 = vmatpush1.msra.mxu0 0.0
      %858 = vmatprep.subr.mxu0 0.0
      %859 = vmatpush1.msra.mxu0 0.0
      %860 = vmatprep.subr.mxu0 %v579
      %861 = vmatpush1.msra.mxu0 %v576
      %862 = vmatprep.subr.mxu0 %v466
      %863 = vmatpush1.msra.mxu0 %v465
      %864 = vmatprep.subr.mxu0 %v462
      %865 = vmatpush1.msra.mxu0 %v461
      %866 = vmatprep.subr.mxu0 %v458
      %867 = vmatpush1.msra.mxu0 %v457
      %868 = vmatprep.subr.mxu0 %v454
      %869 = vmatpush1.msra.mxu0 %v453
      %870 = vmatprep.subr.mxu0 0.0
      %871 = vmatpush2.msra.mxu0 0.0
      %872 = vmatprep.subr.mxu0 0.0
      %873 = vmatpush2.msra.mxu0 0.0
      %874 = vmatprep.subr.mxu0 0.0
      %875 = vmatpush2.msra.mxu0 0.0
      %876 = vmatprep.subr.mxu0 0.0
      %877 = vmatpush2.msra.mxu0 0.0
      %878 = vmatprep.subr.mxu0 0.0
      %879 = vmatpush2.msra.mxu0 0.0
      %880 = vmatprep.subr.mxu0 0.0
      %881 = vmatpush2.msra.mxu0 0.0
      %882 = vmatprep.subr.mxu0 0.0
      %883 = vmatpush2.msra.mxu0 0.0
      %884 = vmatprep.subr.mxu0 0.0
      %885 = vmatpush2.msra.mxu0 0.0
      %886 = vmatprep.subr.mxu0 0.0
      %887 = vmatpush2.msra.mxu0 0.0
      %888 = vmatprep.subr.mxu0 0.0
      %889 = vmatpush2.msra.mxu0 0.0
      %890 = vmatprep.subr.mxu0 0.0
      %891 = vmatpush2.msra.mxu0 0.0
      %892 = vmatprep.subr.mxu0 0.0
      %893 = vmatpush2.msra.mxu0 0.0
      %894 = vmatprep.subr.mxu0 0.0
      %895 = vmatpush2.msra.mxu0 0.0
      %896 = vmatprep.subr.mxu0 0.0
      %897 = vmatpush2.msra.mxu0 0.0
      %898 = vmatprep.subr.mxu0 0.0
      %899 = vmatpush2.msra.mxu0 0.0
      %900 = vmatprep.subr.mxu0 0.0
      %901 = vmatpush2.msra.mxu0 0.0
      %902 = vmatprep.mubr.f32.mxu0 0.0
      %903 = vmatmul.mubr.f32.gmra.mxu0 %v473
      %v904 = vpop.f32.mrf.mxu0
      %v905 = vadd.f32 0.0, %v904
      %v906 = vpop.f32.mrf.mxu0
      %v907 = vadd.f32 0.0, %v906
      %908 = vmatprep.mubr.f32.mxu0 0.0
      %909 = vmatmul.mubr.f32.gmra.mxu0 %v476
      %v910 = vpop.f32.mrf.mxu0
      %v911 = vadd.f32 0.0, %v910
      %v912 = vpop.f32.mrf.mxu0
      %v913 = vadd.f32 0.0, %v912
      %914 = vmatprep.mubr.f32.mxu0 0.0
      %915 = vmatmul.mubr.f32.gmra.mxu0 %v479
      %v916 = vpop.f32.mrf.mxu0
      %v917 = vadd.f32 0.0, %v916
      %v918 = vpop.f32.mrf.mxu0
      %v919 = vadd.f32 0.0, %v918
      %920 = vmatprep.mubr.f32.mxu0 0.0
      %921 = vmatmul.mubr.f32.gmra.mxu0 %v482
      %v922 = vpop.f32.mrf.mxu0
      %v923 = vadd.f32 0.0, %v922
      %v924 = vpop.f32.mrf.mxu0
      %v925 = vadd.f32 0.0, %v924
      %926 = vmatprep.mubr.f32.mxu0 0.0
      %927 = vmatmul.mubr.f32.gmra.mxu0 %v485
      %v928 = vpop.f32.mrf.mxu0
      %v929 = vadd.f32 0.0, %v928
      %v930 = vpop.f32.mrf.mxu0
      %v931 = vadd.f32 0.0, %v930
      %932 = vmatprep.mubr.f32.mxu0 0.0
      %933 = vmatmul.mubr.f32.gmra.mxu0 %v488
      %v934 = vpop.f32.mrf.mxu0
      %v935 = vadd.f32 0.0, %v934
      %v936 = vpop.f32.mrf.mxu0
      %v937 = vadd.f32 0.0, %v936
      %938 = vmatprep.mubr.f32.mxu0 0.0
      %939 = vmatmul.mubr.f32.gmra.mxu0 %v491
      %v940 = vpop.f32.mrf.mxu0
      %v941 = vadd.f32 0.0, %v940
      %v942 = vpop.f32.mrf.mxu0
      %v943 = vadd.f32 0.0, %v942
      %944 = vmatprep.mubr.f32.mxu0 0.0
      %945 = vmatmul.mubr.f32.gmra.mxu0 %v494
      %v946 = vpop.f32.mrf.mxu0
      %v947 = vadd.f32 0.0, %v946
      %v948 = vpop.f32.mrf.mxu0
      %v949 = vadd.f32 0.0, %v948
      %950 = vmatprep.mubr.f32.mxu0 0.0
      %951 = vmatmul.mubr.f32.gmra.mxu0 %v497
      %v952 = vpop.f32.mrf.mxu0
      %v953 = vadd.f32 0.0, %v952
      %v954 = vpop.f32.mrf.mxu0
      %v955 = vadd.f32 0.0, %v954
      %956 = vmatprep.mubr.f32.mxu0 0.0
      %957 = vmatmul.mubr.f32.gmra.mxu0 %v500
      %v958 = vpop.f32.mrf.mxu0
      %v959 = vadd.f32 0.0, %v958
      %v960 = vpop.f32.mrf.mxu0
      %v961 = vadd.f32 0.0, %v960
      %962 = vmatprep.mubr.f32.mxu0 0.0
      %963 = vmatmul.mubr.f32.gmra.mxu0 %v503
      %v964 = vpop.f32.mrf.mxu0
      %v965 = vadd.f32 0.0, %v964
      %v966 = vpop.f32.mrf.mxu0
      %v967 = vadd.f32 0.0, %v966
      %968 = vmatprep.mubr.f32.mxu0 0.0
      %969 = vmatmul.mubr.f32.gmra.mxu0 %v506
      %v970 = vpop.f32.mrf.mxu0
      %v971 = vadd.f32 0.0, %v970
      %v972 = vpop.f32.mrf.mxu0
      %v973 = vadd.f32 0.0, %v972
      %974 = vmatprep.mubr.f32.mxu0 0.0
      %975 = vmatmul.mubr.f32.gmra.mxu0 %v509
      %v976 = vpop.f32.mrf.mxu0
      %v977 = vadd.f32 0.0, %v976
      %v978 = vpop.f32.mrf.mxu0
      %v979 = vadd.f32 0.0, %v978
      %980 = vmatprep.mubr.f32.mxu0 0.0
      %981 = vmatmul.mubr.f32.gmra.mxu0 %v512
      %v982 = vpop.f32.mrf.mxu0
      %v983 = vadd.f32 0.0, %v982
      %v984 = vpop.f32.mrf.mxu0
      %v985 = vadd.f32 0.0, %v984
      %986 = vmatprep.mubr.f32.mxu0 0.0
      %987 = vmatmul.mubr.f32.gmra.mxu0 %v515
      %v988 = vpop.f32.mrf.mxu0
      %v989 = vadd.f32 0.0, %v988
      %v990 = vpop.f32.mrf.mxu0
      %v991 = vadd.f32 0.0, %v990
      %992 = vmatprep.mubr.f32.mxu0 0.0
      %993 = vmatmul.mubr.f32.gmra.mxu0 %v518
      %v994 = vpop.f32.mrf.mxu0
      %v995 = vadd.f32 0.0, %v994
      %v996 = vpop.f32.mrf.mxu0
      %v997 = vadd.f32 0.0, %v996
      %998 = vmatprep.mubr.f32.mxu0 0.0
      %999 = vmatmul.mubr.f32.gmra.mxu0 %v521
      %v1000 = vpop.f32.mrf.mxu0
      %v1001 = vadd.f32 0.0, %v1000
      %v1002 = vpop.f32.mrf.mxu0
      %v1003 = vadd.f32 0.0, %v1002
      %1004 = vmatprep.mubr.f32.mxu0 0.0
      %1005 = vmatmul.mubr.f32.gmra.mxu0 %v524
      %v1006 = vpop.f32.mrf.mxu0
      %v1007 = vadd.f32 0.0, %v1006
      %v1008 = vpop.f32.mrf.mxu0
      %v1009 = vadd.f32 0.0, %v1008
      %1010 = vmatprep.mubr.f32.mxu0 0.0
      %1011 = vmatmul.mubr.f32.gmra.mxu0 %v527
      %v1012 = vpop.f32.mrf.mxu0
      %v1013 = vadd.f32 0.0, %v1012
      %v1014 = vpop.f32.mrf.mxu0
      %v1015 = vadd.f32 0.0, %v1014
      %1016 = vmatprep.mubr.f32.mxu0 0.0
      %1017 = vmatmul.mubr.f32.gmra.mxu0 %v530
      %v1018 = vpop.f32.mrf.mxu0
      %v1019 = vadd.f32 0.0, %v1018
      %v1020 = vpop.f32.mrf.mxu0
      %v1021 = vadd.f32 0.0, %v1020
      %1022 = vmatprep.mubr.f32.mxu0 0.0
      %1023 = vmatmul.mubr.f32.gmra.mxu0 %v533
      %v1024 = vpop.f32.mrf.mxu0
      %v1025 = vadd.f32 0.0, %v1024
      %v1026 = vpop.f32.mrf.mxu0
      %v1027 = vadd.f32 0.0, %v1026
      %1028 = vmatprep.mubr.f32.mxu0 0.0
      %1029 = vmatmul.mubr.f32.gmra.mxu0 %v536
      %v1030 = vpop.f32.mrf.mxu0
      %v1031 = vadd.f32 0.0, %v1030
      %v1032 = vpop.f32.mrf.mxu0
      %v1033 = vadd.f32 0.0, %v1032
      %1034 = vmatprep.mubr.f32.mxu0 0.0
      %1035 = vmatmul.mubr.f32.gmra.mxu0 %v539
      %v1036 = vpop.f32.mrf.mxu0
      %v1037 = vadd.f32 0.0, %v1036
      %v1038 = vpop.f32.mrf.mxu0
      %v1039 = vadd.f32 0.0, %v1038
      %1040 = vmatprep.mubr.f32.mxu0 0.0
      %1041 = vmatmul.mubr.f32.gmra.mxu0 %v542
      %v1042 = vpop.f32.mrf.mxu0
      %v1043 = vadd.f32 0.0, %v1042
      %v1044 = vpop.f32.mrf.mxu0
      %v1045 = vadd.f32 0.0, %v1044
      %1046 = vmatprep.mubr.f32.mxu0 0.0
      %1047 = vmatmul.mubr.f32.gmra.mxu0 %v545
      %v1048 = vpop.f32.mrf.mxu0
      %v1049 = vadd.f32 0.0, %v1048
      %v1050 = vpop.f32.mrf.mxu0
      %v1051 = vadd.f32 0.0, %v1050
      %1052 = vmatprep.mubr.f32.mxu0 0.0
      %1053 = vmatmul.mubr.f32.gmra.mxu0 %v548
      %v1054 = vpop.f32.mrf.mxu0
      %v1055 = vadd.f32 0.0, %v1054
      %v1056 = vpop.f32.mrf.mxu0
      %v1057 = vadd.f32 0.0, %v1056
      %1058 = vmatprep.mubr.f32.mxu0 0.0
      %1059 = vmatmul.mubr.f32.gmra.mxu0 %v551
      %v1060 = vpop.f32.mrf.mxu0
      %v1061 = vadd.f32 0.0, %v1060
      %v1062 = vpop.f32.mrf.mxu0
      %v1063 = vadd.f32 0.0, %v1062
      %1064 = vmatprep.mubr.f32.mxu0 0.0
      %1065 = vmatmul.mubr.f32.gmra.mxu0 %v554
      %v1066 = vpop.f32.mrf.mxu0
      %v1067 = vadd.f32 0.0, %v1066
      %v1068 = vpop.f32.mrf.mxu0
      %v1069 = vadd.f32 0.0, %v1068
      %1070 = vmatprep.mubr.f32.mxu0 0.0
      %1071 = vmatmul.mubr.f32.gmra.mxu0 %v557
      %v1072 = vpop.f32.mrf.mxu0
      %v1073 = vadd.f32 0.0, %v1072
      %v1074 = vpop.f32.mrf.mxu0
      %v1075 = vadd.f32 0.0, %v1074
      %1076 = vmatprep.mubr.f32.mxu0 0.0
      %1077 = vmatmul.mubr.f32.gmra.mxu0 %v560
      %v1078 = vpop.f32.mrf.mxu0
      %v1079 = vadd.f32 0.0, %v1078
      %v1080 = vpop.f32.mrf.mxu0
      %v1081 = vadd.f32 0.0, %v1080
      %1082 = vmatprep.mubr.f32.mxu0 0.0
      %1083 = vmatmul.mubr.f32.gmra.mxu0 %v563
      %v1084 = vpop.f32.mrf.mxu0
      %v1085 = vadd.f32 0.0, %v1084
      %v1086 = vpop.f32.mrf.mxu0
      %v1087 = vadd.f32 0.0, %v1086
      %1088 = vmatprep.mubr.f32.mxu0 0.0
      %1089 = vmatmul.mubr.f32.gmra.mxu0 %v566
      %v1090 = vpop.f32.mrf.mxu0
      %v1091 = vadd.f32 0.0, %v1090
      %v1092 = vpop.f32.mrf.mxu0
      %v1093 = vadd.f32 0.0, %v1092
      %1094 = vdwg.mxu0
      %v1095 = vmax.f32 %v648, 0.0
      %v1096 = vmax.f32 %v650, 0.0
      %v1097 = vmax.f32 %v905, 0.0
      %v1098 = vmax.f32 %v907, 0.0
      %v1099 = vmax.f32 %v654, 0.0
      %v1100 = vmax.f32 %v656, 0.0
      %v1101 = vmax.f32 %v911, 0.0
      %v1102 = vmax.f32 %v913, 0.0
      %v1103 = vmax.f32 %v660, 0.0
      %v1104 = vmax.f32 %v662, 0.0
      %v1105 = vmax.f32 %v917, 0.0
      %v1106 = vmax.f32 %v919, 0.0
      %v1107 = vmax.f32 %v666, 0.0
      %v1108 = vmax.f32 %v668, 0.0
      %v1109 = vmax.f32 %v923, 0.0
      %v1110 = vmax.f32 %v925, 0.0
      %v1111 = vmax.f32 %v672, 0.0
      %v1112 = vmax.f32 %v674, 0.0
      %v1113 = vmax.f32 %v929, 0.0
      %v1114 = vmax.f32 %v931, 0.0
      %v1115 = vmax.f32 %v678, 0.0
      %v1116 = vmax.f32 %v680, 0.0
      %v1117 = vmax.f32 %v935, 0.0
      %v1118 = vmax.f32 %v937, 0.0
      %v1119 = vmax.f32 %v684, 0.0
      %v1120 = vmax.f32 %v686, 0.0
      %v1121 = vmax.f32 %v941, 0.0
      %v1122 = vmax.f32 %v943, 0.0
      %v1123 = vmax.f32 %v690, 0.0
      %v1124 = vmax.f32 %v692, 0.0
      %v1125 = vmax.f32 %v947, 0.0
      %v1126 = vmax.f32 %v949, 0.0
      %v1127 = vmax.f32 %v696, 0.0
      %v1128 = vmax.f32 %v698, 0.0
      %v1129 = vmax.f32 %v953, 0.0
      %v1130 = vmax.f32 %v955, 0.0
      %v1131 = vmax.f32 %v702, 0.0
      %v1132 = vmax.f32 %v704, 0.0
      %v1133 = vmax.f32 %v959, 0.0
      %v1134 = vmax.f32 %v961, 0.0
      %v1135 = vmax.f32 %v708, 0.0
      %v1136 = vmax.f32 %v710, 0.0
      %v1137 = vmax.f32 %v965, 0.0
      %v1138 = vmax.f32 %v967, 0.0
      %v1139 = vmax.f32 %v714, 0.0
      %v1140 = vmax.f32 %v716, 0.0
      %v1141 = vmax.f32 %v971, 0.0
      %v1142 = vmax.f32 %v973, 0.0
      %v1143 = vmax.f32 %v720, 0.0
      %v1144 = vmax.f32 %v722, 0.0
      %v1145 = vmax.f32 %v977, 0.0
      %v1146 = vmax.f32 %v979, 0.0
      %v1147 = vmax.f32 %v726, 0.0
      %v1148 = vmax.f32 %v728, 0.0
      %v1149 = vmax.f32 %v983, 0.0
      %v1150 = vmax.f32 %v985, 0.0
      %v1151 = vmax.f32 %v732, 0.0
      %v1152 = vmax.f32 %v734, 0.0
      %v1153 = vmax.f32 %v989, 0.0
      %v1154 = vmax.f32 %v991, 0.0
      %v1155 = vmax.f32 %v738, 0.0
      %v1156 = vmax.f32 %v740, 0.0
      %v1157 = vmax.f32 %v995, 0.0
      %v1158 = vmax.f32 %v997, 0.0
      %v1159 = vmax.f32 %v744, 0.0
      %v1160 = vmax.f32 %v746, 0.0
      %v1161 = vmax.f32 %v1001, 0.0
      %v1162 = vmax.f32 %v1003, 0.0
      %v1163 = vmax.f32 %v750, 0.0
      %v1164 = vmax.f32 %v752, 0.0
      %v1165 = vmax.f32 %v1007, 0.0
      %v1166 = vmax.f32 %v1009, 0.0
      %v1167 = vmax.f32 %v756, 0.0
      %v1168 = vmax.f32 %v758, 0.0
      %v1169 = vmax.f32 %v1013, 0.0
      %v1170 = vmax.f32 %v1015, 0.0
      %v1171 = vmax.f32 %v762, 0.0
      %v1172 = vmax.f32 %v764, 0.0
      %v1173 = vmax.f32 %v1019, 0.0
      %v1174 = vmax.f32 %v1021, 0.0
      %v1175 = vmax.f32 %v768, 0.0
      %v1176 = vmax.f32 %v770, 0.0
      %v1177 = vmax.f32 %v1025, 0.0
      %v1178 = vmax.f32 %v1027, 0.0
      %v1179 = vmax.f32 %v774, 0.0
      %v1180 = vmax.f32 %v776, 0.0
      %v1181 = vmax.f32 %v1031, 0.0
      %v1182 = vmax.f32 %v1033, 0.0
      %v1183 = vmax.f32 %v780, 0.0
      %v1184 = vmax.f32 %v782, 0.0
      %v1185 = vmax.f32 %v1037, 0.0
      %v1186 = vmax.f32 %v1039, 0.0
      %v1187 = vmax.f32 %v786, 0.0
      %v1188 = vmax.f32 %v788, 0.0
      %v1189 = vmax.f32 %v1043, 0.0
      %v1190 = vmax.f32 %v1045, 0.0
      %v1191 = vmax.f32 %v792, 0.0
      %v1192 = vmax.f32 %v794, 0.0
      %v1193 = vmax.f32 %v1049, 0.0
      %v1194 = vmax.f32 %v1051, 0.0
      %v1195 = vmax.f32 %v798, 0.0
      %v1196 = vmax.f32 %v800, 0.0
      %v1197 = vmax.f32 %v1055, 0.0
      %v1198 = vmax.f32 %v1057, 0.0
      %v1199 = vmax.f32 %v804, 0.0
      %v1200 = vmax.f32 %v806, 0.0
      %v1201 = vmax.f32 %v1061, 0.0
      %v1202 = vmax.f32 %v1063, 0.0
      %v1203 = vmax.f32 %v810, 0.0
      %v1204 = vmax.f32 %v812, 0.0
      %v1205 = vmax.f32 %v1067, 0.0
      %v1206 = vmax.f32 %v1069, 0.0
      %v1207 = vmax.f32 %v816, 0.0
      %v1208 = vmax.f32 %v818, 0.0
      %v1209 = vmax.f32 %v1073, 0.0
      %v1210 = vmax.f32 %v1075, 0.0
      %v1211 = vmax.f32 %v822, 0.0
      %v1212 = vmax.f32 %v824, 0.0
      %v1213 = vmax.f32 %v1079, 0.0
      %v1214 = vmax.f32 %v1081, 0.0
      %v1215 = vmax.f32 %v828, 0.0
      %v1216 = vmax.f32 %v830, 0.0
      %v1217 = vmax.f32 %v1085, 0.0
      %v1218 = vmax.f32 %v1087, 0.0
      %v1219 = vmax.f32 %v834, 0.0
      %v1220 = vmax.f32 %v836, 0.0
      %v1221 = vmax.f32 %v1091, 0.0
      %v1222 = vmax.f32 %v1093, 0.0
      %v1223 = vld [vmem:[%s2] sm:$0xff]
      %v1224 = vld [vmem:[%s2 + $0x8] sm:$0xff]
      %v1225 = vld [vmem:[%s2 + $0x10] sm:$0xff]
      %v1226 = vld [vmem:[%s2 + $0x18] sm:$0xff]
      %v1227 = vld [vmem:[%s2 + $0x20] sm:$0xff]
      %v1228 = vld [vmem:[%s2 + $0x28] sm:$0xff]
      %v1229 = vld [vmem:[%s2 + $0x30] sm:$0xff]
      %v1230 = vld [vmem:[%s2 + $0x38] sm:$0xff]
      %v1231 = vld [vmem:[%s2 + $0x40] sm:$0xff]
      %v1232 = vld [vmem:[%s2 + $0x48] sm:$0xff]
      %v1233 = vld [vmem:[%s2 + $0x50] sm:$0xff]
      %v1234 = vld [vmem:[%s2 + $0x58] sm:$0xff]
      %v1235 = vld [vmem:[%s2 + $0x60] sm:$0xff]
      %v1236 = vld [vmem:[%s2 + $0x68] sm:$0xff]
      %v1237 = vld [vmem:[%s2 + $0x70] sm:$0xff]
      %v1238 = vld [vmem:[%s2 + $0x78] sm:$0xff]
      %v1239 = vld [vmem:[%s2 + $0x80] sm:$0xff]
      %v1240 = vld [vmem:[%s2 + $0x88] sm:$0xff]
      %v1241 = vld [vmem:[%s2 + $0x90] sm:$0xff]
      %v1242 = vld [vmem:[%s2 + $0x98] sm:$0xff]
      %v1243 = vld [vmem:[%s2 + $0xa0] sm:$0xff]
      %v1244 = vld [vmem:[%s2 + $0xa8] sm:$0xff]
      %v1245 = vld [vmem:[%s2 + $0xb0] sm:$0xff]
      %v1246 = vld [vmem:[%s2 + $0xb8] sm:$0xff]
      %v1247 = vld [vmem:[%s2 + $0xc0] sm:$0xff]
      %v1248 = vld [vmem:[%s2 + $0xc8] sm:$0xff]
      %v1249 = vld [vmem:[%s2 + $0xd0] sm:$0xff]
      %v1250 = vld [vmem:[%s2 + $0xd8] sm:$0xff]
      %v1251 = vld [vmem:[%s2 + $0xe0] sm:$0xff]
      %v1252 = vld [vmem:[%s2 + $0xe8] sm:$0xff]
      %v1253 = vld [vmem:[%s2 + $0xf0] sm:$0xff]
      %v1254 = vld [vmem:[%s2 + $0xf8] sm:$0xff]
      %v1255 = vld [vmem:[%s2 + $0x100] sm:$0xff]
      %v1256 = vld [vmem:[%s2 + $0x108] sm:$0xff]
      %v1257 = vld [vmem:[%s2 + $0x110] sm:$0xff]
      %v1258 = vld [vmem:[%s2 + $0x118] sm:$0xff]
      %v1259 = vld [vmem:[%s2 + $0x120] sm:$0xff]
      %v1260 = vld [vmem:[%s2 + $0x128] sm:$0xff]
      %v1261 = vld [vmem:[%s2 + $0x130] sm:$0xff]
      %v1262 = vld [vmem:[%s2 + $0x138] sm:$0xff]
      %v1263 = vld [vmem:[%s2 + $0x140] sm:$0xff]
      %v1264 = vld [vmem:[%s2 + $0x148] sm:$0xff]
      %v1265 = vld [vmem:[%s2 + $0x150] sm:$0xff]
      %v1266 = vld [vmem:[%s2 + $0x158] sm:$0xff]
      %v1267 = vld [vmem:[%s2 + $0x160] sm:$0xff]
      %v1268 = vld [vmem:[%s2 + $0x168] sm:$0xff]
      %v1269 = vld [vmem:[%s2 + $0x170] sm:$0xff]
      %v1270 = vld [vmem:[%s2 + $0x178] sm:$0xff]
      %v1271 = vld [vmem:[%s2 + $0x180] sm:$0xff]
      %v1272 = vld [vmem:[%s2 + $0x188] sm:$0xff]
      %v1273 = vld [vmem:[%s2 + $0x190] sm:$0xff]
      %v1274 = vld [vmem:[%s2 + $0x198] sm:$0xff]
      %v1275 = vld [vmem:[%s2 + $0x1a0] sm:$0xff]
      %v1276 = vld [vmem:[%s2 + $0x1a8] sm:$0xff]
      %v1277 = vld [vmem:[%s2 + $0x1b0] sm:$0xff]
      %v1278 = vld [vmem:[%s2 + $0x1b8] sm:$0xff]
      %v1279 = vld [vmem:[%s2 + $0x1c0] sm:$0xff]
      %v1280 = vld [vmem:[%s2 + $0x1c8] sm:$0xff]
      %v1281 = vld [vmem:[%s2 + $0x1d0] sm:$0xff]
      %v1282 = vld [vmem:[%s2 + $0x1d8] sm:$0xff]
      %v1283 = vld [vmem:[%s2 + $0x1e0] sm:$0xff]
      %v1284 = vld [vmem:[%s2 + $0x1e8] sm:$0xff]
      %v1285 = vld [vmem:[%s2 + $0x1f0] sm:$0xff]
      %v1286 = vld [vmem:[%s2 + $0x1f8] sm:$0xff]
      %v1287 = vld [vmem:[%s2 + $0x200] sm:$0xff]
      %v1288 = vld [vmem:[%s2 + $0x208] sm:$0xff]
      %v1289 = vld [vmem:[%s2 + $0x210] sm:$0xff]
      %v1290 = vld [vmem:[%s2 + $0x218] sm:$0xff]
      %v1291 = vld [vmem:[%s2 + $0x220] sm:$0xff]
      %v1292 = vld [vmem:[%s2 + $0x228] sm:$0xff]
      %v1293 = vld [vmem:[%s2 + $0x230] sm:$0xff]
      %v1294 = vld [vmem:[%s2 + $0x238] sm:$0xff]
      %v1295 = vld [vmem:[%s2 + $0x240] sm:$0xff]
      %v1296 = vld [vmem:[%s2 + $0x248] sm:$0xff]
      %v1297 = vld [vmem:[%s2 + $0x250] sm:$0xff]
      %v1298 = vld [vmem:[%s2 + $0x258] sm:$0xff]
      %v1299 = vld [vmem:[%s2 + $0x260] sm:$0xff]
      %v1300 = vld [vmem:[%s2 + $0x268] sm:$0xff]
      %v1301 = vld [vmem:[%s2 + $0x270] sm:$0xff]
      %v1302 = vld [vmem:[%s2 + $0x278] sm:$0xff]
      %v1303 = vld [vmem:[%s2 + $0x280] sm:$0xff]
      %v1304 = vld [vmem:[%s2 + $0x288] sm:$0xff]
      %v1305 = vld [vmem:[%s2 + $0x290] sm:$0xff]
      %v1306 = vld [vmem:[%s2 + $0x298] sm:$0xff]
      %v1307 = vld [vmem:[%s2 + $0x2a0] sm:$0xff]
      %v1308 = vld [vmem:[%s2 + $0x2a8] sm:$0xff]
      %v1309 = vld [vmem:[%s2 + $0x2b0] sm:$0xff]
      %v1310 = vld [vmem:[%s2 + $0x2b8] sm:$0xff]
      %v1311 = vld [vmem:[%s2 + $0x2c0] sm:$0xff]
      %v1312 = vld [vmem:[%s2 + $0x2c8] sm:$0xff]
      %v1313 = vld [vmem:[%s2 + $0x2d0] sm:$0xff]
      %v1314 = vld [vmem:[%s2 + $0x2d8] sm:$0xff]
      %v1315 = vld [vmem:[%s2 + $0x2e0] sm:$0xff]
      %v1316 = vld [vmem:[%s2 + $0x2e8] sm:$0xff]
      %v1317 = vld [vmem:[%s2 + $0x2f0] sm:$0xff]
      %v1318 = vld [vmem:[%s2 + $0x2f8] sm:$0xff]
      %v1319 = vld [vmem:[%s2 + $0x300] sm:$0xff]
      %v1320 = vld [vmem:[%s2 + $0x308] sm:$0xff]
      %v1321 = vld [vmem:[%s2 + $0x310] sm:$0xff]
      %v1322 = vld [vmem:[%s2 + $0x318] sm:$0xff]
      %v1323 = vld [vmem:[%s2 + $0x320] sm:$0xff]
      %v1324 = vld [vmem:[%s2 + $0x328] sm:$0xff]
      %v1325 = vld [vmem:[%s2 + $0x330] sm:$0xff]
      %v1326 = vld [vmem:[%s2 + $0x338] sm:$0xff]
      %v1327 = vld [vmem:[%s2 + $0x340] sm:$0xff]
      %v1328 = vld [vmem:[%s2 + $0x348] sm:$0xff]
      %v1329 = vld [vmem:[%s2 + $0x350] sm:$0xff]
      %v1330 = vld [vmem:[%s2 + $0x358] sm:$0xff]
      %v1331 = vld [vmem:[%s2 + $0x360] sm:$0xff]
      %v1332 = vld [vmem:[%s2 + $0x368] sm:$0xff]
      %v1333 = vld [vmem:[%s2 + $0x370] sm:$0xff]
      %v1334 = vld [vmem:[%s2 + $0x378] sm:$0xff]
      %v1335 = vld [vmem:[%s2 + $0x380] sm:$0xff]
      %v1336 = vld [vmem:[%s2 + $0x388] sm:$0xff]
      %v1337 = vld [vmem:[%s2 + $0x390] sm:$0xff]
      %v1338 = vld [vmem:[%s2 + $0x398] sm:$0xff]
      %v1339 = vld [vmem:[%s2 + $0x3a0] sm:$0xff]
      %v1340 = vld [vmem:[%s2 + $0x3a8] sm:$0xff]
      %v1341 = vld [vmem:[%s2 + $0x3b0] sm:$0xff]
      %v1342 = vld [vmem:[%s2 + $0x3b8] sm:$0xff]
      %v1343 = vld [vmem:[%s2 + $0x3c0] sm:$0xff]
      %v1344 = vld [vmem:[%s2 + $0x3c8] sm:$0xff]
      %v1345 = vld [vmem:[%s2 + $0x3d0] sm:$0xff]
      %v1346 = vld [vmem:[%s2 + $0x3d8] sm:$0xff]
      %v1347 = vld [vmem:[%s2 + $0x3e0] sm:$0xff]
      %v1348 = vld [vmem:[%s2 + $0x3e8] sm:$0xff]
      %v1349 = vld [vmem:[%s2 + $0x3f0] sm:$0xff]
      %v1350 = vld [vmem:[%s2 + $0x3f8] sm:$0xff]
      %v1351 = vld [vmem:[%s2 + $0x400] sm:$0xff]
      %v1352 = vld [vmem:[%s2 + $0x408] sm:$0xff]
      %v1353 = vld [vmem:[%s2 + $0x410] sm:$0xff]
      %v1354 = vld [vmem:[%s2 + $0x418] sm:$0xff]
      %v1355 = vld [vmem:[%s2 + $0x420] sm:$0xff]
      %v1356 = vld [vmem:[%s2 + $0x428] sm:$0xff]
      %v1357 = vld [vmem:[%s2 + $0x430] sm:$0xff]
      %v1358 = vld [vmem:[%s2 + $0x438] sm:$0xff]
      %v1359 = vld [vmem:[%s2 + $0x440] sm:$0xff]
      %v1360 = vld [vmem:[%s2 + $0x448] sm:$0xff]
      %v1361 = vld [vmem:[%s2 + $0x450] sm:$0xff]
      %v1362 = vld [vmem:[%s2 + $0x458] sm:$0xff]
      %v1363 = vld [vmem:[%s2 + $0x460] sm:$0xff]
      %v1364 = vld [vmem:[%s2 + $0x468] sm:$0xff]
      %v1365 = vld [vmem:[%s2 + $0x470] sm:$0xff]
      %v1366 = vld [vmem:[%s2 + $0x478] sm:$0xff]
      %v1367 = vld [vmem:[%s2 + $0x480] sm:$0xff]
      %v1368 = vld [vmem:[%s2 + $0x488] sm:$0xff]
      %v1369 = vld [vmem:[%s2 + $0x490] sm:$0xff]
      %v1370 = vld [vmem:[%s2 + $0x498] sm:$0xff]
      %v1371 = vld [vmem:[%s2 + $0x4a0] sm:$0xff]
      %v1372 = vld [vmem:[%s2 + $0x4a8] sm:$0xff]
      %v1373 = vld [vmem:[%s2 + $0x4b0] sm:$0xff]
      %v1374 = vld [vmem:[%s2 + $0x4b8] sm:$0xff]
      %v1375 = vld [vmem:[%s2 + $0x4c0] sm:$0xff]
      %v1376 = vld [vmem:[%s2 + $0x4c8] sm:$0xff]
      %v1377 = vld [vmem:[%s2 + $0x4d0] sm:$0xff]
      %v1378 = vld [vmem:[%s2 + $0x4d8] sm:$0xff]
      %v1379 = vld [vmem:[%s2 + $0x4e0] sm:$0xff]
      %v1380 = vld [vmem:[%s2 + $0x4e8] sm:$0xff]
      %v1381 = vld [vmem:[%s2 + $0x4f0] sm:$0xff]
      %v1382 = vld [vmem:[%s2 + $0x4f8] sm:$0xff]
      %v1383 = vld [vmem:[%s2 + $0x500] sm:$0xff]
      %v1384 = vld [vmem:[%s2 + $0x508] sm:$0xff]
      %v1385 = vld [vmem:[%s2 + $0x510] sm:$0xff]
      %v1386 = vld [vmem:[%s2 + $0x518] sm:$0xff]
      %v1387 = vld [vmem:[%s2 + $0x520] sm:$0xff]
      %v1388 = vld [vmem:[%s2 + $0x528] sm:$0xff]
      %v1389 = vld [vmem:[%s2 + $0x530] sm:$0xff]
      %v1390 = vld [vmem:[%s2 + $0x538] sm:$0xff]
      %v1391 = vld [vmem:[%s2 + $0x540] sm:$0x3]
      %v1392 = vld [vmem:[%s2 + $0x548] sm:$0x3]
      %v1393 = vld [vmem:[%s2 + $0x550] sm:$0x3]
      %v1394 = vld [vmem:[%s3] ss:$4 sm:$0x7]
      %v1396 = vlaneseq
      %v1397 = vshrl.u32 %v1396, 7
      %v1398 = vsub.s32 0, %v1397
      %v1399 = vrot.slane %v1394, %v1398
      %v1400 = vlaneseq
      %v1401 = vshrl.u32 %v1400, 7
      %v1402 = vsub.s32 1, %v1401
      %v1403 = vrot.slane %v1394, %v1402
      %v1404 = vlaneseq
      %v1405 = vshrl.u32 %v1404, 7
      %v1406 = vsub.s32 2, %v1405
      %v1407 = vrot.slane %v1394, %v1406
      %vm1411 = vcmask 539648
      %v1413 = vsel %vm1411, %v1098, 0
      %v1416 = vsel %vm1411, %v1102, 0
      %v1419 = vsel %vm1411, %v1106, 0
      %v1422 = vsel %vm1411, %v1110, 0
      %v1425 = vsel %vm1411, %v1114, 0
      %v1428 = vsel %vm1411, %v1118, 0
      %v1431 = vsel %vm1411, %v1122, 0
      %v1434 = vsel %vm1411, %v1126, 0
      %v1437 = vsel %vm1411, %v1130, 0
      %v1440 = vsel %vm1411, %v1134, 0
      %v1443 = vsel %vm1411, %v1138, 0
      %v1446 = vsel %vm1411, %v1142, 0
      %v1449 = vsel %vm1411, %v1146, 0
      %v1452 = vsel %vm1411, %v1150, 0
      %v1455 = vsel %vm1411, %v1154, 0
      %v1458 = vsel %vm1411, %v1158, 0
      %v1461 = vsel %vm1411, %v1162, 0
      %v1464 = vsel %vm1411, %v1166, 0
      %v1467 = vsel %vm1411, %v1170, 0
      %v1470 = vsel %vm1411, %v1174, 0
      %v1473 = vsel %vm1411, %v1178, 0
      %v1476 = vsel %vm1411, %v1182, 0
      %v1479 = vsel %vm1411, %v1186, 0
      %v1482 = vsel %vm1411, %v1190, 0
      %v1485 = vsel %vm1411, %v1194, 0
      %v1488 = vsel %vm1411, %v1198, 0
      %v1491 = vsel %vm1411, %v1202, 0
      %v1494 = vsel %vm1411, %v1206, 0
      %v1497 = vsel %vm1411, %v1210, 0
      %v1500 = vsel %vm1411, %v1214, 0
      %v1503 = vsel %vm1411, %v1218, 0
      %v1506 = vsel %vm1411, %v1222, 0
      %v1509 = vsel %vm568, %v1391, 0
      %v1512 = vsel %vm568, %v1392, 0
      %v1515 = vsel %vm568, %v1393, 0
      %1517 = vmatprep.subr.mxu0 %v1269
      %1518 = vmatpush1.msra.mxu0 %v1268
      %1519 = vmatprep.subr.mxu0 %v1266
      %1520 = vmatpush1.msra.mxu0 %v1265
      %1521 = vmatprep.subr.mxu0 %v1263
      %1522 = vmatpush1.msra.mxu0 %v1262
      %1523 = vmatprep.subr.mxu0 %v1260
      %1524 = vmatpush1.msra.mxu0 %v1259
      %1525 = vmatprep.subr.mxu0 %v1257
      %1526 = vmatpush1.msra.mxu0 %v1256
      %1527 = vmatprep.subr.mxu0 %v1254
      %1528 = vmatpush1.msra.mxu0 %v1253
      %1529 = vmatprep.subr.mxu0 %v1251
      %1530 = vmatpush1.msra.mxu0 %v1250
      %1531 = vmatprep.subr.mxu0 %v1248
      %1532 = vmatpush1.msra.mxu0 %v1247
      %1533 = vmatprep.subr.mxu0 %v1245
      %1534 = vmatpush1.msra.mxu0 %v1244
      %1535 = vmatprep.subr.mxu0 %v1242
      %1536 = vmatpush1.msra.mxu0 %v1241
      %1537 = vmatprep.subr.mxu0 %v1239
      %1538 = vmatpush1.msra.mxu0 %v1238
      %1539 = vmatprep.subr.mxu0 %v1236
      %1540 = vmatpush1.msra.mxu0 %v1235
      %1541 = vmatprep.subr.mxu0 %v1233
      %1542 = vmatpush1.msra.mxu0 %v1232
      %1543 = vmatprep.subr.mxu0 %v1230
      %1544 = vmatpush1.msra.mxu0 %v1229
      %1545 = vmatprep.subr.mxu0 %v1227
      %1546 = vmatpush1.msra.mxu0 %v1226
      %1547 = vmatprep.subr.mxu0 %v1224
      %1548 = vmatpush1.msra.mxu0 %v1223
      %1549 = vmatprep.subr.mxu0 %v1317
      %1550 = vmatpush2.msra.mxu0 %v1316
      %1551 = vmatprep.subr.mxu0 %v1314
      %1552 = vmatpush2.msra.mxu0 %v1313
      %1553 = vmatprep.subr.mxu0 %v1311
      %1554 = vmatpush2.msra.mxu0 %v1310
      %1555 = vmatprep.subr.mxu0 %v1308
      %1556 = vmatpush2.msra.mxu0 %v1307
      %1557 = vmatprep.subr.mxu0 %v1305
      %1558 = vmatpush2.msra.mxu0 %v1304
      %1559 = vmatprep.subr.mxu0 %v1302
      %1560 = vmatpush2.msra.mxu0 %v1301
      %1561 = vmatprep.subr.mxu0 %v1299
      %1562 = vmatpush2.msra.mxu0 %v1298
      %1563 = vmatprep.subr.mxu0 %v1296
      %1564 = vmatpush2.msra.mxu0 %v1295
      %1565 = vmatprep.subr.mxu0 %v1293
      %1566 = vmatpush2.msra.mxu0 %v1292
      %1567 = vmatprep.subr.mxu0 %v1290
      %1568 = vmatpush2.msra.mxu0 %v1289
      %1569 = vmatprep.subr.mxu0 %v1287
      %1570 = vmatpush2.msra.mxu0 %v1286
      %1571 = vmatprep.subr.mxu0 %v1284
      %1572 = vmatpush2.msra.mxu0 %v1283
      %1573 = vmatprep.subr.mxu0 %v1281
      %1574 = vmatpush2.msra.mxu0 %v1280
      %1575 = vmatprep.subr.mxu0 %v1278
      %1576 = vmatpush2.msra.mxu0 %v1277
      %1577 = vmatprep.subr.mxu0 %v1275
      %1578 = vmatpush2.msra.mxu0 %v1274
      %1579 = vmatprep.subr.mxu0 %v1272
      %1580 = vmatpush2.msra.mxu0 %v1271
      %1581 = vmatprep.mubr.f32.mxu0 %v1096
      %1582 = vmatmul.mubr.f32.gmra.mxu0 %v1095
      %v1583 = vpop.f32.mrf.mxu0
      %v1584 = vadd.f32 %v1399, %v1583
      %v1585 = vpop.f32.mrf.mxu0
      %v1586 = vadd.f32 %v1403, %v1585
      %1587 = vmatprep.mubr.f32.mxu0 %v1100
      %1588 = vmatmul.mubr.f32.gmra.mxu0 %v1099
      %v1589 = vpop.f32.mrf.mxu0
      %v1590 = vadd.f32 %v1399, %v1589
      %v1591 = vpop.f32.mrf.mxu0
      %v1592 = vadd.f32 %v1403, %v1591
      %1593 = vmatprep.mubr.f32.mxu0 %v1104
      %1594 = vmatmul.mubr.f32.gmra.mxu0 %v1103
      %v1595 = vpop.f32.mrf.mxu0
      %v1596 = vadd.f32 %v1399, %v1595
      %v1597 = vpop.f32.mrf.mxu0
      %v1598 = vadd.f32 %v1403, %v1597
      %1599 = vmatprep.mubr.f32.mxu0 %v1108
      %1600 = vmatmul.mubr.f32.gmra.mxu0 %v1107
      %v1601 = vpop.f32.mrf.mxu0
      %v1602 = vadd.f32 %v1399, %v1601
      %v1603 = vpop.f32.mrf.mxu0
      %v1604 = vadd.f32 %v1403, %v1603
      %1605 = vmatprep.mubr.f32.mxu0 %v1112
      %1606 = vmatmul.mubr.f32.gmra.mxu0 %v1111
      %v1607 = vpop.f32.mrf.mxu0
      %v1608 = vadd.f32 %v1399, %v1607
      %v1609 = vpop.f32.mrf.mxu0
      %v1610 = vadd.f32 %v1403, %v1609
      %1611 = vmatprep.mubr.f32.mxu0 %v1116
      %1612 = vmatmul.mubr.f32.gmra.mxu0 %v1115
      %v1613 = vpop.f32.mrf.mxu0
      %v1614 = vadd.f32 %v1399, %v1613
      %v1615 = vpop.f32.mrf.mxu0
      %v1616 = vadd.f32 %v1403, %v1615
      %1617 = vmatprep.mubr.f32.mxu0 %v1120
      %1618 = vmatmul.mubr.f32.gmra.mxu0 %v1119
      %v1619 = vpop.f32.mrf.mxu0
      %v1620 = vadd.f32 %v1399, %v1619
      %v1621 = vpop.f32.mrf.mxu0
      %v1622 = vadd.f32 %v1403, %v1621
      %1623 = vmatprep.mubr.f32.mxu0 %v1124
      %1624 = vmatmul.mubr.f32.gmra.mxu0 %v1123
      %v1625 = vpop.f32.mrf.mxu0
      %v1626 = vadd.f32 %v1399, %v1625
      %v1627 = vpop.f32.mrf.mxu0
      %v1628 = vadd.f32 %v1403, %v1627
      %1629 = vmatprep.mubr.f32.mxu0 %v1128
      %1630 = vmatmul.mubr.f32.gmra.mxu0 %v1127
      %v1631 = vpop.f32.mrf.mxu0
      %v1632 = vadd.f32 %v1399, %v1631
      %v1633 = vpop.f32.mrf.mxu0
      %v1634 = vadd.f32 %v1403, %v1633
      %1635 = vmatprep.mubr.f32.mxu0 %v1132
      %1636 = vmatmul.mubr.f32.gmra.mxu0 %v1131
      %v1637 = vpop.f32.mrf.mxu0
      %v1638 = vadd.f32 %v1399, %v1637
      %v1639 = vpop.f32.mrf.mxu0
      %v1640 = vadd.f32 %v1403, %v1639
      %1641 = vmatprep.mubr.f32.mxu0 %v1136
      %1642 = vmatmul.mubr.f32.gmra.mxu0 %v1135
      %v1643 = vpop.f32.mrf.mxu0
      %v1644 = vadd.f32 %v1399, %v1643
      %v1645 = vpop.f32.mrf.mxu0
      %v1646 = vadd.f32 %v1403, %v1645
      %1647 = vmatprep.mubr.f32.mxu0 %v1140
      %1648 = vmatmul.mubr.f32.gmra.mxu0 %v1139
      %v1649 = vpop.f32.mrf.mxu0
      %v1650 = vadd.f32 %v1399, %v1649
      %v1651 = vpop.f32.mrf.mxu0
      %v1652 = vadd.f32 %v1403, %v1651
      %1653 = vmatprep.mubr.f32.mxu0 %v1144
      %1654 = vmatmul.mubr.f32.gmra.mxu0 %v1143
      %v1655 = vpop.f32.mrf.mxu0
      %v1656 = vadd.f32 %v1399, %v1655
      %v1657 = vpop.f32.mrf.mxu0
      %v1658 = vadd.f32 %v1403, %v1657
      %1659 = vmatprep.mubr.f32.mxu0 %v1148
      %1660 = vmatmul.mubr.f32.gmra.mxu0 %v1147
      %v1661 = vpop.f32.mrf.mxu0
      %v1662 = vadd.f32 %v1399, %v1661
      %v1663 = vpop.f32.mrf.mxu0
      %v1664 = vadd.f32 %v1403, %v1663
      %1665 = vmatprep.mubr.f32.mxu0 %v1152
      %1666 = vmatmul.mubr.f32.gmra.mxu0 %v1151
      %v1667 = vpop.f32.mrf.mxu0
      %v1668 = vadd.f32 %v1399, %v1667
      %v1669 = vpop.f32.mrf.mxu0
      %v1670 = vadd.f32 %v1403, %v1669
      %1671 = vmatprep.mubr.f32.mxu0 %v1156
      %1672 = vmatmul.mubr.f32.gmra.mxu0 %v1155
      %v1673 = vpop.f32.mrf.mxu0
      %v1674 = vadd.f32 %v1399, %v1673
      %v1675 = vpop.f32.mrf.mxu0
      %v1676 = vadd.f32 %v1403, %v1675
      %1677 = vmatprep.mubr.f32.mxu0 %v1160
      %1678 = vmatmul.mubr.f32.gmra.mxu0 %v1159
      %v1679 = vpop.f32.mrf.mxu0
      %v1680 = vadd.f32 %v1399, %v1679
      %v1681 = vpop.f32.mrf.mxu0
      %v1682 = vadd.f32 %v1403, %v1681
      %1683 = vmatprep.mubr.f32.mxu0 %v1164
      %1684 = vmatmul.mubr.f32.gmra.mxu0 %v1163
      %v1685 = vpop.f32.mrf.mxu0
      %v1686 = vadd.f32 %v1399, %v1685
      %v1687 = vpop.f32.mrf.mxu0
      %v1688 = vadd.f32 %v1403, %v1687
      %1689 = vmatprep.mubr.f32.mxu0 %v1168
      %1690 = vmatmul.mubr.f32.gmra.mxu0 %v1167
      %v1691 = vpop.f32.mrf.mxu0
      %v1692 = vadd.f32 %v1399, %v1691
      %v1693 = vpop.f32.mrf.mxu0
      %v1694 = vadd.f32 %v1403, %v1693
      %1695 = vmatprep.mubr.f32.mxu0 %v1172
      %1696 = vmatmul.mubr.f32.gmra.mxu0 %v1171
      %v1697 = vpop.f32.mrf.mxu0
      %v1698 = vadd.f32 %v1399, %v1697
      %v1699 = vpop.f32.mrf.mxu0
      %v1700 = vadd.f32 %v1403, %v1699
      %1701 = vmatprep.mubr.f32.mxu0 %v1176
      %1702 = vmatmul.mubr.f32.gmra.mxu0 %v1175
      %v1703 = vpop.f32.mrf.mxu0
      %v1704 = vadd.f32 %v1399, %v1703
      %v1705 = vpop.f32.mrf.mxu0
      %v1706 = vadd.f32 %v1403, %v1705
      %1707 = vmatprep.mubr.f32.mxu0 %v1180
      %1708 = vmatmul.mubr.f32.gmra.mxu0 %v1179
      %v1709 = vpop.f32.mrf.mxu0
      %v1710 = vadd.f32 %v1399, %v1709
      %v1711 = vpop.f32.mrf.mxu0
      %v1712 = vadd.f32 %v1403, %v1711
      %1713 = vmatprep.mubr.f32.mxu0 %v1184
      %1714 = vmatmul.mubr.f32.gmra.mxu0 %v1183
      %v1715 = vpop.f32.mrf.mxu0
      %v1716 = vadd.f32 %v1399, %v1715
      %v1717 = vpop.f32.mrf.mxu0
      %v1718 = vadd.f32 %v1403, %v1717
      %1719 = vmatprep.mubr.f32.mxu0 %v1188
      %1720 = vmatmul.mubr.f32.gmra.mxu0 %v1187
      %v1721 = vpop.f32.mrf.mxu0
      %v1722 = vadd.f32 %v1399, %v1721
      %v1723 = vpop.f32.mrf.mxu0
      %v1724 = vadd.f32 %v1403, %v1723
      %1725 = vmatprep.mubr.f32.mxu0 %v1192
      %1726 = vmatmul.mubr.f32.gmra.mxu0 %v1191
      %v1727 = vpop.f32.mrf.mxu0
      %v1728 = vadd.f32 %v1399, %v1727
      %v1729 = vpop.f32.mrf.mxu0
      %v1730 = vadd.f32 %v1403, %v1729
      %1731 = vmatprep.mubr.f32.mxu0 %v1196
      %1732 = vmatmul.mubr.f32.gmra.mxu0 %v1195
      %v1733 = vpop.f32.mrf.mxu0
      %v1734 = vadd.f32 %v1399, %v1733
      %v1735 = vpop.f32.mrf.mxu0
      %v1736 = vadd.f32 %v1403, %v1735
      %1737 = vmatprep.mubr.f32.mxu0 %v1200
      %1738 = vmatmul.mubr.f32.gmra.mxu0 %v1199
      %v1739 = vpop.f32.mrf.mxu0
      %v1740 = vadd.f32 %v1399, %v1739
      %v1741 = vpop.f32.mrf.mxu0
      %v1742 = vadd.f32 %v1403, %v1741
      %1743 = vmatprep.mubr.f32.mxu0 %v1204
      %1744 = vmatmul.mubr.f32.gmra.mxu0 %v1203
      %v1745 = vpop.f32.mrf.mxu0
      %v1746 = vadd.f32 %v1399, %v1745
      %v1747 = vpop.f32.mrf.mxu0
      %v1748 = vadd.f32 %v1403, %v1747
      %1749 = vmatprep.mubr.f32.mxu0 %v1208
      %1750 = vmatmul.mubr.f32.gmra.mxu0 %v1207
      %v1751 = vpop.f32.mrf.mxu0
      %v1752 = vadd.f32 %v1399, %v1751
      %v1753 = vpop.f32.mrf.mxu0
      %v1754 = vadd.f32 %v1403, %v1753
      %1755 = vmatprep.mubr.f32.mxu0 %v1212
      %1756 = vmatmul.mubr.f32.gmra.mxu0 %v1211
      %v1757 = vpop.f32.mrf.mxu0
      %v1758 = vadd.f32 %v1399, %v1757
      %v1759 = vpop.f32.mrf.mxu0
      %v1760 = vadd.f32 %v1403, %v1759
      %1761 = vmatprep.mubr.f32.mxu0 %v1216
      %1762 = vmatmul.mubr.f32.gmra.mxu0 %v1215
      %v1763 = vpop.f32.mrf.mxu0
      %v1764 = vadd.f32 %v1399, %v1763
      %v1765 = vpop.f32.mrf.mxu0
      %v1766 = vadd.f32 %v1403, %v1765
      %1767 = vmatprep.mubr.f32.mxu0 %v1220
      %1768 = vmatmul.mubr.f32.gmra.mxu0 %v1219
      %v1769 = vpop.f32.mrf.mxu0
      %v1770 = vadd.f32 %v1399, %v1769
      %v1771 = vpop.f32.mrf.mxu0
      %v1772 = vadd.f32 %v1403, %v1771
      %1773 = vdwg.mxu0
      %1774 = vmatprep.subr.mxu0 %v1365
      %1775 = vmatpush1.msra.mxu0 %v1364
      %1776 = vmatprep.subr.mxu0 %v1362
      %1777 = vmatpush1.msra.mxu0 %v1361
      %1778 = vmatprep.subr.mxu0 %v1359
      %1779 = vmatpush1.msra.mxu0 %v1358
      %1780 = vmatprep.subr.mxu0 %v1356
      %1781 = vmatpush1.msra.mxu0 %v1355
      %1782 = vmatprep.subr.mxu0 %v1353
      %1783 = vmatpush1.msra.mxu0 %v1352
      %1784 = vmatprep.subr.mxu0 %v1350
      %1785 = vmatpush1.msra.mxu0 %v1349
      %1786 = vmatprep.subr.mxu0 %v1347
      %1787 = vmatpush1.msra.mxu0 %v1346
      %1788 = vmatprep.subr.mxu0 %v1344
      %1789 = vmatpush1.msra.mxu0 %v1343
      %1790 = vmatprep.subr.mxu0 %v1341
      %1791 = vmatpush1.msra.mxu0 %v1340
      %1792 = vmatprep.subr.mxu0 %v1338
      %1793 = vmatpush1.msra.mxu0 %v1337
      %1794 = vmatprep.subr.mxu0 %v1335
      %1795 = vmatpush1.msra.mxu0 %v1334
      %1796 = vmatprep.subr.mxu0 %v1332
      %1797 = vmatpush1.msra.mxu0 %v1331
      %1798 = vmatprep.subr.mxu0 %v1329
      %1799 = vmatpush1.msra.mxu0 %v1328
      %1800 = vmatprep.subr.mxu0 %v1326
      %1801 = vmatpush1.msra.mxu0 %v1325
      %1802 = vmatprep.subr.mxu0 %v1323
      %1803 = vmatpush1.msra.mxu0 %v1322
      %1804 = vmatprep.subr.mxu0 %v1320
      %1805 = vmatpush1.msra.mxu0 %v1319
      %1806 = vmatprep.subr.mxu0 0.0
      %1807 = vmatpush2.msra.mxu0 0.0
      %1808 = vmatprep.subr.mxu0 0.0
      %1809 = vmatpush2.msra.mxu0 0.0
      %1810 = vmatprep.subr.mxu0 0.0
      %1811 = vmatpush2.msra.mxu0 0.0
      %1812 = vmatprep.subr.mxu0 0.0
      %1813 = vmatpush2.msra.mxu0 0.0
      %1814 = vmatprep.subr.mxu0 0.0
      %1815 = vmatpush2.msra.mxu0 0.0
      %1816 = vmatprep.subr.mxu0 0.0
      %1817 = vmatpush2.msra.mxu0 0.0
      %1818 = vmatprep.subr.mxu0 0.0
      %1819 = vmatpush2.msra.mxu0 0.0
      %1820 = vmatprep.subr.mxu0 %v1512
      %1821 = vmatpush2.msra.mxu0 %v1509
      %1822 = vmatprep.subr.mxu0 %v1389
      %1823 = vmatpush2.msra.mxu0 %v1388
      %1824 = vmatprep.subr.mxu0 %v1386
      %1825 = vmatpush2.msra.mxu0 %v1385
      %1826 = vmatprep.subr.mxu0 %v1383
      %1827 = vmatpush2.msra.mxu0 %v1382
      %1828 = vmatprep.subr.mxu0 %v1380
      %1829 = vmatpush2.msra.mxu0 %v1379
      %1830 = vmatprep.subr.mxu0 %v1377
      %1831 = vmatpush2.msra.mxu0 %v1376
      %1832 = vmatprep.subr.mxu0 %v1374
      %1833 = vmatpush2.msra.mxu0 %v1373
      %1834 = vmatprep.subr.mxu0 %v1371
      %1835 = vmatpush2.msra.mxu0 %v1370
      %1836 = vmatprep.subr.mxu0 %v1368
      %1837 = vmatpush2.msra.mxu0 %v1367
      %1838 = vmatprep.mubr.f32.mxu0 %v1413
      %1839 = vmatmul.mubr.f32.gmra.mxu0 %v1097
      %v1840 = vpop.f32.mrf.mxu0
      %v1841 = vadd.f32 %v1584, %v1840
      %v1842 = vpop.f32.mrf.mxu0
      %v1843 = vadd.f32 %v1586, %v1842
      %1844 = vmatprep.mubr.f32.mxu0 %v1416
      %1845 = vmatmul.mubr.f32.gmra.mxu0 %v1101
      %v1846 = vpop.f32.mrf.mxu0
      %v1847 = vadd.f32 %v1590, %v1846
      %v1848 = vpop.f32.mrf.mxu0
      %v1849 = vadd.f32 %v1592, %v1848
      %1850 = vmatprep.mubr.f32.mxu0 %v1419
      %1851 = vmatmul.mubr.f32.gmra.mxu0 %v1105
      %v1852 = vpop.f32.mrf.mxu0
      %v1853 = vadd.f32 %v1596, %v1852
      %v1854 = vpop.f32.mrf.mxu0
      %v1855 = vadd.f32 %v1598, %v1854
      %1856 = vmatprep.mubr.f32.mxu0 %v1422
      %1857 = vmatmul.mubr.f32.gmra.mxu0 %v1109
      %v1858 = vpop.f32.mrf.mxu0
      %v1859 = vadd.f32 %v1602, %v1858
      %v1860 = vpop.f32.mrf.mxu0
      %v1861 = vadd.f32 %v1604, %v1860
      %1862 = vmatprep.mubr.f32.mxu0 %v1425
      %1863 = vmatmul.mubr.f32.gmra.mxu0 %v1113
      %v1864 = vpop.f32.mrf.mxu0
      %v1865 = vadd.f32 %v1608, %v1864
      %v1866 = vpop.f32.mrf.mxu0
      %v1867 = vadd.f32 %v1610, %v1866
      %1868 = vmatprep.mubr.f32.mxu0 %v1428
      %1869 = vmatmul.mubr.f32.gmra.mxu0 %v1117
      %v1870 = vpop.f32.mrf.mxu0
      %v1871 = vadd.f32 %v1614, %v1870
      %v1872 = vpop.f32.mrf.mxu0
      %v1873 = vadd.f32 %v1616, %v1872
      %1874 = vmatprep.mubr.f32.mxu0 %v1431
      %1875 = vmatmul.mubr.f32.gmra.mxu0 %v1121
      %v1876 = vpop.f32.mrf.mxu0
      %v1877 = vadd.f32 %v1620, %v1876
      %v1878 = vpop.f32.mrf.mxu0
      %v1879 = vadd.f32 %v1622, %v1878
      %1880 = vmatprep.mubr.f32.mxu0 %v1434
      %1881 = vmatmul.mubr.f32.gmra.mxu0 %v1125
      %v1882 = vpop.f32.mrf.mxu0
      %v1883 = vadd.f32 %v1626, %v1882
      %v1884 = vpop.f32.mrf.mxu0
      %v1885 = vadd.f32 %v1628, %v1884
      %1886 = vmatprep.mubr.f32.mxu0 %v1437
      %1887 = vmatmul.mubr.f32.gmra.mxu0 %v1129
      %v1888 = vpop.f32.mrf.mxu0
      %v1889 = vadd.f32 %v1632, %v1888
      %v1890 = vpop.f32.mrf.mxu0
      %v1891 = vadd.f32 %v1634, %v1890
      %1892 = vmatprep.mubr.f32.mxu0 %v1440
      %1893 = vmatmul.mubr.f32.gmra.mxu0 %v1133
      %v1894 = vpop.f32.mrf.mxu0
      %v1895 = vadd.f32 %v1638, %v1894
      %v1896 = vpop.f32.mrf.mxu0
      %v1897 = vadd.f32 %v1640, %v1896
      %1898 = vmatprep.mubr.f32.mxu0 %v1443
      %1899 = vmatmul.mubr.f32.gmra.mxu0 %v1137
      %v1900 = vpop.f32.mrf.mxu0
      %v1901 = vadd.f32 %v1644, %v1900
      %v1902 = vpop.f32.mrf.mxu0
      %v1903 = vadd.f32 %v1646, %v1902
      %1904 = vmatprep.mubr.f32.mxu0 %v1446
      %1905 = vmatmul.mubr.f32.gmra.mxu0 %v1141
      %v1906 = vpop.f32.mrf.mxu0
      %v1907 = vadd.f32 %v1650, %v1906
      %v1908 = vpop.f32.mrf.mxu0
      %v1909 = vadd.f32 %v1652, %v1908
      %1910 = vmatprep.mubr.f32.mxu0 %v1449
      %1911 = vmatmul.mubr.f32.gmra.mxu0 %v1145
      %v1912 = vpop.f32.mrf.mxu0
      %v1913 = vadd.f32 %v1656, %v1912
      %v1914 = vpop.f32.mrf.mxu0
      %v1915 = vadd.f32 %v1658, %v1914
      %1916 = vmatprep.mubr.f32.mxu0 %v1452
      %1917 = vmatmul.mubr.f32.gmra.mxu0 %v1149
      %v1918 = vpop.f32.mrf.mxu0
      %v1919 = vadd.f32 %v1662, %v1918
      %v1920 = vpop.f32.mrf.mxu0
      %v1921 = vadd.f32 %v1664, %v1920
      %1922 = vmatprep.mubr.f32.mxu0 %v1455
      %1923 = vmatmul.mubr.f32.gmra.mxu0 %v1153
      %v1924 = vpop.f32.mrf.mxu0
      %v1925 = vadd.f32 %v1668, %v1924
      %v1926 = vpop.f32.mrf.mxu0
      %v1927 = vadd.f32 %v1670, %v1926
      %1928 = vmatprep.mubr.f32.mxu0 %v1458
      %1929 = vmatmul.mubr.f32.gmra.mxu0 %v1157
      %v1930 = vpop.f32.mrf.mxu0
      %v1931 = vadd.f32 %v1674, %v1930
      %v1932 = vpop.f32.mrf.mxu0
      %v1933 = vadd.f32 %v1676, %v1932
      %1934 = vmatprep.mubr.f32.mxu0 %v1461
      %1935 = vmatmul.mubr.f32.gmra.mxu0 %v1161
      %v1936 = vpop.f32.mrf.mxu0
      %v1937 = vadd.f32 %v1680, %v1936
      %v1938 = vpop.f32.mrf.mxu0
      %v1939 = vadd.f32 %v1682, %v1938
      %1940 = vmatprep.mubr.f32.mxu0 %v1464
      %1941 = vmatmul.mubr.f32.gmra.mxu0 %v1165
      %v1942 = vpop.f32.mrf.mxu0
      %v1943 = vadd.f32 %v1686, %v1942
      %v1944 = vpop.f32.mrf.mxu0
      %v1945 = vadd.f32 %v1688, %v1944
      %1946 = vmatprep.mubr.f32.mxu0 %v1467
      %1947 = vmatmul.mubr.f32.gmra.mxu0 %v1169
      %v1948 = vpop.f32.mrf.mxu0
      %v1949 = vadd.f32 %v1692, %v1948
      %v1950 = vpop.f32.mrf.mxu0
      %v1951 = vadd.f32 %v1694, %v1950
      %1952 = vmatprep.mubr.f32.mxu0 %v1470
      %1953 = vmatmul.mubr.f32.gmra.mxu0 %v1173
      %v1954 = vpop.f32.mrf.mxu0
      %v1955 = vadd.f32 %v1698, %v1954
      %v1956 = vpop.f32.mrf.mxu0
      %v1957 = vadd.f32 %v1700, %v1956
      %1958 = vmatprep.mubr.f32.mxu0 %v1473
      %1959 = vmatmul.mubr.f32.gmra.mxu0 %v1177
      %v1960 = vpop.f32.mrf.mxu0
      %v1961 = vadd.f32 %v1704, %v1960
      %v1962 = vpop.f32.mrf.mxu0
      %v1963 = vadd.f32 %v1706, %v1962
      %1964 = vmatprep.mubr.f32.mxu0 %v1476
      %1965 = vmatmul.mubr.f32.gmra.mxu0 %v1181
      %v1966 = vpop.f32.mrf.mxu0
      %v1967 = vadd.f32 %v1710, %v1966
      %v1968 = vpop.f32.mrf.mxu0
      %v1969 = vadd.f32 %v1712, %v1968
      %1970 = vmatprep.mubr.f32.mxu0 %v1479
      %1971 = vmatmul.mubr.f32.gmra.mxu0 %v1185
      %v1972 = vpop.f32.mrf.mxu0
      %v1973 = vadd.f32 %v1716, %v1972
      %v1974 = vpop.f32.mrf.mxu0
      %v1975 = vadd.f32 %v1718, %v1974
      %1976 = vmatprep.mubr.f32.mxu0 %v1482
      %1977 = vmatmul.mubr.f32.gmra.mxu0 %v1189
      %v1978 = vpop.f32.mrf.mxu0
      %v1979 = vadd.f32 %v1722, %v1978
      %v1980 = vpop.f32.mrf.mxu0
      %v1981 = vadd.f32 %v1724, %v1980
      %1982 = vmatprep.mubr.f32.mxu0 %v1485
      %1983 = vmatmul.mubr.f32.gmra.mxu0 %v1193
      %v1984 = vpop.f32.mrf.mxu0
      %v1985 = vadd.f32 %v1728, %v1984
      %v1986 = vpop.f32.mrf.mxu0
      %v1987 = vadd.f32 %v1730, %v1986
      %1988 = vmatprep.mubr.f32.mxu0 %v1488
      %1989 = vmatmul.mubr.f32.gmra.mxu0 %v1197
      %v1990 = vpop.f32.mrf.mxu0
      %v1991 = vadd.f32 %v1734, %v1990
      %v1992 = vpop.f32.mrf.mxu0
      %v1993 = vadd.f32 %v1736, %v1992
      %1994 = vmatprep.mubr.f32.mxu0 %v1491
      %1995 = vmatmul.mubr.f32.gmra.mxu0 %v1201
      %v1996 = vpop.f32.mrf.mxu0
      %v1997 = vadd.f32 %v1740, %v1996
      %v1998 = vpop.f32.mrf.mxu0
      %v1999 = vadd.f32 %v1742, %v1998
      %2000 = vmatprep.mubr.f32.mxu0 %v1494
      %2001 = vmatmul.mubr.f32.gmra.mxu0 %v1205
      %v2002 = vpop.f32.mrf.mxu0
      %v2003 = vadd.f32 %v1746, %v2002
      %v2004 = vpop.f32.mrf.mxu0
      %v2005 = vadd.f32 %v1748, %v2004
      %2006 = vmatprep.mubr.f32.mxu0 %v1497
      %2007 = vmatmul.mubr.f32.gmra.mxu0 %v1209
      %v2008 = vpop.f32.mrf.mxu0
      %v2009 = vadd.f32 %v1752, %v2008
      %v2010 = vpop.f32.mrf.mxu0
      %v2011 = vadd.f32 %v1754, %v2010
      %2012 = vmatprep.mubr.f32.mxu0 %v1500
      %2013 = vmatmul.mubr.f32.gmra.mxu0 %v1213
      %v2014 = vpop.f32.mrf.mxu0
      %v2015 = vadd.f32 %v1758, %v2014
      %v2016 = vpop.f32.mrf.mxu0
      %v2017 = vadd.f32 %v1760, %v2016
      %2018 = vmatprep.mubr.f32.mxu0 %v1503
      %2019 = vmatmul.mubr.f32.gmra.mxu0 %v1217
      %v2020 = vpop.f32.mrf.mxu0
      %v2021 = vadd.f32 %v1764, %v2020
      %v2022 = vpop.f32.mrf.mxu0
      %v2023 = vadd.f32 %v1766, %v2022
      %2024 = vmatprep.mubr.f32.mxu0 %v1506
      %2025 = vmatmul.mubr.f32.gmra.mxu0 %v1221
      %v2026 = vpop.f32.mrf.mxu0
      %v2027 = vadd.f32 %v1770, %v2026
      %v2028 = vpop.f32.mrf.mxu0
      %v2029 = vadd.f32 %v1772, %v2028
      %2030 = vdwg.mxu0
      %2031 = vmatprep.subr.mxu0 0.0
      %2032 = vmatpush1.msra.mxu0 %v1270
      %2033 = vmatprep.subr.mxu0 0.0
      %2034 = vmatpush1.msra.mxu0 %v1267
      %2035 = vmatprep.subr.mxu0 0.0
      %2036 = vmatpush1.msra.mxu0 %v1264
      %2037 = vmatprep.subr.mxu0 0.0
      %2038 = vmatpush1.msra.mxu0 %v1261
      %2039 = vmatprep.subr.mxu0 0.0
      %2040 = vmatpush1.msra.mxu0 %v1258
      %2041 = vmatprep.subr.mxu0 0.0
      %2042 = vmatpush1.msra.mxu0 %v1255
      %2043 = vmatprep.subr.mxu0 0.0
      %2044 = vmatpush1.msra.mxu0 %v1252
      %2045 = vmatprep.subr.mxu0 0.0
      %2046 = vmatpush1.msra.mxu0 %v1249
      %2047 = vmatprep.subr.mxu0 0.0
      %2048 = vmatpush1.msra.mxu0 %v1246
      %2049 = vmatprep.subr.mxu0 0.0
      %2050 = vmatpush1.msra.mxu0 %v1243
      %2051 = vmatprep.subr.mxu0 0.0
      %2052 = vmatpush1.msra.mxu0 %v1240
      %2053 = vmatprep.subr.mxu0 0.0
      %2054 = vmatpush1.msra.mxu0 %v1237
      %2055 = vmatprep.subr.mxu0 0.0
      %2056 = vmatpush1.msra.mxu0 %v1234
      %2057 = vmatprep.subr.mxu0 0.0
      %2058 = vmatpush1.msra.mxu0 %v1231
      %2059 = vmatprep.subr.mxu0 0.0
      %2060 = vmatpush1.msra.mxu0 %v1228
      %2061 = vmatprep.subr.mxu0 0.0
      %2062 = vmatpush1.msra.mxu0 %v1225
      %2063 = vmatprep.subr.mxu0 0.0
      %2064 = vmatpush2.msra.mxu0 %v1318
      %2065 = vmatprep.subr.mxu0 0.0
      %2066 = vmatpush2.msra.mxu0 %v1315
      %2067 = vmatprep.subr.mxu0 0.0
      %2068 = vmatpush2.msra.mxu0 %v1312
      %2069 = vmatprep.subr.mxu0 0.0
      %2070 = vmatpush2.msra.mxu0 %v1309
      %2071 = vmatprep.subr.mxu0 0.0
      %2072 = vmatpush2.msra.mxu0 %v1306
      %2073 = vmatprep.subr.mxu0 0.0
      %2074 = vmatpush2.msra.mxu0 %v1303
      %2075 = vmatprep.subr.mxu0 0.0
      %2076 = vmatpush2.msra.mxu0 %v1300
      %2077 = vmatprep.subr.mxu0 0.0
      %2078 = vmatpush2.msra.mxu0 %v1297
      %2079 = vmatprep.subr.mxu0 0.0
      %2080 = vmatpush2.msra.mxu0 %v1294
      %2081 = vmatprep.subr.mxu0 0.0
      %2082 = vmatpush2.msra.mxu0 %v1291
      %2083 = vmatprep.subr.mxu0 0.0
      %2084 = vmatpush2.msra.mxu0 %v1288
      %2085 = vmatprep.subr.mxu0 0.0
      %2086 = vmatpush2.msra.mxu0 %v1285
      %2087 = vmatprep.subr.mxu0 0.0
      %2088 = vmatpush2.msra.mxu0 %v1282
      %2089 = vmatprep.subr.mxu0 0.0
      %2090 = vmatpush2.msra.mxu0 %v1279
      %2091 = vmatprep.subr.mxu0 0.0
      %2092 = vmatpush2.msra.mxu0 %v1276
      %2093 = vmatprep.subr.mxu0 0.0
      %2094 = vmatpush2.msra.mxu0 %v1273
      %2095 = vmatprep.mubr.f32.mxu0 %v1096
      %2096 = vmatmul.mubr.f32.gmra.mxu0 %v1095
      %v2097 = vpop.f32.mrf.mxu0
      %v2098 = vadd.f32 %v1407, %v2097
      %v2099 = vpop.f32.mrf.mxu0
      %2100 = vmatprep.mubr.f32.mxu0 %v1100
      %2101 = vmatmul.mubr.f32.gmra.mxu0 %v1099
      %v2102 = vpop.f32.mrf.mxu0
      %v2103 = vadd.f32 %v1407, %v2102
      %v2104 = vpop.f32.mrf.mxu0
      %2105 = vmatprep.mubr.f32.mxu0 %v1104
      %2106 = vmatmul.mubr.f32.gmra.mxu0 %v1103
      %v2107 = vpop.f32.mrf.mxu0
      %v2108 = vadd.f32 %v1407, %v2107
      %v2109 = vpop.f32.mrf.mxu0
      %2110 = vmatprep.mubr.f32.mxu0 %v1108
      %2111 = vmatmul.mubr.f32.gmra.mxu0 %v1107
      %v2112 = vpop.f32.mrf.mxu0
      %v2113 = vadd.f32 %v1407, %v2112
      %v2114 = vpop.f32.mrf.mxu0
      %2115 = vmatprep.mubr.f32.mxu0 %v1112
      %2116 = vmatmul.mubr.f32.gmra.mxu0 %v1111
      %v2117 = vpop.f32.mrf.mxu0
      %v2118 = vadd.f32 %v1407, %v2117
      %v2119 = vpop.f32.mrf.mxu0
      %2120 = vmatprep.mubr.f32.mxu0 %v1116
      %2121 = vmatmul.mubr.f32.gmra.mxu0 %v1115
      %v2122 = vpop.f32.mrf.mxu0
      %v2123 = vadd.f32 %v1407, %v2122
      %v2124 = vpop.f32.mrf.mxu0
      %2125 = vmatprep.mubr.f32.mxu0 %v1120
      %2126 = vmatmul.mubr.f32.gmra.mxu0 %v1119
      %v2127 = vpop.f32.mrf.mxu0
      %v2128 = vadd.f32 %v1407, %v2127
      %v2129 = vpop.f32.mrf.mxu0
      %2130 = vmatprep.mubr.f32.mxu0 %v1124
      %2131 = vmatmul.mubr.f32.gmra.mxu0 %v1123
      %v2132 = vpop.f32.mrf.mxu0
      %v2133 = vadd.f32 %v1407, %v2132
      %v2134 = vpop.f32.mrf.mxu0
      %2135 = vmatprep.mubr.f32.mxu0 %v1128
      %2136 = vmatmul.mubr.f32.gmra.mxu0 %v1127
      %v2137 = vpop.f32.mrf.mxu0
      %v2138 = vadd.f32 %v1407, %v2137
      %v2139 = vpop.f32.mrf.mxu0
      %2140 = vmatprep.mubr.f32.mxu0 %v1132
      %2141 = vmatmul.mubr.f32.gmra.mxu0 %v1131
      %v2142 = vpop.f32.mrf.mxu0
      %v2143 = vadd.f32 %v1407, %v2142
      %v2144 = vpop.f32.mrf.mxu0
      %2145 = vmatprep.mubr.f32.mxu0 %v1136
      %2146 = vmatmul.mubr.f32.gmra.mxu0 %v1135
      %v2147 = vpop.f32.mrf.mxu0
      %v2148 = vadd.f32 %v1407, %v2147
      %v2149 = vpop.f32.mrf.mxu0
      %2150 = vmatprep.mubr.f32.mxu0 %v1140
      %2151 = vmatmul.mubr.f32.gmra.mxu0 %v1139
      %v2152 = vpop.f32.mrf.mxu0
      %v2153 = vadd.f32 %v1407, %v2152
      %v2154 = vpop.f32.mrf.mxu0
      %2155 = vmatprep.mubr.f32.mxu0 %v1144
      %2156 = vmatmul.mubr.f32.gmra.mxu0 %v1143
      %v2157 = vpop.f32.mrf.mxu0
      %v2158 = vadd.f32 %v1407, %v2157
      %v2159 = vpop.f32.mrf.mxu0
      %2160 = vmatprep.mubr.f32.mxu0 %v1148
      %2161 = vmatmul.mubr.f32.gmra.mxu0 %v1147
      %v2162 = vpop.f32.mrf.mxu0
      %v2163 = vadd.f32 %v1407, %v2162
      %v2164 = vpop.f32.mrf.mxu0
      %2165 = vmatprep.mubr.f32.mxu0 %v1152
      %2166 = vmatmul.mubr.f32.gmra.mxu0 %v1151
      %v2167 = vpop.f32.mrf.mxu0
      %v2168 = vadd.f32 %v1407, %v2167
      %v2169 = vpop.f32.mrf.mxu0
      %2170 = vmatprep.mubr.f32.mxu0 %v1156
      %2171 = vmatmul.mubr.f32.gmra.mxu0 %v1155
      %v2172 = vpop.f32.mrf.mxu0
      %v2173 = vadd.f32 %v1407, %v2172
      %v2174 = vpop.f32.mrf.mxu0
      %2175 = vmatprep.mubr.f32.mxu0 %v1160
      %2176 = vmatmul.mubr.f32.gmra.mxu0 %v1159
      %v2177 = vpop.f32.mrf.mxu0
      %v2178 = vadd.f32 %v1407, %v2177
      %v2179 = vpop.f32.mrf.mxu0
      %2180 = vmatprep.mubr.f32.mxu0 %v1164
      %2181 = vmatmul.mubr.f32.gmra.mxu0 %v1163
      %v2182 = vpop.f32.mrf.mxu0
      %v2183 = vadd.f32 %v1407, %v2182
      %v2184 = vpop.f32.mrf.mxu0
      %2185 = vmatprep.mubr.f32.mxu0 %v1168
      %2186 = vmatmul.mubr.f32.gmra.mxu0 %v1167
      %v2187 = vpop.f32.mrf.mxu0
      %v2188 = vadd.f32 %v1407, %v2187
      %v2189 = vpop.f32.mrf.mxu0
      %2190 = vmatprep.mubr.f32.mxu0 %v1172
      %2191 = vmatmul.mubr.f32.gmra.mxu0 %v1171
      %v2192 = vpop.f32.mrf.mxu0
      %v2193 = vadd.f32 %v1407, %v2192
      %v2194 = vpop.f32.mrf.mxu0
      %2195 = vmatprep.mubr.f32.mxu0 %v1176
      %2196 = vmatmul.mubr.f32.gmra.mxu0 %v1175
      %v2197 = vpop.f32.mrf.mxu0
      %v2198 = vadd.f32 %v1407, %v2197
      %v2199 = vpop.f32.mrf.mxu0
      %2200 = vmatprep.mubr.f32.mxu0 %v1180
      %2201 = vmatmul.mubr.f32.gmra.mxu0 %v1179
      %v2202 = vpop.f32.mrf.mxu0
      %v2203 = vadd.f32 %v1407, %v2202
      %v2204 = vpop.f32.mrf.mxu0
      %2205 = vmatprep.mubr.f32.mxu0 %v1184
      %2206 = vmatmul.mubr.f32.gmra.mxu0 %v1183
      %v2207 = vpop.f32.mrf.mxu0
      %v2208 = vadd.f32 %v1407, %v2207
      %v2209 = vpop.f32.mrf.mxu0
      %2210 = vmatprep.mubr.f32.mxu0 %v1188
      %2211 = vmatmul.mubr.f32.gmra.mxu0 %v1187
      %v2212 = vpop.f32.mrf.mxu0
      %v2213 = vadd.f32 %v1407, %v2212
      %v2214 = vpop.f32.mrf.mxu0
      %2215 = vmatprep.mubr.f32.mxu0 %v1192
      %2216 = vmatmul.mubr.f32.gmra.mxu0 %v1191
      %v2217 = vpop.f32.mrf.mxu0
      %v2218 = vadd.f32 %v1407, %v2217
      %v2219 = vpop.f32.mrf.mxu0
      %2220 = vmatprep.mubr.f32.mxu0 %v1196
      %2221 = vmatmul.mubr.f32.gmra.mxu0 %v1195
      %v2222 = vpop.f32.mrf.mxu0
      %v2223 = vadd.f32 %v1407, %v2222
      %v2224 = vpop.f32.mrf.mxu0
      %2225 = vmatprep.mubr.f32.mxu0 %v1200
      %2226 = vmatmul.mubr.f32.gmra.mxu0 %v1199
      %v2227 = vpop.f32.mrf.mxu0
      %v2228 = vadd.f32 %v1407, %v2227
      %v2229 = vpop.f32.mrf.mxu0
      %2230 = vmatprep.mubr.f32.mxu0 %v1204
      %2231 = vmatmul.mubr.f32.gmra.mxu0 %v1203
      %v2232 = vpop.f32.mrf.mxu0
      %v2233 = vadd.f32 %v1407, %v2232
      %v2234 = vpop.f32.mrf.mxu0
      %2235 = vmatprep.mubr.f32.mxu0 %v1208
      %2236 = vmatmul.mubr.f32.gmra.mxu0 %v1207
      %v2237 = vpop.f32.mrf.mxu0
      %v2238 = vadd.f32 %v1407, %v2237
      %v2239 = vpop.f32.mrf.mxu0
      %2240 = vmatprep.mubr.f32.mxu0 %v1212
      %2241 = vmatmul.mubr.f32.gmra.mxu0 %v1211
      %v2242 = vpop.f32.mrf.mxu0
      %v2243 = vadd.f32 %v1407, %v2242
      %v2244 = vpop.f32.mrf.mxu0
      %2245 = vmatprep.mubr.f32.mxu0 %v1216
      %2246 = vmatmul.mubr.f32.gmra.mxu0 %v1215
      %v2247 = vpop.f32.mrf.mxu0
      %v2248 = vadd.f32 %v1407, %v2247
      %v2249 = vpop.f32.mrf.mxu0
      %2250 = vmatprep.mubr.f32.mxu0 %v1220
      %2251 = vmatmul.mubr.f32.gmra.mxu0 %v1219
      %v2252 = vpop.f32.mrf.mxu0
      %v2253 = vadd.f32 %v1407, %v2252
      %v2254 = vpop.f32.mrf.mxu0
      %2255 = vdwg.mxu0
      %2256 = vmatprep.subr.mxu0 0.0
      %2257 = vmatpush1.msra.mxu0 %v1366
      %2258 = vmatprep.subr.mxu0 0.0
      %2259 = vmatpush1.msra.mxu0 %v1363
      %2260 = vmatprep.subr.mxu0 0.0
      %2261 = vmatpush1.msra.mxu0 %v1360
      %2262 = vmatprep.subr.mxu0 0.0
      %2263 = vmatpush1.msra.mxu0 %v1357
      %2264 = vmatprep.subr.mxu0 0.0
      %2265 = vmatpush1.msra.mxu0 %v1354
      %2266 = vmatprep.subr.mxu0 0.0
      %2267 = vmatpush1.msra.mxu0 %v1351
      %2268 = vmatprep.subr.mxu0 0.0
      %2269 = vmatpush1.msra.mxu0 %v1348
      %2270 = vmatprep.subr.mxu0 0.0
      %2271 = vmatpush1.msra.mxu0 %v1345
      %2272 = vmatprep.subr.mxu0 0.0
      %2273 = vmatpush1.msra.mxu0 %v1342
      %2274 = vmatprep.subr.mxu0 0.0
      %2275 = vmatpush1.msra.mxu0 %v1339
      %2276 = vmatprep.subr.mxu0 0.0
      %2277 = vmatpush1.msra.mxu0 %v1336
      %2278 = vmatprep.subr.mxu0 0.0
      %2279 = vmatpush1.msra.mxu0 %v1333
      %2280 = vmatprep.subr.mxu0 0.0
      %2281 = vmatpush1.msra.mxu0 %v1330
      %2282 = vmatprep.subr.mxu0 0.0
      %2283 = vmatpush1.msra.mxu0 %v1327
      %2284 = vmatprep.subr.mxu0 0.0
      %2285 = vmatpush1.msra.mxu0 %v1324
      %2286 = vmatprep.subr.mxu0 0.0
      %2287 = vmatpush1.msra.mxu0 %v1321
      %2288 = vmatprep.subr.mxu0 0.0
      %2289 = vmatpush2.msra.mxu0 0.0
      %2290 = vmatprep.subr.mxu0 0.0
      %2291 = vmatpush2.msra.mxu0 0.0
      %2292 = vmatprep.subr.mxu0 0.0
      %2293 = vmatpush2.msra.mxu0 0.0
      %2294 = vmatprep.subr.mxu0 0.0
      %2295 = vmatpush2.msra.mxu0 0.0
      %2296 = vmatprep.subr.mxu0 0.0
      %2297 = vmatpush2.msra.mxu0 0.0
      %2298 = vmatprep.subr.mxu0 0.0
      %2299 = vmatpush2.msra.mxu0 0.0
      %2300 = vmatprep.subr.mxu0 0.0
      %2301 = vmatpush2.msra.mxu0 0.0
      %2302 = vmatprep.subr.mxu0 0.0
      %2303 = vmatpush2.msra.mxu0 %v1515
      %2304 = vmatprep.subr.mxu0 0.0
      %2305 = vmatpush2.msra.mxu0 %v1390
      %2306 = vmatprep.subr.mxu0 0.0
      %2307 = vmatpush2.msra.mxu0 %v1387
      %2308 = vmatprep.subr.mxu0 0.0
      %2309 = vmatpush2.msra.mxu0 %v1384
      %2310 = vmatprep.subr.mxu0 0.0
      %2311 = vmatpush2.msra.mxu0 %v1381
      %2312 = vmatprep.subr.mxu0 0.0
      %2313 = vmatpush2.msra.mxu0 %v1378
      %2314 = vmatprep.subr.mxu0 0.0
      %2315 = vmatpush2.msra.mxu0 %v1375
      %2316 = vmatprep.subr.mxu0 0.0
      %2317 = vmatpush2.msra.mxu0 %v1372
      %2318 = vmatprep.subr.mxu0 0.0
      %2319 = vmatpush2.msra.mxu0 %v1369
      %2320 = vmatprep.mubr.f32.mxu0 %v1413
      %2321 = vmatmul.mubr.f32.gmra.mxu0 %v1097
      %v2322 = vpop.f32.mrf.mxu0
      %v2323 = vadd.f32 %v2098, %v2322
      %v2324 = vpop.f32.mrf.mxu0
      %2325 = vmatprep.mubr.f32.mxu0 %v1416
      %2326 = vmatmul.mubr.f32.gmra.mxu0 %v1101
      %v2327 = vpop.f32.mrf.mxu0
      %v2328 = vadd.f32 %v2103, %v2327
      %v2329 = vpop.f32.mrf.mxu0
      %2330 = vmatprep.mubr.f32.mxu0 %v1419
      %2331 = vmatmul.mubr.f32.gmra.mxu0 %v1105
      %v2332 = vpop.f32.mrf.mxu0
      %v2333 = vadd.f32 %v2108, %v2332
      %v2334 = vpop.f32.mrf.mxu0
      %2335 = vmatprep.mubr.f32.mxu0 %v1422
      %2336 = vmatmul.mubr.f32.gmra.mxu0 %v1109
      %v2337 = vpop.f32.mrf.mxu0
      %v2338 = vadd.f32 %v2113, %v2337
      %v2339 = vpop.f32.mrf.mxu0
      %2340 = vmatprep.mubr.f32.mxu0 %v1425
      %2341 = vmatmul.mubr.f32.gmra.mxu0 %v1113
      %v2342 = vpop.f32.mrf.mxu0
      %v2343 = vadd.f32 %v2118, %v2342
      %v2344 = vpop.f32.mrf.mxu0
      %2345 = vmatprep.mubr.f32.mxu0 %v1428
      %2346 = vmatmul.mubr.f32.gmra.mxu0 %v1117
      %v2347 = vpop.f32.mrf.mxu0
      %v2348 = vadd.f32 %v2123, %v2347
      %v2349 = vpop.f32.mrf.mxu0
      %2350 = vmatprep.mubr.f32.mxu0 %v1431
      %2351 = vmatmul.mubr.f32.gmra.mxu0 %v1121
      %v2352 = vpop.f32.mrf.mxu0
      %v2353 = vadd.f32 %v2128, %v2352
      %v2354 = vpop.f32.mrf.mxu0
      %2355 = vmatprep.mubr.f32.mxu0 %v1434
      %2356 = vmatmul.mubr.f32.gmra.mxu0 %v1125
      %v2357 = vpop.f32.mrf.mxu0
      %v2358 = vadd.f32 %v2133, %v2357
      %v2359 = vpop.f32.mrf.mxu0
      %2360 = vmatprep.mubr.f32.mxu0 %v1437
      %2361 = vmatmul.mubr.f32.gmra.mxu0 %v1129
      %v2362 = vpop.f32.mrf.mxu0
      %v2363 = vadd.f32 %v2138, %v2362
      %v2364 = vpop.f32.mrf.mxu0
      %2365 = vmatprep.mubr.f32.mxu0 %v1440
      %2366 = vmatmul.mubr.f32.gmra.mxu0 %v1133
      %v2367 = vpop.f32.mrf.mxu0
      %v2368 = vadd.f32 %v2143, %v2367
      %v2369 = vpop.f32.mrf.mxu0
      %2370 = vmatprep.mubr.f32.mxu0 %v1443
      %2371 = vmatmul.mubr.f32.gmra.mxu0 %v1137
      %v2372 = vpop.f32.mrf.mxu0
      %v2373 = vadd.f32 %v2148, %v2372
      %v2374 = vpop.f32.mrf.mxu0
      %2375 = vmatprep.mubr.f32.mxu0 %v1446
      %2376 = vmatmul.mubr.f32.gmra.mxu0 %v1141
      %v2377 = vpop.f32.mrf.mxu0
      %v2378 = vadd.f32 %v2153, %v2377
      %v2379 = vpop.f32.mrf.mxu0
      %2380 = vmatprep.mubr.f32.mxu0 %v1449
      %2381 = vmatmul.mubr.f32.gmra.mxu0 %v1145
      %v2382 = vpop.f32.mrf.mxu0
      %v2383 = vadd.f32 %v2158, %v2382
      %v2384 = vpop.f32.mrf.mxu0
      %2385 = vmatprep.mubr.f32.mxu0 %v1452
      %2386 = vmatmul.mubr.f32.gmra.mxu0 %v1149
      %v2387 = vpop.f32.mrf.mxu0
      %v2388 = vadd.f32 %v2163, %v2387
      %v2389 = vpop.f32.mrf.mxu0
      %2390 = vmatprep.mubr.f32.mxu0 %v1455
      %2391 = vmatmul.mubr.f32.gmra.mxu0 %v1153
      %v2392 = vpop.f32.mrf.mxu0
      %v2393 = vadd.f32 %v2168, %v2392
      %v2394 = vpop.f32.mrf.mxu0
      %2395 = vmatprep.mubr.f32.mxu0 %v1458
      %2396 = vmatmul.mubr.f32.gmra.mxu0 %v1157
      %v2397 = vpop.f32.mrf.mxu0
      %v2398 = vadd.f32 %v2173, %v2397
      %v2399 = vpop.f32.mrf.mxu0
      %2400 = vmatprep.mubr.f32.mxu0 %v1461
      %2401 = vmatmul.mubr.f32.gmra.mxu0 %v1161
      %v2402 = vpop.f32.mrf.mxu0
      %v2403 = vadd.f32 %v2178, %v2402
      %v2404 = vpop.f32.mrf.mxu0
      %2405 = vmatprep.mubr.f32.mxu0 %v1464
      %2406 = vmatmul.mubr.f32.gmra.mxu0 %v1165
      %v2407 = vpop.f32.mrf.mxu0
      %v2408 = vadd.f32 %v2183, %v2407
      %v2409 = vpop.f32.mrf.mxu0
      %2410 = vmatprep.mubr.f32.mxu0 %v1467
      %2411 = vmatmul.mubr.f32.gmra.mxu0 %v1169
      %v2412 = vpop.f32.mrf.mxu0
      %v2413 = vadd.f32 %v2188, %v2412
      %v2414 = vpop.f32.mrf.mxu0
      %2415 = vmatprep.mubr.f32.mxu0 %v1470
      %2416 = vmatmul.mubr.f32.gmra.mxu0 %v1173
      %v2417 = vpop.f32.mrf.mxu0
      %v2418 = vadd.f32 %v2193, %v2417
      %v2419 = vpop.f32.mrf.mxu0
      %2420 = vmatprep.mubr.f32.mxu0 %v1473
      %2421 = vmatmul.mubr.f32.gmra.mxu0 %v1177
      %v2422 = vpop.f32.mrf.mxu0
      %v2423 = vadd.f32 %v2198, %v2422
      %v2424 = vpop.f32.mrf.mxu0
      %2425 = vmatprep.mubr.f32.mxu0 %v1476
      %2426 = vmatmul.mubr.f32.gmra.mxu0 %v1181
      %v2427 = vpop.f32.mrf.mxu0
      %v2428 = vadd.f32 %v2203, %v2427
      %v2429 = vpop.f32.mrf.mxu0
      %2430 = vmatprep.mubr.f32.mxu0 %v1479
      %2431 = vmatmul.mubr.f32.gmra.mxu0 %v1185
      %v2432 = vpop.f32.mrf.mxu0
      %v2433 = vadd.f32 %v2208, %v2432
      %v2434 = vpop.f32.mrf.mxu0
      %2435 = vmatprep.mubr.f32.mxu0 %v1482
      %2436 = vmatmul.mubr.f32.gmra.mxu0 %v1189
      %v2437 = vpop.f32.mrf.mxu0
      %v2438 = vadd.f32 %v2213, %v2437
      %v2439 = vpop.f32.mrf.mxu0
      %2440 = vmatprep.mubr.f32.mxu0 %v1485
      %2441 = vmatmul.mubr.f32.gmra.mxu0 %v1193
      %v2442 = vpop.f32.mrf.mxu0
      %v2443 = vadd.f32 %v2218, %v2442
      %v2444 = vpop.f32.mrf.mxu0
      %2445 = vmatprep.mubr.f32.mxu0 %v1488
      %2446 = vmatmul.mubr.f32.gmra.mxu0 %v1197
      %v2447 = vpop.f32.mrf.mxu0
      %v2448 = vadd.f32 %v2223, %v2447
      %v2449 = vpop.f32.mrf.mxu0
      %2450 = vmatprep.mubr.f32.mxu0 %v1491
      %2451 = vmatmul.mubr.f32.gmra.mxu0 %v1201
      %v2452 = vpop.f32.mrf.mxu0
      %v2453 = vadd.f32 %v2228, %v2452
      %v2454 = vpop.f32.mrf.mxu0
      %2455 = vmatprep.mubr.f32.mxu0 %v1494
      %2456 = vmatmul.mubr.f32.gmra.mxu0 %v1205
      %v2457 = vpop.f32.mrf.mxu0
      %v2458 = vadd.f32 %v2233, %v2457
      %v2459 = vpop.f32.mrf.mxu0
      %2460 = vmatprep.mubr.f32.mxu0 %v1497
      %2461 = vmatmul.mubr.f32.gmra.mxu0 %v1209
      %v2462 = vpop.f32.mrf.mxu0
      %v2463 = vadd.f32 %v2238, %v2462
      %v2464 = vpop.f32.mrf.mxu0
      %2465 = vmatprep.mubr.f32.mxu0 %v1500
      %2466 = vmatmul.mubr.f32.gmra.mxu0 %v1213
      %v2467 = vpop.f32.mrf.mxu0
      %v2468 = vadd.f32 %v2243, %v2467
      %v2469 = vpop.f32.mrf.mxu0
      %2470 = vmatprep.mubr.f32.mxu0 %v1503
      %2471 = vmatmul.mubr.f32.gmra.mxu0 %v1217
      %v2472 = vpop.f32.mrf.mxu0
      %v2473 = vadd.f32 %v2248, %v2472
      %v2474 = vpop.f32.mrf.mxu0
      %2475 = vmatprep.mubr.f32.mxu0 %v1506
      %2476 = vmatmul.mubr.f32.gmra.mxu0 %v1221
      %v2477 = vpop.f32.mrf.mxu0
      %v2478 = vadd.f32 %v2253, %v2477
      %v2479 = vpop.f32.mrf.mxu0
      %2480 = vdwg.mxu0
      %v2481 = vadd.f32 %v1841, %v1843
      %vm2482 = vcmask 850944
      %v2483 = vsel %vm2482, %v2323, 0.0
      %v2484 = vadd.f32 %v2481, %v2483
      %2485 = vadd.xlane.f32.xlu0 %v2484
      %v2486 = vpop.xlane.xlu0 %2485
      %v2487 = vadd.f32 %v1847, %v1849
      %v2488 = vsel %vm2482, %v2328, 0.0
      %v2489 = vadd.f32 %v2487, %v2488
      %2490 = vadd.xlane.f32.xlu0 %v2489
      %v2491 = vpop.xlane.xlu0 %2490
      %v2492 = vadd.f32 %v1853, %v1855
      %v2493 = vsel %vm2482, %v2333, 0.0
      %v2494 = vadd.f32 %v2492, %v2493
      %2495 = vadd.xlane.f32.xlu0 %v2494
      %v2496 = vpop.xlane.xlu0 %2495
      %v2497 = vadd.f32 %v1859, %v1861
      %v2498 = vsel %vm2482, %v2338, 0.0
      %v2499 = vadd.f32 %v2497, %v2498
      %2500 = vadd.xlane.f32.xlu0 %v2499
      %v2501 = vpop.xlane.xlu0 %2500
      %v2502 = vadd.f32 %v1865, %v1867
      %v2503 = vsel %vm2482, %v2343, 0.0
      %v2504 = vadd.f32 %v2502, %v2503
      %2505 = vadd.xlane.f32.xlu0 %v2504
      %v2506 = vpop.xlane.xlu0 %2505
      %v2507 = vadd.f32 %v1871, %v1873
      %v2508 = vsel %vm2482, %v2348, 0.0
      %v2509 = vadd.f32 %v2507, %v2508
      %2510 = vadd.xlane.f32.xlu0 %v2509
      %v2511 = vpop.xlane.xlu0 %2510
      %v2512 = vadd.f32 %v1877, %v1879
      %v2513 = vsel %vm2482, %v2353, 0.0
      %v2514 = vadd.f32 %v2512, %v2513
      %2515 = vadd.xlane.f32.xlu0 %v2514
      %v2516 = vpop.xlane.xlu0 %2515
      %v2517 = vadd.f32 %v1883, %v1885
      %v2518 = vsel %vm2482, %v2358, 0.0
      %v2519 = vadd.f32 %v2517, %v2518
      %2520 = vadd.xlane.f32.xlu0 %v2519
      %v2521 = vpop.xlane.xlu0 %2520
      %v2522 = vadd.f32 %v1889, %v1891
      %v2523 = vsel %vm2482, %v2363, 0.0
      %v2524 = vadd.f32 %v2522, %v2523
      %2525 = vadd.xlane.f32.xlu0 %v2524
      %v2526 = vpop.xlane.xlu0 %2525
      %v2527 = vadd.f32 %v1895, %v1897
      %v2528 = vsel %vm2482, %v2368, 0.0
      %v2529 = vadd.f32 %v2527, %v2528
      %2530 = vadd.xlane.f32.xlu0 %v2529
      %v2531 = vpop.xlane.xlu0 %2530
      %v2532 = vadd.f32 %v1901, %v1903
      %v2533 = vsel %vm2482, %v2373, 0.0
      %v2534 = vadd.f32 %v2532, %v2533
      %2535 = vadd.xlane.f32.xlu0 %v2534
      %v2536 = vpop.xlane.xlu0 %2535
      %v2537 = vadd.f32 %v1907, %v1909
      %v2538 = vsel %vm2482, %v2378, 0.0
      %v2539 = vadd.f32 %v2537, %v2538
      %2540 = vadd.xlane.f32.xlu0 %v2539
      %v2541 = vpop.xlane.xlu0 %2540
      %v2542 = vadd.f32 %v1913, %v1915
      %v2543 = vsel %vm2482, %v2383, 0.0
      %v2544 = vadd.f32 %v2542, %v2543
      %2545 = vadd.xlane.f32.xlu0 %v2544
      %v2546 = vpop.xlane.xlu0 %2545
      %v2547 = vadd.f32 %v1919, %v1921
      %v2548 = vsel %vm2482, %v2388, 0.0
      %v2549 = vadd.f32 %v2547, %v2548
      %2550 = vadd.xlane.f32.xlu0 %v2549
      %v2551 = vpop.xlane.xlu0 %2550
      %v2552 = vadd.f32 %v1925, %v1927
      %v2553 = vsel %vm2482, %v2393, 0.0
      %v2554 = vadd.f32 %v2552, %v2553
      %2555 = vadd.xlane.f32.xlu0 %v2554
      %v2556 = vpop.xlane.xlu0 %2555
      %v2557 = vadd.f32 %v1931, %v1933
      %v2558 = vsel %vm2482, %v2398, 0.0
      %v2559 = vadd.f32 %v2557, %v2558
      %2560 = vadd.xlane.f32.xlu0 %v2559
      %v2561 = vpop.xlane.xlu0 %2560
      %v2562 = vadd.f32 %v1937, %v1939
      %v2563 = vsel %vm2482, %v2403, 0.0
      %v2564 = vadd.f32 %v2562, %v2563
      %2565 = vadd.xlane.f32.xlu0 %v2564
      %v2566 = vpop.xlane.xlu0 %2565
      %v2567 = vadd.f32 %v1943, %v1945
      %v2568 = vsel %vm2482, %v2408, 0.0
      %v2569 = vadd.f32 %v2567, %v2568
      %2570 = vadd.xlane.f32.xlu0 %v2569
      %v2571 = vpop.xlane.xlu0 %2570
      %v2572 = vadd.f32 %v1949, %v1951
      %v2573 = vsel %vm2482, %v2413, 0.0
      %v2574 = vadd.f32 %v2572, %v2573
      %2575 = vadd.xlane.f32.xlu0 %v2574
      %v2576 = vpop.xlane.xlu0 %2575
      %v2577 = vadd.f32 %v1955, %v1957
      %v2578 = vsel %vm2482, %v2418, 0.0
      %v2579 = vadd.f32 %v2577, %v2578
      %2580 = vadd.xlane.f32.xlu0 %v2579
      %v2581 = vpop.xlane.xlu0 %2580
      %v2582 = vadd.f32 %v1961, %v1963
      %v2583 = vsel %vm2482, %v2423, 0.0
      %v2584 = vadd.f32 %v2582, %v2583
      %2585 = vadd.xlane.f32.xlu0 %v2584
      %v2586 = vpop.xlane.xlu0 %2585
      %v2587 = vadd.f32 %v1967, %v1969
      %v2588 = vsel %vm2482, %v2428, 0.0
      %v2589 = vadd.f32 %v2587, %v2588
      %2590 = vadd.xlane.f32.xlu0 %v2589
      %v2591 = vpop.xlane.xlu0 %2590
      %v2592 = vadd.f32 %v1973, %v1975
      %v2593 = vsel %vm2482, %v2433, 0.0
      %v2594 = vadd.f32 %v2592, %v2593
      %2595 = vadd.xlane.f32.xlu0 %v2594
      %v2596 = vpop.xlane.xlu0 %2595
      %v2597 = vadd.f32 %v1979, %v1981
      %v2598 = vsel %vm2482, %v2438, 0.0
      %v2599 = vadd.f32 %v2597, %v2598
      %2600 = vadd.xlane.f32.xlu0 %v2599
      %v2601 = vpop.xlane.xlu0 %2600
      %v2602 = vadd.f32 %v1985, %v1987
      %v2603 = vsel %vm2482, %v2443, 0.0
      %v2604 = vadd.f32 %v2602, %v2603
      %2605 = vadd.xlane.f32.xlu0 %v2604
      %v2606 = vpop.xlane.xlu0 %2605
      %v2607 = vadd.f32 %v1991, %v1993
      %v2608 = vsel %vm2482, %v2448, 0.0
      %v2609 = vadd.f32 %v2607, %v2608
      %2610 = vadd.xlane.f32.xlu0 %v2609
      %v2611 = vpop.xlane.xlu0 %2610
      %v2612 = vadd.f32 %v1997, %v1999
      %v2613 = vsel %vm2482, %v2453, 0.0
      %v2614 = vadd.f32 %v2612, %v2613
      %2615 = vadd.xlane.f32.xlu0 %v2614
      %v2616 = vpop.xlane.xlu0 %2615
      %v2617 = vadd.f32 %v2003, %v2005
      %v2618 = vsel %vm2482, %v2458, 0.0
      %v2619 = vadd.f32 %v2617, %v2618
      %2620 = vadd.xlane.f32.xlu0 %v2619
      %v2621 = vpop.xlane.xlu0 %2620
      %v2622 = vadd.f32 %v2009, %v2011
      %v2623 = vsel %vm2482, %v2463, 0.0
      %v2624 = vadd.f32 %v2622, %v2623
      %2625 = vadd.xlane.f32.xlu0 %v2624
      %v2626 = vpop.xlane.xlu0 %2625
      %v2627 = vadd.f32 %v2015, %v2017
      %v2628 = vsel %vm2482, %v2468, 0.0
      %v2629 = vadd.f32 %v2627, %v2628
      %2630 = vadd.xlane.f32.xlu0 %v2629
      %v2631 = vpop.xlane.xlu0 %2630
      %v2632 = vadd.f32 %v2021, %v2023
      %v2633 = vsel %vm2482, %v2473, 0.0
      %v2634 = vadd.f32 %v2632, %v2633
      %2635 = vadd.xlane.f32.xlu0 %v2634
      %v2636 = vpop.xlane.xlu0 %2635
      %v2637 = vadd.f32 %v2027, %v2029
      %v2638 = vsel %vm2482, %v2478, 0.0
      %v2639 = vadd.f32 %v2637, %v2638
      %2640 = vadd.xlane.f32.xlu0 %v2639
      %v2641 = vpop.xlane.xlu0 %2640
      %v2642 = vrcp.pop 360.0
      %v2643 = vmul.f32 %v2486, %v2642
      %v2644 = vmul.f32 %v2491, %v2642
      %v2645 = vmul.f32 %v2496, %v2642
      %v2646 = vmul.f32 %v2501, %v2642
      %v2647 = vmul.f32 %v2506, %v2642
      %v2648 = vmul.f32 %v2511, %v2642
      %v2649 = vmul.f32 %v2516, %v2642
      %v2650 = vmul.f32 %v2521, %v2642
      %v2651 = vmul.f32 %v2526, %v2642
      %v2652 = vmul.f32 %v2531, %v2642
      %v2653 = vmul.f32 %v2536, %v2642
      %v2654 = vmul.f32 %v2541, %v2642
      %v2655 = vmul.f32 %v2546, %v2642
      %v2656 = vmul.f32 %v2551, %v2642
      %v2657 = vmul.f32 %v2556, %v2642
      %v2658 = vmul.f32 %v2561, %v2642
      %v2659 = vmul.f32 %v2566, %v2642
      %v2660 = vmul.f32 %v2571, %v2642
      %v2661 = vmul.f32 %v2576, %v2642
      %v2662 = vmul.f32 %v2581, %v2642
      %v2663 = vmul.f32 %v2586, %v2642
      %v2664 = vmul.f32 %v2591, %v2642
      %v2665 = vmul.f32 %v2596, %v2642
      %v2666 = vmul.f32 %v2601, %v2642
      %v2667 = vmul.f32 %v2606, %v2642
      %v2668 = vmul.f32 %v2611, %v2642
      %v2669 = vmul.f32 %v2616, %v2642
      %v2670 = vmul.f32 %v2621, %v2642
      %v2671 = vmul.f32 %v2626, %v2642
      %v2672 = vmul.f32 %v2631, %v2642
      %v2673 = vmul.f32 %v2636, %v2642
      %v2674 = vmul.f32 %v2641, %v2642
      %v2675 = vsub.f32 %v1841, %v2643
      %v2676 = vsub.f32 %v1843, %v2643
      %v2677 = vsub.f32 %v2323, %v2643
      %v2678 = vsub.f32 %v1847, %v2644
      %v2679 = vsub.f32 %v1849, %v2644
      %v2680 = vsub.f32 %v2328, %v2644
      %v2681 = vsub.f32 %v1853, %v2645
      %v2682 = vsub.f32 %v1855, %v2645
      %v2683 = vsub.f32 %v2333, %v2645
      %v2684 = vsub.f32 %v1859, %v2646
      %v2685 = vsub.f32 %v1861, %v2646
      %v2686 = vsub.f32 %v2338, %v2646
      %v2687 = vsub.f32 %v1865, %v2647
      %v2688 = vsub.f32 %v1867, %v2647
      %v2689 = vsub.f32 %v2343, %v2647
      %v2690 = vsub.f32 %v1871, %v2648
      %v2691 = vsub.f32 %v1873, %v2648
      %v2692 = vsub.f32 %v2348, %v2648
      %v2693 = vsub.f32 %v1877, %v2649
      %v2694 = vsub.f32 %v1879, %v2649
      %v2695 = vsub.f32 %v2353, %v2649
      %v2696 = vsub.f32 %v1883, %v2650
      %v2697 = vsub.f32 %v1885, %v2650
      %v2698 = vsub.f32 %v2358, %v2650
      %v2699 = vsub.f32 %v1889, %v2651
      %v2700 = vsub.f32 %v1891, %v2651
      %v2701 = vsub.f32 %v2363, %v2651
      %v2702 = vsub.f32 %v1895, %v2652
      %v2703 = vsub.f32 %v1897, %v2652
      %v2704 = vsub.f32 %v2368, %v2652
      %v2705 = vsub.f32 %v1901, %v2653
      %v2706 = vsub.f32 %v1903, %v2653
      %v2707 = vsub.f32 %v2373, %v2653
      %v2708 = vsub.f32 %v1907, %v2654
      %v2709 = vsub.f32 %v1909, %v2654
      %v2710 = vsub.f32 %v2378, %v2654
      %v2711 = vsub.f32 %v1913, %v2655
      %v2712 = vsub.f32 %v1915, %v2655
      %v2713 = vsub.f32 %v2383, %v2655
      %v2714 = vsub.f32 %v1919, %v2656
      %v2715 = vsub.f32 %v1921, %v2656
      %v2716 = vsub.f32 %v2388, %v2656
      %v2717 = vsub.f32 %v1925, %v2657
      %v2718 = vsub.f32 %v1927, %v2657
      %v2719 = vsub.f32 %v2393, %v2657
      %v2720 = vsub.f32 %v1931, %v2658
      %v2721 = vsub.f32 %v1933, %v2658
      %v2722 = vsub.f32 %v2398, %v2658
      %v2723 = vsub.f32 %v1937, %v2659
      %v2724 = vsub.f32 %v1939, %v2659
      %v2725 = vsub.f32 %v2403, %v2659
      %v2726 = vsub.f32 %v1943, %v2660
      %v2727 = vsub.f32 %v1945, %v2660
      %v2728 = vsub.f32 %v2408, %v2660
      %v2729 = vsub.f32 %v1949, %v2661
      %v2730 = vsub.f32 %v1951, %v2661
      %v2731 = vsub.f32 %v2413, %v2661
      %v2732 = vsub.f32 %v1955, %v2662
      %v2733 = vsub.f32 %v1957, %v2662
      %v2734 = vsub.f32 %v2418, %v2662
      %v2735 = vsub.f32 %v1961, %v2663
      %v2736 = vsub.f32 %v1963, %v2663
      %v2737 = vsub.f32 %v2423, %v2663
      %v2738 = vsub.f32 %v1967, %v2664
      %v2739 = vsub.f32 %v1969, %v2664
      %v2740 = vsub.f32 %v2428, %v2664
      %v2741 = vsub.f32 %v1973, %v2665
      %v2742 = vsub.f32 %v1975, %v2665
      %v2743 = vsub.f32 %v2433, %v2665
      %v2744 = vsub.f32 %v1979, %v2666
      %v2745 = vsub.f32 %v1981, %v2666
      %v2746 = vsub.f32 %v2438, %v2666
      %v2747 = vsub.f32 %v1985, %v2667
      %v2748 = vsub.f32 %v1987, %v2667
      %v2749 = vsub.f32 %v2443, %v2667
      %v2750 = vsub.f32 %v1991, %v2668
      %v2751 = vsub.f32 %v1993, %v2668
      %v2752 = vsub.f32 %v2448, %v2668
      %v2753 = vsub.f32 %v1997, %v2669
      %v2754 = vsub.f32 %v1999, %v2669
      %v2755 = vsub.f32 %v2453, %v2669
      %v2756 = vsub.f32 %v2003, %v2670
      %v2757 = vsub.f32 %v2005, %v2670
      %v2758 = vsub.f32 %v2458, %v2670
      %v2759 = vsub.f32 %v2009, %v2671
      %v2760 = vsub.f32 %v2011, %v2671
      %v2761 = vsub.f32 %v2463, %v2671
      %v2762 = vsub.f32 %v2015, %v2672
      %v2763 = vsub.f32 %v2017, %v2672
      %v2764 = vsub.f32 %v2468, %v2672
      %v2765 = vsub.f32 %v2021, %v2673
      %v2766 = vsub.f32 %v2023, %v2673
      %v2767 = vsub.f32 %v2473, %v2673
      %v2768 = vsub.f32 %v2027, %v2674
      %v2769 = vsub.f32 %v2029, %v2674
      %v2770 = vsub.f32 %v2478, %v2674
      %v2771 = vmul.f32 %v2675, %v2675
      %v2772 = vmul.f32 %v2676, %v2676
      %v2773 = vmul.f32 %v2677, %v2677
      %v2774 = vmul.f32 %v2678, %v2678
      %v2775 = vmul.f32 %v2679, %v2679
      %v2776 = vmul.f32 %v2680, %v2680
      %v2777 = vmul.f32 %v2681, %v2681
      %v2778 = vmul.f32 %v2682, %v2682
      %v2779 = vmul.f32 %v2683, %v2683
      %v2780 = vmul.f32 %v2684, %v2684
      %v2781 = vmul.f32 %v2685, %v2685
      %v2782 = vmul.f32 %v2686, %v2686
      %v2783 = vmul.f32 %v2687, %v2687
      %v2784 = vmul.f32 %v2688, %v2688
      %v2785 = vmul.f32 %v2689, %v2689
      %v2786 = vmul.f32 %v2690, %v2690
      %v2787 = vmul.f32 %v2691, %v2691
      %v2788 = vmul.f32 %v2692, %v2692
      %v2789 = vmul.f32 %v2693, %v2693
      %v2790 = vmul.f32 %v2694, %v2694
      %v2791 = vmul.f32 %v2695, %v2695
      %v2792 = vmul.f32 %v2696, %v2696
      %v2793 = vmul.f32 %v2697, %v2697
      %v2794 = vmul.f32 %v2698, %v2698
      %v2795 = vmul.f32 %v2699, %v2699
      %v2796 = vmul.f32 %v2700, %v2700
      %v2797 = vmul.f32 %v2701, %v2701
      %v2798 = vmul.f32 %v2702, %v2702
      %v2799 = vmul.f32 %v2703, %v2703
      %v2800 = vmul.f32 %v2704, %v2704
      %v2801 = vmul.f32 %v2705, %v2705
      %v2802 = vmul.f32 %v2706, %v2706
      %v2803 = vmul.f32 %v2707, %v2707
      %v2804 = vmul.f32 %v2708, %v2708
      %v2805 = vmul.f32 %v2709, %v2709
      %v2806 = vmul.f32 %v2710, %v2710
      %v2807 = vmul.f32 %v2711, %v2711
      %v2808 = vmul.f32 %v2712, %v2712
      %v2809 = vmul.f32 %v2713, %v2713
      %v2810 = vmul.f32 %v2714, %v2714
      %v2811 = vmul.f32 %v2715, %v2715
      %v2812 = vmul.f32 %v2716, %v2716
      %v2813 = vmul.f32 %v2717, %v2717
      %v2814 = vmul.f32 %v2718, %v2718
      %v2815 = vmul.f32 %v2719, %v2719
      %v2816 = vmul.f32 %v2720, %v2720
      %v2817 = vmul.f32 %v2721, %v2721
      %v2818 = vmul.f32 %v2722, %v2722
      %v2819 = vmul.f32 %v2723, %v2723
      %v2820 = vmul.f32 %v2724, %v2724
      %v2821 = vmul.f32 %v2725, %v2725
      %v2822 = vmul.f32 %v2726, %v2726
      %v2823 = vmul.f32 %v2727, %v2727
      %v2824 = vmul.f32 %v2728, %v2728
      %v2825 = vmul.f32 %v2729, %v2729
      %v2826 = vmul.f32 %v2730, %v2730
      %v2827 = vmul.f32 %v2731, %v2731
      %v2828 = vmul.f32 %v2732, %v2732
      %v2829 = vmul.f32 %v2733, %v2733
      %v2830 = vmul.f32 %v2734, %v2734
      %v2831 = vmul.f32 %v2735, %v2735
      %v2832 = vmul.f32 %v2736, %v2736
      %v2833 = vmul.f32 %v2737, %v2737
      %v2834 = vmul.f32 %v2738, %v2738
      %v2835 = vmul.f32 %v2739, %v2739
      %v2836 = vmul.f32 %v2740, %v2740
      %v2837 = vmul.f32 %v2741, %v2741
      %v2838 = vmul.f32 %v2742, %v2742
      %v2839 = vmul.f32 %v2743, %v2743
      %v2840 = vmul.f32 %v2744, %v2744
      %v2841 = vmul.f32 %v2745, %v2745
      %v2842 = vmul.f32 %v2746, %v2746
      %v2843 = vmul.f32 %v2747, %v2747
      %v2844 = vmul.f32 %v2748, %v2748
      %v2845 = vmul.f32 %v2749, %v2749
      %v2846 = vmul.f32 %v2750, %v2750
      %v2847 = vmul.f32 %v2751, %v2751
      %v2848 = vmul.f32 %v2752, %v2752
      %v2849 = vmul.f32 %v2753, %v2753
      %v2850 = vmul.f32 %v2754, %v2754
      %v2851 = vmul.f32 %v2755, %v2755
      %v2852 = vmul.f32 %v2756, %v2756
      %v2853 = vmul.f32 %v2757, %v2757
      %v2854 = vmul.f32 %v2758, %v2758
      %v2855 = vmul.f32 %v2759, %v2759
      %v2856 = vmul.f32 %v2760, %v2760
      %v2857 = vmul.f32 %v2761, %v2761
      %v2858 = vmul.f32 %v2762, %v2762
      %v2859 = vmul.f32 %v2763, %v2763
      %v2860 = vmul.f32 %v2764, %v2764
      %v2861 = vmul.f32 %v2765, %v2765
      %v2862 = vmul.f32 %v2766, %v2766
      %v2863 = vmul.f32 %v2767, %v2767
      %v2864 = vmul.f32 %v2768, %v2768
      %v2865 = vmul.f32 %v2769, %v2769
      %v2866 = vmul.f32 %v2770, %v2770
      %v2867 = vadd.f32 %v2771, %v2772
      %v2868 = vsel %vm2482, %v2773, 0.0
      %v2869 = vadd.f32 %v2867, %v2868
      %2870 = vadd.xlane.f32.xlu0 %v2869
      %v2871 = vpop.xlane.xlu0 %2870
      %v2872 = vadd.f32 %v2774, %v2775
      %v2873 = vsel %vm2482, %v2776, 0.0
      %v2874 = vadd.f32 %v2872, %v2873
      %2875 = vadd.xlane.f32.xlu0 %v2874
      %v2876 = vpop.xlane.xlu0 %2875
      %v2877 = vadd.f32 %v2777, %v2778
      %v2878 = vsel %vm2482, %v2779, 0.0
      %v2879 = vadd.f32 %v2877, %v2878
      %2880 = vadd.xlane.f32.xlu0 %v2879
      %v2881 = vpop.xlane.xlu0 %2880
      %v2882 = vadd.f32 %v2780, %v2781
      %v2883 = vsel %vm2482, %v2782, 0.0
      %v2884 = vadd.f32 %v2882, %v2883
      %2885 = vadd.xlane.f32.xlu0 %v2884
      %v2886 = vpop.xlane.xlu0 %2885
      %v2887 = vadd.f32 %v2783, %v2784
      %v2888 = vsel %vm2482, %v2785, 0.0
      %v2889 = vadd.f32 %v2887, %v2888
      %2890 = vadd.xlane.f32.xlu0 %v2889
      %v2891 = vpop.xlane.xlu0 %2890
      %v2892 = vadd.f32 %v2786, %v2787
      %v2893 = vsel %vm2482, %v2788, 0.0
      %v2894 = vadd.f32 %v2892, %v2893
      %2895 = vadd.xlane.f32.xlu0 %v2894
      %v2896 = vpop.xlane.xlu0 %2895
      %v2897 = vadd.f32 %v2789, %v2790
      %v2898 = vsel %vm2482, %v2791, 0.0
      %v2899 = vadd.f32 %v2897, %v2898
      %2900 = vadd.xlane.f32.xlu0 %v2899
      %v2901 = vpop.xlane.xlu0 %2900
      %v2902 = vadd.f32 %v2792, %v2793
      %v2903 = vsel %vm2482, %v2794, 0.0
      %v2904 = vadd.f32 %v2902, %v2903
      %2905 = vadd.xlane.f32.xlu0 %v2904
      %v2906 = vpop.xlane.xlu0 %2905
      %v2907 = vadd.f32 %v2795, %v2796
      %v2908 = vsel %vm2482, %v2797, 0.0
      %v2909 = vadd.f32 %v2907, %v2908
      %2910 = vadd.xlane.f32.xlu0 %v2909
      %v2911 = vpop.xlane.xlu0 %2910
      %v2912 = vadd.f32 %v2798, %v2799
      %v2913 = vsel %vm2482, %v2800, 0.0
      %v2914 = vadd.f32 %v2912, %v2913
      %2915 = vadd.xlane.f32.xlu0 %v2914
      %v2916 = vpop.xlane.xlu0 %2915
      %v2917 = vadd.f32 %v2801, %v2802
      %v2918 = vsel %vm2482, %v2803, 0.0
      %v2919 = vadd.f32 %v2917, %v2918
      %2920 = vadd.xlane.f32.xlu0 %v2919
      %v2921 = vpop.xlane.xlu0 %2920
      %v2922 = vadd.f32 %v2804, %v2805
      %v2923 = vsel %vm2482, %v2806, 0.0
      %v2924 = vadd.f32 %v2922, %v2923
      %2925 = vadd.xlane.f32.xlu0 %v2924
      %v2926 = vpop.xlane.xlu0 %2925
      %v2927 = vadd.f32 %v2807, %v2808
      %v2928 = vsel %vm2482, %v2809, 0.0
      %v2929 = vadd.f32 %v2927, %v2928
      %2930 = vadd.xlane.f32.xlu0 %v2929
      %v2931 = vpop.xlane.xlu0 %2930
      %v2932 = vadd.f32 %v2810, %v2811
      %v2933 = vsel %vm2482, %v2812, 0.0
      %v2934 = vadd.f32 %v2932, %v2933
      %2935 = vadd.xlane.f32.xlu0 %v2934
      %v2936 = vpop.xlane.xlu0 %2935
      %v2937 = vadd.f32 %v2813, %v2814
      %v2938 = vsel %vm2482, %v2815, 0.0
      %v2939 = vadd.f32 %v2937, %v2938
      %2940 = vadd.xlane.f32.xlu0 %v2939
      %v2941 = vpop.xlane.xlu0 %2940
      %v2942 = vadd.f32 %v2816, %v2817
      %v2943 = vsel %vm2482, %v2818, 0.0
      %v2944 = vadd.f32 %v2942, %v2943
      %2945 = vadd.xlane.f32.xlu0 %v2944
      %v2946 = vpop.xlane.xlu0 %2945
      %v2947 = vadd.f32 %v2819, %v2820
      %v2948 = vsel %vm2482, %v2821, 0.0
      %v2949 = vadd.f32 %v2947, %v2948
      %2950 = vadd.xlane.f32.xlu0 %v2949
      %v2951 = vpop.xlane.xlu0 %2950
      %v2952 = vadd.f32 %v2822, %v2823
      %v2953 = vsel %vm2482, %v2824, 0.0
      %v2954 = vadd.f32 %v2952, %v2953
      %2955 = vadd.xlane.f32.xlu0 %v2954
      %v2956 = vpop.xlane.xlu0 %2955
      %v2957 = vadd.f32 %v2825, %v2826
      %v2958 = vsel %vm2482, %v2827, 0.0
      %v2959 = vadd.f32 %v2957, %v2958
      %2960 = vadd.xlane.f32.xlu0 %v2959
      %v2961 = vpop.xlane.xlu0 %2960
      %v2962 = vadd.f32 %v2828, %v2829
      %v2963 = vsel %vm2482, %v2830, 0.0
      %v2964 = vadd.f32 %v2962, %v2963
      %2965 = vadd.xlane.f32.xlu0 %v2964
      %v2966 = vpop.xlane.xlu0 %2965
      %v2967 = vadd.f32 %v2831, %v2832
      %v2968 = vsel %vm2482, %v2833, 0.0
      %v2969 = vadd.f32 %v2967, %v2968
      %2970 = vadd.xlane.f32.xlu0 %v2969
      %v2971 = vpop.xlane.xlu0 %2970
      %v2972 = vadd.f32 %v2834, %v2835
      %v2973 = vsel %vm2482, %v2836, 0.0
      %v2974 = vadd.f32 %v2972, %v2973
      %2975 = vadd.xlane.f32.xlu0 %v2974
      %v2976 = vpop.xlane.xlu0 %2975
      %v2977 = vadd.f32 %v2837, %v2838
      %v2978 = vsel %vm2482, %v2839, 0.0
      %v2979 = vadd.f32 %v2977, %v2978
      %2980 = vadd.xlane.f32.xlu0 %v2979
      %v2981 = vpop.xlane.xlu0 %2980
      %v2982 = vadd.f32 %v2840, %v2841
      %v2983 = vsel %vm2482, %v2842, 0.0
      %v2984 = vadd.f32 %v2982, %v2983
      %2985 = vadd.xlane.f32.xlu0 %v2984
      %v2986 = vpop.xlane.xlu0 %2985
      %v2987 = vadd.f32 %v2843, %v2844
      %v2988 = vsel %vm2482, %v2845, 0.0
      %v2989 = vadd.f32 %v2987, %v2988
      %2990 = vadd.xlane.f32.xlu0 %v2989
      %v2991 = vpop.xlane.xlu0 %2990
      %v2992 = vadd.f32 %v2846, %v2847
      %v2993 = vsel %vm2482, %v2848, 0.0
      %v2994 = vadd.f32 %v2992, %v2993
      %2995 = vadd.xlane.f32.xlu0 %v2994
      %v2996 = vpop.xlane.xlu0 %2995
      %v2997 = vadd.f32 %v2849, %v2850
      %v2998 = vsel %vm2482, %v2851, 0.0
      %v2999 = vadd.f32 %v2997, %v2998
      %3000 = vadd.xlane.f32.xlu0 %v2999
      %v3001 = vpop.xlane.xlu0 %3000
      %v3002 = vadd.f32 %v2852, %v2853
      %v3003 = vsel %vm2482, %v2854, 0.0
      %v3004 = vadd.f32 %v3002, %v3003
      %3005 = vadd.xlane.f32.xlu0 %v3004
      %v3006 = vpop.xlane.xlu0 %3005
      %v3007 = vadd.f32 %v2855, %v2856
      %v3008 = vsel %vm2482, %v2857, 0.0
      %v3009 = vadd.f32 %v3007, %v3008
      %3010 = vadd.xlane.f32.xlu0 %v3009
      %v3011 = vpop.xlane.xlu0 %3010
      %v3012 = vadd.f32 %v2858, %v2859
      %v3013 = vsel %vm2482, %v2860, 0.0
      %v3014 = vadd.f32 %v3012, %v3013
      %3015 = vadd.xlane.f32.xlu0 %v3014
      %v3016 = vpop.xlane.xlu0 %3015
      %v3017 = vadd.f32 %v2861, %v2862
      %v3018 = vsel %vm2482, %v2863, 0.0
      %v3019 = vadd.f32 %v3017, %v3018
      %3020 = vadd.xlane.f32.xlu0 %v3019
      %v3021 = vpop.xlane.xlu0 %3020
      %v3022 = vadd.f32 %v2864, %v2865
      %v3023 = vsel %vm2482, %v2866, 0.0
      %v3024 = vadd.f32 %v3022, %v3023
      %3025 = vadd.xlane.f32.xlu0 %v3024
      %v3026 = vpop.xlane.xlu0 %3025
      %v3027 = vmul.f32 %v2871, %v2642
      %v3028 = vmul.f32 %v2876, %v2642
      %v3029 = vmul.f32 %v2881, %v2642
      %v3030 = vmul.f32 %v2886, %v2642
      %v3031 = vmul.f32 %v2891, %v2642
      %v3032 = vmul.f32 %v2896, %v2642
      %v3033 = vmul.f32 %v2901, %v2642
      %v3034 = vmul.f32 %v2906, %v2642
      %v3035 = vmul.f32 %v2911, %v2642
      %v3036 = vmul.f32 %v2916, %v2642
      %v3037 = vmul.f32 %v2921, %v2642
      %v3038 = vmul.f32 %v2926, %v2642
      %v3039 = vmul.f32 %v2931, %v2642
      %v3040 = vmul.f32 %v2936, %v2642
      %v3041 = vmul.f32 %v2941, %v2642
      %v3042 = vmul.f32 %v2946, %v2642
      %v3043 = vmul.f32 %v2951, %v2642
      %v3044 = vmul.f32 %v2956, %v2642
      %v3045 = vmul.f32 %v2961, %v2642
      %v3046 = vmul.f32 %v2966, %v2642
      %v3047 = vmul.f32 %v2971, %v2642
      %v3048 = vmul.f32 %v2976, %v2642
      %v3049 = vmul.f32 %v2981, %v2642
      %v3050 = vmul.f32 %v2986, %v2642
      %v3051 = vmul.f32 %v2991, %v2642
      %v3052 = vmul.f32 %v2996, %v2642
      %v3053 = vmul.f32 %v3001, %v2642
      %v3054 = vmul.f32 %v3006, %v2642
      %v3055 = vmul.f32 %v3011, %v2642
      %v3056 = vmul.f32 %v3016, %v2642
      %v3057 = vmul.f32 %v3021, %v2642
      %v3058 = vmul.f32 %v3026, %v2642
      %v3059 = vadd.f32 %v3027, 1e-05
      %v3060 = vadd.f32 %v3028, 1e-05
      %v3061 = vadd.f32 %v3029, 1e-05
      %v3062 = vadd.f32 %v3030, 1e-05
      %v3063 = vadd.f32 %v3031, 1e-05
      %v3064 = vadd.f32 %v3032, 1e-05
      %v3065 = vadd.f32 %v3033, 1e-05
      %v3066 = vadd.f32 %v3034, 1e-05
      %v3067 = vadd.f32 %v3035, 1e-05
      %v3068 = vadd.f32 %v3036, 1e-05
      %v3069 = vadd.f32 %v3037, 1e-05
      %v3070 = vadd.f32 %v3038, 1e-05
      %v3071 = vadd.f32 %v3039, 1e-05
      %v3072 = vadd.f32 %v3040, 1e-05
      %v3073 = vadd.f32 %v3041, 1e-05
      %v3074 = vadd.f32 %v3042, 1e-05
      %v3075 = vadd.f32 %v3043, 1e-05
      %v3076 = vadd.f32 %v3044, 1e-05
      %v3077 = vadd.f32 %v3045, 1e-05
      %v3078 = vadd.f32 %v3046, 1e-05
      %v3079 = vadd.f32 %v3047, 1e-05
      %v3080 = vadd.f32 %v3048, 1e-05
      %v3081 = vadd.f32 %v3049, 1e-05
      %v3082 = vadd.f32 %v3050, 1e-05
      %v3083 = vadd.f32 %v3051, 1e-05
      %v3084 = vadd.f32 %v3052, 1e-05
      %v3085 = vadd.f32 %v3053, 1e-05
      %v3086 = vadd.f32 %v3054, 1e-05
      %v3087 = vadd.f32 %v3055, 1e-05
      %v3088 = vadd.f32 %v3056, 1e-05
      %v3089 = vadd.f32 %v3057, 1e-05
      %v3090 = vadd.f32 %v3058, 1e-05
      %v3091 = vrsqrt.pop %v3059
      %v3092 = vrsqrt.pop %v3060
      %v3093 = vrsqrt.pop %v3061
      %v3094 = vrsqrt.pop %v3062
      %v3095 = vrsqrt.pop %v3063
      %v3096 = vrsqrt.pop %v3064
      %v3097 = vrsqrt.pop %v3065
      %v3098 = vrsqrt.pop %v3066
      %v3099 = vrsqrt.pop %v3067
      %v3100 = vrsqrt.pop %v3068
      %v3101 = vrsqrt.pop %v3069
      %v3102 = vrsqrt.pop %v3070
      %v3103 = vrsqrt.pop %v3071
      %v3104 = vrsqrt.pop %v3072
      %v3105 = vrsqrt.pop %v3073
      %v3106 = vrsqrt.pop %v3074
      %v3107 = vrsqrt.pop %v3075
      %v3108 = vrsqrt.pop %v3076
      %v3109 = vrsqrt.pop %v3077
      %v3110 = vrsqrt.pop %v3078
      %v3111 = vrsqrt.pop %v3079
      %v3112 = vrsqrt.pop %v3080
      %v3113 = vrsqrt.pop %v3081
      %v3114 = vrsqrt.pop %v3082
      %v3115 = vrsqrt.pop %v3083
      %v3116 = vrsqrt.pop %v3084
      %v3117 = vrsqrt.pop %v3085
      %v3118 = vrsqrt.pop %v3086
      %v3119 = vrsqrt.pop %v3087
      %v3120 = vrsqrt.pop %v3088
      %v3121 = vrsqrt.pop %v3089
      %v3122 = vrsqrt.pop %v3090
      %v3123 = vmul.f32 %v2675, %v3091
      %v3124 = vmul.f32 %v2676, %v3091
      %v3125 = vmul.f32 %v2677, %v3091
      %v3126 = vmul.f32 %v2678, %v3092
      %v3127 = vmul.f32 %v2679, %v3092
      %v3128 = vmul.f32 %v2680, %v3092
      %v3129 = vmul.f32 %v2681, %v3093
      %v3130 = vmul.f32 %v2682, %v3093
      %v3131 = vmul.f32 %v2683, %v3093
      %v3132 = vmul.f32 %v2684, %v3094
      %v3133 = vmul.f32 %v2685, %v3094
      %v3134 = vmul.f32 %v2686, %v3094
      %v3135 = vmul.f32 %v2687, %v3095
      %v3136 = vmul.f32 %v2688, %v3095
      %v3137 = vmul.f32 %v2689, %v3095
      %v3138 = vmul.f32 %v2690, %v3096
      %v3139 = vmul.f32 %v2691, %v3096
      %v3140 = vmul.f32 %v2692, %v3096
      %v3141 = vmul.f32 %v2693, %v3097
      %v3142 = vmul.f32 %v2694, %v3097
      %v3143 = vmul.f32 %v2695, %v3097
      %v3144 = vmul.f32 %v2696, %v3098
      %v3145 = vmul.f32 %v2697, %v3098
      %v3146 = vmul.f32 %v2698, %v3098
      %v3147 = vmul.f32 %v2699, %v3099
      %v3148 = vmul.f32 %v2700, %v3099
      %v3149 = vmul.f32 %v2701, %v3099
      %v3150 = vmul.f32 %v2702, %v3100
      %v3151 = vmul.f32 %v2703, %v3100
      %v3152 = vmul.f32 %v2704, %v3100
      %v3153 = vmul.f32 %v2705, %v3101
      %v3154 = vmul.f32 %v2706, %v3101
      %v3155 = vmul.f32 %v2707, %v3101
      %v3156 = vmul.f32 %v2708, %v3102
      %v3157 = vmul.f32 %v2709, %v3102
      %v3158 = vmul.f32 %v2710, %v3102
      %v3159 = vmul.f32 %v2711, %v3103
      %v3160 = vmul.f32 %v2712, %v3103
      %v3161 = vmul.f32 %v2713, %v3103
      %v3162 = vmul.f32 %v2714, %v3104
      %v3163 = vmul.f32 %v2715, %v3104
      %v3164 = vmul.f32 %v2716, %v3104
      %v3165 = vmul.f32 %v2717, %v3105
      %v3166 = vmul.f32 %v2718, %v3105
      %v3167 = vmul.f32 %v2719, %v3105
      %v3168 = vmul.f32 %v2720, %v3106
      %v3169 = vmul.f32 %v2721, %v3106
      %v3170 = vmul.f32 %v2722, %v3106
      %v3171 = vmul.f32 %v2723, %v3107
      %v3172 = vmul.f32 %v2724, %v3107
      %v3173 = vmul.f32 %v2725, %v3107
      %v3174 = vmul.f32 %v2726, %v3108
      %v3175 = vmul.f32 %v2727, %v3108
      %v3176 = vmul.f32 %v2728, %v3108
      %v3177 = vmul.f32 %v2729, %v3109
      %v3178 = vmul.f32 %v2730, %v3109
      %v3179 = vmul.f32 %v2731, %v3109
      %v3180 = vmul.f32 %v2732, %v3110
      %v3181 = vmul.f32 %v2733, %v3110
      %v3182 = vmul.f32 %v2734, %v3110
      %v3183 = vmul.f32 %v2735, %v3111
      %v3184 = vmul.f32 %v2736, %v3111
      %v3185 = vmul.f32 %v2737, %v3111
      %v3186 = vmul.f32 %v2738, %v3112
      %v3187 = vmul.f32 %v2739, %v3112
      %v3188 = vmul.f32 %v2740, %v3112
      %v3189 = vmul.f32 %v2741, %v3113
      %v3190 = vmul.f32 %v2742, %v3113
      %v3191 = vmul.f32 %v2743, %v3113
      %v3192 = vmul.f32 %v2744, %v3114
      %v3193 = vmul.f32 %v2745, %v3114
      %v3194 = vmul.f32 %v2746, %v3114
      %v3195 = vmul.f32 %v2747, %v3115
      %v3196 = vmul.f32 %v2748, %v3115
      %v3197 = vmul.f32 %v2749, %v3115
      %v3198 = vmul.f32 %v2750, %v3116
      %v3199 = vmul.f32 %v2751, %v3116
      %v3200 = vmul.f32 %v2752, %v3116
      %v3201 = vmul.f32 %v2753, %v3117
      %v3202 = vmul.f32 %v2754, %v3117
      %v3203 = vmul.f32 %v2755, %v3117
      %v3204 = vmul.f32 %v2756, %v3118
      %v3205 = vmul.f32 %v2757, %v3118
      %v3206 = vmul.f32 %v2758, %v3118
      %v3207 = vmul.f32 %v2759, %v3119
      %v3208 = vmul.f32 %v2760, %v3119
      %v3209 = vmul.f32 %v2761, %v3119
      %v3210 = vmul.f32 %v2762, %v3120
      %v3211 = vmul.f32 %v2763, %v3120
      %v3212 = vmul.f32 %v2764, %v3120
      %v3213 = vmul.f32 %v2765, %v3121
      %v3214 = vmul.f32 %v2766, %v3121
      %v3215 = vmul.f32 %v2767, %v3121
      %v3216 = vmul.f32 %v2768, %v3122
      %v3217 = vmul.f32 %v2769, %v3122
      %v3218 = vmul.f32 %v2770, %v3122
      %s3219 = scalar_lea.vmem %s3, 1
      %v3220 = vld [vmem:[%s3219] ss:$4 sm:$0x7]
      %v3222 = vlaneseq
      %v3223 = vshrl.u32 %v3222, 7
      %v3224 = vsub.s32 0, %v3223
      %v3225 = vrot.slane %v3220, %v3224
      %v3226 = vlaneseq
      %v3227 = vshrl.u32 %v3226, 7
      %v3228 = vsub.s32 1, %v3227
      %v3229 = vrot.slane %v3220, %v3228
      %v3230 = vlaneseq
      %v3231 = vshrl.u32 %v3230, 7
      %v3232 = vsub.s32 2, %v3231
      %v3233 = vrot.slane %v3220, %v3232
      %v3237 = vmul.f32 %v3123, %v3225
      %v3238 = vmul.f32 %v3124, %v3229
      %v3239 = vmul.f32 %v3125, %v3233
      %v3240 = vmul.f32 %v3126, %v3225
      %v3241 = vmul.f32 %v3127, %v3229
      %v3242 = vmul.f32 %v3128, %v3233
      %v3243 = vmul.f32 %v3129, %v3225
      %v3244 = vmul.f32 %v3130, %v3229
      %v3245 = vmul.f32 %v3131, %v3233
      %v3246 = vmul.f32 %v3132, %v3225
      %v3247 = vmul.f32 %v3133, %v3229
      %v3248 = vmul.f32 %v3134, %v3233
      %v3249 = vmul.f32 %v3135, %v3225
      %v3250 = vmul.f32 %v3136, %v3229
      %v3251 = vmul.f32 %v3137, %v3233
      %v3252 = vmul.f32 %v3138, %v3225
      %v3253 = vmul.f32 %v3139, %v3229
      %v3254 = vmul.f32 %v3140, %v3233
      %v3255 = vmul.f32 %v3141, %v3225
      %v3256 = vmul.f32 %v3142, %v3229
      %v3257 = vmul.f32 %v3143, %v3233
      %v3258 = vmul.f32 %v3144, %v3225
      %v3259 = vmul.f32 %v3145, %v3229
      %v3260 = vmul.f32 %v3146, %v3233
      %v3261 = vmul.f32 %v3147, %v3225
      %v3262 = vmul.f32 %v3148, %v3229
      %v3263 = vmul.f32 %v3149, %v3233
      %v3264 = vmul.f32 %v3150, %v3225
      %v3265 = vmul.f32 %v3151, %v3229
      %v3266 = vmul.f32 %v3152, %v3233
      %v3267 = vmul.f32 %v3153, %v3225
      %v3268 = vmul.f32 %v3154, %v3229
      %v3269 = vmul.f32 %v3155, %v3233
      %v3270 = vmul.f32 %v3156, %v3225
      %v3271 = vmul.f32 %v3157, %v3229
      %v3272 = vmul.f32 %v3158, %v3233
      %v3273 = vmul.f32 %v3159, %v3225
      %v3274 = vmul.f32 %v3160, %v3229
      %v3275 = vmul.f32 %v3161, %v3233
      %v3276 = vmul.f32 %v3162, %v3225
      %v3277 = vmul.f32 %v3163, %v3229
      %v3278 = vmul.f32 %v3164, %v3233
      %v3279 = vmul.f32 %v3165, %v3225
      %v3280 = vmul.f32 %v3166, %v3229
      %v3281 = vmul.f32 %v3167, %v3233
      %v3282 = vmul.f32 %v3168, %v3225
      %v3283 = vmul.f32 %v3169, %v3229
      %v3284 = vmul.f32 %v3170, %v3233
      %v3285 = vmul.f32 %v3171, %v3225
      %v3286 = vmul.f32 %v3172, %v3229
      %v3287 = vmul.f32 %v3173, %v3233
      %v3288 = vmul.f32 %v3174, %v3225
      %v3289 = vmul.f32 %v3175, %v3229
      %v3290 = vmul.f32 %v3176, %v3233
      %v3291 = vmul.f32 %v3177, %v3225
      %v3292 = vmul.f32 %v3178, %v3229
      %v3293 = vmul.f32 %v3179, %v3233
      %v3294 = vmul.f32 %v3180, %v3225
      %v3295 = vmul.f32 %v3181, %v3229
      %v3296 = vmul.f32 %v3182, %v3233
      %v3297 = vmul.f32 %v3183, %v3225
      %v3298 = vmul.f32 %v3184, %v3229
      %v3299 = vmul.f32 %v3185, %v3233
      %v3300 = vmul.f32 %v3186, %v3225
      %v3301 = vmul.f32 %v3187, %v3229
      %v3302 = vmul.f32 %v3188, %v3233
      %v3303 = vmul.f32 %v3189, %v3225
      %v3304 = vmul.f32 %v3190, %v3229
      %v3305 = vmul.f32 %v3191, %v3233
      %v3306 = vmul.f32 %v3192, %v3225
      %v3307 = vmul.f32 %v3193, %v3229
      %v3308 = vmul.f32 %v3194, %v3233
      %v3309 = vmul.f32 %v3195, %v3225
      %v3310 = vmul.f32 %v3196, %v3229
      %v3311 = vmul.f32 %v3197, %v3233
      %v3312 = vmul.f32 %v3198, %v3225
      %v3313 = vmul.f32 %v3199, %v3229
      %v3314 = vmul.f32 %v3200, %v3233
      %v3315 = vmul.f32 %v3201, %v3225
      %v3316 = vmul.f32 %v3202, %v3229
      %v3317 = vmul.f32 %v3203, %v3233
      %v3318 = vmul.f32 %v3204, %v3225
      %v3319 = vmul.f32 %v3205, %v3229
      %v3320 = vmul.f32 %v3206, %v3233
      %v3321 = vmul.f32 %v3207, %v3225
      %v3322 = vmul.f32 %v3208, %v3229
      %v3323 = vmul.f32 %v3209, %v3233
      %v3324 = vmul.f32 %v3210, %v3225
      %v3325 = vmul.f32 %v3211, %v3229
      %v3326 = vmul.f32 %v3212, %v3233
      %v3327 = vmul.f32 %v3213, %v3225
      %v3328 = vmul.f32 %v3214, %v3229
      %v3329 = vmul.f32 %v3215, %v3233
      %v3330 = vmul.f32 %v3216, %v3225
      %v3331 = vmul.f32 %v3217, %v3229
      %v3332 = vmul.f32 %v3218, %v3233
      %s3333 = scalar_lea.vmem %s3, 2
      %v3334 = vld [vmem:[%s3333] ss:$4 sm:$0x7]
      %v3336 = vlaneseq
      %v3337 = vshrl.u32 %v3336, 7
      %v3338 = vsub.s32 0, %v3337
      %v3339 = vrot.slane %v3334, %v3338
      %v3340 = vlaneseq
      %v3341 = vshrl.u32 %v3340, 7
      %v3342 = vsub.s32 1, %v3341
      %v3343 = vrot.slane %v3334, %v3342
      %v3344 = vlaneseq
      %v3345 = vshrl.u32 %v3344, 7
      %v3346 = vsub.s32 2, %v3345
      %v3347 = vrot.slane %v3334, %v3346
      %v3351 = vadd.f32 %v3237, %v3339
      %v3352 = vadd.f32 %v3238, %v3343
      %v3353 = vadd.f32 %v3239, %v3347
      %v3354 = vadd.f32 %v3240, %v3339
      %v3355 = vadd.f32 %v3241, %v3343
      %v3356 = vadd.f32 %v3242, %v3347
      %v3357 = vadd.f32 %v3243, %v3339
      %v3358 = vadd.f32 %v3244, %v3343
      %v3359 = vadd.f32 %v3245, %v3347
      %v3360 = vadd.f32 %v3246, %v3339
      %v3361 = vadd.f32 %v3247, %v3343
      %v3362 = vadd.f32 %v3248, %v3347
      %v3363 = vadd.f32 %v3249, %v3339
      %v3364 = vadd.f32 %v3250, %v3343
      %v3365 = vadd.f32 %v3251, %v3347
      %v3366 = vadd.f32 %v3252, %v3339
      %v3367 = vadd.f32 %v3253, %v3343
      %v3368 = vadd.f32 %v3254, %v3347
      %v3369 = vadd.f32 %v3255, %v3339
      %v3370 = vadd.f32 %v3256, %v3343
      %v3371 = vadd.f32 %v3257, %v3347
      %v3372 = vadd.f32 %v3258, %v3339
      %v3373 = vadd.f32 %v3259, %v3343
      %v3374 = vadd.f32 %v3260, %v3347
      %v3375 = vadd.f32 %v3261, %v3339
      %v3376 = vadd.f32 %v3262, %v3343
      %v3377 = vadd.f32 %v3263, %v3347
      %v3378 = vadd.f32 %v3264, %v3339
      %v3379 = vadd.f32 %v3265, %v3343
      %v3380 = vadd.f32 %v3266, %v3347
      %v3381 = vadd.f32 %v3267, %v3339
      %v3382 = vadd.f32 %v3268, %v3343
      %v3383 = vadd.f32 %v3269, %v3347
      %v3384 = vadd.f32 %v3270, %v3339
      %v3385 = vadd.f32 %v3271, %v3343
      %v3386 = vadd.f32 %v3272, %v3347
      %v3387 = vadd.f32 %v3273, %v3339
      %v3388 = vadd.f32 %v3274, %v3343
      %v3389 = vadd.f32 %v3275, %v3347
      %v3390 = vadd.f32 %v3276, %v3339
      %v3391 = vadd.f32 %v3277, %v3343
      %v3392 = vadd.f32 %v3278, %v3347
      %v3393 = vadd.f32 %v3279, %v3339
      %v3394 = vadd.f32 %v3280, %v3343
      %v3395 = vadd.f32 %v3281, %v3347
      %v3396 = vadd.f32 %v3282, %v3339
      %v3397 = vadd.f32 %v3283, %v3343
      %v3398 = vadd.f32 %v3284, %v3347
      %v3399 = vadd.f32 %v3285, %v3339
      %v3400 = vadd.f32 %v3286, %v3343
      %v3401 = vadd.f32 %v3287, %v3347
      %v3402 = vadd.f32 %v3288, %v3339
      %v3403 = vadd.f32 %v3289, %v3343
      %v3404 = vadd.f32 %v3290, %v3347
      %v3405 = vadd.f32 %v3291, %v3339
      %v3406 = vadd.f32 %v3292, %v3343
      %v3407 = vadd.f32 %v3293, %v3347
      %v3408 = vadd.f32 %v3294, %v3339
      %v3409 = vadd.f32 %v3295, %v3343
      %v3410 = vadd.f32 %v3296, %v3347
      %v3411 = vadd.f32 %v3297, %v3339
      %v3412 = vadd.f32 %v3298, %v3343
      %v3413 = vadd.f32 %v3299, %v3347
      %v3414 = vadd.f32 %v3300, %v3339
      %v3415 = vadd.f32 %v3301, %v3343
      %v3416 = vadd.f32 %v3302, %v3347
      %v3417 = vadd.f32 %v3303, %v3339
      %v3418 = vadd.f32 %v3304, %v3343
      %v3419 = vadd.f32 %v3305, %v3347
      %v3420 = vadd.f32 %v3306, %v3339
      %v3421 = vadd.f32 %v3307, %v3343
      %v3422 = vadd.f32 %v3308, %v3347
      %v3423 = vadd.f32 %v3309, %v3339
      %v3424 = vadd.f32 %v3310, %v3343
      %v3425 = vadd.f32 %v3311, %v3347
      %v3426 = vadd.f32 %v3312, %v3339
      %v3427 = vadd.f32 %v3313, %v3343
      %v3428 = vadd.f32 %v3314, %v3347
      %v3429 = vadd.f32 %v3315, %v3339
      %v3430 = vadd.f32 %v3316, %v3343
      %v3431 = vadd.f32 %v3317, %v3347
      %v3432 = vadd.f32 %v3318, %v3339
      %v3433 = vadd.f32 %v3319, %v3343
      %v3434 = vadd.f32 %v3320, %v3347
      %v3435 = vadd.f32 %v3321, %v3339
      %v3436 = vadd.f32 %v3322, %v3343
      %v3437 = vadd.f32 %v3323, %v3347
      %v3438 = vadd.f32 %v3324, %v3339
      %v3439 = vadd.f32 %v3325, %v3343
      %v3440 = vadd.f32 %v3326, %v3347
      %v3441 = vadd.f32 %v3327, %v3339
      %v3442 = vadd.f32 %v3328, %v3343
      %v3443 = vadd.f32 %v3329, %v3347
      %v3444 = vadd.f32 %v3330, %v3339
      %v3445 = vadd.f32 %v3331, %v3343
      %v3446 = vadd.f32 %v3332, %v3347
      %v3447 = vmax.f32 %v3351, 0.0
      %v3448 = vmax.f32 %v3352, 0.0
      %v3449 = vmax.f32 %v3353, 0.0
      %v3450 = vmax.f32 %v3354, 0.0
      %v3451 = vmax.f32 %v3355, 0.0
      %v3452 = vmax.f32 %v3356, 0.0
      %v3453 = vmax.f32 %v3357, 0.0
      %v3454 = vmax.f32 %v3358, 0.0
      %v3455 = vmax.f32 %v3359, 0.0
      %v3456 = vmax.f32 %v3360, 0.0
      %v3457 = vmax.f32 %v3361, 0.0
      %v3458 = vmax.f32 %v3362, 0.0
      %v3459 = vmax.f32 %v3363, 0.0
      %v3460 = vmax.f32 %v3364, 0.0
      %v3461 = vmax.f32 %v3365, 0.0
      %v3462 = vmax.f32 %v3366, 0.0
      %v3463 = vmax.f32 %v3367, 0.0
      %v3464 = vmax.f32 %v3368, 0.0
      %v3465 = vmax.f32 %v3369, 0.0
      %v3466 = vmax.f32 %v3370, 0.0
      %v3467 = vmax.f32 %v3371, 0.0
      %v3468 = vmax.f32 %v3372, 0.0
      %v3469 = vmax.f32 %v3373, 0.0
      %v3470 = vmax.f32 %v3374, 0.0
      %v3471 = vmax.f32 %v3375, 0.0
      %v3472 = vmax.f32 %v3376, 0.0
      %v3473 = vmax.f32 %v3377, 0.0
      %v3474 = vmax.f32 %v3378, 0.0
      %v3475 = vmax.f32 %v3379, 0.0
      %v3476 = vmax.f32 %v3380, 0.0
      %v3477 = vmax.f32 %v3381, 0.0
      %v3478 = vmax.f32 %v3382, 0.0
      %v3479 = vmax.f32 %v3383, 0.0
      %v3480 = vmax.f32 %v3384, 0.0
      %v3481 = vmax.f32 %v3385, 0.0
      %v3482 = vmax.f32 %v3386, 0.0
      %v3483 = vmax.f32 %v3387, 0.0
      %v3484 = vmax.f32 %v3388, 0.0
      %v3485 = vmax.f32 %v3389, 0.0
      %v3486 = vmax.f32 %v3390, 0.0
      %v3487 = vmax.f32 %v3391, 0.0
      %v3488 = vmax.f32 %v3392, 0.0
      %v3489 = vmax.f32 %v3393, 0.0
      %v3490 = vmax.f32 %v3394, 0.0
      %v3491 = vmax.f32 %v3395, 0.0
      %v3492 = vmax.f32 %v3396, 0.0
      %v3493 = vmax.f32 %v3397, 0.0
      %v3494 = vmax.f32 %v3398, 0.0
      %v3495 = vmax.f32 %v3399, 0.0
      %v3496 = vmax.f32 %v3400, 0.0
      %v3497 = vmax.f32 %v3401, 0.0
      %v3498 = vmax.f32 %v3402, 0.0
      %v3499 = vmax.f32 %v3403, 0.0
      %v3500 = vmax.f32 %v3404, 0.0
      %v3501 = vmax.f32 %v3405, 0.0
      %v3502 = vmax.f32 %v3406, 0.0
      %v3503 = vmax.f32 %v3407, 0.0
      %v3504 = vmax.f32 %v3408, 0.0
      %v3505 = vmax.f32 %v3409, 0.0
      %v3506 = vmax.f32 %v3410, 0.0
      %v3507 = vmax.f32 %v3411, 0.0
      %v3508 = vmax.f32 %v3412, 0.0
      %v3509 = vmax.f32 %v3413, 0.0
      %v3510 = vmax.f32 %v3414, 0.0
      %v3511 = vmax.f32 %v3415, 0.0
      %v3512 = vmax.f32 %v3416, 0.0
      %v3513 = vmax.f32 %v3417, 0.0
      %v3514 = vmax.f32 %v3418, 0.0
      %v3515 = vmax.f32 %v3419, 0.0
      %v3516 = vmax.f32 %v3420, 0.0
      %v3517 = vmax.f32 %v3421, 0.0
      %v3518 = vmax.f32 %v3422, 0.0
      %v3519 = vmax.f32 %v3423, 0.0
      %v3520 = vmax.f32 %v3424, 0.0
      %v3521 = vmax.f32 %v3425, 0.0
      %v3522 = vmax.f32 %v3426, 0.0
      %v3523 = vmax.f32 %v3427, 0.0
      %v3524 = vmax.f32 %v3428, 0.0
      %v3525 = vmax.f32 %v3429, 0.0
      %v3526 = vmax.f32 %v3430, 0.0
      %v3527 = vmax.f32 %v3431, 0.0
      %v3528 = vmax.f32 %v3432, 0.0
      %v3529 = vmax.f32 %v3433, 0.0
      %v3530 = vmax.f32 %v3434, 0.0
      %v3531 = vmax.f32 %v3435, 0.0
      %v3532 = vmax.f32 %v3436, 0.0
      %v3533 = vmax.f32 %v3437, 0.0
      %v3534 = vmax.f32 %v3438, 0.0
      %v3535 = vmax.f32 %v3439, 0.0
      %v3536 = vmax.f32 %v3440, 0.0
      %v3537 = vmax.f32 %v3441, 0.0
      %v3538 = vmax.f32 %v3442, 0.0
      %v3539 = vmax.f32 %v3443, 0.0
      %v3540 = vmax.f32 %v3444, 0.0
      %v3541 = vmax.f32 %v3445, 0.0
      %v3542 = vmax.f32 %v3446, 0.0
      %v3543 = vld [vmem:[%s4] sm:$0xff]
      %v3544 = vld [vmem:[%s4 + $0x8] sm:$0xff]
      %v3545 = vld [vmem:[%s4 + $0x10] sm:$0xff]
      %v3546 = vld [vmem:[%s4 + $0x18] sm:$0xff]
      %v3547 = vld [vmem:[%s4 + $0x20] sm:$0xff]
      %v3548 = vld [vmem:[%s4 + $0x28] sm:$0xff]
      %v3549 = vld [vmem:[%s4 + $0x30] sm:$0xff]
      %v3550 = vld [vmem:[%s4 + $0x38] sm:$0xff]
      %v3551 = vld [vmem:[%s4 + $0x40] sm:$0xff]
      %v3552 = vld [vmem:[%s4 + $0x48] sm:$0xff]
      %v3553 = vld [vmem:[%s4 + $0x50] sm:$0xff]
      %v3554 = vld [vmem:[%s4 + $0x58] sm:$0xff]
      %v3555 = vld [vmem:[%s4 + $0x60] sm:$0xff]
      %v3556 = vld [vmem:[%s4 + $0x68] sm:$0xff]
      %v3557 = vld [vmem:[%s4 + $0x70] sm:$0xff]
      %v3558 = vld [vmem:[%s4 + $0x78] sm:$0xff]
      %v3559 = vld [vmem:[%s4 + $0x80] sm:$0xff]
      %v3560 = vld [vmem:[%s4 + $0x88] sm:$0xff]
      %v3561 = vld [vmem:[%s4 + $0x90] sm:$0xff]
      %v3562 = vld [vmem:[%s4 + $0x98] sm:$0xff]
      %v3563 = vld [vmem:[%s4 + $0xa0] sm:$0xff]
      %v3564 = vld [vmem:[%s4 + $0xa8] sm:$0xff]
      %v3565 = vld [vmem:[%s4 + $0xb0] sm:$0xff]
      %v3566 = vld [vmem:[%s4 + $0xb8] sm:$0xff]
      %v3567 = vld [vmem:[%s4 + $0xc0] sm:$0xff]
      %v3568 = vld [vmem:[%s4 + $0xc8] sm:$0xff]
      %v3569 = vld [vmem:[%s4 + $0xd0] sm:$0xff]
      %v3570 = vld [vmem:[%s4 + $0xd8] sm:$0xff]
      %v3571 = vld [vmem:[%s4 + $0xe0] sm:$0xff]
      %v3572 = vld [vmem:[%s4 + $0xe8] sm:$0xff]
      %v3573 = vld [vmem:[%s4 + $0xf0] sm:$0xff]
      %v3574 = vld [vmem:[%s4 + $0xf8] sm:$0xff]
      %v3575 = vld [vmem:[%s4 + $0x100] sm:$0xff]
      %v3576 = vld [vmem:[%s4 + $0x108] sm:$0xff]
      %v3577 = vld [vmem:[%s4 + $0x110] sm:$0xff]
      %v3578 = vld [vmem:[%s4 + $0x118] sm:$0xff]
      %v3579 = vld [vmem:[%s4 + $0x120] sm:$0xff]
      %v3580 = vld [vmem:[%s4 + $0x128] sm:$0xff]
      %v3581 = vld [vmem:[%s4 + $0x130] sm:$0xff]
      %v3582 = vld [vmem:[%s4 + $0x138] sm:$0xff]
      %v3583 = vld [vmem:[%s4 + $0x140] sm:$0xff]
      %v3584 = vld [vmem:[%s4 + $0x148] sm:$0xff]
      %v3585 = vld [vmem:[%s4 + $0x150] sm:$0xff]
      %v3586 = vld [vmem:[%s4 + $0x158] sm:$0xff]
      %v3587 = vld [vmem:[%s4 + $0x160] sm:$0xff]
      %v3588 = vld [vmem:[%s4 + $0x168] sm:$0xff]
      %v3589 = vld [vmem:[%s4 + $0x170] sm:$0xff]
      %v3590 = vld [vmem:[%s4 + $0x178] sm:$0xff]
      %v3591 = vld [vmem:[%s4 + $0x180] sm:$0xff]
      %v3592 = vld [vmem:[%s4 + $0x188] sm:$0xff]
      %v3593 = vld [vmem:[%s4 + $0x190] sm:$0xff]
      %v3594 = vld [vmem:[%s4 + $0x198] sm:$0xff]
      %v3595 = vld [vmem:[%s4 + $0x1a0] sm:$0xff]
      %v3596 = vld [vmem:[%s4 + $0x1a8] sm:$0xff]
      %v3597 = vld [vmem:[%s4 + $0x1b0] sm:$0xff]
      %v3598 = vld [vmem:[%s4 + $0x1b8] sm:$0xff]
      %v3599 = vld [vmem:[%s4 + $0x1c0] sm:$0xff]
      %v3600 = vld [vmem:[%s4 + $0x1c8] sm:$0xff]
      %v3601 = vld [vmem:[%s4 + $0x1d0] sm:$0xff]
      %v3602 = vld [vmem:[%s4 + $0x1d8] sm:$0xff]
      %v3603 = vld [vmem:[%s4 + $0x1e0] sm:$0xff]
      %v3604 = vld [vmem:[%s4 + $0x1e8] sm:$0xff]
      %v3605 = vld [vmem:[%s4 + $0x1f0] sm:$0xff]
      %v3606 = vld [vmem:[%s4 + $0x1f8] sm:$0xff]
      %v3607 = vld [vmem:[%s4 + $0x200] sm:$0xff]
      %v3608 = vld [vmem:[%s4 + $0x208] sm:$0xff]
      %v3609 = vld [vmem:[%s4 + $0x210] sm:$0xff]
      %v3610 = vld [vmem:[%s4 + $0x218] sm:$0xff]
      %v3611 = vld [vmem:[%s4 + $0x220] sm:$0xff]
      %v3612 = vld [vmem:[%s4 + $0x228] sm:$0xff]
      %v3613 = vld [vmem:[%s4 + $0x230] sm:$0xff]
      %v3614 = vld [vmem:[%s4 + $0x238] sm:$0xff]
      %v3615 = vld [vmem:[%s4 + $0x240] sm:$0xff]
      %v3616 = vld [vmem:[%s4 + $0x248] sm:$0xff]
      %v3617 = vld [vmem:[%s4 + $0x250] sm:$0xff]
      %v3618 = vld [vmem:[%s4 + $0x258] sm:$0xff]
      %v3619 = vld [vmem:[%s4 + $0x260] sm:$0xff]
      %v3620 = vld [vmem:[%s4 + $0x268] sm:$0xff]
      %v3621 = vld [vmem:[%s4 + $0x270] sm:$0xff]
      %v3622 = vld [vmem:[%s4 + $0x278] sm:$0xff]
      %v3623 = vld [vmem:[%s4 + $0x280] sm:$0xff]
      %v3624 = vld [vmem:[%s4 + $0x288] sm:$0xff]
      %v3625 = vld [vmem:[%s4 + $0x290] sm:$0xff]
      %v3626 = vld [vmem:[%s4 + $0x298] sm:$0xff]
      %v3627 = vld [vmem:[%s4 + $0x2a0] sm:$0xff]
      %v3628 = vld [vmem:[%s4 + $0x2a8] sm:$0xff]
      %v3629 = vld [vmem:[%s4 + $0x2b0] sm:$0xff]
      %v3630 = vld [vmem:[%s4 + $0x2b8] sm:$0xff]
      %v3631 = vld [vmem:[%s4 + $0x2c0] sm:$0xff]
      %v3632 = vld [vmem:[%s4 + $0x2c8] sm:$0xff]
      %v3633 = vld [vmem:[%s5] ss:$4 sm:$0x3]
      %v3635 = vlaneseq
      %v3636 = vshrl.u32 %v3635, 7
      %v3637 = vsub.s32 0, %v3636
      %v3638 = vrot.slane %v3633, %v3637
      %v3639 = vlaneseq
      %v3640 = vshrl.u32 %v3639, 7
      %v3641 = vsub.s32 1, %v3640
      %v3642 = vrot.slane %v3633, %v3641
      %v3646 = vsel %vm2482, %v3449, 0
      %v3649 = vsel %vm2482, %v3452, 0
      %v3652 = vsel %vm2482, %v3455, 0
      %v3655 = vsel %vm2482, %v3458, 0
      %v3658 = vsel %vm2482, %v3461, 0
      %v3661 = vsel %vm2482, %v3464, 0
      %v3664 = vsel %vm2482, %v3467, 0
      %v3667 = vsel %vm2482, %v3470, 0
      %v3670 = vsel %vm2482, %v3473, 0
      %v3673 = vsel %vm2482, %v3476, 0
      %v3676 = vsel %vm2482, %v3479, 0
      %v3679 = vsel %vm2482, %v3482, 0
      %v3682 = vsel %vm2482, %v3485, 0
      %v3685 = vsel %vm2482, %v3488, 0
      %v3688 = vsel %vm2482, %v3491, 0
      %v3691 = vsel %vm2482, %v3494, 0
      %v3694 = vsel %vm2482, %v3497, 0
      %v3697 = vsel %vm2482, %v3500, 0
      %v3700 = vsel %vm2482, %v3503, 0
      %v3703 = vsel %vm2482, %v3506, 0
      %v3706 = vsel %vm2482, %v3509, 0
      %v3709 = vsel %vm2482, %v3512, 0
      %v3712 = vsel %vm2482, %v3515, 0
      %v3715 = vsel %vm2482, %v3518, 0
      %v3718 = vsel %vm2482, %v3521, 0
      %v3721 = vsel %vm2482, %v3524, 0
      %v3724 = vsel %vm2482, %v3527, 0
      %v3727 = vsel %vm2482, %v3530, 0
      %v3730 = vsel %vm2482, %v3533, 0
      %v3733 = vsel %vm2482, %v3536, 0
      %v3736 = vsel %vm2482, %v3539, 0
      %v3739 = vsel %vm2482, %v3542, 0
      %3741 = vmatprep.subr.mxu0 %v3574
      %3742 = vmatpush1.msra.mxu0 %v3573
      %3743 = vmatprep.subr.mxu0 %v3572
      %3744 = vmatpush1.msra.mxu0 %v3571
      %3745 = vmatprep.subr.mxu0 %v3570
      %3746 = vmatpush1.msra.mxu0 %v3569
      %3747 = vmatprep.subr.mxu0 %v3568
      %3748 = vmatpush1.msra.mxu0 %v3567
      %3749 = vmatprep.subr.mxu0 %v3566
      %3750 = vmatpush1.msra.mxu0 %v3565
      %3751 = vmatprep.subr.mxu0 %v3564
      %3752 = vmatpush1.msra.mxu0 %v3563
      %3753 = vmatprep.subr.mxu0 %v3562
      %3754 = vmatpush1.msra.mxu0 %v3561
      %3755 = vmatprep.subr.mxu0 %v3560
      %3756 = vmatpush1.msra.mxu0 %v3559
      %3757 = vmatprep.subr.mxu0 %v3558
      %3758 = vmatpush1.msra.mxu0 %v3557
      %3759 = vmatprep.subr.mxu0 %v3556
      %3760 = vmatpush1.msra.mxu0 %v3555
      %3761 = vmatprep.subr.mxu0 %v3554
      %3762 = vmatpush1.msra.mxu0 %v3553
      %3763 = vmatprep.subr.mxu0 %v3552
      %3764 = vmatpush1.msra.mxu0 %v3551
      %3765 = vmatprep.subr.mxu0 %v3550
      %3766 = vmatpush1.msra.mxu0 %v3549
      %3767 = vmatprep.subr.mxu0 %v3548
      %3768 = vmatpush1.msra.mxu0 %v3547
      %3769 = vmatprep.subr.mxu0 %v3546
      %3770 = vmatpush1.msra.mxu0 %v3545
      %3771 = vmatprep.subr.mxu0 %v3544
      %3772 = vmatpush1.msra.mxu0 %v3543
      %3773 = vmatprep.subr.mxu0 %v3606
      %3774 = vmatpush2.msra.mxu0 %v3605
      %3775 = vmatprep.subr.mxu0 %v3604
      %3776 = vmatpush2.msra.mxu0 %v3603
      %3777 = vmatprep.subr.mxu0 %v3602
      %3778 = vmatpush2.msra.mxu0 %v3601
      %3779 = vmatprep.subr.mxu0 %v3600
      %3780 = vmatpush2.msra.mxu0 %v3599
      %3781 = vmatprep.subr.mxu0 %v3598
      %3782 = vmatpush2.msra.mxu0 %v3597
      %3783 = vmatprep.subr.mxu0 %v3596
      %3784 = vmatpush2.msra.mxu0 %v3595
      %3785 = vmatprep.subr.mxu0 %v3594
      %3786 = vmatpush2.msra.mxu0 %v3593
      %3787 = vmatprep.subr.mxu0 %v3592
      %3788 = vmatpush2.msra.mxu0 %v3591
      %3789 = vmatprep.subr.mxu0 %v3590
      %3790 = vmatpush2.msra.mxu0 %v3589
      %3791 = vmatprep.subr.mxu0 %v3588
      %3792 = vmatpush2.msra.mxu0 %v3587
      %3793 = vmatprep.subr.mxu0 %v3586
      %3794 = vmatpush2.msra.mxu0 %v3585
      %3795 = vmatprep.subr.mxu0 %v3584
      %3796 = vmatpush2.msra.mxu0 %v3583
      %3797 = vmatprep.subr.mxu0 %v3582
      %3798 = vmatpush2.msra.mxu0 %v3581
      %3799 = vmatprep.subr.mxu0 %v3580
      %3800 = vmatpush2.msra.mxu0 %v3579
      %3801 = vmatprep.subr.mxu0 %v3578
      %3802 = vmatpush2.msra.mxu0 %v3577
      %3803 = vmatprep.subr.mxu0 %v3576
      %3804 = vmatpush2.msra.mxu0 %v3575
      %3805 = vmatprep.mubr.f32.mxu0 %v3448
      %3806 = vmatmul.mubr.f32.gmra.mxu0 %v3447
      %v3807 = vpop.f32.mrf.mxu0
      %v3808 = vadd.f32 %v3638, %v3807
      %v3809 = vpop.f32.mrf.mxu0
      %v3810 = vadd.f32 %v3642, %v3809
      %3811 = vmatprep.mubr.f32.mxu0 %v3451
      %3812 = vmatmul.mubr.f32.gmra.mxu0 %v3450
      %v3813 = vpop.f32.mrf.mxu0
      %v3814 = vadd.f32 %v3638, %v3813
      %v3815 = vpop.f32.mrf.mxu0
      %v3816 = vadd.f32 %v3642, %v3815
      %3817 = vmatprep.mubr.f32.mxu0 %v3454
      %3818 = vmatmul.mubr.f32.gmra.mxu0 %v3453
      %v3819 = vpop.f32.mrf.mxu0
      %v3820 = vadd.f32 %v3638, %v3819
      %v3821 = vpop.f32.mrf.mxu0
      %v3822 = vadd.f32 %v3642, %v3821
      %3823 = vmatprep.mubr.f32.mxu0 %v3457
      %3824 = vmatmul.mubr.f32.gmra.mxu0 %v3456
      %v3825 = vpop.f32.mrf.mxu0
      %v3826 = vadd.f32 %v3638, %v3825
      %v3827 = vpop.f32.mrf.mxu0
      %v3828 = vadd.f32 %v3642, %v3827
      %3829 = vmatprep.mubr.f32.mxu0 %v3460
      %3830 = vmatmul.mubr.f32.gmra.mxu0 %v3459
      %v3831 = vpop.f32.mrf.mxu0
      %v3832 = vadd.f32 %v3638, %v3831
      %v3833 = vpop.f32.mrf.mxu0
      %v3834 = vadd.f32 %v3642, %v3833
      %3835 = vmatprep.mubr.f32.mxu0 %v3463
      %3836 = vmatmul.mubr.f32.gmra.mxu0 %v3462
      %v3837 = vpop.f32.mrf.mxu0
      %v3838 = vadd.f32 %v3638, %v3837
      %v3839 = vpop.f32.mrf.mxu0
      %v3840 = vadd.f32 %v3642, %v3839
      %3841 = vmatprep.mubr.f32.mxu0 %v3466
      %3842 = vmatmul.mubr.f32.gmra.mxu0 %v3465
      %v3843 = vpop.f32.mrf.mxu0
      %v3844 = vadd.f32 %v3638, %v3843
      %v3845 = vpop.f32.mrf.mxu0
      %v3846 = vadd.f32 %v3642, %v3845
      %3847 = vmatprep.mubr.f32.mxu0 %v3469
      %3848 = vmatmul.mubr.f32.gmra.mxu0 %v3468
      %v3849 = vpop.f32.mrf.mxu0
      %v3850 = vadd.f32 %v3638, %v3849
      %v3851 = vpop.f32.mrf.mxu0
      %v3852 = vadd.f32 %v3642, %v3851
      %3853 = vmatprep.mubr.f32.mxu0 %v3472
      %3854 = vmatmul.mubr.f32.gmra.mxu0 %v3471
      %v3855 = vpop.f32.mrf.mxu0
      %v3856 = vadd.f32 %v3638, %v3855
      %v3857 = vpop.f32.mrf.mxu0
      %v3858 = vadd.f32 %v3642, %v3857
      %3859 = vmatprep.mubr.f32.mxu0 %v3475
      %3860 = vmatmul.mubr.f32.gmra.mxu0 %v3474
      %v3861 = vpop.f32.mrf.mxu0
      %v3862 = vadd.f32 %v3638, %v3861
      %v3863 = vpop.f32.mrf.mxu0
      %v3864 = vadd.f32 %v3642, %v3863
      %3865 = vmatprep.mubr.f32.mxu0 %v3478
      %3866 = vmatmul.mubr.f32.gmra.mxu0 %v3477
      %v3867 = vpop.f32.mrf.mxu0
      %v3868 = vadd.f32 %v3638, %v3867
      %v3869 = vpop.f32.mrf.mxu0
      %v3870 = vadd.f32 %v3642, %v3869
      %3871 = vmatprep.mubr.f32.mxu0 %v3481
      %3872 = vmatmul.mubr.f32.gmra.mxu0 %v3480
      %v3873 = vpop.f32.mrf.mxu0
      %v3874 = vadd.f32 %v3638, %v3873
      %v3875 = vpop.f32.mrf.mxu0
      %v3876 = vadd.f32 %v3642, %v3875
      %3877 = vmatprep.mubr.f32.mxu0 %v3484
      %3878 = vmatmul.mubr.f32.gmra.mxu0 %v3483
      %v3879 = vpop.f32.mrf.mxu0
      %v3880 = vadd.f32 %v3638, %v3879
      %v3881 = vpop.f32.mrf.mxu0
      %v3882 = vadd.f32 %v3642, %v3881
      %3883 = vmatprep.mubr.f32.mxu0 %v3487
      %3884 = vmatmul.mubr.f32.gmra.mxu0 %v3486
      %v3885 = vpop.f32.mrf.mxu0
      %v3886 = vadd.f32 %v3638, %v3885
      %v3887 = vpop.f32.mrf.mxu0
      %v3888 = vadd.f32 %v3642, %v3887
      %3889 = vmatprep.mubr.f32.mxu0 %v3490
      %3890 = vmatmul.mubr.f32.gmra.mxu0 %v3489
      %v3891 = vpop.f32.mrf.mxu0
      %v3892 = vadd.f32 %v3638, %v3891
      %v3893 = vpop.f32.mrf.mxu0
      %v3894 = vadd.f32 %v3642, %v3893
      %3895 = vmatprep.mubr.f32.mxu0 %v3493
      %3896 = vmatmul.mubr.f32.gmra.mxu0 %v3492
      %v3897 = vpop.f32.mrf.mxu0
      %v3898 = vadd.f32 %v3638, %v3897
      %v3899 = vpop.f32.mrf.mxu0
      %v3900 = vadd.f32 %v3642, %v3899
      %3901 = vmatprep.mubr.f32.mxu0 %v3496
      %3902 = vmatmul.mubr.f32.gmra.mxu0 %v3495
      %v3903 = vpop.f32.mrf.mxu0
      %v3904 = vadd.f32 %v3638, %v3903
      %v3905 = vpop.f32.mrf.mxu0
      %v3906 = vadd.f32 %v3642, %v3905
      %3907 = vmatprep.mubr.f32.mxu0 %v3499
      %3908 = vmatmul.mubr.f32.gmra.mxu0 %v3498
      %v3909 = vpop.f32.mrf.mxu0
      %v3910 = vadd.f32 %v3638, %v3909
      %v3911 = vpop.f32.mrf.mxu0
      %v3912 = vadd.f32 %v3642, %v3911
      %3913 = vmatprep.mubr.f32.mxu0 %v3502
      %3914 = vmatmul.mubr.f32.gmra.mxu0 %v3501
      %v3915 = vpop.f32.mrf.mxu0
      %v3916 = vadd.f32 %v3638, %v3915
      %v3917 = vpop.f32.mrf.mxu0
      %v3918 = vadd.f32 %v3642, %v3917
      %3919 = vmatprep.mubr.f32.mxu0 %v3505
      %3920 = vmatmul.mubr.f32.gmra.mxu0 %v3504
      %v3921 = vpop.f32.mrf.mxu0
      %v3922 = vadd.f32 %v3638, %v3921
      %v3923 = vpop.f32.mrf.mxu0
      %v3924 = vadd.f32 %v3642, %v3923
      %3925 = vmatprep.mubr.f32.mxu0 %v3508
      %3926 = vmatmul.mubr.f32.gmra.mxu0 %v3507
      %v3927 = vpop.f32.mrf.mxu0
      %v3928 = vadd.f32 %v3638, %v3927
      %v3929 = vpop.f32.mrf.mxu0
      %v3930 = vadd.f32 %v3642, %v3929
      %3931 = vmatprep.mubr.f32.mxu0 %v3511
      %3932 = vmatmul.mubr.f32.gmra.mxu0 %v3510
      %v3933 = vpop.f32.mrf.mxu0
      %v3934 = vadd.f32 %v3638, %v3933
      %v3935 = vpop.f32.mrf.mxu0
      %v3936 = vadd.f32 %v3642, %v3935
      %3937 = vmatprep.mubr.f32.mxu0 %v3514
      %3938 = vmatmul.mubr.f32.gmra.mxu0 %v3513
      %v3939 = vpop.f32.mrf.mxu0
      %v3940 = vadd.f32 %v3638, %v3939
      %v3941 = vpop.f32.mrf.mxu0
      %v3942 = vadd.f32 %v3642, %v3941
      %3943 = vmatprep.mubr.f32.mxu0 %v3517
      %3944 = vmatmul.mubr.f32.gmra.mxu0 %v3516
      %v3945 = vpop.f32.mrf.mxu0
      %v3946 = vadd.f32 %v3638, %v3945
      %v3947 = vpop.f32.mrf.mxu0
      %v3948 = vadd.f32 %v3642, %v3947
      %3949 = vmatprep.mubr.f32.mxu0 %v3520
      %3950 = vmatmul.mubr.f32.gmra.mxu0 %v3519
      %v3951 = vpop.f32.mrf.mxu0
      %v3952 = vadd.f32 %v3638, %v3951
      %v3953 = vpop.f32.mrf.mxu0
      %v3954 = vadd.f32 %v3642, %v3953
      %3955 = vmatprep.mubr.f32.mxu0 %v3523
      %3956 = vmatmul.mubr.f32.gmra.mxu0 %v3522
      %v3957 = vpop.f32.mrf.mxu0
      %v3958 = vadd.f32 %v3638, %v3957
      %v3959 = vpop.f32.mrf.mxu0
      %v3960 = vadd.f32 %v3642, %v3959
      %3961 = vmatprep.mubr.f32.mxu0 %v3526
      %3962 = vmatmul.mubr.f32.gmra.mxu0 %v3525
      %v3963 = vpop.f32.mrf.mxu0
      %v3964 = vadd.f32 %v3638, %v3963
      %v3965 = vpop.f32.mrf.mxu0
      %v3966 = vadd.f32 %v3642, %v3965
      %3967 = vmatprep.mubr.f32.mxu0 %v3529
      %3968 = vmatmul.mubr.f32.gmra.mxu0 %v3528
      %v3969 = vpop.f32.mrf.mxu0
      %v3970 = vadd.f32 %v3638, %v3969
      %v3971 = vpop.f32.mrf.mxu0
      %v3972 = vadd.f32 %v3642, %v3971
      %3973 = vmatprep.mubr.f32.mxu0 %v3532
      %3974 = vmatmul.mubr.f32.gmra.mxu0 %v3531
      %v3975 = vpop.f32.mrf.mxu0
      %v3976 = vadd.f32 %v3638, %v3975
      %v3977 = vpop.f32.mrf.mxu0
      %v3978 = vadd.f32 %v3642, %v3977
      %3979 = vmatprep.mubr.f32.mxu0 %v3535
      %3980 = vmatmul.mubr.f32.gmra.mxu0 %v3534
      %v3981 = vpop.f32.mrf.mxu0
      %v3982 = vadd.f32 %v3638, %v3981
      %v3983 = vpop.f32.mrf.mxu0
      %v3984 = vadd.f32 %v3642, %v3983
      %3985 = vmatprep.mubr.f32.mxu0 %v3538
      %3986 = vmatmul.mubr.f32.gmra.mxu0 %v3537
      %v3987 = vpop.f32.mrf.mxu0
      %v3988 = vadd.f32 %v3638, %v3987
      %v3989 = vpop.f32.mrf.mxu0
      %v3990 = vadd.f32 %v3642, %v3989
      %3991 = vmatprep.mubr.f32.mxu0 %v3541
      %3992 = vmatmul.mubr.f32.gmra.mxu0 %v3540
      %v3993 = vpop.f32.mrf.mxu0
      %v3994 = vadd.f32 %v3638, %v3993
      %v3995 = vpop.f32.mrf.mxu0
      %v3996 = vadd.f32 %v3642, %v3995
      %3997 = vdwg.mxu0
      %3998 = vmatprep.subr.mxu0 0.0
      %3999 = vmatpush1.msra.mxu0 0.0
      %4000 = vmatprep.subr.mxu0 0.0
      %4001 = vmatpush1.msra.mxu0 0.0
      %4002 = vmatprep.subr.mxu0 0.0
      %4003 = vmatpush1.msra.mxu0 0.0
      %4004 = vmatprep.subr.mxu0 %v3632
      %4005 = vmatpush1.msra.mxu0 %v3631
      %4006 = vmatprep.subr.mxu0 %v3630
      %4007 = vmatpush1.msra.mxu0 %v3629
      %4008 = vmatprep.subr.mxu0 %v3628
      %4009 = vmatpush1.msra.mxu0 %v3627
      %4010 = vmatprep.subr.mxu0 %v3626
      %4011 = vmatpush1.msra.mxu0 %v3625
      %4012 = vmatprep.subr.mxu0 %v3624
      %4013 = vmatpush1.msra.mxu0 %v3623
      %4014 = vmatprep.subr.mxu0 %v3622
      %4015 = vmatpush1.msra.mxu0 %v3621
      %4016 = vmatprep.subr.mxu0 %v3620
      %4017 = vmatpush1.msra.mxu0 %v3619
      %4018 = vmatprep.subr.mxu0 %v3618
      %4019 = vmatpush1.msra.mxu0 %v3617
      %4020 = vmatprep.subr.mxu0 %v3616
      %4021 = vmatpush1.msra.mxu0 %v3615
      %4022 = vmatprep.subr.mxu0 %v3614
      %4023 = vmatpush1.msra.mxu0 %v3613
      %4024 = vmatprep.subr.mxu0 %v3612
      %4025 = vmatpush1.msra.mxu0 %v3611
      %4026 = vmatprep.subr.mxu0 %v3610
      %4027 = vmatpush1.msra.mxu0 %v3609
      %4028 = vmatprep.subr.mxu0 %v3608
      %4029 = vmatpush1.msra.mxu0 %v3607
      %4030 = vmatprep.subr.mxu0 0.0
      %4031 = vmatpush2.msra.mxu0 0.0
      %4032 = vmatprep.subr.mxu0 0.0
      %4033 = vmatpush2.msra.mxu0 0.0
      %4034 = vmatprep.subr.mxu0 0.0
      %4035 = vmatpush2.msra.mxu0 0.0
      %4036 = vmatprep.subr.mxu0 0.0
      %4037 = vmatpush2.msra.mxu0 0.0
      %4038 = vmatprep.subr.mxu0 0.0
      %4039 = vmatpush2.msra.mxu0 0.0
      %4040 = vmatprep.subr.mxu0 0.0
      %4041 = vmatpush2.msra.mxu0 0.0
      %4042 = vmatprep.subr.mxu0 0.0
      %4043 = vmatpush2.msra.mxu0 0.0
      %4044 = vmatprep.subr.mxu0 0.0
      %4045 = vmatpush2.msra.mxu0 0.0
      %4046 = vmatprep.subr.mxu0 0.0
      %4047 = vmatpush2.msra.mxu0 0.0
      %4048 = vmatprep.subr.mxu0 0.0
      %4049 = vmatpush2.msra.mxu0 0.0
      %4050 = vmatprep.subr.mxu0 0.0
      %4051 = vmatpush2.msra.mxu0 0.0
      %4052 = vmatprep.subr.mxu0 0.0
      %4053 = vmatpush2.msra.mxu0 0.0
      %4054 = vmatprep.subr.mxu0 0.0
      %4055 = vmatpush2.msra.mxu0 0.0
      %4056 = vmatprep.subr.mxu0 0.0
      %4057 = vmatpush2.msra.mxu0 0.0
      %4058 = vmatprep.subr.mxu0 0.0
      %4059 = vmatpush2.msra.mxu0 0.0
      %4060 = vmatprep.subr.mxu0 0.0
      %4061 = vmatpush2.msra.mxu0 0.0
      %4062 = vmatprep.mubr.f32.mxu0 0.0
      %4063 = vmatmul.mubr.f32.gmra.mxu0 %v3646
      %v4064 = vpop.f32.mrf.mxu0
      %v4065 = vadd.f32 %v3808, %v4064
      %v4066 = vpop.f32.mrf.mxu0
      %v4067 = vadd.f32 %v3810, %v4066
      %4068 = vmatprep.mubr.f32.mxu0 0.0
      %4069 = vmatmul.mubr.f32.gmra.mxu0 %v3649
      %v4070 = vpop.f32.mrf.mxu0
      %v4071 = vadd.f32 %v3814, %v4070
      %v4072 = vpop.f32.mrf.mxu0
      %v4073 = vadd.f32 %v3816, %v4072
      %4074 = vmatprep.mubr.f32.mxu0 0.0
      %4075 = vmatmul.mubr.f32.gmra.mxu0 %v3652
      %v4076 = vpop.f32.mrf.mxu0
      %v4077 = vadd.f32 %v3820, %v4076
      %v4078 = vpop.f32.mrf.mxu0
      %v4079 = vadd.f32 %v3822, %v4078
      %4080 = vmatprep.mubr.f32.mxu0 0.0
      %4081 = vmatmul.mubr.f32.gmra.mxu0 %v3655
      %v4082 = vpop.f32.mrf.mxu0
      %v4083 = vadd.f32 %v3826, %v4082
      %v4084 = vpop.f32.mrf.mxu0
      %v4085 = vadd.f32 %v3828, %v4084
      %4086 = vmatprep.mubr.f32.mxu0 0.0
      %4087 = vmatmul.mubr.f32.gmra.mxu0 %v3658
      %v4088 = vpop.f32.mrf.mxu0
      %v4089 = vadd.f32 %v3832, %v4088
      %v4090 = vpop.f32.mrf.mxu0
      %v4091 = vadd.f32 %v3834, %v4090
      %4092 = vmatprep.mubr.f32.mxu0 0.0
      %4093 = vmatmul.mubr.f32.gmra.mxu0 %v3661
      %v4094 = vpop.f32.mrf.mxu0
      %v4095 = vadd.f32 %v3838, %v4094
      %v4096 = vpop.f32.mrf.mxu0
      %v4097 = vadd.f32 %v3840, %v4096
      %4098 = vmatprep.mubr.f32.mxu0 0.0
      %4099 = vmatmul.mubr.f32.gmra.mxu0 %v3664
      %v4100 = vpop.f32.mrf.mxu0
      %v4101 = vadd.f32 %v3844, %v4100
      %v4102 = vpop.f32.mrf.mxu0
      %v4103 = vadd.f32 %v3846, %v4102
      %4104 = vmatprep.mubr.f32.mxu0 0.0
      %4105 = vmatmul.mubr.f32.gmra.mxu0 %v3667
      %v4106 = vpop.f32.mrf.mxu0
      %v4107 = vadd.f32 %v3850, %v4106
      %v4108 = vpop.f32.mrf.mxu0
      %v4109 = vadd.f32 %v3852, %v4108
      %4110 = vmatprep.mubr.f32.mxu0 0.0
      %4111 = vmatmul.mubr.f32.gmra.mxu0 %v3670
      %v4112 = vpop.f32.mrf.mxu0
      %v4113 = vadd.f32 %v3856, %v4112
      %v4114 = vpop.f32.mrf.mxu0
      %v4115 = vadd.f32 %v3858, %v4114
      %4116 = vmatprep.mubr.f32.mxu0 0.0
      %4117 = vmatmul.mubr.f32.gmra.mxu0 %v3673
      %v4118 = vpop.f32.mrf.mxu0
      %v4119 = vadd.f32 %v3862, %v4118
      %v4120 = vpop.f32.mrf.mxu0
      %v4121 = vadd.f32 %v3864, %v4120
      %4122 = vmatprep.mubr.f32.mxu0 0.0
      %4123 = vmatmul.mubr.f32.gmra.mxu0 %v3676
      %v4124 = vpop.f32.mrf.mxu0
      %v4125 = vadd.f32 %v3868, %v4124
      %v4126 = vpop.f32.mrf.mxu0
      %v4127 = vadd.f32 %v3870, %v4126
      %4128 = vmatprep.mubr.f32.mxu0 0.0
      %4129 = vmatmul.mubr.f32.gmra.mxu0 %v3679
      %v4130 = vpop.f32.mrf.mxu0
      %v4131 = vadd.f32 %v3874, %v4130
      %v4132 = vpop.f32.mrf.mxu0
      %v4133 = vadd.f32 %v3876, %v4132
      %4134 = vmatprep.mubr.f32.mxu0 0.0
      %4135 = vmatmul.mubr.f32.gmra.mxu0 %v3682
      %v4136 = vpop.f32.mrf.mxu0
      %v4137 = vadd.f32 %v3880, %v4136
      %v4138 = vpop.f32.mrf.mxu0
      %v4139 = vadd.f32 %v3882, %v4138
      %4140 = vmatprep.mubr.f32.mxu0 0.0
      %4141 = vmatmul.mubr.f32.gmra.mxu0 %v3685
      %v4142 = vpop.f32.mrf.mxu0
      %v4143 = vadd.f32 %v3886, %v4142
      %v4144 = vpop.f32.mrf.mxu0
      %v4145 = vadd.f32 %v3888, %v4144
      %4146 = vmatprep.mubr.f32.mxu0 0.0
      %4147 = vmatmul.mubr.f32.gmra.mxu0 %v3688
      %v4148 = vpop.f32.mrf.mxu0
      %v4149 = vadd.f32 %v3892, %v4148
      %v4150 = vpop.f32.mrf.mxu0
      %v4151 = vadd.f32 %v3894, %v4150
      %4152 = vmatprep.mubr.f32.mxu0 0.0
      %4153 = vmatmul.mubr.f32.gmra.mxu0 %v3691
      %v4154 = vpop.f32.mrf.mxu0
      %v4155 = vadd.f32 %v3898, %v4154
      %v4156 = vpop.f32.mrf.mxu0
      %v4157 = vadd.f32 %v3900, %v4156
      %4158 = vmatprep.mubr.f32.mxu0 0.0
      %4159 = vmatmul.mubr.f32.gmra.mxu0 %v3694
      %v4160 = vpop.f32.mrf.mxu0
      %v4161 = vadd.f32 %v3904, %v4160
      %v4162 = vpop.f32.mrf.mxu0
      %v4163 = vadd.f32 %v3906, %v4162
      %4164 = vmatprep.mubr.f32.mxu0 0.0
      %4165 = vmatmul.mubr.f32.gmra.mxu0 %v3697
      %v4166 = vpop.f32.mrf.mxu0
      %v4167 = vadd.f32 %v3910, %v4166
      %v4168 = vpop.f32.mrf.mxu0
      %v4169 = vadd.f32 %v3912, %v4168
      %4170 = vmatprep.mubr.f32.mxu0 0.0
      %4171 = vmatmul.mubr.f32.gmra.mxu0 %v3700
      %v4172 = vpop.f32.mrf.mxu0
      %v4173 = vadd.f32 %v3916, %v4172
      %v4174 = vpop.f32.mrf.mxu0
      %v4175 = vadd.f32 %v3918, %v4174
      %4176 = vmatprep.mubr.f32.mxu0 0.0
      %4177 = vmatmul.mubr.f32.gmra.mxu0 %v3703
      %v4178 = vpop.f32.mrf.mxu0
      %v4179 = vadd.f32 %v3922, %v4178
      %v4180 = vpop.f32.mrf.mxu0
      %v4181 = vadd.f32 %v3924, %v4180
      %4182 = vmatprep.mubr.f32.mxu0 0.0
      %4183 = vmatmul.mubr.f32.gmra.mxu0 %v3706
      %v4184 = vpop.f32.mrf.mxu0
      %v4185 = vadd.f32 %v3928, %v4184
      %v4186 = vpop.f32.mrf.mxu0
      %v4187 = vadd.f32 %v3930, %v4186
      %4188 = vmatprep.mubr.f32.mxu0 0.0
      %4189 = vmatmul.mubr.f32.gmra.mxu0 %v3709
      %v4190 = vpop.f32.mrf.mxu0
      %v4191 = vadd.f32 %v3934, %v4190
      %v4192 = vpop.f32.mrf.mxu0
      %v4193 = vadd.f32 %v3936, %v4192
      %4194 = vmatprep.mubr.f32.mxu0 0.0
      %4195 = vmatmul.mubr.f32.gmra.mxu0 %v3712
      %v4196 = vpop.f32.mrf.mxu0
      %v4197 = vadd.f32 %v3940, %v4196
      %v4198 = vpop.f32.mrf.mxu0
      %v4199 = vadd.f32 %v3942, %v4198
      %4200 = vmatprep.mubr.f32.mxu0 0.0
      %4201 = vmatmul.mubr.f32.gmra.mxu0 %v3715
      %v4202 = vpop.f32.mrf.mxu0
      %v4203 = vadd.f32 %v3946, %v4202
      %v4204 = vpop.f32.mrf.mxu0
      %v4205 = vadd.f32 %v3948, %v4204
      %4206 = vmatprep.mubr.f32.mxu0 0.0
      %4207 = vmatmul.mubr.f32.gmra.mxu0 %v3718
      %v4208 = vpop.f32.mrf.mxu0
      %v4209 = vadd.f32 %v3952, %v4208
      %v4210 = vpop.f32.mrf.mxu0
      %v4211 = vadd.f32 %v3954, %v4210
      %4212 = vmatprep.mubr.f32.mxu0 0.0
      %4213 = vmatmul.mubr.f32.gmra.mxu0 %v3721
      %v4214 = vpop.f32.mrf.mxu0
      %v4215 = vadd.f32 %v3958, %v4214
      %v4216 = vpop.f32.mrf.mxu0
      %v4217 = vadd.f32 %v3960, %v4216
      %4218 = vmatprep.mubr.f32.mxu0 0.0
      %4219 = vmatmul.mubr.f32.gmra.mxu0 %v3724
      %v4220 = vpop.f32.mrf.mxu0
      %v4221 = vadd.f32 %v3964, %v4220
      %v4222 = vpop.f32.mrf.mxu0
      %v4223 = vadd.f32 %v3966, %v4222
      %4224 = vmatprep.mubr.f32.mxu0 0.0
      %4225 = vmatmul.mubr.f32.gmra.mxu0 %v3727
      %v4226 = vpop.f32.mrf.mxu0
      %v4227 = vadd.f32 %v3970, %v4226
      %v4228 = vpop.f32.mrf.mxu0
      %v4229 = vadd.f32 %v3972, %v4228
      %4230 = vmatprep.mubr.f32.mxu0 0.0
      %4231 = vmatmul.mubr.f32.gmra.mxu0 %v3730
      %v4232 = vpop.f32.mrf.mxu0
      %v4233 = vadd.f32 %v3976, %v4232
      %v4234 = vpop.f32.mrf.mxu0
      %v4235 = vadd.f32 %v3978, %v4234
      %4236 = vmatprep.mubr.f32.mxu0 0.0
      %4237 = vmatmul.mubr.f32.gmra.mxu0 %v3733
      %v4238 = vpop.f32.mrf.mxu0
      %v4239 = vadd.f32 %v3982, %v4238
      %v4240 = vpop.f32.mrf.mxu0
      %v4241 = vadd.f32 %v3984, %v4240
      %4242 = vmatprep.mubr.f32.mxu0 0.0
      %4243 = vmatmul.mubr.f32.gmra.mxu0 %v3736
      %v4244 = vpop.f32.mrf.mxu0
      %v4245 = vadd.f32 %v3988, %v4244
      %v4246 = vpop.f32.mrf.mxu0
      %v4247 = vadd.f32 %v3990, %v4246
      %4248 = vmatprep.mubr.f32.mxu0 0.0
      %4249 = vmatmul.mubr.f32.gmra.mxu0 %v3739
      %v4250 = vpop.f32.mrf.mxu0
      %v4251 = vadd.f32 %v3994, %v4250
      %v4252 = vpop.f32.mrf.mxu0
      %v4253 = vadd.f32 %v3996, %v4252
      %4254 = vdwg.mxu0
      %vm4255 = vcmask 424960
      %v4256 = vsel %vm4255, %v4067, 0.0
      %v4257 = vadd.f32 %v4065, %v4256
      %4258 = vadd.xlane.f32.xlu0 %v4257
      %v4259 = vpop.xlane.xlu0 %4258
      %v4260 = vsel %vm4255, %v4073, 0.0
      %v4261 = vadd.f32 %v4071, %v4260
      %4262 = vadd.xlane.f32.xlu0 %v4261
      %v4263 = vpop.xlane.xlu0 %4262
      %v4264 = vsel %vm4255, %v4079, 0.0
      %v4265 = vadd.f32 %v4077, %v4264
      %4266 = vadd.xlane.f32.xlu0 %v4265
      %v4267 = vpop.xlane.xlu0 %4266
      %v4268 = vsel %vm4255, %v4085, 0.0
      %v4269 = vadd.f32 %v4083, %v4268
      %4270 = vadd.xlane.f32.xlu0 %v4269
      %v4271 = vpop.xlane.xlu0 %4270
      %v4272 = vsel %vm4255, %v4091, 0.0
      %v4273 = vadd.f32 %v4089, %v4272
      %4274 = vadd.xlane.f32.xlu0 %v4273
      %v4275 = vpop.xlane.xlu0 %4274
      %v4276 = vsel %vm4255, %v4097, 0.0
      %v4277 = vadd.f32 %v4095, %v4276
      %4278 = vadd.xlane.f32.xlu0 %v4277
      %v4279 = vpop.xlane.xlu0 %4278
      %v4280 = vsel %vm4255, %v4103, 0.0
      %v4281 = vadd.f32 %v4101, %v4280
      %4282 = vadd.xlane.f32.xlu0 %v4281
      %v4283 = vpop.xlane.xlu0 %4282
      %v4284 = vsel %vm4255, %v4109, 0.0
      %v4285 = vadd.f32 %v4107, %v4284
      %4286 = vadd.xlane.f32.xlu0 %v4285
      %v4287 = vpop.xlane.xlu0 %4286
      %v4288 = vsel %vm4255, %v4115, 0.0
      %v4289 = vadd.f32 %v4113, %v4288
      %4290 = vadd.xlane.f32.xlu0 %v4289
      %v4291 = vpop.xlane.xlu0 %4290
      %v4292 = vsel %vm4255, %v4121, 0.0
      %v4293 = vadd.f32 %v4119, %v4292
      %4294 = vadd.xlane.f32.xlu0 %v4293
      %v4295 = vpop.xlane.xlu0 %4294
      %v4296 = vsel %vm4255, %v4127, 0.0
      %v4297 = vadd.f32 %v4125, %v4296
      %4298 = vadd.xlane.f32.xlu0 %v4297
      %v4299 = vpop.xlane.xlu0 %4298
      %v4300 = vsel %vm4255, %v4133, 0.0
      %v4301 = vadd.f32 %v4131, %v4300
      %4302 = vadd.xlane.f32.xlu0 %v4301
      %v4303 = vpop.xlane.xlu0 %4302
      %v4304 = vsel %vm4255, %v4139, 0.0
      %v4305 = vadd.f32 %v4137, %v4304
      %4306 = vadd.xlane.f32.xlu0 %v4305
      %v4307 = vpop.xlane.xlu0 %4306
      %v4308 = vsel %vm4255, %v4145, 0.0
      %v4309 = vadd.f32 %v4143, %v4308
      %4310 = vadd.xlane.f32.xlu0 %v4309
      %v4311 = vpop.xlane.xlu0 %4310
      %v4312 = vsel %vm4255, %v4151, 0.0
      %v4313 = vadd.f32 %v4149, %v4312
      %4314 = vadd.xlane.f32.xlu0 %v4313
      %v4315 = vpop.xlane.xlu0 %4314
      %v4316 = vsel %vm4255, %v4157, 0.0
      %v4317 = vadd.f32 %v4155, %v4316
      %4318 = vadd.xlane.f32.xlu0 %v4317
      %v4319 = vpop.xlane.xlu0 %4318
      %v4320 = vsel %vm4255, %v4163, 0.0
      %v4321 = vadd.f32 %v4161, %v4320
      %4322 = vadd.xlane.f32.xlu0 %v4321
      %v4323 = vpop.xlane.xlu0 %4322
      %v4324 = vsel %vm4255, %v4169, 0.0
      %v4325 = vadd.f32 %v4167, %v4324
      %4326 = vadd.xlane.f32.xlu0 %v4325
      %v4327 = vpop.xlane.xlu0 %4326
      %v4328 = vsel %vm4255, %v4175, 0.0
      %v4329 = vadd.f32 %v4173, %v4328
      %4330 = vadd.xlane.f32.xlu0 %v4329
      %v4331 = vpop.xlane.xlu0 %4330
      %v4332 = vsel %vm4255, %v4181, 0.0
      %v4333 = vadd.f32 %v4179, %v4332
      %4334 = vadd.xlane.f32.xlu0 %v4333
      %v4335 = vpop.xlane.xlu0 %4334
      %v4336 = vsel %vm4255, %v4187, 0.0
      %v4337 = vadd.f32 %v4185, %v4336
      %4338 = vadd.xlane.f32.xlu0 %v4337
      %v4339 = vpop.xlane.xlu0 %4338
      %v4340 = vsel %vm4255, %v4193, 0.0
      %v4341 = vadd.f32 %v4191, %v4340
      %4342 = vadd.xlane.f32.xlu0 %v4341
      %v4343 = vpop.xlane.xlu0 %4342
      %v4344 = vsel %vm4255, %v4199, 0.0
      %v4345 = vadd.f32 %v4197, %v4344
      %4346 = vadd.xlane.f32.xlu0 %v4345
      %v4347 = vpop.xlane.xlu0 %4346
      %v4348 = vsel %vm4255, %v4205, 0.0
      %v4349 = vadd.f32 %v4203, %v4348
      %4350 = vadd.xlane.f32.xlu0 %v4349
      %v4351 = vpop.xlane.xlu0 %4350
      %v4352 = vsel %vm4255, %v4211, 0.0
      %v4353 = vadd.f32 %v4209, %v4352
      %4354 = vadd.xlane.f32.xlu0 %v4353
      %v4355 = vpop.xlane.xlu0 %4354
      %v4356 = vsel %vm4255, %v4217, 0.0
      %v4357 = vadd.f32 %v4215, %v4356
      %4358 = vadd.xlane.f32.xlu0 %v4357
      %v4359 = vpop.xlane.xlu0 %4358
      %v4360 = vsel %vm4255, %v4223, 0.0
      %v4361 = vadd.f32 %v4221, %v4360
      %4362 = vadd.xlane.f32.xlu0 %v4361
      %v4363 = vpop.xlane.xlu0 %4362
      %v4364 = vsel %vm4255, %v4229, 0.0
      %v4365 = vadd.f32 %v4227, %v4364
      %4366 = vadd.xlane.f32.xlu0 %v4365
      %v4367 = vpop.xlane.xlu0 %4366
      %v4368 = vsel %vm4255, %v4235, 0.0
      %v4369 = vadd.f32 %v4233, %v4368
      %4370 = vadd.xlane.f32.xlu0 %v4369
      %v4371 = vpop.xlane.xlu0 %4370
      %v4372 = vsel %vm4255, %v4241, 0.0
      %v4373 = vadd.f32 %v4239, %v4372
      %4374 = vadd.xlane.f32.xlu0 %v4373
      %v4375 = vpop.xlane.xlu0 %4374
      %v4376 = vsel %vm4255, %v4247, 0.0
      %v4377 = vadd.f32 %v4245, %v4376
      %4378 = vadd.xlane.f32.xlu0 %v4377
      %v4379 = vpop.xlane.xlu0 %4378
      %v4380 = vsel %vm4255, %v4253, 0.0
      %v4381 = vadd.f32 %v4251, %v4380
      %4382 = vadd.xlane.f32.xlu0 %v4381
      %v4383 = vpop.xlane.xlu0 %4382
      %v4384 = vrcp.pop 180.0
      %v4385 = vmul.f32 %v4259, %v4384
      %v4386 = vmul.f32 %v4263, %v4384
      %v4387 = vmul.f32 %v4267, %v4384
      %v4388 = vmul.f32 %v4271, %v4384
      %v4389 = vmul.f32 %v4275, %v4384
      %v4390 = vmul.f32 %v4279, %v4384
      %v4391 = vmul.f32 %v4283, %v4384
      %v4392 = vmul.f32 %v4287, %v4384
      %v4393 = vmul.f32 %v4291, %v4384
      %v4394 = vmul.f32 %v4295, %v4384
      %v4395 = vmul.f32 %v4299, %v4384
      %v4396 = vmul.f32 %v4303, %v4384
      %v4397 = vmul.f32 %v4307, %v4384
      %v4398 = vmul.f32 %v4311, %v4384
      %v4399 = vmul.f32 %v4315, %v4384
      %v4400 = vmul.f32 %v4319, %v4384
      %v4401 = vmul.f32 %v4323, %v4384
      %v4402 = vmul.f32 %v4327, %v4384
      %v4403 = vmul.f32 %v4331, %v4384
      %v4404 = vmul.f32 %v4335, %v4384
      %v4405 = vmul.f32 %v4339, %v4384
      %v4406 = vmul.f32 %v4343, %v4384
      %v4407 = vmul.f32 %v4347, %v4384
      %v4408 = vmul.f32 %v4351, %v4384
      %v4409 = vmul.f32 %v4355, %v4384
      %v4410 = vmul.f32 %v4359, %v4384
      %v4411 = vmul.f32 %v4363, %v4384
      %v4412 = vmul.f32 %v4367, %v4384
      %v4413 = vmul.f32 %v4371, %v4384
      %v4414 = vmul.f32 %v4375, %v4384
      %v4415 = vmul.f32 %v4379, %v4384
      %v4416 = vmul.f32 %v4383, %v4384
      %v4417 = vsub.f32 %v4065, %v4385
      %v4418 = vsub.f32 %v4067, %v4385
      %v4419 = vsub.f32 %v4071, %v4386
      %v4420 = vsub.f32 %v4073, %v4386
      %v4421 = vsub.f32 %v4077, %v4387
      %v4422 = vsub.f32 %v4079, %v4387
      %v4423 = vsub.f32 %v4083, %v4388
      %v4424 = vsub.f32 %v4085, %v4388
      %v4425 = vsub.f32 %v4089, %v4389
      %v4426 = vsub.f32 %v4091, %v4389
      %v4427 = vsub.f32 %v4095, %v4390
      %v4428 = vsub.f32 %v4097, %v4390
      %v4429 = vsub.f32 %v4101, %v4391
      %v4430 = vsub.f32 %v4103, %v4391
      %v4431 = vsub.f32 %v4107, %v4392
      %v4432 = vsub.f32 %v4109, %v4392
      %v4433 = vsub.f32 %v4113, %v4393
      %v4434 = vsub.f32 %v4115, %v4393
      %v4435 = vsub.f32 %v4119, %v4394
      %v4436 = vsub.f32 %v4121, %v4394
      %v4437 = vsub.f32 %v4125, %v4395
      %v4438 = vsub.f32 %v4127, %v4395
      %v4439 = vsub.f32 %v4131, %v4396
      %v4440 = vsub.f32 %v4133, %v4396
      %v4441 = vsub.f32 %v4137, %v4397
      %v4442 = vsub.f32 %v4139, %v4397
      %v4443 = vsub.f32 %v4143, %v4398
      %v4444 = vsub.f32 %v4145, %v4398
      %v4445 = vsub.f32 %v4149, %v4399
      %v4446 = vsub.f32 %v4151, %v4399
      %v4447 = vsub.f32 %v4155, %v4400
      %v4448 = vsub.f32 %v4157, %v4400
      %v4449 = vsub.f32 %v4161, %v4401
      %v4450 = vsub.f32 %v4163, %v4401
      %v4451 = vsub.f32 %v4167, %v4402
      %v4452 = vsub.f32 %v4169, %v4402
      %v4453 = vsub.f32 %v4173, %v4403
      %v4454 = vsub.f32 %v4175, %v4403
      %v4455 = vsub.f32 %v4179, %v4404
      %v4456 = vsub.f32 %v4181, %v4404
      %v4457 = vsub.f32 %v4185, %v4405
      %v4458 = vsub.f32 %v4187, %v4405
      %v4459 = vsub.f32 %v4191, %v4406
      %v4460 = vsub.f32 %v4193, %v4406
      %v4461 = vsub.f32 %v4197, %v4407
      %v4462 = vsub.f32 %v4199, %v4407
      %v4463 = vsub.f32 %v4203, %v4408
      %v4464 = vsub.f32 %v4205, %v4408
      %v4465 = vsub.f32 %v4209, %v4409
      %v4466 = vsub.f32 %v4211, %v4409
      %v4467 = vsub.f32 %v4215, %v4410
      %v4468 = vsub.f32 %v4217, %v4410
      %v4469 = vsub.f32 %v4221, %v4411
      %v4470 = vsub.f32 %v4223, %v4411
      %v4471 = vsub.f32 %v4227, %v4412
      %v4472 = vsub.f32 %v4229, %v4412
      %v4473 = vsub.f32 %v4233, %v4413
      %v4474 = vsub.f32 %v4235, %v4413
      %v4475 = vsub.f32 %v4239, %v4414
      %v4476 = vsub.f32 %v4241, %v4414
      %v4477 = vsub.f32 %v4245, %v4415
      %v4478 = vsub.f32 %v4247, %v4415
      %v4479 = vsub.f32 %v4251, %v4416
      %v4480 = vsub.f32 %v4253, %v4416
      %v4481 = vmul.f32 %v4417, %v4417
      %v4482 = vmul.f32 %v4418, %v4418
      %v4483 = vmul.f32 %v4419, %v4419
      %v4484 = vmul.f32 %v4420, %v4420
      %v4485 = vmul.f32 %v4421, %v4421
      %v4486 = vmul.f32 %v4422, %v4422
      %v4487 = vmul.f32 %v4423, %v4423
      %v4488 = vmul.f32 %v4424, %v4424
      %v4489 = vmul.f32 %v4425, %v4425
      %v4490 = vmul.f32 %v4426, %v4426
      %v4491 = vmul.f32 %v4427, %v4427
      %v4492 = vmul.f32 %v4428, %v4428
      %v4493 = vmul.f32 %v4429, %v4429
      %v4494 = vmul.f32 %v4430, %v4430
      %v4495 = vmul.f32 %v4431, %v4431
      %v4496 = vmul.f32 %v4432, %v4432
      %v4497 = vmul.f32 %v4433, %v4433
      %v4498 = vmul.f32 %v4434, %v4434
      %v4499 = vmul.f32 %v4435, %v4435
      %v4500 = vmul.f32 %v4436, %v4436
      %v4501 = vmul.f32 %v4437, %v4437
      %v4502 = vmul.f32 %v4438, %v4438
      %v4503 = vmul.f32 %v4439, %v4439
      %v4504 = vmul.f32 %v4440, %v4440
      %v4505 = vmul.f32 %v4441, %v4441
      %v4506 = vmul.f32 %v4442, %v4442
      %v4507 = vmul.f32 %v4443, %v4443
      %v4508 = vmul.f32 %v4444, %v4444
      %v4509 = vmul.f32 %v4445, %v4445
      %v4510 = vmul.f32 %v4446, %v4446
      %v4511 = vmul.f32 %v4447, %v4447
      %v4512 = vmul.f32 %v4448, %v4448
      %v4513 = vmul.f32 %v4449, %v4449
      %v4514 = vmul.f32 %v4450, %v4450
      %v4515 = vmul.f32 %v4451, %v4451
      %v4516 = vmul.f32 %v4452, %v4452
      %v4517 = vmul.f32 %v4453, %v4453
      %v4518 = vmul.f32 %v4454, %v4454
      %v4519 = vmul.f32 %v4455, %v4455
      %v4520 = vmul.f32 %v4456, %v4456
      %v4521 = vmul.f32 %v4457, %v4457
      %v4522 = vmul.f32 %v4458, %v4458
      %v4523 = vmul.f32 %v4459, %v4459
      %v4524 = vmul.f32 %v4460, %v4460
      %v4525 = vmul.f32 %v4461, %v4461
      %v4526 = vmul.f32 %v4462, %v4462
      %v4527 = vmul.f32 %v4463, %v4463
      %v4528 = vmul.f32 %v4464, %v4464
      %v4529 = vmul.f32 %v4465, %v4465
      %v4530 = vmul.f32 %v4466, %v4466
      %v4531 = vmul.f32 %v4467, %v4467
      %v4532 = vmul.f32 %v4468, %v4468
      %v4533 = vmul.f32 %v4469, %v4469
      %v4534 = vmul.f32 %v4470, %v4470
      %v4535 = vmul.f32 %v4471, %v4471
      %v4536 = vmul.f32 %v4472, %v4472
      %v4537 = vmul.f32 %v4473, %v4473
      %v4538 = vmul.f32 %v4474, %v4474
      %v4539 = vmul.f32 %v4475, %v4475
      %v4540 = vmul.f32 %v4476, %v4476
      %v4541 = vmul.f32 %v4477, %v4477
      %v4542 = vmul.f32 %v4478, %v4478
      %v4543 = vmul.f32 %v4479, %v4479
      %v4544 = vmul.f32 %v4480, %v4480
      %v4545 = vsel %vm4255, %v4482, 0.0
      %v4546 = vadd.f32 %v4481, %v4545
      %4547 = vadd.xlane.f32.xlu0 %v4546
      %v4548 = vpop.xlane.xlu0 %4547
      %v4549 = vsel %vm4255, %v4484, 0.0
      %v4550 = vadd.f32 %v4483, %v4549
      %4551 = vadd.xlane.f32.xlu0 %v4550
      %v4552 = vpop.xlane.xlu0 %4551
      %v4553 = vsel %vm4255, %v4486, 0.0
      %v4554 = vadd.f32 %v4485, %v4553
      %4555 = vadd.xlane.f32.xlu0 %v4554
      %v4556 = vpop.xlane.xlu0 %4555
      %v4557 = vsel %vm4255, %v4488, 0.0
      %v4558 = vadd.f32 %v4487, %v4557
      %4559 = vadd.xlane.f32.xlu0 %v4558
      %v4560 = vpop.xlane.xlu0 %4559
      %v4561 = vsel %vm4255, %v4490, 0.0
      %v4562 = vadd.f32 %v4489, %v4561
      %4563 = vadd.xlane.f32.xlu0 %v4562
      %v4564 = vpop.xlane.xlu0 %4563
      %v4565 = vsel %vm4255, %v4492, 0.0
      %v4566 = vadd.f32 %v4491, %v4565
      %4567 = vadd.xlane.f32.xlu0 %v4566
      %v4568 = vpop.xlane.xlu0 %4567
      %v4569 = vsel %vm4255, %v4494, 0.0
      %v4570 = vadd.f32 %v4493, %v4569
      %4571 = vadd.xlane.f32.xlu0 %v4570
      %v4572 = vpop.xlane.xlu0 %4571
      %v4573 = vsel %vm4255, %v4496, 0.0
      %v4574 = vadd.f32 %v4495, %v4573
      %4575 = vadd.xlane.f32.xlu0 %v4574
      %v4576 = vpop.xlane.xlu0 %4575
      %v4577 = vsel %vm4255, %v4498, 0.0
      %v4578 = vadd.f32 %v4497, %v4577
      %4579 = vadd.xlane.f32.xlu0 %v4578
      %v4580 = vpop.xlane.xlu0 %4579
      %v4581 = vsel %vm4255, %v4500, 0.0
      %v4582 = vadd.f32 %v4499, %v4581
      %4583 = vadd.xlane.f32.xlu0 %v4582
      %v4584 = vpop.xlane.xlu0 %4583
      %v4585 = vsel %vm4255, %v4502, 0.0
      %v4586 = vadd.f32 %v4501, %v4585
      %4587 = vadd.xlane.f32.xlu0 %v4586
      %v4588 = vpop.xlane.xlu0 %4587
      %v4589 = vsel %vm4255, %v4504, 0.0
      %v4590 = vadd.f32 %v4503, %v4589
      %4591 = vadd.xlane.f32.xlu0 %v4590
      %v4592 = vpop.xlane.xlu0 %4591
      %v4593 = vsel %vm4255, %v4506, 0.0
      %v4594 = vadd.f32 %v4505, %v4593
      %4595 = vadd.xlane.f32.xlu0 %v4594
      %v4596 = vpop.xlane.xlu0 %4595
      %v4597 = vsel %vm4255, %v4508, 0.0
      %v4598 = vadd.f32 %v4507, %v4597
      %4599 = vadd.xlane.f32.xlu0 %v4598
      %v4600 = vpop.xlane.xlu0 %4599
      %v4601 = vsel %vm4255, %v4510, 0.0
      %v4602 = vadd.f32 %v4509, %v4601
      %4603 = vadd.xlane.f32.xlu0 %v4602
      %v4604 = vpop.xlane.xlu0 %4603
      %v4605 = vsel %vm4255, %v4512, 0.0
      %v4606 = vadd.f32 %v4511, %v4605
      %4607 = vadd.xlane.f32.xlu0 %v4606
      %v4608 = vpop.xlane.xlu0 %4607
      %v4609 = vsel %vm4255, %v4514, 0.0
      %v4610 = vadd.f32 %v4513, %v4609
      %4611 = vadd.xlane.f32.xlu0 %v4610
      %v4612 = vpop.xlane.xlu0 %4611
      %v4613 = vsel %vm4255, %v4516, 0.0
      %v4614 = vadd.f32 %v4515, %v4613
      %4615 = vadd.xlane.f32.xlu0 %v4614
      %v4616 = vpop.xlane.xlu0 %4615
      %v4617 = vsel %vm4255, %v4518, 0.0
      %v4618 = vadd.f32 %v4517, %v4617
      %4619 = vadd.xlane.f32.xlu0 %v4618
      %v4620 = vpop.xlane.xlu0 %4619
      %v4621 = vsel %vm4255, %v4520, 0.0
      %v4622 = vadd.f32 %v4519, %v4621
      %4623 = vadd.xlane.f32.xlu0 %v4622
      %v4624 = vpop.xlane.xlu0 %4623
      %v4625 = vsel %vm4255, %v4522, 0.0
      %v4626 = vadd.f32 %v4521, %v4625
      %4627 = vadd.xlane.f32.xlu0 %v4626
      %v4628 = vpop.xlane.xlu0 %4627
      %v4629 = vsel %vm4255, %v4524, 0.0
      %v4630 = vadd.f32 %v4523, %v4629
      %4631 = vadd.xlane.f32.xlu0 %v4630
      %v4632 = vpop.xlane.xlu0 %4631
      %v4633 = vsel %vm4255, %v4526, 0.0
      %v4634 = vadd.f32 %v4525, %v4633
      %4635 = vadd.xlane.f32.xlu0 %v4634
      %v4636 = vpop.xlane.xlu0 %4635
      %v4637 = vsel %vm4255, %v4528, 0.0
      %v4638 = vadd.f32 %v4527, %v4637
      %4639 = vadd.xlane.f32.xlu0 %v4638
      %v4640 = vpop.xlane.xlu0 %4639
      %v4641 = vsel %vm4255, %v4530, 0.0
      %v4642 = vadd.f32 %v4529, %v4641
      %4643 = vadd.xlane.f32.xlu0 %v4642
      %v4644 = vpop.xlane.xlu0 %4643
      %v4645 = vsel %vm4255, %v4532, 0.0
      %v4646 = vadd.f32 %v4531, %v4645
      %4647 = vadd.xlane.f32.xlu0 %v4646
      %v4648 = vpop.xlane.xlu0 %4647
      %v4649 = vsel %vm4255, %v4534, 0.0
      %v4650 = vadd.f32 %v4533, %v4649
      %4651 = vadd.xlane.f32.xlu0 %v4650
      %v4652 = vpop.xlane.xlu0 %4651
      %v4653 = vsel %vm4255, %v4536, 0.0
      %v4654 = vadd.f32 %v4535, %v4653
      %4655 = vadd.xlane.f32.xlu0 %v4654
      %v4656 = vpop.xlane.xlu0 %4655
      %v4657 = vsel %vm4255, %v4538, 0.0
      %v4658 = vadd.f32 %v4537, %v4657
      %4659 = vadd.xlane.f32.xlu0 %v4658
      %v4660 = vpop.xlane.xlu0 %4659
      %v4661 = vsel %vm4255, %v4540, 0.0
      %v4662 = vadd.f32 %v4539, %v4661
      %4663 = vadd.xlane.f32.xlu0 %v4662
      %v4664 = vpop.xlane.xlu0 %4663
      %v4665 = vsel %vm4255, %v4542, 0.0
      %v4666 = vadd.f32 %v4541, %v4665
      %4667 = vadd.xlane.f32.xlu0 %v4666
      %v4668 = vpop.xlane.xlu0 %4667
      %v4669 = vsel %vm4255, %v4544, 0.0
      %v4670 = vadd.f32 %v4543, %v4669
      %4671 = vadd.xlane.f32.xlu0 %v4670
      %v4672 = vpop.xlane.xlu0 %4671
      %v4673 = vmul.f32 %v4548, %v4384
      %v4674 = vmul.f32 %v4552, %v4384
      %v4675 = vmul.f32 %v4556, %v4384
      %v4676 = vmul.f32 %v4560, %v4384
      %v4677 = vmul.f32 %v4564, %v4384
      %v4678 = vmul.f32 %v4568, %v4384
      %v4679 = vmul.f32 %v4572, %v4384
      %v4680 = vmul.f32 %v4576, %v4384
      %v4681 = vmul.f32 %v4580, %v4384
      %v4682 = vmul.f32 %v4584, %v4384
      %v4683 = vmul.f32 %v4588, %v4384
      %v4684 = vmul.f32 %v4592, %v4384
      %v4685 = vmul.f32 %v4596, %v4384
      %v4686 = vmul.f32 %v4600, %v4384
      %v4687 = vmul.f32 %v4604, %v4384
      %v4688 = vmul.f32 %v4608, %v4384
      %v4689 = vmul.f32 %v4612, %v4384
      %v4690 = vmul.f32 %v4616, %v4384
      %v4691 = vmul.f32 %v4620, %v4384
      %v4692 = vmul.f32 %v4624, %v4384
      %v4693 = vmul.f32 %v4628, %v4384
      %v4694 = vmul.f32 %v4632, %v4384
      %v4695 = vmul.f32 %v4636, %v4384
      %v4696 = vmul.f32 %v4640, %v4384
      %v4697 = vmul.f32 %v4644, %v4384
      %v4698 = vmul.f32 %v4648, %v4384
      %v4699 = vmul.f32 %v4652, %v4384
      %v4700 = vmul.f32 %v4656, %v4384
      %v4701 = vmul.f32 %v4660, %v4384
      %v4702 = vmul.f32 %v4664, %v4384
      %v4703 = vmul.f32 %v4668, %v4384
      %v4704 = vmul.f32 %v4672, %v4384
      %v4705 = vadd.f32 %v4673, 1e-05
      %v4706 = vadd.f32 %v4674, 1e-05
      %v4707 = vadd.f32 %v4675, 1e-05
      %v4708 = vadd.f32 %v4676, 1e-05
      %v4709 = vadd.f32 %v4677, 1e-05
      %v4710 = vadd.f32 %v4678, 1e-05
      %v4711 = vadd.f32 %v4679, 1e-05
      %v4712 = vadd.f32 %v4680, 1e-05
      %v4713 = vadd.f32 %v4681, 1e-05
      %v4714 = vadd.f32 %v4682, 1e-05
      %v4715 = vadd.f32 %v4683, 1e-05
      %v4716 = vadd.f32 %v4684, 1e-05
      %v4717 = vadd.f32 %v4685, 1e-05
      %v4718 = vadd.f32 %v4686, 1e-05
      %v4719 = vadd.f32 %v4687, 1e-05
      %v4720 = vadd.f32 %v4688, 1e-05
      %v4721 = vadd.f32 %v4689, 1e-05
      %v4722 = vadd.f32 %v4690, 1e-05
      %v4723 = vadd.f32 %v4691, 1e-05
      %v4724 = vadd.f32 %v4692, 1e-05
      %v4725 = vadd.f32 %v4693, 1e-05
      %v4726 = vadd.f32 %v4694, 1e-05
      %v4727 = vadd.f32 %v4695, 1e-05
      %v4728 = vadd.f32 %v4696, 1e-05
      %v4729 = vadd.f32 %v4697, 1e-05
      %v4730 = vadd.f32 %v4698, 1e-05
      %v4731 = vadd.f32 %v4699, 1e-05
      %v4732 = vadd.f32 %v4700, 1e-05
      %v4733 = vadd.f32 %v4701, 1e-05
      %v4734 = vadd.f32 %v4702, 1e-05
      %v4735 = vadd.f32 %v4703, 1e-05
      %v4736 = vadd.f32 %v4704, 1e-05
      %v4737 = vrsqrt.pop %v4705
      %v4738 = vrsqrt.pop %v4706
      %v4739 = vrsqrt.pop %v4707
      %v4740 = vrsqrt.pop %v4708
      %v4741 = vrsqrt.pop %v4709
      %v4742 = vrsqrt.pop %v4710
      %v4743 = vrsqrt.pop %v4711
      %v4744 = vrsqrt.pop %v4712
      %v4745 = vrsqrt.pop %v4713
      %v4746 = vrsqrt.pop %v4714
      %v4747 = vrsqrt.pop %v4715
      %v4748 = vrsqrt.pop %v4716
      %v4749 = vrsqrt.pop %v4717
      %v4750 = vrsqrt.pop %v4718
      %v4751 = vrsqrt.pop %v4719
      %v4752 = vrsqrt.pop %v4720
      %v4753 = vrsqrt.pop %v4721
      %v4754 = vrsqrt.pop %v4722
      %v4755 = vrsqrt.pop %v4723
      %v4756 = vrsqrt.pop %v4724
      %v4757 = vrsqrt.pop %v4725
      %v4758 = vrsqrt.pop %v4726
      %v4759 = vrsqrt.pop %v4727
      %v4760 = vrsqrt.pop %v4728
      %v4761 = vrsqrt.pop %v4729
      %v4762 = vrsqrt.pop %v4730
      %v4763 = vrsqrt.pop %v4731
      %v4764 = vrsqrt.pop %v4732
      %v4765 = vrsqrt.pop %v4733
      %v4766 = vrsqrt.pop %v4734
      %v4767 = vrsqrt.pop %v4735
      %v4768 = vrsqrt.pop %v4736
      %v4769 = vmul.f32 %v4417, %v4737
      %v4770 = vmul.f32 %v4418, %v4737
      %v4771 = vmul.f32 %v4419, %v4738
      %v4772 = vmul.f32 %v4420, %v4738
      %v4773 = vmul.f32 %v4421, %v4739
      %v4774 = vmul.f32 %v4422, %v4739
      %v4775 = vmul.f32 %v4423, %v4740
      %v4776 = vmul.f32 %v4424, %v4740
      %v4777 = vmul.f32 %v4425, %v4741
      %v4778 = vmul.f32 %v4426, %v4741
      %v4779 = vmul.f32 %v4427, %v4742
      %v4780 = vmul.f32 %v4428, %v4742
      %v4781 = vmul.f32 %v4429, %v4743
      %v4782 = vmul.f32 %v4430, %v4743
      %v4783 = vmul.f32 %v4431, %v4744
      %v4784 = vmul.f32 %v4432, %v4744
      %v4785 = vmul.f32 %v4433, %v4745
      %v4786 = vmul.f32 %v4434, %v4745
      %v4787 = vmul.f32 %v4435, %v4746
      %v4788 = vmul.f32 %v4436, %v4746
      %v4789 = vmul.f32 %v4437, %v4747
      %v4790 = vmul.f32 %v4438, %v4747
      %v4791 = vmul.f32 %v4439, %v4748
      %v4792 = vmul.f32 %v4440, %v4748
      %v4793 = vmul.f32 %v4441, %v4749
      %v4794 = vmul.f32 %v4442, %v4749
      %v4795 = vmul.f32 %v4443, %v4750
      %v4796 = vmul.f32 %v4444, %v4750
      %v4797 = vmul.f32 %v4445, %v4751
      %v4798 = vmul.f32 %v4446, %v4751
      %v4799 = vmul.f32 %v4447, %v4752
      %v4800 = vmul.f32 %v4448, %v4752
      %v4801 = vmul.f32 %v4449, %v4753
      %v4802 = vmul.f32 %v4450, %v4753
      %v4803 = vmul.f32 %v4451, %v4754
      %v4804 = vmul.f32 %v4452, %v4754
      %v4805 = vmul.f32 %v4453, %v4755
      %v4806 = vmul.f32 %v4454, %v4755
      %v4807 = vmul.f32 %v4455, %v4756
      %v4808 = vmul.f32 %v4456, %v4756
      %v4809 = vmul.f32 %v4457, %v4757
      %v4810 = vmul.f32 %v4458, %v4757
      %v4811 = vmul.f32 %v4459, %v4758
      %v4812 = vmul.f32 %v4460, %v4758
      %v4813 = vmul.f32 %v4461, %v4759
      %v4814 = vmul.f32 %v4462, %v4759
      %v4815 = vmul.f32 %v4463, %v4760
      %v4816 = vmul.f32 %v4464, %v4760
      %v4817 = vmul.f32 %v4465, %v4761
      %v4818 = vmul.f32 %v4466, %v4761
      %v4819 = vmul.f32 %v4467, %v4762
      %v4820 = vmul.f32 %v4468, %v4762
      %v4821 = vmul.f32 %v4469, %v4763
      %v4822 = vmul.f32 %v4470, %v4763
      %v4823 = vmul.f32 %v4471, %v4764
      %v4824 = vmul.f32 %v4472, %v4764
      %v4825 = vmul.f32 %v4473, %v4765
      %v4826 = vmul.f32 %v4474, %v4765
      %v4827 = vmul.f32 %v4475, %v4766
      %v4828 = vmul.f32 %v4476, %v4766
      %v4829 = vmul.f32 %v4477, %v4767
      %v4830 = vmul.f32 %v4478, %v4767
      %v4831 = vmul.f32 %v4479, %v4768
      %v4832 = vmul.f32 %v4480, %v4768
      %s4833 = scalar_lea.vmem %s5, 1
      %v4834 = vld [vmem:[%s4833] ss:$4 sm:$0x3]
      %v4836 = vlaneseq
      %v4837 = vshrl.u32 %v4836, 7
      %v4838 = vsub.s32 0, %v4837
      %v4839 = vrot.slane %v4834, %v4838
      %v4840 = vlaneseq
      %v4841 = vshrl.u32 %v4840, 7
      %v4842 = vsub.s32 1, %v4841
      %v4843 = vrot.slane %v4834, %v4842
      %v4846 = vmul.f32 %v4769, %v4839
      %v4847 = vmul.f32 %v4770, %v4843
      %v4848 = vmul.f32 %v4771, %v4839
      %v4849 = vmul.f32 %v4772, %v4843
      %v4850 = vmul.f32 %v4773, %v4839
      %v4851 = vmul.f32 %v4774, %v4843
      %v4852 = vmul.f32 %v4775, %v4839
      %v4853 = vmul.f32 %v4776, %v4843
      %v4854 = vmul.f32 %v4777, %v4839
      %v4855 = vmul.f32 %v4778, %v4843
      %v4856 = vmul.f32 %v4779, %v4839
      %v4857 = vmul.f32 %v4780, %v4843
      %v4858 = vmul.f32 %v4781, %v4839
      %v4859 = vmul.f32 %v4782, %v4843
      %v4860 = vmul.f32 %v4783, %v4839
      %v4861 = vmul.f32 %v4784, %v4843
      %v4862 = vmul.f32 %v4785, %v4839
      %v4863 = vmul.f32 %v4786, %v4843
      %v4864 = vmul.f32 %v4787, %v4839
      %v4865 = vmul.f32 %v4788, %v4843
      %v4866 = vmul.f32 %v4789, %v4839
      %v4867 = vmul.f32 %v4790, %v4843
      %v4868 = vmul.f32 %v4791, %v4839
      %v4869 = vmul.f32 %v4792, %v4843
      %v4870 = vmul.f32 %v4793, %v4839
      %v4871 = vmul.f32 %v4794, %v4843
      %v4872 = vmul.f32 %v4795, %v4839
      %v4873 = vmul.f32 %v4796, %v4843
      %v4874 = vmul.f32 %v4797, %v4839
      %v4875 = vmul.f32 %v4798, %v4843
      %v4876 = vmul.f32 %v4799, %v4839
      %v4877 = vmul.f32 %v4800, %v4843
      %v4878 = vmul.f32 %v4801, %v4839
      %v4879 = vmul.f32 %v4802, %v4843
      %v4880 = vmul.f32 %v4803, %v4839
      %v4881 = vmul.f32 %v4804, %v4843
      %v4882 = vmul.f32 %v4805, %v4839
      %v4883 = vmul.f32 %v4806, %v4843
      %v4884 = vmul.f32 %v4807, %v4839
      %v4885 = vmul.f32 %v4808, %v4843
      %v4886 = vmul.f32 %v4809, %v4839
      %v4887 = vmul.f32 %v4810, %v4843
      %v4888 = vmul.f32 %v4811, %v4839
      %v4889 = vmul.f32 %v4812, %v4843
      %v4890 = vmul.f32 %v4813, %v4839
      %v4891 = vmul.f32 %v4814, %v4843
      %v4892 = vmul.f32 %v4815, %v4839
      %v4893 = vmul.f32 %v4816, %v4843
      %v4894 = vmul.f32 %v4817, %v4839
      %v4895 = vmul.f32 %v4818, %v4843
      %v4896 = vmul.f32 %v4819, %v4839
      %v4897 = vmul.f32 %v4820, %v4843
      %v4898 = vmul.f32 %v4821, %v4839
      %v4899 = vmul.f32 %v4822, %v4843
      %v4900 = vmul.f32 %v4823, %v4839
      %v4901 = vmul.f32 %v4824, %v4843
      %v4902 = vmul.f32 %v4825, %v4839
      %v4903 = vmul.f32 %v4826, %v4843
      %v4904 = vmul.f32 %v4827, %v4839
      %v4905 = vmul.f32 %v4828, %v4843
      %v4906 = vmul.f32 %v4829, %v4839
      %v4907 = vmul.f32 %v4830, %v4843
      %v4908 = vmul.f32 %v4831, %v4839
      %v4909 = vmul.f32 %v4832, %v4843
      %s4910 = scalar_lea.vmem %s5, 2
      %v4911 = vld [vmem:[%s4910] ss:$4 sm:$0x3]
      %v4913 = vlaneseq
      %v4914 = vshrl.u32 %v4913, 7
      %v4915 = vsub.s32 0, %v4914
      %v4916 = vrot.slane %v4911, %v4915
      %v4917 = vlaneseq
      %v4918 = vshrl.u32 %v4917, 7
      %v4919 = vsub.s32 1, %v4918
      %v4920 = vrot.slane %v4911, %v4919
      %v4923 = vadd.f32 %v4846, %v4916
      %v4924 = vadd.f32 %v4847, %v4920
      %v4925 = vadd.f32 %v4848, %v4916
      %v4926 = vadd.f32 %v4849, %v4920
      %v4927 = vadd.f32 %v4850, %v4916
      %v4928 = vadd.f32 %v4851, %v4920
      %v4929 = vadd.f32 %v4852, %v4916
      %v4930 = vadd.f32 %v4853, %v4920
      %v4931 = vadd.f32 %v4854, %v4916
      %v4932 = vadd.f32 %v4855, %v4920
      %v4933 = vadd.f32 %v4856, %v4916
      %v4934 = vadd.f32 %v4857, %v4920
      %v4935 = vadd.f32 %v4858, %v4916
      %v4936 = vadd.f32 %v4859, %v4920
      %v4937 = vadd.f32 %v4860, %v4916
      %v4938 = vadd.f32 %v4861, %v4920
      %v4939 = vadd.f32 %v4862, %v4916
      %v4940 = vadd.f32 %v4863, %v4920
      %v4941 = vadd.f32 %v4864, %v4916
      %v4942 = vadd.f32 %v4865, %v4920
      %v4943 = vadd.f32 %v4866, %v4916
      %v4944 = vadd.f32 %v4867, %v4920
      %v4945 = vadd.f32 %v4868, %v4916
      %v4946 = vadd.f32 %v4869, %v4920
      %v4947 = vadd.f32 %v4870, %v4916
      %v4948 = vadd.f32 %v4871, %v4920
      %v4949 = vadd.f32 %v4872, %v4916
      %v4950 = vadd.f32 %v4873, %v4920
      %v4951 = vadd.f32 %v4874, %v4916
      %v4952 = vadd.f32 %v4875, %v4920
      %v4953 = vadd.f32 %v4876, %v4916
      %v4954 = vadd.f32 %v4877, %v4920
      %v4955 = vadd.f32 %v4878, %v4916
      %v4956 = vadd.f32 %v4879, %v4920
      %v4957 = vadd.f32 %v4880, %v4916
      %v4958 = vadd.f32 %v4881, %v4920
      %v4959 = vadd.f32 %v4882, %v4916
      %v4960 = vadd.f32 %v4883, %v4920
      %v4961 = vadd.f32 %v4884, %v4916
      %v4962 = vadd.f32 %v4885, %v4920
      %v4963 = vadd.f32 %v4886, %v4916
      %v4964 = vadd.f32 %v4887, %v4920
      %v4965 = vadd.f32 %v4888, %v4916
      %v4966 = vadd.f32 %v4889, %v4920
      %v4967 = vadd.f32 %v4890, %v4916
      %v4968 = vadd.f32 %v4891, %v4920
      %v4969 = vadd.f32 %v4892, %v4916
      %v4970 = vadd.f32 %v4893, %v4920
      %v4971 = vadd.f32 %v4894, %v4916
      %v4972 = vadd.f32 %v4895, %v4920
      %v4973 = vadd.f32 %v4896, %v4916
      %v4974 = vadd.f32 %v4897, %v4920
      %v4975 = vadd.f32 %v4898, %v4916
      %v4976 = vadd.f32 %v4899, %v4920
      %v4977 = vadd.f32 %v4900, %v4916
      %v4978 = vadd.f32 %v4901, %v4920
      %v4979 = vadd.f32 %v4902, %v4916
      %v4980 = vadd.f32 %v4903, %v4920
      %v4981 = vadd.f32 %v4904, %v4916
      %v4982 = vadd.f32 %v4905, %v4920
      %v4983 = vadd.f32 %v4906, %v4916
      %v4984 = vadd.f32 %v4907, %v4920
      %v4985 = vadd.f32 %v4908, %v4916
      %v4986 = vadd.f32 %v4909, %v4920
      %v4987 = vmax.f32 %v4923, 0.0
      %v4988 = vmax.f32 %v4924, 0.0
      %v4989 = vmax.f32 %v4925, 0.0
      %v4990 = vmax.f32 %v4926, 0.0
      %v4991 = vmax.f32 %v4927, 0.0
      %v4992 = vmax.f32 %v4928, 0.0
      %v4993 = vmax.f32 %v4929, 0.0
      %v4994 = vmax.f32 %v4930, 0.0
      %v4995 = vmax.f32 %v4931, 0.0
      %v4996 = vmax.f32 %v4932, 0.0
      %v4997 = vmax.f32 %v4933, 0.0
      %v4998 = vmax.f32 %v4934, 0.0
      %v4999 = vmax.f32 %v4935, 0.0
      %v5000 = vmax.f32 %v4936, 0.0
      %v5001 = vmax.f32 %v4937, 0.0
      %v5002 = vmax.f32 %v4938, 0.0
      %v5003 = vmax.f32 %v4939, 0.0
      %v5004 = vmax.f32 %v4940, 0.0
      %v5005 = vmax.f32 %v4941, 0.0
      %v5006 = vmax.f32 %v4942, 0.0
      %v5007 = vmax.f32 %v4943, 0.0
      %v5008 = vmax.f32 %v4944, 0.0
      %v5009 = vmax.f32 %v4945, 0.0
      %v5010 = vmax.f32 %v4946, 0.0
      %v5011 = vmax.f32 %v4947, 0.0
      %v5012 = vmax.f32 %v4948, 0.0
      %v5013 = vmax.f32 %v4949, 0.0
      %v5014 = vmax.f32 %v4950, 0.0
      %v5015 = vmax.f32 %v4951, 0.0
      %v5016 = vmax.f32 %v4952, 0.0
      %v5017 = vmax.f32 %v4953, 0.0
      %v5018 = vmax.f32 %v4954, 0.0
      %v5019 = vmax.f32 %v4955, 0.0
      %v5020 = vmax.f32 %v4956, 0.0
      %v5021 = vmax.f32 %v4957, 0.0
      %v5022 = vmax.f32 %v4958, 0.0
      %v5023 = vmax.f32 %v4959, 0.0
      %v5024 = vmax.f32 %v4960, 0.0
      %v5025 = vmax.f32 %v4961, 0.0
      %v5026 = vmax.f32 %v4962, 0.0
      %v5027 = vmax.f32 %v4963, 0.0
      %v5028 = vmax.f32 %v4964, 0.0
      %v5029 = vmax.f32 %v4965, 0.0
      %v5030 = vmax.f32 %v4966, 0.0
      %v5031 = vmax.f32 %v4967, 0.0
      %v5032 = vmax.f32 %v4968, 0.0
      %v5033 = vmax.f32 %v4969, 0.0
      %v5034 = vmax.f32 %v4970, 0.0
      %v5035 = vmax.f32 %v4971, 0.0
      %v5036 = vmax.f32 %v4972, 0.0
      %v5037 = vmax.f32 %v4973, 0.0
      %v5038 = vmax.f32 %v4974, 0.0
      %v5039 = vmax.f32 %v4975, 0.0
      %v5040 = vmax.f32 %v4976, 0.0
      %v5041 = vmax.f32 %v4977, 0.0
      %v5042 = vmax.f32 %v4978, 0.0
      %v5043 = vmax.f32 %v4979, 0.0
      %v5044 = vmax.f32 %v4980, 0.0
      %v5045 = vmax.f32 %v4981, 0.0
      %v5046 = vmax.f32 %v4982, 0.0
      %v5047 = vmax.f32 %v4983, 0.0
      %v5048 = vmax.f32 %v4984, 0.0
      %v5049 = vmax.f32 %v4985, 0.0
      %v5050 = vmax.f32 %v4986, 0.0
      %v5051 = vld [vmem:[%s6] sm:$0xff]
      %v5052 = vld [vmem:[%s6 + $0x8] sm:$0xff]
      %v5053 = vld [vmem:[%s6 + $0x10] sm:$0xff]
      %v5054 = vld [vmem:[%s6 + $0x18] sm:$0xff]
      %v5055 = vld [vmem:[%s6 + $0x20] sm:$0xff]
      %v5056 = vld [vmem:[%s6 + $0x28] sm:$0xff]
      %v5057 = vld [vmem:[%s6 + $0x30] sm:$0xff]
      %v5058 = vld [vmem:[%s6 + $0x38] sm:$0xff]
      %v5059 = vld [vmem:[%s6 + $0x40] sm:$0xff]
      %v5060 = vld [vmem:[%s6 + $0x48] sm:$0xff]
      %v5061 = vld [vmem:[%s6 + $0x50] sm:$0xff]
      %v5062 = vld [vmem:[%s6 + $0x58] sm:$0xff]
      %v5063 = vld [vmem:[%s6 + $0x60] sm:$0xff]
      %v5064 = vld [vmem:[%s6 + $0x68] sm:$0xff]
      %v5065 = vld [vmem:[%s6 + $0x70] sm:$0xff]
      %v5066 = vld [vmem:[%s6 + $0x78] sm:$0xff]
      %v5067 = vld [vmem:[%s6 + $0x80] sm:$0xff]
      %v5068 = vld [vmem:[%s6 + $0x88] sm:$0xff]
      %v5069 = vld [vmem:[%s6 + $0x90] sm:$0xff]
      %v5070 = vld [vmem:[%s6 + $0x98] sm:$0xff]
      %v5071 = vld [vmem:[%s6 + $0xa0] sm:$0xff]
      %v5072 = vld [vmem:[%s6 + $0xa8] sm:$0xff]
      %v5073 = vld [vmem:[%s6 + $0xb0] sm:$0xf]
      %v5074 = vld [vmem:[%s7] sm:$0x1]
      %v5075 = vlaneseq
      %v5076 = vshrl.u32 %v5075, 7
      %v5077 = vsub.s32 0, %v5076
      %v5078 = vrot.slane %v5074, %v5077
      %v5080 = vsel %vm4255, %v4988, 0
      %v5083 = vsel %vm4255, %v4990, 0
      %v5086 = vsel %vm4255, %v4992, 0
      %v5089 = vsel %vm4255, %v4994, 0
      %v5092 = vsel %vm4255, %v4996, 0
      %v5095 = vsel %vm4255, %v4998, 0
      %v5098 = vsel %vm4255, %v5000, 0
      %v5101 = vsel %vm4255, %v5002, 0
      %v5104 = vsel %vm4255, %v5004, 0
      %v5107 = vsel %vm4255, %v5006, 0
      %v5110 = vsel %vm4255, %v5008, 0
      %v5113 = vsel %vm4255, %v5010, 0
      %v5116 = vsel %vm4255, %v5012, 0
      %v5119 = vsel %vm4255, %v5014, 0
      %v5122 = vsel %vm4255, %v5016, 0
      %v5125 = vsel %vm4255, %v5018, 0
      %v5128 = vsel %vm4255, %v5020, 0
      %v5131 = vsel %vm4255, %v5022, 0
      %v5134 = vsel %vm4255, %v5024, 0
      %v5137 = vsel %vm4255, %v5026, 0
      %v5140 = vsel %vm4255, %v5028, 0
      %v5143 = vsel %vm4255, %v5030, 0
      %v5146 = vsel %vm4255, %v5032, 0
      %v5149 = vsel %vm4255, %v5034, 0
      %v5152 = vsel %vm4255, %v5036, 0
      %v5155 = vsel %vm4255, %v5038, 0
      %v5158 = vsel %vm4255, %v5040, 0
      %v5161 = vsel %vm4255, %v5042, 0
      %v5164 = vsel %vm4255, %v5044, 0
      %v5167 = vsel %vm4255, %v5046, 0
      %v5170 = vsel %vm4255, %v5048, 0
      %v5173 = vsel %vm4255, %v5050, 0
      %vm5175 = vcmask 1043456
      %v5177 = vsel %vm5175, %v5073, 0
      %5179 = vmatprep.subr.mxu0 0.0
      %5180 = vmatpush1.msra.mxu0 %v5066
      %5181 = vmatprep.subr.mxu0 0.0
      %5182 = vmatpush1.msra.mxu0 %v5065
      %5183 = vmatprep.subr.mxu0 0.0
      %5184 = vmatpush1.msra.mxu0 %v5064
      %5185 = vmatprep.subr.mxu0 0.0
      %5186 = vmatpush1.msra.mxu0 %v5063
      %5187 = vmatprep.subr.mxu0 0.0
      %5188 = vmatpush1.msra.mxu0 %v5062
      %5189 = vmatprep.subr.mxu0 0.0
      %5190 = vmatpush1.msra.mxu0 %v5061
      %5191 = vmatprep.subr.mxu0 0.0
      %5192 = vmatpush1.msra.mxu0 %v5060
      %5193 = vmatprep.subr.mxu0 0.0
      %5194 = vmatpush1.msra.mxu0 %v5059
      %5195 = vmatprep.subr.mxu0 0.0
      %5196 = vmatpush1.msra.mxu0 %v5058
      %5197 = vmatprep.subr.mxu0 0.0
      %5198 = vmatpush1.msra.mxu0 %v5057
      %5199 = vmatprep.subr.mxu0 0.0
      %5200 = vmatpush1.msra.mxu0 %v5056
      %5201 = vmatprep.subr.mxu0 0.0
      %5202 = vmatpush1.msra.mxu0 %v5055
      %5203 = vmatprep.subr.mxu0 0.0
      %5204 = vmatpush1.msra.mxu0 %v5054
      %5205 = vmatprep.subr.mxu0 0.0
      %5206 = vmatpush1.msra.mxu0 %v5053
      %5207 = vmatprep.subr.mxu0 0.0
      %5208 = vmatpush1.msra.mxu0 %v5052
      %5209 = vmatprep.subr.mxu0 0.0
      %5210 = vmatpush1.msra.mxu0 %v5051
      %5211 = vmatprep.subr.mxu0 0.0
      %5212 = vmatpush2.msra.mxu0 0.0
      %5213 = vmatprep.subr.mxu0 0.0
      %5214 = vmatpush2.msra.mxu0 0.0
      %5215 = vmatprep.subr.mxu0 0.0
      %5216 = vmatpush2.msra.mxu0 0.0
      %5217 = vmatprep.subr.mxu0 0.0
      %5218 = vmatpush2.msra.mxu0 0.0
      %5219 = vmatprep.subr.mxu0 0.0
      %5220 = vmatpush2.msra.mxu0 0.0
      %5221 = vmatprep.subr.mxu0 0.0
      %5222 = vmatpush2.msra.mxu0 0.0
      %5223 = vmatprep.subr.mxu0 0.0
      %5224 = vmatpush2.msra.mxu0 0.0
      %5225 = vmatprep.subr.mxu0 0.0
      %5226 = vmatpush2.msra.mxu0 0.0
      %5227 = vmatprep.subr.mxu0 0.0
      %5228 = vmatpush2.msra.mxu0 0.0
      %5229 = vmatprep.subr.mxu0 0.0
      %5230 = vmatpush2.msra.mxu0 %v5177
      %5231 = vmatprep.subr.mxu0 0.0
      %5232 = vmatpush2.msra.mxu0 %v5072
      %5233 = vmatprep.subr.mxu0 0.0
      %5234 = vmatpush2.msra.mxu0 %v5071
      %5235 = vmatprep.subr.mxu0 0.0
      %5236 = vmatpush2.msra.mxu0 %v5070
      %5237 = vmatprep.subr.mxu0 0.0
      %5238 = vmatpush2.msra.mxu0 %v5069
      %5239 = vmatprep.subr.mxu0 0.0
      %5240 = vmatpush2.msra.mxu0 %v5068
      %5241 = vmatprep.subr.mxu0 0.0
      %5242 = vmatpush2.msra.mxu0 %v5067
      %5243 = vmatprep.mubr.f32.mxu0 %v5080
      %5244 = vmatmul.mubr.f32.gmra.mxu0 %v4987
      %v5245 = vpop.f32.mrf.mxu0
      %v5246 = vadd.f32 %v5078, %v5245
      %v5247 = vpop.f32.mrf.mxu0
      %5248 = vmatprep.mubr.f32.mxu0 %v5083
      %5249 = vmatmul.mubr.f32.gmra.mxu0 %v4989
      %v5250 = vpop.f32.mrf.mxu0
      %v5251 = vadd.f32 %v5078, %v5250
      %v5252 = vpop.f32.mrf.mxu0
      %5253 = vmatprep.mubr.f32.mxu0 %v5086
      %5254 = vmatmul.mubr.f32.gmra.mxu0 %v4991
      %v5255 = vpop.f32.mrf.mxu0
      %v5256 = vadd.f32 %v5078, %v5255
      %v5257 = vpop.f32.mrf.mxu0
      %5258 = vmatprep.mubr.f32.mxu0 %v5089
      %5259 = vmatmul.mubr.f32.gmra.mxu0 %v4993
      %v5260 = vpop.f32.mrf.mxu0
      %v5261 = vadd.f32 %v5078, %v5260
      %v5262 = vpop.f32.mrf.mxu0
      %5263 = vmatprep.mubr.f32.mxu0 %v5092
      %5264 = vmatmul.mubr.f32.gmra.mxu0 %v4995
      %v5265 = vpop.f32.mrf.mxu0
      %v5266 = vadd.f32 %v5078, %v5265
      %v5267 = vpop.f32.mrf.mxu0
      %5268 = vmatprep.mubr.f32.mxu0 %v5095
      %5269 = vmatmul.mubr.f32.gmra.mxu0 %v4997
      %v5270 = vpop.f32.mrf.mxu0
      %v5271 = vadd.f32 %v5078, %v5270
      %v5272 = vpop.f32.mrf.mxu0
      %5273 = vmatprep.mubr.f32.mxu0 %v5098
      %5274 = vmatmul.mubr.f32.gmra.mxu0 %v4999
      %v5275 = vpop.f32.mrf.mxu0
      %v5276 = vadd.f32 %v5078, %v5275
      %v5277 = vpop.f32.mrf.mxu0
      %5278 = vmatprep.mubr.f32.mxu0 %v5101
      %5279 = vmatmul.mubr.f32.gmra.mxu0 %v5001
      %v5280 = vpop.f32.mrf.mxu0
      %v5281 = vadd.f32 %v5078, %v5280
      %v5282 = vpop.f32.mrf.mxu0
      %5283 = vmatprep.mubr.f32.mxu0 %v5104
      %5284 = vmatmul.mubr.f32.gmra.mxu0 %v5003
      %v5285 = vpop.f32.mrf.mxu0
      %v5286 = vadd.f32 %v5078, %v5285
      %v5287 = vpop.f32.mrf.mxu0
      %5288 = vmatprep.mubr.f32.mxu0 %v5107
      %5289 = vmatmul.mubr.f32.gmra.mxu0 %v5005
      %v5290 = vpop.f32.mrf.mxu0
      %v5291 = vadd.f32 %v5078, %v5290
      %v5292 = vpop.f32.mrf.mxu0
      %5293 = vmatprep.mubr.f32.mxu0 %v5110
      %5294 = vmatmul.mubr.f32.gmra.mxu0 %v5007
      %v5295 = vpop.f32.mrf.mxu0
      %v5296 = vadd.f32 %v5078, %v5295
      %v5297 = vpop.f32.mrf.mxu0
      %5298 = vmatprep.mubr.f32.mxu0 %v5113
      %5299 = vmatmul.mubr.f32.gmra.mxu0 %v5009
      %v5300 = vpop.f32.mrf.mxu0
      %v5301 = vadd.f32 %v5078, %v5300
      %v5302 = vpop.f32.mrf.mxu0
      %5303 = vmatprep.mubr.f32.mxu0 %v5116
      %5304 = vmatmul.mubr.f32.gmra.mxu0 %v5011
      %v5305 = vpop.f32.mrf.mxu0
      %v5306 = vadd.f32 %v5078, %v5305
      %v5307 = vpop.f32.mrf.mxu0
      %5308 = vmatprep.mubr.f32.mxu0 %v5119
      %5309 = vmatmul.mubr.f32.gmra.mxu0 %v5013
      %v5310 = vpop.f32.mrf.mxu0
      %v5311 = vadd.f32 %v5078, %v5310
      %v5312 = vpop.f32.mrf.mxu0
      %5313 = vmatprep.mubr.f32.mxu0 %v5122
      %5314 = vmatmul.mubr.f32.gmra.mxu0 %v5015
      %v5315 = vpop.f32.mrf.mxu0
      %v5316 = vadd.f32 %v5078, %v5315
      %v5317 = vpop.f32.mrf.mxu0
      %5318 = vmatprep.mubr.f32.mxu0 %v5125
      %5319 = vmatmul.mubr.f32.gmra.mxu0 %v5017
      %v5320 = vpop.f32.mrf.mxu0
      %v5321 = vadd.f32 %v5078, %v5320
      %v5322 = vpop.f32.mrf.mxu0
      %5323 = vmatprep.mubr.f32.mxu0 %v5128
      %5324 = vmatmul.mubr.f32.gmra.mxu0 %v5019
      %v5325 = vpop.f32.mrf.mxu0
      %v5326 = vadd.f32 %v5078, %v5325
      %v5327 = vpop.f32.mrf.mxu0
      %5328 = vmatprep.mubr.f32.mxu0 %v5131
      %5329 = vmatmul.mubr.f32.gmra.mxu0 %v5021
      %v5330 = vpop.f32.mrf.mxu0
      %v5331 = vadd.f32 %v5078, %v5330
      %v5332 = vpop.f32.mrf.mxu0
      %5333 = vmatprep.mubr.f32.mxu0 %v5134
      %5334 = vmatmul.mubr.f32.gmra.mxu0 %v5023
      %v5335 = vpop.f32.mrf.mxu0
      %v5336 = vadd.f32 %v5078, %v5335
      %v5337 = vpop.f32.mrf.mxu0
      %5338 = vmatprep.mubr.f32.mxu0 %v5137
      %5339 = vmatmul.mubr.f32.gmra.mxu0 %v5025
      %v5340 = vpop.f32.mrf.mxu0
      %v5341 = vadd.f32 %v5078, %v5340
      %v5342 = vpop.f32.mrf.mxu0
      %5343 = vmatprep.mubr.f32.mxu0 %v5140
      %5344 = vmatmul.mubr.f32.gmra.mxu0 %v5027
      %v5345 = vpop.f32.mrf.mxu0
      %v5346 = vadd.f32 %v5078, %v5345
      %v5347 = vpop.f32.mrf.mxu0
      %5348 = vmatprep.mubr.f32.mxu0 %v5143
      %5349 = vmatmul.mubr.f32.gmra.mxu0 %v5029
      %v5350 = vpop.f32.mrf.mxu0
      %v5351 = vadd.f32 %v5078, %v5350
      %v5352 = vpop.f32.mrf.mxu0
      %5353 = vmatprep.mubr.f32.mxu0 %v5146
      %5354 = vmatmul.mubr.f32.gmra.mxu0 %v5031
      %v5355 = vpop.f32.mrf.mxu0
      %v5356 = vadd.f32 %v5078, %v5355
      %v5357 = vpop.f32.mrf.mxu0
      %5358 = vmatprep.mubr.f32.mxu0 %v5149
      %5359 = vmatmul.mubr.f32.gmra.mxu0 %v5033
      %v5360 = vpop.f32.mrf.mxu0
      %v5361 = vadd.f32 %v5078, %v5360
      %v5362 = vpop.f32.mrf.mxu0
      %5363 = vmatprep.mubr.f32.mxu0 %v5152
      %5364 = vmatmul.mubr.f32.gmra.mxu0 %v5035
      %v5365 = vpop.f32.mrf.mxu0
      %v5366 = vadd.f32 %v5078, %v5365
      %v5367 = vpop.f32.mrf.mxu0
      %5368 = vmatprep.mubr.f32.mxu0 %v5155
      %5369 = vmatmul.mubr.f32.gmra.mxu0 %v5037
      %v5370 = vpop.f32.mrf.mxu0
      %v5371 = vadd.f32 %v5078, %v5370
      %v5372 = vpop.f32.mrf.mxu0
      %5373 = vmatprep.mubr.f32.mxu0 %v5158
      %5374 = vmatmul.mubr.f32.gmra.mxu0 %v5039
      %v5375 = vpop.f32.mrf.mxu0
      %v5376 = vadd.f32 %v5078, %v5375
      %v5377 = vpop.f32.mrf.mxu0
      %5378 = vmatprep.mubr.f32.mxu0 %v5161
      %5379 = vmatmul.mubr.f32.gmra.mxu0 %v5041
      %v5380 = vpop.f32.mrf.mxu0
      %v5381 = vadd.f32 %v5078, %v5380
      %v5382 = vpop.f32.mrf.mxu0
      %5383 = vmatprep.mubr.f32.mxu0 %v5164
      %5384 = vmatmul.mubr.f32.gmra.mxu0 %v5043
      %v5385 = vpop.f32.mrf.mxu0
      %v5386 = vadd.f32 %v5078, %v5385
      %v5387 = vpop.f32.mrf.mxu0
      %5388 = vmatprep.mubr.f32.mxu0 %v5167
      %5389 = vmatmul.mubr.f32.gmra.mxu0 %v5045
      %v5390 = vpop.f32.mrf.mxu0
      %v5391 = vadd.f32 %v5078, %v5390
      %v5392 = vpop.f32.mrf.mxu0
      %5393 = vmatprep.mubr.f32.mxu0 %v5170
      %5394 = vmatmul.mubr.f32.gmra.mxu0 %v5047
      %v5395 = vpop.f32.mrf.mxu0
      %v5396 = vadd.f32 %v5078, %v5395
      %v5397 = vpop.f32.mrf.mxu0
      %5398 = vmatprep.mubr.f32.mxu0 %v5173
      %5399 = vmatmul.mubr.f32.gmra.mxu0 %v5049
      %v5400 = vpop.f32.mrf.mxu0
      %v5401 = vadd.f32 %v5078, %v5400
      %v5402 = vpop.f32.mrf.mxu0
      %5403 = vdwg.mxu0
      %vm5404 = vcmask 736256
      %v5405 = vsel %vm5404, %v5246, 0.0
      %5406 = vadd.xlane.f32.xlu0 %v5405
      %v5407 = vpop.xlane.xlu0 %5406
      %v5408 = vsel %vm5404, %v5251, 0.0
      %5409 = vadd.xlane.f32.xlu0 %v5408
      %v5410 = vpop.xlane.xlu0 %5409
      %v5411 = vsel %vm5404, %v5256, 0.0
      %5412 = vadd.xlane.f32.xlu0 %v5411
      %v5413 = vpop.xlane.xlu0 %5412
      %v5414 = vsel %vm5404, %v5261, 0.0
      %5415 = vadd.xlane.f32.xlu0 %v5414
      %v5416 = vpop.xlane.xlu0 %5415
      %v5417 = vsel %vm5404, %v5266, 0.0
      %5418 = vadd.xlane.f32.xlu0 %v5417
      %v5419 = vpop.xlane.xlu0 %5418
      %v5420 = vsel %vm5404, %v5271, 0.0
      %5421 = vadd.xlane.f32.xlu0 %v5420
      %v5422 = vpop.xlane.xlu0 %5421
      %v5423 = vsel %vm5404, %v5276, 0.0
      %5424 = vadd.xlane.f32.xlu0 %v5423
      %v5425 = vpop.xlane.xlu0 %5424
      %v5426 = vsel %vm5404, %v5281, 0.0
      %5427 = vadd.xlane.f32.xlu0 %v5426
      %v5428 = vpop.xlane.xlu0 %5427
      %v5429 = vsel %vm5404, %v5286, 0.0
      %5430 = vadd.xlane.f32.xlu0 %v5429
      %v5431 = vpop.xlane.xlu0 %5430
      %v5432 = vsel %vm5404, %v5291, 0.0
      %5433 = vadd.xlane.f32.xlu0 %v5432
      %v5434 = vpop.xlane.xlu0 %5433
      %v5435 = vsel %vm5404, %v5296, 0.0
      %5436 = vadd.xlane.f32.xlu0 %v5435
      %v5437 = vpop.xlane.xlu0 %5436
      %v5438 = vsel %vm5404, %v5301, 0.0
      %5439 = vadd.xlane.f32.xlu0 %v5438
      %v5440 = vpop.xlane.xlu0 %5439
      %v5441 = vsel %vm5404, %v5306, 0.0
      %5442 = vadd.xlane.f32.xlu0 %v5441
      %v5443 = vpop.xlane.xlu0 %5442
      %v5444 = vsel %vm5404, %v5311, 0.0
      %5445 = vadd.xlane.f32.xlu0 %v5444
      %v5446 = vpop.xlane.xlu0 %5445
      %v5447 = vsel %vm5404, %v5316, 0.0
      %5448 = vadd.xlane.f32.xlu0 %v5447
      %v5449 = vpop.xlane.xlu0 %5448
      %v5450 = vsel %vm5404, %v5321, 0.0
      %5451 = vadd.xlane.f32.xlu0 %v5450
      %v5452 = vpop.xlane.xlu0 %5451
      %v5453 = vsel %vm5404, %v5326, 0.0
      %5454 = vadd.xlane.f32.xlu0 %v5453
      %v5455 = vpop.xlane.xlu0 %5454
      %v5456 = vsel %vm5404, %v5331, 0.0
      %5457 = vadd.xlane.f32.xlu0 %v5456
      %v5458 = vpop.xlane.xlu0 %5457
      %v5459 = vsel %vm5404, %v5336, 0.0
      %5460 = vadd.xlane.f32.xlu0 %v5459
      %v5461 = vpop.xlane.xlu0 %5460
      %v5462 = vsel %vm5404, %v5341, 0.0
      %5463 = vadd.xlane.f32.xlu0 %v5462
      %v5464 = vpop.xlane.xlu0 %5463
      %v5465 = vsel %vm5404, %v5346, 0.0
      %5466 = vadd.xlane.f32.xlu0 %v5465
      %v5467 = vpop.xlane.xlu0 %5466
      %v5468 = vsel %vm5404, %v5351, 0.0
      %5469 = vadd.xlane.f32.xlu0 %v5468
      %v5470 = vpop.xlane.xlu0 %5469
      %v5471 = vsel %vm5404, %v5356, 0.0
      %5472 = vadd.xlane.f32.xlu0 %v5471
      %v5473 = vpop.xlane.xlu0 %5472
      %v5474 = vsel %vm5404, %v5361, 0.0
      %5475 = vadd.xlane.f32.xlu0 %v5474
      %v5476 = vpop.xlane.xlu0 %5475
      %v5477 = vsel %vm5404, %v5366, 0.0
      %5478 = vadd.xlane.f32.xlu0 %v5477
      %v5479 = vpop.xlane.xlu0 %5478
      %v5480 = vsel %vm5404, %v5371, 0.0
      %5481 = vadd.xlane.f32.xlu0 %v5480
      %v5482 = vpop.xlane.xlu0 %5481
      %v5483 = vsel %vm5404, %v5376, 0.0
      %5484 = vadd.xlane.f32.xlu0 %v5483
      %v5485 = vpop.xlane.xlu0 %5484
      %v5486 = vsel %vm5404, %v5381, 0.0
      %5487 = vadd.xlane.f32.xlu0 %v5486
      %v5488 = vpop.xlane.xlu0 %5487
      %v5489 = vsel %vm5404, %v5386, 0.0
      %5490 = vadd.xlane.f32.xlu0 %v5489
      %v5491 = vpop.xlane.xlu0 %5490
      %v5492 = vsel %vm5404, %v5391, 0.0
      %5493 = vadd.xlane.f32.xlu0 %v5492
      %v5494 = vpop.xlane.xlu0 %5493
      %v5495 = vsel %vm5404, %v5396, 0.0
      %5496 = vadd.xlane.f32.xlu0 %v5495
      %v5497 = vpop.xlane.xlu0 %5496
      %v5498 = vsel %vm5404, %v5401, 0.0
      %5499 = vadd.xlane.f32.xlu0 %v5498
      %v5500 = vpop.xlane.xlu0 %5499
      %v5501 = vrcp.pop 90.0
      %v5502 = vmul.f32 %v5407, %v5501
      %v5503 = vmul.f32 %v5410, %v5501
      %v5504 = vmul.f32 %v5413, %v5501
      %v5505 = vmul.f32 %v5416, %v5501
      %v5506 = vmul.f32 %v5419, %v5501
      %v5507 = vmul.f32 %v5422, %v5501
      %v5508 = vmul.f32 %v5425, %v5501
      %v5509 = vmul.f32 %v5428, %v5501
      %v5510 = vmul.f32 %v5431, %v5501
      %v5511 = vmul.f32 %v5434, %v5501
      %v5512 = vmul.f32 %v5437, %v5501
      %v5513 = vmul.f32 %v5440, %v5501
      %v5514 = vmul.f32 %v5443, %v5501
      %v5515 = vmul.f32 %v5446, %v5501
      %v5516 = vmul.f32 %v5449, %v5501
      %v5517 = vmul.f32 %v5452, %v5501
      %v5518 = vmul.f32 %v5455, %v5501
      %v5519 = vmul.f32 %v5458, %v5501
      %v5520 = vmul.f32 %v5461, %v5501
      %v5521 = vmul.f32 %v5464, %v5501
      %v5522 = vmul.f32 %v5467, %v5501
      %v5523 = vmul.f32 %v5470, %v5501
      %v5524 = vmul.f32 %v5473, %v5501
      %v5525 = vmul.f32 %v5476, %v5501
      %v5526 = vmul.f32 %v5479, %v5501
      %v5527 = vmul.f32 %v5482, %v5501
      %v5528 = vmul.f32 %v5485, %v5501
      %v5529 = vmul.f32 %v5488, %v5501
      %v5530 = vmul.f32 %v5491, %v5501
      %v5531 = vmul.f32 %v5494, %v5501
      %v5532 = vmul.f32 %v5497, %v5501
      %v5533 = vmul.f32 %v5500, %v5501
      %v5534 = vsub.f32 %v5246, %v5502
      %v5535 = vsub.f32 %v5251, %v5503
      %v5536 = vsub.f32 %v5256, %v5504
      %v5537 = vsub.f32 %v5261, %v5505
      %v5538 = vsub.f32 %v5266, %v5506
      %v5539 = vsub.f32 %v5271, %v5507
      %v5540 = vsub.f32 %v5276, %v5508
      %v5541 = vsub.f32 %v5281, %v5509
      %v5542 = vsub.f32 %v5286, %v5510
      %v5543 = vsub.f32 %v5291, %v5511
      %v5544 = vsub.f32 %v5296, %v5512
      %v5545 = vsub.f32 %v5301, %v5513
      %v5546 = vsub.f32 %v5306, %v5514
      %v5547 = vsub.f32 %v5311, %v5515
      %v5548 = vsub.f32 %v5316, %v5516
      %v5549 = vsub.f32 %v5321, %v5517
      %v5550 = vsub.f32 %v5326, %v5518
      %v5551 = vsub.f32 %v5331, %v5519
      %v5552 = vsub.f32 %v5336, %v5520
      %v5553 = vsub.f32 %v5341, %v5521
      %v5554 = vsub.f32 %v5346, %v5522
      %v5555 = vsub.f32 %v5351, %v5523
      %v5556 = vsub.f32 %v5356, %v5524
      %v5557 = vsub.f32 %v5361, %v5525
      %v5558 = vsub.f32 %v5366, %v5526
      %v5559 = vsub.f32 %v5371, %v5527
      %v5560 = vsub.f32 %v5376, %v5528
      %v5561 = vsub.f32 %v5381, %v5529
      %v5562 = vsub.f32 %v5386, %v5530
      %v5563 = vsub.f32 %v5391, %v5531
      %v5564 = vsub.f32 %v5396, %v5532
      %v5565 = vsub.f32 %v5401, %v5533
      %v5566 = vmul.f32 %v5534, %v5534
      %v5567 = vmul.f32 %v5535, %v5535
      %v5568 = vmul.f32 %v5536, %v5536
      %v5569 = vmul.f32 %v5537, %v5537
      %v5570 = vmul.f32 %v5538, %v5538
      %v5571 = vmul.f32 %v5539, %v5539
      %v5572 = vmul.f32 %v5540, %v5540
      %v5573 = vmul.f32 %v5541, %v5541
      %v5574 = vmul.f32 %v5542, %v5542
      %v5575 = vmul.f32 %v5543, %v5543
      %v5576 = vmul.f32 %v5544, %v5544
      %v5577 = vmul.f32 %v5545, %v5545
      %v5578 = vmul.f32 %v5546, %v5546
      %v5579 = vmul.f32 %v5547, %v5547
      %v5580 = vmul.f32 %v5548, %v5548
      %v5581 = vmul.f32 %v5549, %v5549
      %v5582 = vmul.f32 %v5550, %v5550
      %v5583 = vmul.f32 %v5551, %v5551
      %v5584 = vmul.f32 %v5552, %v5552
      %v5585 = vmul.f32 %v5553, %v5553
      %v5586 = vmul.f32 %v5554, %v5554
      %v5587 = vmul.f32 %v5555, %v5555
      %v5588 = vmul.f32 %v5556, %v5556
      %v5589 = vmul.f32 %v5557, %v5557
      %v5590 = vmul.f32 %v5558, %v5558
      %v5591 = vmul.f32 %v5559, %v5559
      %v5592 = vmul.f32 %v5560, %v5560
      %v5593 = vmul.f32 %v5561, %v5561
      %v5594 = vmul.f32 %v5562, %v5562
      %v5595 = vmul.f32 %v5563, %v5563
      %v5596 = vmul.f32 %v5564, %v5564
      %v5597 = vmul.f32 %v5565, %v5565
      %v5598 = vsel %vm5404, %v5566, 0.0
      %5599 = vadd.xlane.f32.xlu0 %v5598
      %v5600 = vpop.xlane.xlu0 %5599
      %v5601 = vsel %vm5404, %v5567, 0.0
      %5602 = vadd.xlane.f32.xlu0 %v5601
      %v5603 = vpop.xlane.xlu0 %5602
      %v5604 = vsel %vm5404, %v5568, 0.0
      %5605 = vadd.xlane.f32.xlu0 %v5604
      %v5606 = vpop.xlane.xlu0 %5605
      %v5607 = vsel %vm5404, %v5569, 0.0
      %5608 = vadd.xlane.f32.xlu0 %v5607
      %v5609 = vpop.xlane.xlu0 %5608
      %v5610 = vsel %vm5404, %v5570, 0.0
      %5611 = vadd.xlane.f32.xlu0 %v5610
      %v5612 = vpop.xlane.xlu0 %5611
      %v5613 = vsel %vm5404, %v5571, 0.0
      %5614 = vadd.xlane.f32.xlu0 %v5613
      %v5615 = vpop.xlane.xlu0 %5614
      %v5616 = vsel %vm5404, %v5572, 0.0
      %5617 = vadd.xlane.f32.xlu0 %v5616
      %v5618 = vpop.xlane.xlu0 %5617
      %v5619 = vsel %vm5404, %v5573, 0.0
      %5620 = vadd.xlane.f32.xlu0 %v5619
      %v5621 = vpop.xlane.xlu0 %5620
      %v5622 = vsel %vm5404, %v5574, 0.0
      %5623 = vadd.xlane.f32.xlu0 %v5622
      %v5624 = vpop.xlane.xlu0 %5623
      %v5625 = vsel %vm5404, %v5575, 0.0
      %5626 = vadd.xlane.f32.xlu0 %v5625
      %v5627 = vpop.xlane.xlu0 %5626
      %v5628 = vsel %vm5404, %v5576, 0.0
      %5629 = vadd.xlane.f32.xlu0 %v5628
      %v5630 = vpop.xlane.xlu0 %5629
      %v5631 = vsel %vm5404, %v5577, 0.0
      %5632 = vadd.xlane.f32.xlu0 %v5631
      %v5633 = vpop.xlane.xlu0 %5632
      %v5634 = vsel %vm5404, %v5578, 0.0
      %5635 = vadd.xlane.f32.xlu0 %v5634
      %v5636 = vpop.xlane.xlu0 %5635
      %v5637 = vsel %vm5404, %v5579, 0.0
      %5638 = vadd.xlane.f32.xlu0 %v5637
      %v5639 = vpop.xlane.xlu0 %5638
      %v5640 = vsel %vm5404, %v5580, 0.0
      %5641 = vadd.xlane.f32.xlu0 %v5640
      %v5642 = vpop.xlane.xlu0 %5641
      %v5643 = vsel %vm5404, %v5581, 0.0
      %5644 = vadd.xlane.f32.xlu0 %v5643
      %v5645 = vpop.xlane.xlu0 %5644
      %v5646 = vsel %vm5404, %v5582, 0.0
      %5647 = vadd.xlane.f32.xlu0 %v5646
      %v5648 = vpop.xlane.xlu0 %5647
      %v5649 = vsel %vm5404, %v5583, 0.0
      %5650 = vadd.xlane.f32.xlu0 %v5649
      %v5651 = vpop.xlane.xlu0 %5650
      %v5652 = vsel %vm5404, %v5584, 0.0
      %5653 = vadd.xlane.f32.xlu0 %v5652
      %v5654 = vpop.xlane.xlu0 %5653
      %v5655 = vsel %vm5404, %v5585, 0.0
      %5656 = vadd.xlane.f32.xlu0 %v5655
      %v5657 = vpop.xlane.xlu0 %5656
      %v5658 = vsel %vm5404, %v5586, 0.0
      %5659 = vadd.xlane.f32.xlu0 %v5658
      %v5660 = vpop.xlane.xlu0 %5659
      %v5661 = vsel %vm5404, %v5587, 0.0
      %5662 = vadd.xlane.f32.xlu0 %v5661
      %v5663 = vpop.xlane.xlu0 %5662
      %v5664 = vsel %vm5404, %v5588, 0.0
      %5665 = vadd.xlane.f32.xlu0 %v5664
      %v5666 = vpop.xlane.xlu0 %5665
      %v5667 = vsel %vm5404, %v5589, 0.0
      %5668 = vadd.xlane.f32.xlu0 %v5667
      %v5669 = vpop.xlane.xlu0 %5668
      %v5670 = vsel %vm5404, %v5590, 0.0
      %5671 = vadd.xlane.f32.xlu0 %v5670
      %v5672 = vpop.xlane.xlu0 %5671
      %v5673 = vsel %vm5404, %v5591, 0.0
      %5674 = vadd.xlane.f32.xlu0 %v5673
      %v5675 = vpop.xlane.xlu0 %5674
      %v5676 = vsel %vm5404, %v5592, 0.0
      %5677 = vadd.xlane.f32.xlu0 %v5676
      %v5678 = vpop.xlane.xlu0 %5677
      %v5679 = vsel %vm5404, %v5593, 0.0
      %5680 = vadd.xlane.f32.xlu0 %v5679
      %v5681 = vpop.xlane.xlu0 %5680
      %v5682 = vsel %vm5404, %v5594, 0.0
      %5683 = vadd.xlane.f32.xlu0 %v5682
      %v5684 = vpop.xlane.xlu0 %5683
      %v5685 = vsel %vm5404, %v5595, 0.0
      %5686 = vadd.xlane.f32.xlu0 %v5685
      %v5687 = vpop.xlane.xlu0 %5686
      %v5688 = vsel %vm5404, %v5596, 0.0
      %5689 = vadd.xlane.f32.xlu0 %v5688
      %v5690 = vpop.xlane.xlu0 %5689
      %v5691 = vsel %vm5404, %v5597, 0.0
      %5692 = vadd.xlane.f32.xlu0 %v5691
      %v5693 = vpop.xlane.xlu0 %5692
      %v5694 = vmul.f32 %v5600, %v5501
      %v5695 = vmul.f32 %v5603, %v5501
      %v5696 = vmul.f32 %v5606, %v5501
      %v5697 = vmul.f32 %v5609, %v5501
      %v5698 = vmul.f32 %v5612, %v5501
      %v5699 = vmul.f32 %v5615, %v5501
      %v5700 = vmul.f32 %v5618, %v5501
      %v5701 = vmul.f32 %v5621, %v5501
      %v5702 = vmul.f32 %v5624, %v5501
      %v5703 = vmul.f32 %v5627, %v5501
      %v5704 = vmul.f32 %v5630, %v5501
      %v5705 = vmul.f32 %v5633, %v5501
      %v5706 = vmul.f32 %v5636, %v5501
      %v5707 = vmul.f32 %v5639, %v5501
      %v5708 = vmul.f32 %v5642, %v5501
      %v5709 = vmul.f32 %v5645, %v5501
      %v5710 = vmul.f32 %v5648, %v5501
      %v5711 = vmul.f32 %v5651, %v5501
      %v5712 = vmul.f32 %v5654, %v5501
      %v5713 = vmul.f32 %v5657, %v5501
      %v5714 = vmul.f32 %v5660, %v5501
      %v5715 = vmul.f32 %v5663, %v5501
      %v5716 = vmul.f32 %v5666, %v5501
      %v5717 = vmul.f32 %v5669, %v5501
      %v5718 = vmul.f32 %v5672, %v5501
      %v5719 = vmul.f32 %v5675, %v5501
      %v5720 = vmul.f32 %v5678, %v5501
      %v5721 = vmul.f32 %v5681, %v5501
      %v5722 = vmul.f32 %v5684, %v5501
      %v5723 = vmul.f32 %v5687, %v5501
      %v5724 = vmul.f32 %v5690, %v5501
      %v5725 = vmul.f32 %v5693, %v5501
      %v5726 = vadd.f32 %v5694, 1e-05
      %v5727 = vadd.f32 %v5695, 1e-05
      %v5728 = vadd.f32 %v5696, 1e-05
      %v5729 = vadd.f32 %v5697, 1e-05
      %v5730 = vadd.f32 %v5698, 1e-05
      %v5731 = vadd.f32 %v5699, 1e-05
      %v5732 = vadd.f32 %v5700, 1e-05
      %v5733 = vadd.f32 %v5701, 1e-05
      %v5734 = vadd.f32 %v5702, 1e-05
      %v5735 = vadd.f32 %v5703, 1e-05
      %v5736 = vadd.f32 %v5704, 1e-05
      %v5737 = vadd.f32 %v5705, 1e-05
      %v5738 = vadd.f32 %v5706, 1e-05
      %v5739 = vadd.f32 %v5707, 1e-05
      %v5740 = vadd.f32 %v5708, 1e-05
      %v5741 = vadd.f32 %v5709, 1e-05
      %v5742 = vadd.f32 %v5710, 1e-05
      %v5743 = vadd.f32 %v5711, 1e-05
      %v5744 = vadd.f32 %v5712, 1e-05
      %v5745 = vadd.f32 %v5713, 1e-05
      %v5746 = vadd.f32 %v5714, 1e-05
      %v5747 = vadd.f32 %v5715, 1e-05
      %v5748 = vadd.f32 %v5716, 1e-05
      %v5749 = vadd.f32 %v5717, 1e-05
      %v5750 = vadd.f32 %v5718, 1e-05
      %v5751 = vadd.f32 %v5719, 1e-05
      %v5752 = vadd.f32 %v5720, 1e-05
      %v5753 = vadd.f32 %v5721, 1e-05
      %v5754 = vadd.f32 %v5722, 1e-05
      %v5755 = vadd.f32 %v5723, 1e-05
      %v5756 = vadd.f32 %v5724, 1e-05
      %v5757 = vadd.f32 %v5725, 1e-05
      %v5758 = vrsqrt.pop %v5726
      %v5759 = vrsqrt.pop %v5727
      %v5760 = vrsqrt.pop %v5728
      %v5761 = vrsqrt.pop %v5729
      %v5762 = vrsqrt.pop %v5730
      %v5763 = vrsqrt.pop %v5731
      %v5764 = vrsqrt.pop %v5732
      %v5765 = vrsqrt.pop %v5733
      %v5766 = vrsqrt.pop %v5734
      %v5767 = vrsqrt.pop %v5735
      %v5768 = vrsqrt.pop %v5736
      %v5769 = vrsqrt.pop %v5737
      %v5770 = vrsqrt.pop %v5738
      %v5771 = vrsqrt.pop %v5739
      %v5772 = vrsqrt.pop %v5740
      %v5773 = vrsqrt.pop %v5741
      %v5774 = vrsqrt.pop %v5742
      %v5775 = vrsqrt.pop %v5743
      %v5776 = vrsqrt.pop %v5744
      %v5777 = vrsqrt.pop %v5745
      %v5778 = vrsqrt.pop %v5746
      %v5779 = vrsqrt.pop %v5747
      %v5780 = vrsqrt.pop %v5748
      %v5781 = vrsqrt.pop %v5749
      %v5782 = vrsqrt.pop %v5750
      %v5783 = vrsqrt.pop %v5751
      %v5784 = vrsqrt.pop %v5752
      %v5785 = vrsqrt.pop %v5753
      %v5786 = vrsqrt.pop %v5754
      %v5787 = vrsqrt.pop %v5755
      %v5788 = vrsqrt.pop %v5756
      %v5789 = vrsqrt.pop %v5757
      %v5790 = vmul.f32 %v5534, %v5758
      %v5791 = vmul.f32 %v5535, %v5759
      %v5792 = vmul.f32 %v5536, %v5760
      %v5793 = vmul.f32 %v5537, %v5761
      %v5794 = vmul.f32 %v5538, %v5762
      %v5795 = vmul.f32 %v5539, %v5763
      %v5796 = vmul.f32 %v5540, %v5764
      %v5797 = vmul.f32 %v5541, %v5765
      %v5798 = vmul.f32 %v5542, %v5766
      %v5799 = vmul.f32 %v5543, %v5767
      %v5800 = vmul.f32 %v5544, %v5768
      %v5801 = vmul.f32 %v5545, %v5769
      %v5802 = vmul.f32 %v5546, %v5770
      %v5803 = vmul.f32 %v5547, %v5771
      %v5804 = vmul.f32 %v5548, %v5772
      %v5805 = vmul.f32 %v5549, %v5773
      %v5806 = vmul.f32 %v5550, %v5774
      %v5807 = vmul.f32 %v5551, %v5775
      %v5808 = vmul.f32 %v5552, %v5776
      %v5809 = vmul.f32 %v5553, %v5777
      %v5810 = vmul.f32 %v5554, %v5778
      %v5811 = vmul.f32 %v5555, %v5779
      %v5812 = vmul.f32 %v5556, %v5780
      %v5813 = vmul.f32 %v5557, %v5781
      %v5814 = vmul.f32 %v5558, %v5782
      %v5815 = vmul.f32 %v5559, %v5783
      %v5816 = vmul.f32 %v5560, %v5784
      %v5817 = vmul.f32 %v5561, %v5785
      %v5818 = vmul.f32 %v5562, %v5786
      %v5819 = vmul.f32 %v5563, %v5787
      %v5820 = vmul.f32 %v5564, %v5788
      %v5821 = vmul.f32 %v5565, %v5789
      %v5822 = vld [vmem:[%s7 + $0x1] sm:$0x1]
      %v5823 = vlaneseq
      %v5824 = vshrl.u32 %v5823, 7
      %v5825 = vsub.s32 0, %v5824
      %v5826 = vrot.slane %v5822, %v5825
      %v5827 = vmul.f32 %v5790, %v5826
      %v5828 = vmul.f32 %v5791, %v5826
      %v5829 = vmul.f32 %v5792, %v5826
      %v5830 = vmul.f32 %v5793, %v5826
      %v5831 = vmul.f32 %v5794, %v5826
      %v5832 = vmul.f32 %v5795, %v5826
      %v5833 = vmul.f32 %v5796, %v5826
      %v5834 = vmul.f32 %v5797, %v5826
      %v5835 = vmul.f32 %v5798, %v5826
      %v5836 = vmul.f32 %v5799, %v5826
      %v5837 = vmul.f32 %v5800, %v5826
      %v5838 = vmul.f32 %v5801, %v5826
      %v5839 = vmul.f32 %v5802, %v5826
      %v5840 = vmul.f32 %v5803, %v5826
      %v5841 = vmul.f32 %v5804, %v5826
      %v5842 = vmul.f32 %v5805, %v5826
      %v5843 = vmul.f32 %v5806, %v5826
      %v5844 = vmul.f32 %v5807, %v5826
      %v5845 = vmul.f32 %v5808, %v5826
      %v5846 = vmul.f32 %v5809, %v5826
      %v5847 = vmul.f32 %v5810, %v5826
      %v5848 = vmul.f32 %v5811, %v5826
      %v5849 = vmul.f32 %v5812, %v5826
      %v5850 = vmul.f32 %v5813, %v5826
      %v5851 = vmul.f32 %v5814, %v5826
      %v5852 = vmul.f32 %v5815, %v5826
      %v5853 = vmul.f32 %v5816, %v5826
      %v5854 = vmul.f32 %v5817, %v5826
      %v5855 = vmul.f32 %v5818, %v5826
      %v5856 = vmul.f32 %v5819, %v5826
      %v5857 = vmul.f32 %v5820, %v5826
      %v5858 = vmul.f32 %v5821, %v5826
      %v5859 = vld [vmem:[%s7 + $0x2] sm:$0x1]
      %v5860 = vlaneseq
      %v5861 = vshrl.u32 %v5860, 7
      %v5862 = vsub.s32 0, %v5861
      %v5863 = vrot.slane %v5859, %v5862
      %v5864 = vadd.f32 %v5827, %v5863
      %v5865 = vadd.f32 %v5828, %v5863
      %v5866 = vadd.f32 %v5829, %v5863
      %v5867 = vadd.f32 %v5830, %v5863
      %v5868 = vadd.f32 %v5831, %v5863
      %v5869 = vadd.f32 %v5832, %v5863
      %v5870 = vadd.f32 %v5833, %v5863
      %v5871 = vadd.f32 %v5834, %v5863
      %v5872 = vadd.f32 %v5835, %v5863
      %v5873 = vadd.f32 %v5836, %v5863
      %v5874 = vadd.f32 %v5837, %v5863
      %v5875 = vadd.f32 %v5838, %v5863
      %v5876 = vadd.f32 %v5839, %v5863
      %v5877 = vadd.f32 %v5840, %v5863
      %v5878 = vadd.f32 %v5841, %v5863
      %v5879 = vadd.f32 %v5842, %v5863
      %v5880 = vadd.f32 %v5843, %v5863
      %v5881 = vadd.f32 %v5844, %v5863
      %v5882 = vadd.f32 %v5845, %v5863
      %v5883 = vadd.f32 %v5846, %v5863
      %v5884 = vadd.f32 %v5847, %v5863
      %v5885 = vadd.f32 %v5848, %v5863
      %v5886 = vadd.f32 %v5849, %v5863
      %v5887 = vadd.f32 %v5850, %v5863
      %v5888 = vadd.f32 %v5851, %v5863
      %v5889 = vadd.f32 %v5852, %v5863
      %v5890 = vadd.f32 %v5853, %v5863
      %v5891 = vadd.f32 %v5854, %v5863
      %v5892 = vadd.f32 %v5855, %v5863
      %v5893 = vadd.f32 %v5856, %v5863
      %v5894 = vadd.f32 %v5857, %v5863
      %v5895 = vadd.f32 %v5858, %v5863
      %v5896 = vmax.f32 %v5864, 0.0
      %v5897 = vmax.f32 %v5865, 0.0
      %v5898 = vmax.f32 %v5866, 0.0
      %v5899 = vmax.f32 %v5867, 0.0
      %v5900 = vmax.f32 %v5868, 0.0
      %v5901 = vmax.f32 %v5869, 0.0
      %v5902 = vmax.f32 %v5870, 0.0
      %v5903 = vmax.f32 %v5871, 0.0
      %v5904 = vmax.f32 %v5872, 0.0
      %v5905 = vmax.f32 %v5873, 0.0
      %v5906 = vmax.f32 %v5874, 0.0
      %v5907 = vmax.f32 %v5875, 0.0
      %v5908 = vmax.f32 %v5876, 0.0
      %v5909 = vmax.f32 %v5877, 0.0
      %v5910 = vmax.f32 %v5878, 0.0
      %v5911 = vmax.f32 %v5879, 0.0
      %v5912 = vmax.f32 %v5880, 0.0
      %v5913 = vmax.f32 %v5881, 0.0
      %v5914 = vmax.f32 %v5882, 0.0
      %v5915 = vmax.f32 %v5883, 0.0
      %v5916 = vmax.f32 %v5884, 0.0
      %v5917 = vmax.f32 %v5885, 0.0
      %v5918 = vmax.f32 %v5886, 0.0
      %v5919 = vmax.f32 %v5887, 0.0
      %v5920 = vmax.f32 %v5888, 0.0
      %v5921 = vmax.f32 %v5889, 0.0
      %v5922 = vmax.f32 %v5890, 0.0
      %v5923 = vmax.f32 %v5891, 0.0
      %v5924 = vmax.f32 %v5892, 0.0
      %v5925 = vmax.f32 %v5893, 0.0
      %v5926 = vmax.f32 %v5894, 0.0
      %v5927 = vmax.f32 %v5895, 0.0
      %v5928 = vld [vmem:[%s8] sm:$0xff]
      %v5929 = vld [vmem:[%s8 + $0x8] sm:$0xff]
      %v5930 = vld [vmem:[%s8 + $0x10] sm:$0xff]
      %v5931 = vld [vmem:[%s8 + $0x18] sm:$0xff]
      %v5932 = vld [vmem:[%s8 + $0x20] sm:$0xff]
      %v5933 = vld [vmem:[%s8 + $0x28] sm:$0xff]
      %v5934 = vld [vmem:[%s8 + $0x30] sm:$0xff]
      %v5935 = vld [vmem:[%s8 + $0x38] sm:$0xff]
      %v5936 = vld [vmem:[%s8 + $0x40] sm:$0xff]
      %v5937 = vld [vmem:[%s8 + $0x48] sm:$0xff]
      %v5938 = vld [vmem:[%s8 + $0x50] sm:$0xff]
      %v5939 = vld [vmem:[%s8 + $0x58] sm:$0x3]
      %v5940 = vld [vmem:[%s9] sm:$0x1]
      %v5941 = vlaneseq
      %v5942 = vshrl.u32 %v5941, 7
      %v5943 = vsub.s32 0, %v5942
      %v5944 = vrot.slane %v5940, %v5943
      %v5946 = vsel %vm5404, %v5896, 0
      %v5949 = vsel %vm5404, %v5897, 0
      %v5952 = vsel %vm5404, %v5898, 0
      %v5955 = vsel %vm5404, %v5899, 0
      %v5958 = vsel %vm5404, %v5900, 0
      %v5961 = vsel %vm5404, %v5901, 0
      %v5964 = vsel %vm5404, %v5902, 0
      %v5967 = vsel %vm5404, %v5903, 0
      %v5970 = vsel %vm5404, %v5904, 0
      %v5973 = vsel %vm5404, %v5905, 0
      %v5976 = vsel %vm5404, %v5906, 0
      %v5979 = vsel %vm5404, %v5907, 0
      %v5982 = vsel %vm5404, %v5908, 0
      %v5985 = vsel %vm5404, %v5909, 0
      %v5988 = vsel %vm5404, %v5910, 0
      %v5991 = vsel %vm5404, %v5911, 0
      %v5994 = vsel %vm5404, %v5912, 0
      %v5997 = vsel %vm5404, %v5913, 0
      %v6000 = vsel %vm5404, %v5914, 0
      %v6003 = vsel %vm5404, %v5915, 0
      %v6006 = vsel %vm5404, %v5916, 0
      %v6009 = vsel %vm5404, %v5917, 0
      %v6012 = vsel %vm5404, %v5918, 0
      %v6015 = vsel %vm5404, %v5919, 0
      %v6018 = vsel %vm5404, %v5920, 0
      %v6021 = vsel %vm5404, %v5921, 0
      %v6024 = vsel %vm5404, %v5922, 0
      %v6027 = vsel %vm5404, %v5923, 0
      %v6030 = vsel %vm5404, %v5924, 0
      %v6033 = vsel %vm5404, %v5925, 0
      %v6036 = vsel %vm5404, %v5926, 0
      %v6039 = vsel %vm5404, %v5927, 0
      %v6042 = vsel %vm568, %v5939, 0
      %6044 = vmatprep.subr.mxu0 0.0
      %6045 = vmatpush1.msra.mxu0 0.0
      %6046 = vmatprep.subr.mxu0 0.0
      %6047 = vmatpush1.msra.mxu0 0.0
      %6048 = vmatprep.subr.mxu0 0.0
      %6049 = vmatpush1.msra.mxu0 0.0
      %6050 = vmatprep.subr.mxu0 0.0
      %6051 = vmatpush1.msra.mxu0 0.0
      %6052 = vmatprep.subr.mxu0 0.0
      %6053 = vmatpush1.msra.mxu0 %v6042
      %6054 = vmatprep.subr.mxu0 0.0
      %6055 = vmatpush1.msra.mxu0 %v5938
      %6056 = vmatprep.subr.mxu0 0.0
      %6057 = vmatpush1.msra.mxu0 %v5937
      %6058 = vmatprep.subr.mxu0 0.0
      %6059 = vmatpush1.msra.mxu0 %v5936
      %6060 = vmatprep.subr.mxu0 0.0
      %6061 = vmatpush1.msra.mxu0 %v5935
      %6062 = vmatprep.subr.mxu0 0.0
      %6063 = vmatpush1.msra.mxu0 %v5934
      %6064 = vmatprep.subr.mxu0 0.0
      %6065 = vmatpush1.msra.mxu0 %v5933
      %6066 = vmatprep.subr.mxu0 0.0
      %6067 = vmatpush1.msra.mxu0 %v5932
      %6068 = vmatprep.subr.mxu0 0.0
      %6069 = vmatpush1.msra.mxu0 %v5931
      %6070 = vmatprep.subr.mxu0 0.0
      %6071 = vmatpush1.msra.mxu0 %v5930
      %6072 = vmatprep.subr.mxu0 0.0
      %6073 = vmatpush1.msra.mxu0 %v5929
      %6074 = vmatprep.subr.mxu0 0.0
      %6075 = vmatpush1.msra.mxu0 %v5928
      %6076 = vmatprep.subr.mxu0 0.0
      %6077 = vmatpush2.msra.mxu0 0.0
      %6078 = vmatprep.subr.mxu0 0.0
      %6079 = vmatpush2.msra.mxu0 0.0
      %6080 = vmatprep.subr.mxu0 0.0
      %6081 = vmatpush2.msra.mxu0 0.0
      %6082 = vmatprep.subr.mxu0 0.0
      %6083 = vmatpush2.msra.mxu0 0.0
      %6084 = vmatprep.subr.mxu0 0.0
      %6085 = vmatpush2.msra.mxu0 0.0
      %6086 = vmatprep.subr.mxu0 0.0
      %6087 = vmatpush2.msra.mxu0 0.0
      %6088 = vmatprep.subr.mxu0 0.0
      %6089 = vmatpush2.msra.mxu0 0.0
      %6090 = vmatprep.subr.mxu0 0.0
      %6091 = vmatpush2.msra.mxu0 0.0
      %6092 = vmatprep.subr.mxu0 0.0
      %6093 = vmatpush2.msra.mxu0 0.0
      %6094 = vmatprep.subr.mxu0 0.0
      %6095 = vmatpush2.msra.mxu0 0.0
      %6096 = vmatprep.subr.mxu0 0.0
      %6097 = vmatpush2.msra.mxu0 0.0
      %6098 = vmatprep.subr.mxu0 0.0
      %6099 = vmatpush2.msra.mxu0 0.0
      %6100 = vmatprep.subr.mxu0 0.0
      %6101 = vmatpush2.msra.mxu0 0.0
      %6102 = vmatprep.subr.mxu0 0.0
      %6103 = vmatpush2.msra.mxu0 0.0
      %6104 = vmatprep.subr.mxu0 0.0
      %6105 = vmatpush2.msra.mxu0 0.0
      %6106 = vmatprep.subr.mxu0 0.0
      %6107 = vmatpush2.msra.mxu0 0.0
      %6108 = vmatprep.mubr.f32.mxu0 0.0
      %6109 = vmatmul.mubr.f32.gmra.mxu0 %v5946
      %v6110 = vpop.f32.mrf.mxu0
      %v6111 = vadd.f32 %v5944, %v6110
      %v6112 = vpop.f32.mrf.mxu0
      %6113 = vmatprep.mubr.f32.mxu0 0.0
      %6114 = vmatmul.mubr.f32.gmra.mxu0 %v5949
      %v6115 = vpop.f32.mrf.mxu0
      %v6116 = vadd.f32 %v5944, %v6115
      %v6117 = vpop.f32.mrf.mxu0
      %6118 = vmatprep.mubr.f32.mxu0 0.0
      %6119 = vmatmul.mubr.f32.gmra.mxu0 %v5952
      %v6120 = vpop.f32.mrf.mxu0
      %v6121 = vadd.f32 %v5944, %v6120
      %v6122 = vpop.f32.mrf.mxu0
      %6123 = vmatprep.mubr.f32.mxu0 0.0
      %6124 = vmatmul.mubr.f32.gmra.mxu0 %v5955
      %v6125 = vpop.f32.mrf.mxu0
      %v6126 = vadd.f32 %v5944, %v6125
      %v6127 = vpop.f32.mrf.mxu0
      %6128 = vmatprep.mubr.f32.mxu0 0.0
      %6129 = vmatmul.mubr.f32.gmra.mxu0 %v5958
      %v6130 = vpop.f32.mrf.mxu0
      %v6131 = vadd.f32 %v5944, %v6130
      %v6132 = vpop.f32.mrf.mxu0
      %6133 = vmatprep.mubr.f32.mxu0 0.0
      %6134 = vmatmul.mubr.f32.gmra.mxu0 %v5961
      %v6135 = vpop.f32.mrf.mxu0
      %v6136 = vadd.f32 %v5944, %v6135
      %v6137 = vpop.f32.mrf.mxu0
      %6138 = vmatprep.mubr.f32.mxu0 0.0
      %6139 = vmatmul.mubr.f32.gmra.mxu0 %v5964
      %v6140 = vpop.f32.mrf.mxu0
      %v6141 = vadd.f32 %v5944, %v6140
      %v6142 = vpop.f32.mrf.mxu0
      %6143 = vmatprep.mubr.f32.mxu0 0.0
      %6144 = vmatmul.mubr.f32.gmra.mxu0 %v5967
      %v6145 = vpop.f32.mrf.mxu0
      %v6146 = vadd.f32 %v5944, %v6145
      %v6147 = vpop.f32.mrf.mxu0
      %6148 = vmatprep.mubr.f32.mxu0 0.0
      %6149 = vmatmul.mubr.f32.gmra.mxu0 %v5970
      %v6150 = vpop.f32.mrf.mxu0
      %v6151 = vadd.f32 %v5944, %v6150
      %v6152 = vpop.f32.mrf.mxu0
      %6153 = vmatprep.mubr.f32.mxu0 0.0
      %6154 = vmatmul.mubr.f32.gmra.mxu0 %v5973
      %v6155 = vpop.f32.mrf.mxu0
      %v6156 = vadd.f32 %v5944, %v6155
      %v6157 = vpop.f32.mrf.mxu0
      %6158 = vmatprep.mubr.f32.mxu0 0.0
      %6159 = vmatmul.mubr.f32.gmra.mxu0 %v5976
      %v6160 = vpop.f32.mrf.mxu0
      %v6161 = vadd.f32 %v5944, %v6160
      %v6162 = vpop.f32.mrf.mxu0
      %6163 = vmatprep.mubr.f32.mxu0 0.0
      %6164 = vmatmul.mubr.f32.gmra.mxu0 %v5979
      %v6165 = vpop.f32.mrf.mxu0
      %v6166 = vadd.f32 %v5944, %v6165
      %v6167 = vpop.f32.mrf.mxu0
      %6168 = vmatprep.mubr.f32.mxu0 0.0
      %6169 = vmatmul.mubr.f32.gmra.mxu0 %v5982
      %v6170 = vpop.f32.mrf.mxu0
      %v6171 = vadd.f32 %v5944, %v6170
      %v6172 = vpop.f32.mrf.mxu0
      %6173 = vmatprep.mubr.f32.mxu0 0.0
      %6174 = vmatmul.mubr.f32.gmra.mxu0 %v5985
      %v6175 = vpop.f32.mrf.mxu0
      %v6176 = vadd.f32 %v5944, %v6175
      %v6177 = vpop.f32.mrf.mxu0
      %6178 = vmatprep.mubr.f32.mxu0 0.0
      %6179 = vmatmul.mubr.f32.gmra.mxu0 %v5988
      %v6180 = vpop.f32.mrf.mxu0
      %v6181 = vadd.f32 %v5944, %v6180
      %v6182 = vpop.f32.mrf.mxu0
      %6183 = vmatprep.mubr.f32.mxu0 0.0
      %6184 = vmatmul.mubr.f32.gmra.mxu0 %v5991
      %v6185 = vpop.f32.mrf.mxu0
      %v6186 = vadd.f32 %v5944, %v6185
      %v6187 = vpop.f32.mrf.mxu0
      %6188 = vmatprep.mubr.f32.mxu0 0.0
      %6189 = vmatmul.mubr.f32.gmra.mxu0 %v5994
      %v6190 = vpop.f32.mrf.mxu0
      %v6191 = vadd.f32 %v5944, %v6190
      %v6192 = vpop.f32.mrf.mxu0
      %6193 = vmatprep.mubr.f32.mxu0 0.0
      %6194 = vmatmul.mubr.f32.gmra.mxu0 %v5997
      %v6195 = vpop.f32.mrf.mxu0
      %v6196 = vadd.f32 %v5944, %v6195
      %v6197 = vpop.f32.mrf.mxu0
      %6198 = vmatprep.mubr.f32.mxu0 0.0
      %6199 = vmatmul.mubr.f32.gmra.mxu0 %v6000
      %v6200 = vpop.f32.mrf.mxu0
      %v6201 = vadd.f32 %v5944, %v6200
      %v6202 = vpop.f32.mrf.mxu0
      %6203 = vmatprep.mubr.f32.mxu0 0.0
      %6204 = vmatmul.mubr.f32.gmra.mxu0 %v6003
      %v6205 = vpop.f32.mrf.mxu0
      %v6206 = vadd.f32 %v5944, %v6205
      %v6207 = vpop.f32.mrf.mxu0
      %6208 = vmatprep.mubr.f32.mxu0 0.0
      %6209 = vmatmul.mubr.f32.gmra.mxu0 %v6006
      %v6210 = vpop.f32.mrf.mxu0
      %v6211 = vadd.f32 %v5944, %v6210
      %v6212 = vpop.f32.mrf.mxu0
      %6213 = vmatprep.mubr.f32.mxu0 0.0
      %6214 = vmatmul.mubr.f32.gmra.mxu0 %v6009
      %v6215 = vpop.f32.mrf.mxu0
      %v6216 = vadd.f32 %v5944, %v6215
      %v6217 = vpop.f32.mrf.mxu0
      %6218 = vmatprep.mubr.f32.mxu0 0.0
      %6219 = vmatmul.mubr.f32.gmra.mxu0 %v6012
      %v6220 = vpop.f32.mrf.mxu0
      %v6221 = vadd.f32 %v5944, %v6220
      %v6222 = vpop.f32.mrf.mxu0
      %6223 = vmatprep.mubr.f32.mxu0 0.0
      %6224 = vmatmul.mubr.f32.gmra.mxu0 %v6015
      %v6225 = vpop.f32.mrf.mxu0
      %v6226 = vadd.f32 %v5944, %v6225
      %v6227 = vpop.f32.mrf.mxu0
      %6228 = vmatprep.mubr.f32.mxu0 0.0
      %6229 = vmatmul.mubr.f32.gmra.mxu0 %v6018
      %v6230 = vpop.f32.mrf.mxu0
      %v6231 = vadd.f32 %v5944, %v6230
      %v6232 = vpop.f32.mrf.mxu0
      %6233 = vmatprep.mubr.f32.mxu0 0.0
      %6234 = vmatmul.mubr.f32.gmra.mxu0 %v6021
      %v6235 = vpop.f32.mrf.mxu0
      %v6236 = vadd.f32 %v5944, %v6235
      %v6237 = vpop.f32.mrf.mxu0
      %6238 = vmatprep.mubr.f32.mxu0 0.0
      %6239 = vmatmul.mubr.f32.gmra.mxu0 %v6024
      %v6240 = vpop.f32.mrf.mxu0
      %v6241 = vadd.f32 %v5944, %v6240
      %v6242 = vpop.f32.mrf.mxu0
      %6243 = vmatprep.mubr.f32.mxu0 0.0
      %6244 = vmatmul.mubr.f32.gmra.mxu0 %v6027
      %v6245 = vpop.f32.mrf.mxu0
      %v6246 = vadd.f32 %v5944, %v6245
      %v6247 = vpop.f32.mrf.mxu0
      %6248 = vmatprep.mubr.f32.mxu0 0.0
      %6249 = vmatmul.mubr.f32.gmra.mxu0 %v6030
      %v6250 = vpop.f32.mrf.mxu0
      %v6251 = vadd.f32 %v5944, %v6250
      %v6252 = vpop.f32.mrf.mxu0
      %6253 = vmatprep.mubr.f32.mxu0 0.0
      %6254 = vmatmul.mubr.f32.gmra.mxu0 %v6033
      %v6255 = vpop.f32.mrf.mxu0
      %v6256 = vadd.f32 %v5944, %v6255
      %v6257 = vpop.f32.mrf.mxu0
      %6258 = vmatprep.mubr.f32.mxu0 0.0
      %6259 = vmatmul.mubr.f32.gmra.mxu0 %v6036
      %v6260 = vpop.f32.mrf.mxu0
      %v6261 = vadd.f32 %v5944, %v6260
      %v6262 = vpop.f32.mrf.mxu0
      %6263 = vmatprep.mubr.f32.mxu0 0.0
      %6264 = vmatmul.mubr.f32.gmra.mxu0 %v6039
      %v6265 = vpop.f32.mrf.mxu0
      %v6266 = vadd.f32 %v5944, %v6265
      %v6267 = vpop.f32.mrf.mxu0
      %6268 = vdwg.mxu0
      %vm6269 = vcmask 367616
      %v6270 = vsel %vm6269, %v6111, 0.0
      %6271 = vadd.xlane.f32.xlu0 %v6270
      %v6272 = vpop.xlane.xlu0 %6271
      %v6273 = vsel %vm6269, %v6116, 0.0
      %6274 = vadd.xlane.f32.xlu0 %v6273
      %v6275 = vpop.xlane.xlu0 %6274
      %v6276 = vsel %vm6269, %v6121, 0.0
      %6277 = vadd.xlane.f32.xlu0 %v6276
      %v6278 = vpop.xlane.xlu0 %6277
      %v6279 = vsel %vm6269, %v6126, 0.0
      %6280 = vadd.xlane.f32.xlu0 %v6279
      %v6281 = vpop.xlane.xlu0 %6280
      %v6282 = vsel %vm6269, %v6131, 0.0
      %6283 = vadd.xlane.f32.xlu0 %v6282
      %v6284 = vpop.xlane.xlu0 %6283
      %v6285 = vsel %vm6269, %v6136, 0.0
      %6286 = vadd.xlane.f32.xlu0 %v6285
      %v6287 = vpop.xlane.xlu0 %6286
      %v6288 = vsel %vm6269, %v6141, 0.0
      %6289 = vadd.xlane.f32.xlu0 %v6288
      %v6290 = vpop.xlane.xlu0 %6289
      %v6291 = vsel %vm6269, %v6146, 0.0
      %6292 = vadd.xlane.f32.xlu0 %v6291
      %v6293 = vpop.xlane.xlu0 %6292
      %v6294 = vsel %vm6269, %v6151, 0.0
      %6295 = vadd.xlane.f32.xlu0 %v6294
      %v6296 = vpop.xlane.xlu0 %6295
      %v6297 = vsel %vm6269, %v6156, 0.0
      %6298 = vadd.xlane.f32.xlu0 %v6297
      %v6299 = vpop.xlane.xlu0 %6298
      %v6300 = vsel %vm6269, %v6161, 0.0
      %6301 = vadd.xlane.f32.xlu0 %v6300
      %v6302 = vpop.xlane.xlu0 %6301
      %v6303 = vsel %vm6269, %v6166, 0.0
      %6304 = vadd.xlane.f32.xlu0 %v6303
      %v6305 = vpop.xlane.xlu0 %6304
      %v6306 = vsel %vm6269, %v6171, 0.0
      %6307 = vadd.xlane.f32.xlu0 %v6306
      %v6308 = vpop.xlane.xlu0 %6307
      %v6309 = vsel %vm6269, %v6176, 0.0
      %6310 = vadd.xlane.f32.xlu0 %v6309
      %v6311 = vpop.xlane.xlu0 %6310
      %v6312 = vsel %vm6269, %v6181, 0.0
      %6313 = vadd.xlane.f32.xlu0 %v6312
      %v6314 = vpop.xlane.xlu0 %6313
      %v6315 = vsel %vm6269, %v6186, 0.0
      %6316 = vadd.xlane.f32.xlu0 %v6315
      %v6317 = vpop.xlane.xlu0 %6316
      %v6318 = vsel %vm6269, %v6191, 0.0
      %6319 = vadd.xlane.f32.xlu0 %v6318
      %v6320 = vpop.xlane.xlu0 %6319
      %v6321 = vsel %vm6269, %v6196, 0.0
      %6322 = vadd.xlane.f32.xlu0 %v6321
      %v6323 = vpop.xlane.xlu0 %6322
      %v6324 = vsel %vm6269, %v6201, 0.0
      %6325 = vadd.xlane.f32.xlu0 %v6324
      %v6326 = vpop.xlane.xlu0 %6325
      %v6327 = vsel %vm6269, %v6206, 0.0
      %6328 = vadd.xlane.f32.xlu0 %v6327
      %v6329 = vpop.xlane.xlu0 %6328
      %v6330 = vsel %vm6269, %v6211, 0.0
      %6331 = vadd.xlane.f32.xlu0 %v6330
      %v6332 = vpop.xlane.xlu0 %6331
      %v6333 = vsel %vm6269, %v6216, 0.0
      %6334 = vadd.xlane.f32.xlu0 %v6333
      %v6335 = vpop.xlane.xlu0 %6334
      %v6336 = vsel %vm6269, %v6221, 0.0
      %6337 = vadd.xlane.f32.xlu0 %v6336
      %v6338 = vpop.xlane.xlu0 %6337
      %v6339 = vsel %vm6269, %v6226, 0.0
      %6340 = vadd.xlane.f32.xlu0 %v6339
      %v6341 = vpop.xlane.xlu0 %6340
      %v6342 = vsel %vm6269, %v6231, 0.0
      %6343 = vadd.xlane.f32.xlu0 %v6342
      %v6344 = vpop.xlane.xlu0 %6343
      %v6345 = vsel %vm6269, %v6236, 0.0
      %6346 = vadd.xlane.f32.xlu0 %v6345
      %v6347 = vpop.xlane.xlu0 %6346
      %v6348 = vsel %vm6269, %v6241, 0.0
      %6349 = vadd.xlane.f32.xlu0 %v6348
      %v6350 = vpop.xlane.xlu0 %6349
      %v6351 = vsel %vm6269, %v6246, 0.0
      %6352 = vadd.xlane.f32.xlu0 %v6351
      %v6353 = vpop.xlane.xlu0 %6352
      %v6354 = vsel %vm6269, %v6251, 0.0
      %6355 = vadd.xlane.f32.xlu0 %v6354
      %v6356 = vpop.xlane.xlu0 %6355
      %v6357 = vsel %vm6269, %v6256, 0.0
      %6358 = vadd.xlane.f32.xlu0 %v6357
      %v6359 = vpop.xlane.xlu0 %6358
      %v6360 = vsel %vm6269, %v6261, 0.0
      %6361 = vadd.xlane.f32.xlu0 %v6360
      %v6362 = vpop.xlane.xlu0 %6361
      %v6363 = vsel %vm6269, %v6266, 0.0
      %6364 = vadd.xlane.f32.xlu0 %v6363
      %v6365 = vpop.xlane.xlu0 %6364
      %v6366 = vrcp.pop 45.0
      %v6367 = vmul.f32 %v6272, %v6366
      %v6368 = vmul.f32 %v6275, %v6366
      %v6369 = vmul.f32 %v6278, %v6366
      %v6370 = vmul.f32 %v6281, %v6366
      %v6371 = vmul.f32 %v6284, %v6366
      %v6372 = vmul.f32 %v6287, %v6366
      %v6373 = vmul.f32 %v6290, %v6366
      %v6374 = vmul.f32 %v6293, %v6366
      %v6375 = vmul.f32 %v6296, %v6366
      %v6376 = vmul.f32 %v6299, %v6366
      %v6377 = vmul.f32 %v6302, %v6366
      %v6378 = vmul.f32 %v6305, %v6366
      %v6379 = vmul.f32 %v6308, %v6366
      %v6380 = vmul.f32 %v6311, %v6366
      %v6381 = vmul.f32 %v6314, %v6366
      %v6382 = vmul.f32 %v6317, %v6366
      %v6383 = vmul.f32 %v6320, %v6366
      %v6384 = vmul.f32 %v6323, %v6366
      %v6385 = vmul.f32 %v6326, %v6366
      %v6386 = vmul.f32 %v6329, %v6366
      %v6387 = vmul.f32 %v6332, %v6366
      %v6388 = vmul.f32 %v6335, %v6366
      %v6389 = vmul.f32 %v6338, %v6366
      %v6390 = vmul.f32 %v6341, %v6366
      %v6391 = vmul.f32 %v6344, %v6366
      %v6392 = vmul.f32 %v6347, %v6366
      %v6393 = vmul.f32 %v6350, %v6366
      %v6394 = vmul.f32 %v6353, %v6366
      %v6395 = vmul.f32 %v6356, %v6366
      %v6396 = vmul.f32 %v6359, %v6366
      %v6397 = vmul.f32 %v6362, %v6366
      %v6398 = vmul.f32 %v6365, %v6366
      %v6399 = vsub.f32 %v6111, %v6367
      %v6400 = vsub.f32 %v6116, %v6368
      %v6401 = vsub.f32 %v6121, %v6369
      %v6402 = vsub.f32 %v6126, %v6370
      %v6403 = vsub.f32 %v6131, %v6371
      %v6404 = vsub.f32 %v6136, %v6372
      %v6405 = vsub.f32 %v6141, %v6373
      %v6406 = vsub.f32 %v6146, %v6374
      %v6407 = vsub.f32 %v6151, %v6375
      %v6408 = vsub.f32 %v6156, %v6376
      %v6409 = vsub.f32 %v6161, %v6377
      %v6410 = vsub.f32 %v6166, %v6378
      %v6411 = vsub.f32 %v6171, %v6379
      %v6412 = vsub.f32 %v6176, %v6380
      %v6413 = vsub.f32 %v6181, %v6381
      %v6414 = vsub.f32 %v6186, %v6382
      %v6415 = vsub.f32 %v6191, %v6383
      %v6416 = vsub.f32 %v6196, %v6384
      %v6417 = vsub.f32 %v6201, %v6385
      %v6418 = vsub.f32 %v6206, %v6386
      %v6419 = vsub.f32 %v6211, %v6387
      %v6420 = vsub.f32 %v6216, %v6388
      %v6421 = vsub.f32 %v6221, %v6389
      %v6422 = vsub.f32 %v6226, %v6390
      %v6423 = vsub.f32 %v6231, %v6391
      %v6424 = vsub.f32 %v6236, %v6392
      %v6425 = vsub.f32 %v6241, %v6393
      %v6426 = vsub.f32 %v6246, %v6394
      %v6427 = vsub.f32 %v6251, %v6395
      %v6428 = vsub.f32 %v6256, %v6396
      %v6429 = vsub.f32 %v6261, %v6397
      %v6430 = vsub.f32 %v6266, %v6398
      %v6431 = vmul.f32 %v6399, %v6399
      %v6432 = vmul.f32 %v6400, %v6400
      %v6433 = vmul.f32 %v6401, %v6401
      %v6434 = vmul.f32 %v6402, %v6402
      %v6435 = vmul.f32 %v6403, %v6403
      %v6436 = vmul.f32 %v6404, %v6404
      %v6437 = vmul.f32 %v6405, %v6405
      %v6438 = vmul.f32 %v6406, %v6406
      %v6439 = vmul.f32 %v6407, %v6407
      %v6440 = vmul.f32 %v6408, %v6408
      %v6441 = vmul.f32 %v6409, %v6409
      %v6442 = vmul.f32 %v6410, %v6410
      %v6443 = vmul.f32 %v6411, %v6411
      %v6444 = vmul.f32 %v6412, %v6412
      %v6445 = vmul.f32 %v6413, %v6413
      %v6446 = vmul.f32 %v6414, %v6414
      %v6447 = vmul.f32 %v6415, %v6415
      %v6448 = vmul.f32 %v6416, %v6416
      %v6449 = vmul.f32 %v6417, %v6417
      %v6450 = vmul.f32 %v6418, %v6418
      %v6451 = vmul.f32 %v6419, %v6419
      %v6452 = vmul.f32 %v6420, %v6420
      %v6453 = vmul.f32 %v6421, %v6421
      %v6454 = vmul.f32 %v6422, %v6422
      %v6455 = vmul.f32 %v6423, %v6423
      %v6456 = vmul.f32 %v6424, %v6424
      %v6457 = vmul.f32 %v6425, %v6425
      %v6458 = vmul.f32 %v6426, %v6426
      %v6459 = vmul.f32 %v6427, %v6427
      %v6460 = vmul.f32 %v6428, %v6428
      %v6461 = vmul.f32 %v6429, %v6429
      %v6462 = vmul.f32 %v6430, %v6430
      %v6463 = vsel %vm6269, %v6431, 0.0
      %6464 = vadd.xlane.f32.xlu0 %v6463
      %v6465 = vpop.xlane.xlu0 %6464
      %v6466 = vsel %vm6269, %v6432, 0.0
      %6467 = vadd.xlane.f32.xlu0 %v6466
      %v6468 = vpop.xlane.xlu0 %6467
      %v6469 = vsel %vm6269, %v6433, 0.0
      %6470 = vadd.xlane.f32.xlu0 %v6469
      %v6471 = vpop.xlane.xlu0 %6470
      %v6472 = vsel %vm6269, %v6434, 0.0
      %6473 = vadd.xlane.f32.xlu0 %v6472
      %v6474 = vpop.xlane.xlu0 %6473
      %v6475 = vsel %vm6269, %v6435, 0.0
      %6476 = vadd.xlane.f32.xlu0 %v6475
      %v6477 = vpop.xlane.xlu0 %6476
      %v6478 = vsel %vm6269, %v6436, 0.0
      %6479 = vadd.xlane.f32.xlu0 %v6478
      %v6480 = vpop.xlane.xlu0 %6479
      %v6481 = vsel %vm6269, %v6437, 0.0
      %6482 = vadd.xlane.f32.xlu0 %v6481
      %v6483 = vpop.xlane.xlu0 %6482
      %v6484 = vsel %vm6269, %v6438, 0.0
      %6485 = vadd.xlane.f32.xlu0 %v6484
      %v6486 = vpop.xlane.xlu0 %6485
      %v6487 = vsel %vm6269, %v6439, 0.0
      %6488 = vadd.xlane.f32.xlu0 %v6487
      %v6489 = vpop.xlane.xlu0 %6488
      %v6490 = vsel %vm6269, %v6440, 0.0
      %6491 = vadd.xlane.f32.xlu0 %v6490
      %v6492 = vpop.xlane.xlu0 %6491
      %v6493 = vsel %vm6269, %v6441, 0.0
      %6494 = vadd.xlane.f32.xlu0 %v6493
      %v6495 = vpop.xlane.xlu0 %6494
      %v6496 = vsel %vm6269, %v6442, 0.0
      %6497 = vadd.xlane.f32.xlu0 %v6496
      %v6498 = vpop.xlane.xlu0 %6497
      %v6499 = vsel %vm6269, %v6443, 0.0
      %6500 = vadd.xlane.f32.xlu0 %v6499
      %v6501 = vpop.xlane.xlu0 %6500
      %v6502 = vsel %vm6269, %v6444, 0.0
      %6503 = vadd.xlane.f32.xlu0 %v6502
      %v6504 = vpop.xlane.xlu0 %6503
      %v6505 = vsel %vm6269, %v6445, 0.0
      %6506 = vadd.xlane.f32.xlu0 %v6505
      %v6507 = vpop.xlane.xlu0 %6506
      %v6508 = vsel %vm6269, %v6446, 0.0
      %6509 = vadd.xlane.f32.xlu0 %v6508
      %v6510 = vpop.xlane.xlu0 %6509
      %v6511 = vsel %vm6269, %v6447, 0.0
      %6512 = vadd.xlane.f32.xlu0 %v6511
      %v6513 = vpop.xlane.xlu0 %6512
      %v6514 = vsel %vm6269, %v6448, 0.0
      %6515 = vadd.xlane.f32.xlu0 %v6514
      %v6516 = vpop.xlane.xlu0 %6515
      %v6517 = vsel %vm6269, %v6449, 0.0
      %6518 = vadd.xlane.f32.xlu0 %v6517
      %v6519 = vpop.xlane.xlu0 %6518
      %v6520 = vsel %vm6269, %v6450, 0.0
      %6521 = vadd.xlane.f32.xlu0 %v6520
      %v6522 = vpop.xlane.xlu0 %6521
      %v6523 = vsel %vm6269, %v6451, 0.0
      %6524 = vadd.xlane.f32.xlu0 %v6523
      %v6525 = vpop.xlane.xlu0 %6524
      %v6526 = vsel %vm6269, %v6452, 0.0
      %6527 = vadd.xlane.f32.xlu0 %v6526
      %v6528 = vpop.xlane.xlu0 %6527
      %v6529 = vsel %vm6269, %v6453, 0.0
      %6530 = vadd.xlane.f32.xlu0 %v6529
      %v6531 = vpop.xlane.xlu0 %6530
      %v6532 = vsel %vm6269, %v6454, 0.0
      %6533 = vadd.xlane.f32.xlu0 %v6532
      %v6534 = vpop.xlane.xlu0 %6533
      %v6535 = vsel %vm6269, %v6455, 0.0
      %6536 = vadd.xlane.f32.xlu0 %v6535
      %v6537 = vpop.xlane.xlu0 %6536
      %v6538 = vsel %vm6269, %v6456, 0.0
      %6539 = vadd.xlane.f32.xlu0 %v6538
      %v6540 = vpop.xlane.xlu0 %6539
      %v6541 = vsel %vm6269, %v6457, 0.0
      %6542 = vadd.xlane.f32.xlu0 %v6541
      %v6543 = vpop.xlane.xlu0 %6542
      %v6544 = vsel %vm6269, %v6458, 0.0
      %6545 = vadd.xlane.f32.xlu0 %v6544
      %v6546 = vpop.xlane.xlu0 %6545
      %v6547 = vsel %vm6269, %v6459, 0.0
      %6548 = vadd.xlane.f32.xlu0 %v6547
      %v6549 = vpop.xlane.xlu0 %6548
      %v6550 = vsel %vm6269, %v6460, 0.0
      %6551 = vadd.xlane.f32.xlu0 %v6550
      %v6552 = vpop.xlane.xlu0 %6551
      %v6553 = vsel %vm6269, %v6461, 0.0
      %6554 = vadd.xlane.f32.xlu0 %v6553
      %v6555 = vpop.xlane.xlu0 %6554
      %v6556 = vsel %vm6269, %v6462, 0.0
      %6557 = vadd.xlane.f32.xlu0 %v6556
      %v6558 = vpop.xlane.xlu0 %6557
      %v6559 = vmul.f32 %v6465, %v6366
      %v6560 = vmul.f32 %v6468, %v6366
      %v6561 = vmul.f32 %v6471, %v6366
      %v6562 = vmul.f32 %v6474, %v6366
      %v6563 = vmul.f32 %v6477, %v6366
      %v6564 = vmul.f32 %v6480, %v6366
      %v6565 = vmul.f32 %v6483, %v6366
      %v6566 = vmul.f32 %v6486, %v6366
      %v6567 = vmul.f32 %v6489, %v6366
      %v6568 = vmul.f32 %v6492, %v6366
      %v6569 = vmul.f32 %v6495, %v6366
      %v6570 = vmul.f32 %v6498, %v6366
      %v6571 = vmul.f32 %v6501, %v6366
      %v6572 = vmul.f32 %v6504, %v6366
      %v6573 = vmul.f32 %v6507, %v6366
      %v6574 = vmul.f32 %v6510, %v6366
      %v6575 = vmul.f32 %v6513, %v6366
      %v6576 = vmul.f32 %v6516, %v6366
      %v6577 = vmul.f32 %v6519, %v6366
      %v6578 = vmul.f32 %v6522, %v6366
      %v6579 = vmul.f32 %v6525, %v6366
      %v6580 = vmul.f32 %v6528, %v6366
      %v6581 = vmul.f32 %v6531, %v6366
      %v6582 = vmul.f32 %v6534, %v6366
      %v6583 = vmul.f32 %v6537, %v6366
      %v6584 = vmul.f32 %v6540, %v6366
      %v6585 = vmul.f32 %v6543, %v6366
      %v6586 = vmul.f32 %v6546, %v6366
      %v6587 = vmul.f32 %v6549, %v6366
      %v6588 = vmul.f32 %v6552, %v6366
      %v6589 = vmul.f32 %v6555, %v6366
      %v6590 = vmul.f32 %v6558, %v6366
      %v6591 = vadd.f32 %v6559, 1e-05
      %v6592 = vadd.f32 %v6560, 1e-05
      %v6593 = vadd.f32 %v6561, 1e-05
      %v6594 = vadd.f32 %v6562, 1e-05
      %v6595 = vadd.f32 %v6563, 1e-05
      %v6596 = vadd.f32 %v6564, 1e-05
      %v6597 = vadd.f32 %v6565, 1e-05
      %v6598 = vadd.f32 %v6566, 1e-05
      %v6599 = vadd.f32 %v6567, 1e-05
      %v6600 = vadd.f32 %v6568, 1e-05
      %v6601 = vadd.f32 %v6569, 1e-05
      %v6602 = vadd.f32 %v6570, 1e-05
      %v6603 = vadd.f32 %v6571, 1e-05
      %v6604 = vadd.f32 %v6572, 1e-05
      %v6605 = vadd.f32 %v6573, 1e-05
      %v6606 = vadd.f32 %v6574, 1e-05
      %v6607 = vadd.f32 %v6575, 1e-05
      %v6608 = vadd.f32 %v6576, 1e-05
      %v6609 = vadd.f32 %v6577, 1e-05
      %v6610 = vadd.f32 %v6578, 1e-05
      %v6611 = vadd.f32 %v6579, 1e-05
      %v6612 = vadd.f32 %v6580, 1e-05
      %v6613 = vadd.f32 %v6581, 1e-05
      %v6614 = vadd.f32 %v6582, 1e-05
      %v6615 = vadd.f32 %v6583, 1e-05
      %v6616 = vadd.f32 %v6584, 1e-05
      %v6617 = vadd.f32 %v6585, 1e-05
      %v6618 = vadd.f32 %v6586, 1e-05
      %v6619 = vadd.f32 %v6587, 1e-05
      %v6620 = vadd.f32 %v6588, 1e-05
      %v6621 = vadd.f32 %v6589, 1e-05
      %v6622 = vadd.f32 %v6590, 1e-05
      %v6623 = vrsqrt.pop %v6591
      %v6624 = vrsqrt.pop %v6592
      %v6625 = vrsqrt.pop %v6593
      %v6626 = vrsqrt.pop %v6594
      %v6627 = vrsqrt.pop %v6595
      %v6628 = vrsqrt.pop %v6596
      %v6629 = vrsqrt.pop %v6597
      %v6630 = vrsqrt.pop %v6598
      %v6631 = vrsqrt.pop %v6599
      %v6632 = vrsqrt.pop %v6600
      %v6633 = vrsqrt.pop %v6601
      %v6634 = vrsqrt.pop %v6602
      %v6635 = vrsqrt.pop %v6603
      %v6636 = vrsqrt.pop %v6604
      %v6637 = vrsqrt.pop %v6605
      %v6638 = vrsqrt.pop %v6606
      %v6639 = vrsqrt.pop %v6607
      %v6640 = vrsqrt.pop %v6608
      %v6641 = vrsqrt.pop %v6609
      %v6642 = vrsqrt.pop %v6610
      %v6643 = vrsqrt.pop %v6611
      %v6644 = vrsqrt.pop %v6612
      %v6645 = vrsqrt.pop %v6613
      %v6646 = vrsqrt.pop %v6614
      %v6647 = vrsqrt.pop %v6615
      %v6648 = vrsqrt.pop %v6616
      %v6649 = vrsqrt.pop %v6617
      %v6650 = vrsqrt.pop %v6618
      %v6651 = vrsqrt.pop %v6619
      %v6652 = vrsqrt.pop %v6620
      %v6653 = vrsqrt.pop %v6621
      %v6654 = vrsqrt.pop %v6622
      %v6655 = vmul.f32 %v6399, %v6623
      %v6656 = vmul.f32 %v6400, %v6624
      %v6657 = vmul.f32 %v6401, %v6625
      %v6658 = vmul.f32 %v6402, %v6626
      %v6659 = vmul.f32 %v6403, %v6627
      %v6660 = vmul.f32 %v6404, %v6628
      %v6661 = vmul.f32 %v6405, %v6629
      %v6662 = vmul.f32 %v6406, %v6630
      %v6663 = vmul.f32 %v6407, %v6631
      %v6664 = vmul.f32 %v6408, %v6632
      %v6665 = vmul.f32 %v6409, %v6633
      %v6666 = vmul.f32 %v6410, %v6634
      %v6667 = vmul.f32 %v6411, %v6635
      %v6668 = vmul.f32 %v6412, %v6636
      %v6669 = vmul.f32 %v6413, %v6637
      %v6670 = vmul.f32 %v6414, %v6638
      %v6671 = vmul.f32 %v6415, %v6639
      %v6672 = vmul.f32 %v6416, %v6640
      %v6673 = vmul.f32 %v6417, %v6641
      %v6674 = vmul.f32 %v6418, %v6642
      %v6675 = vmul.f32 %v6419, %v6643
      %v6676 = vmul.f32 %v6420, %v6644
      %v6677 = vmul.f32 %v6421, %v6645
      %v6678 = vmul.f32 %v6422, %v6646
      %v6679 = vmul.f32 %v6423, %v6647
      %v6680 = vmul.f32 %v6424, %v6648
      %v6681 = vmul.f32 %v6425, %v6649
      %v6682 = vmul.f32 %v6426, %v6650
      %v6683 = vmul.f32 %v6427, %v6651
      %v6684 = vmul.f32 %v6428, %v6652
      %v6685 = vmul.f32 %v6429, %v6653
      %v6686 = vmul.f32 %v6430, %v6654
      %v6687 = vld [vmem:[%s9 + $0x1] sm:$0x1]
      %v6688 = vlaneseq
      %v6689 = vshrl.u32 %v6688, 7
      %v6690 = vsub.s32 0, %v6689
      %v6691 = vrot.slane %v6687, %v6690
      %v6692 = vmul.f32 %v6655, %v6691
      %v6693 = vmul.f32 %v6656, %v6691
      %v6694 = vmul.f32 %v6657, %v6691
      %v6695 = vmul.f32 %v6658, %v6691
      %v6696 = vmul.f32 %v6659, %v6691
      %v6697 = vmul.f32 %v6660, %v6691
      %v6698 = vmul.f32 %v6661, %v6691
      %v6699 = vmul.f32 %v6662, %v6691
      %v6700 = vmul.f32 %v6663, %v6691
      %v6701 = vmul.f32 %v6664, %v6691
      %v6702 = vmul.f32 %v6665, %v6691
      %v6703 = vmul.f32 %v6666, %v6691
      %v6704 = vmul.f32 %v6667, %v6691
      %v6705 = vmul.f32 %v6668, %v6691
      %v6706 = vmul.f32 %v6669, %v6691
      %v6707 = vmul.f32 %v6670, %v6691
      %v6708 = vmul.f32 %v6671, %v6691
      %v6709 = vmul.f32 %v6672, %v6691
      %v6710 = vmul.f32 %v6673, %v6691
      %v6711 = vmul.f32 %v6674, %v6691
      %v6712 = vmul.f32 %v6675, %v6691
      %v6713 = vmul.f32 %v6676, %v6691
      %v6714 = vmul.f32 %v6677, %v6691
      %v6715 = vmul.f32 %v6678, %v6691
      %v6716 = vmul.f32 %v6679, %v6691
      %v6717 = vmul.f32 %v6680, %v6691
      %v6718 = vmul.f32 %v6681, %v6691
      %v6719 = vmul.f32 %v6682, %v6691
      %v6720 = vmul.f32 %v6683, %v6691
      %v6721 = vmul.f32 %v6684, %v6691
      %v6722 = vmul.f32 %v6685, %v6691
      %v6723 = vmul.f32 %v6686, %v6691
      %v6724 = vld [vmem:[%s9 + $0x2] sm:$0x1]
      %v6725 = vlaneseq
      %v6726 = vshrl.u32 %v6725, 7
      %v6727 = vsub.s32 0, %v6726
      %v6728 = vrot.slane %v6724, %v6727
      %v6729 = vadd.f32 %v6692, %v6728
      %v6730 = vadd.f32 %v6693, %v6728
      %v6731 = vadd.f32 %v6694, %v6728
      %v6732 = vadd.f32 %v6695, %v6728
      %v6733 = vadd.f32 %v6696, %v6728
      %v6734 = vadd.f32 %v6697, %v6728
      %v6735 = vadd.f32 %v6698, %v6728
      %v6736 = vadd.f32 %v6699, %v6728
      %v6737 = vadd.f32 %v6700, %v6728
      %v6738 = vadd.f32 %v6701, %v6728
      %v6739 = vadd.f32 %v6702, %v6728
      %v6740 = vadd.f32 %v6703, %v6728
      %v6741 = vadd.f32 %v6704, %v6728
      %v6742 = vadd.f32 %v6705, %v6728
      %v6743 = vadd.f32 %v6706, %v6728
      %v6744 = vadd.f32 %v6707, %v6728
      %v6745 = vadd.f32 %v6708, %v6728
      %v6746 = vadd.f32 %v6709, %v6728
      %v6747 = vadd.f32 %v6710, %v6728
      %v6748 = vadd.f32 %v6711, %v6728
      %v6749 = vadd.f32 %v6712, %v6728
      %v6750 = vadd.f32 %v6713, %v6728
      %v6751 = vadd.f32 %v6714, %v6728
      %v6752 = vadd.f32 %v6715, %v6728
      %v6753 = vadd.f32 %v6716, %v6728
      %v6754 = vadd.f32 %v6717, %v6728
      %v6755 = vadd.f32 %v6718, %v6728
      %v6756 = vadd.f32 %v6719, %v6728
      %v6757 = vadd.f32 %v6720, %v6728
      %v6758 = vadd.f32 %v6721, %v6728
      %v6759 = vadd.f32 %v6722, %v6728
      %v6760 = vadd.f32 %v6723, %v6728
      %v6761 = vmax.f32 %v6729, 0.0
      %v6762 = vmax.f32 %v6730, 0.0
      %v6763 = vmax.f32 %v6731, 0.0
      %v6764 = vmax.f32 %v6732, 0.0
      %v6765 = vmax.f32 %v6733, 0.0
      %v6766 = vmax.f32 %v6734, 0.0
      %v6767 = vmax.f32 %v6735, 0.0
      %v6768 = vmax.f32 %v6736, 0.0
      %v6769 = vmax.f32 %v6737, 0.0
      %v6770 = vmax.f32 %v6738, 0.0
      %v6771 = vmax.f32 %v6739, 0.0
      %v6772 = vmax.f32 %v6740, 0.0
      %v6773 = vmax.f32 %v6741, 0.0
      %v6774 = vmax.f32 %v6742, 0.0
      %v6775 = vmax.f32 %v6743, 0.0
      %v6776 = vmax.f32 %v6744, 0.0
      %v6777 = vmax.f32 %v6745, 0.0
      %v6778 = vmax.f32 %v6746, 0.0
      %v6779 = vmax.f32 %v6747, 0.0
      %v6780 = vmax.f32 %v6748, 0.0
      %v6781 = vmax.f32 %v6749, 0.0
      %v6782 = vmax.f32 %v6750, 0.0
      %v6783 = vmax.f32 %v6751, 0.0
      %v6784 = vmax.f32 %v6752, 0.0
      %v6785 = vmax.f32 %v6753, 0.0
      %v6786 = vmax.f32 %v6754, 0.0
      %v6787 = vmax.f32 %v6755, 0.0
      %v6788 = vmax.f32 %v6756, 0.0
      %v6789 = vmax.f32 %v6757, 0.0
      %v6790 = vmax.f32 %v6758, 0.0
      %v6791 = vmax.f32 %v6759, 0.0
      %v6792 = vmax.f32 %v6760, 0.0
      %v6793 = vld [vmem:[%s10] sm:$0x1]
      %v6795 = vlaneseq
      %v6796 = vshrl.u32 %v6795, 7
      %v6797 = vsub.s32 0, %v6796
      %v6798 = vrot.slane %v6793, %v6797
      %v6800 = vmul.f32 %v6761, %v6798
      %v6801 = vmul.f32 %v6762, %v6798
      %v6802 = vmul.f32 %v6763, %v6798
      %v6803 = vmul.f32 %v6764, %v6798
      %v6804 = vmul.f32 %v6765, %v6798
      %v6805 = vmul.f32 %v6766, %v6798
      %v6806 = vmul.f32 %v6767, %v6798
      %v6807 = vmul.f32 %v6768, %v6798
      %v6808 = vmul.f32 %v6769, %v6798
      %v6809 = vmul.f32 %v6770, %v6798
      %v6810 = vmul.f32 %v6771, %v6798
      %v6811 = vmul.f32 %v6772, %v6798
      %v6812 = vmul.f32 %v6773, %v6798
      %v6813 = vmul.f32 %v6774, %v6798
      %v6814 = vmul.f32 %v6775, %v6798
      %v6815 = vmul.f32 %v6776, %v6798
      %v6816 = vmul.f32 %v6777, %v6798
      %v6817 = vmul.f32 %v6778, %v6798
      %v6818 = vmul.f32 %v6779, %v6798
      %v6819 = vmul.f32 %v6780, %v6798
      %v6820 = vmul.f32 %v6781, %v6798
      %v6821 = vmul.f32 %v6782, %v6798
      %v6822 = vmul.f32 %v6783, %v6798
      %v6823 = vmul.f32 %v6784, %v6798
      %v6824 = vmul.f32 %v6785, %v6798
      %v6825 = vmul.f32 %v6786, %v6798
      %v6826 = vmul.f32 %v6787, %v6798
      %v6827 = vmul.f32 %v6788, %v6798
      %v6828 = vmul.f32 %v6789, %v6798
      %v6829 = vmul.f32 %v6790, %v6798
      %v6830 = vmul.f32 %v6791, %v6798
      %v6831 = vmul.f32 %v6792, %v6798
      %v6832 = vsel %vm6269, %v6800, 0.0
      %6833 = vadd.xlane.f32.xlu0 %v6832
      %v6834 = vpop.xlane.xlu0 %6833
      %v6835 = vsel %vm6269, %v6801, 0.0
      %6836 = vadd.xlane.f32.xlu0 %v6835
      %v6837 = vpop.xlane.xlu0 %6836
      %v6838 = vsel %vm6269, %v6802, 0.0
      %6839 = vadd.xlane.f32.xlu0 %v6838
      %v6840 = vpop.xlane.xlu0 %6839
      %v6841 = vsel %vm6269, %v6803, 0.0
      %6842 = vadd.xlane.f32.xlu0 %v6841
      %v6843 = vpop.xlane.xlu0 %6842
      %v6844 = vsel %vm6269, %v6804, 0.0
      %6845 = vadd.xlane.f32.xlu0 %v6844
      %v6846 = vpop.xlane.xlu0 %6845
      %v6847 = vsel %vm6269, %v6805, 0.0
      %6848 = vadd.xlane.f32.xlu0 %v6847
      %v6849 = vpop.xlane.xlu0 %6848
      %v6850 = vsel %vm6269, %v6806, 0.0
      %6851 = vadd.xlane.f32.xlu0 %v6850
      %v6852 = vpop.xlane.xlu0 %6851
      %v6853 = vsel %vm6269, %v6807, 0.0
      %6854 = vadd.xlane.f32.xlu0 %v6853
      %v6855 = vpop.xlane.xlu0 %6854
      %v6856 = vsel %vm6269, %v6808, 0.0
      %6857 = vadd.xlane.f32.xlu0 %v6856
      %v6858 = vpop.xlane.xlu0 %6857
      %v6859 = vsel %vm6269, %v6809, 0.0
      %6860 = vadd.xlane.f32.xlu0 %v6859
      %v6861 = vpop.xlane.xlu0 %6860
      %v6862 = vsel %vm6269, %v6810, 0.0
      %6863 = vadd.xlane.f32.xlu0 %v6862
      %v6864 = vpop.xlane.xlu0 %6863
      %v6865 = vsel %vm6269, %v6811, 0.0
      %6866 = vadd.xlane.f32.xlu0 %v6865
      %v6867 = vpop.xlane.xlu0 %6866
      %v6868 = vsel %vm6269, %v6812, 0.0
      %6869 = vadd.xlane.f32.xlu0 %v6868
      %v6870 = vpop.xlane.xlu0 %6869
      %v6871 = vsel %vm6269, %v6813, 0.0
      %6872 = vadd.xlane.f32.xlu0 %v6871
      %v6873 = vpop.xlane.xlu0 %6872
      %v6874 = vsel %vm6269, %v6814, 0.0
      %6875 = vadd.xlane.f32.xlu0 %v6874
      %v6876 = vpop.xlane.xlu0 %6875
      %v6877 = vsel %vm6269, %v6815, 0.0
      %6878 = vadd.xlane.f32.xlu0 %v6877
      %v6879 = vpop.xlane.xlu0 %6878
      %v6880 = vsel %vm6269, %v6816, 0.0
      %6881 = vadd.xlane.f32.xlu0 %v6880
      %v6882 = vpop.xlane.xlu0 %6881
      %v6883 = vsel %vm6269, %v6817, 0.0
      %6884 = vadd.xlane.f32.xlu0 %v6883
      %v6885 = vpop.xlane.xlu0 %6884
      %v6886 = vsel %vm6269, %v6818, 0.0
      %6887 = vadd.xlane.f32.xlu0 %v6886
      %v6888 = vpop.xlane.xlu0 %6887
      %v6889 = vsel %vm6269, %v6819, 0.0
      %6890 = vadd.xlane.f32.xlu0 %v6889
      %v6891 = vpop.xlane.xlu0 %6890
      %v6892 = vsel %vm6269, %v6820, 0.0
      %6893 = vadd.xlane.f32.xlu0 %v6892
      %v6894 = vpop.xlane.xlu0 %6893
      %v6895 = vsel %vm6269, %v6821, 0.0
      %6896 = vadd.xlane.f32.xlu0 %v6895
      %v6897 = vpop.xlane.xlu0 %6896
      %v6898 = vsel %vm6269, %v6822, 0.0
      %6899 = vadd.xlane.f32.xlu0 %v6898
      %v6900 = vpop.xlane.xlu0 %6899
      %v6901 = vsel %vm6269, %v6823, 0.0
      %6902 = vadd.xlane.f32.xlu0 %v6901
      %v6903 = vpop.xlane.xlu0 %6902
      %v6904 = vsel %vm6269, %v6824, 0.0
      %6905 = vadd.xlane.f32.xlu0 %v6904
      %v6906 = vpop.xlane.xlu0 %6905
      %v6907 = vsel %vm6269, %v6825, 0.0
      %6908 = vadd.xlane.f32.xlu0 %v6907
      %v6909 = vpop.xlane.xlu0 %6908
      %v6910 = vsel %vm6269, %v6826, 0.0
      %6911 = vadd.xlane.f32.xlu0 %v6910
      %v6912 = vpop.xlane.xlu0 %6911
      %v6913 = vsel %vm6269, %v6827, 0.0
      %6914 = vadd.xlane.f32.xlu0 %v6913
      %v6915 = vpop.xlane.xlu0 %6914
      %v6916 = vsel %vm6269, %v6828, 0.0
      %6917 = vadd.xlane.f32.xlu0 %v6916
      %v6918 = vpop.xlane.xlu0 %6917
      %v6919 = vsel %vm6269, %v6829, 0.0
      %6920 = vadd.xlane.f32.xlu0 %v6919
      %v6921 = vpop.xlane.xlu0 %6920
      %v6922 = vsel %vm6269, %v6830, 0.0
      %6923 = vadd.xlane.f32.xlu0 %v6922
      %v6924 = vpop.xlane.xlu0 %6923
      %v6925 = vsel %vm6269, %v6831, 0.0
      %6926 = vadd.xlane.f32.xlu0 %v6925
      %v6927 = vpop.xlane.xlu0 %6926
      %v6928 = vld [vmem:[#allocation2] sm:$0x1]
      %v6930 = vlaneseq
      %v6931 = vshrl.u32 %v6930, 7
      %v6932 = vsub.s32 0, %v6931
      %v6933 = vrot.slane %v6928, %v6932
      %v6935 = vadd.f32 %v6834, %v6933
      %v6936 = vadd.f32 %v6837, %v6933
      %v6937 = vadd.f32 %v6840, %v6933
      %v6938 = vadd.f32 %v6843, %v6933
      %v6939 = vadd.f32 %v6846, %v6933
      %v6940 = vadd.f32 %v6849, %v6933
      %v6941 = vadd.f32 %v6852, %v6933
      %v6942 = vadd.f32 %v6855, %v6933
      %v6943 = vadd.f32 %v6858, %v6933
      %v6944 = vadd.f32 %v6861, %v6933
      %v6945 = vadd.f32 %v6864, %v6933
      %v6946 = vadd.f32 %v6867, %v6933
      %v6947 = vadd.f32 %v6870, %v6933
      %v6948 = vadd.f32 %v6873, %v6933
      %v6949 = vadd.f32 %v6876, %v6933
      %v6950 = vadd.f32 %v6879, %v6933
      %v6951 = vadd.f32 %v6882, %v6933
      %v6952 = vadd.f32 %v6885, %v6933
      %v6953 = vadd.f32 %v6888, %v6933
      %v6954 = vadd.f32 %v6891, %v6933
      %v6955 = vadd.f32 %v6894, %v6933
      %v6956 = vadd.f32 %v6897, %v6933
      %v6957 = vadd.f32 %v6900, %v6933
      %v6958 = vadd.f32 %v6903, %v6933
      %v6959 = vadd.f32 %v6906, %v6933
      %v6960 = vadd.f32 %v6909, %v6933
      %v6961 = vadd.f32 %v6912, %v6933
      %v6962 = vadd.f32 %v6915, %v6933
      %v6963 = vadd.f32 %v6918, %v6933
      %v6964 = vadd.f32 %v6921, %v6933
      %v6965 = vadd.f32 %v6924, %v6933
      %v6966 = vadd.f32 %v6927, %v6933
      %vm6967 = vcmask 7168
      %6968 = vst.msk [vmem:[%s417] sm:$0xff] %vm6967, %v6935
      %6969 = vst.msk [vmem:[%s417 + $0x8] sm:$0xff] %vm6967, %v6936
      %6970 = vst.msk [vmem:[%s417 + $0x10] sm:$0xff] %vm6967, %v6937
      %6971 = vst.msk [vmem:[%s417 + $0x18] sm:$0xff] %vm6967, %v6938
      %6972 = vst.msk [vmem:[%s417 + $0x20] sm:$0xff] %vm6967, %v6939
      %6973 = vst.msk [vmem:[%s417 + $0x28] sm:$0xff] %vm6967, %v6940
      %6974 = vst.msk [vmem:[%s417 + $0x30] sm:$0xff] %vm6967, %v6941
      %6975 = vst.msk [vmem:[%s417 + $0x38] sm:$0xff] %vm6967, %v6942
      %6976 = vst.msk [vmem:[%s417 + $0x40] sm:$0xff] %vm6967, %v6943
      %6977 = vst.msk [vmem:[%s417 + $0x48] sm:$0xff] %vm6967, %v6944
      %6978 = vst.msk [vmem:[%s417 + $0x50] sm:$0xff] %vm6967, %v6945
      %6979 = vst.msk [vmem:[%s417 + $0x58] sm:$0xff] %vm6967, %v6946
      %6980 = vst.msk [vmem:[%s417 + $0x60] sm:$0xff] %vm6967, %v6947
      %6981 = vst.msk [vmem:[%s417 + $0x68] sm:$0xff] %vm6967, %v6948
      %6982 = vst.msk [vmem:[%s417 + $0x70] sm:$0xff] %vm6967, %v6949
      %6983 = vst.msk [vmem:[%s417 + $0x78] sm:$0xff] %vm6967, %v6950
      %6984 = vst.msk [vmem:[%s417 + $0x80] sm:$0xff] %vm6967, %v6951
      %6985 = vst.msk [vmem:[%s417 + $0x88] sm:$0xff] %vm6967, %v6952
      %6986 = vst.msk [vmem:[%s417 + $0x90] sm:$0xff] %vm6967, %v6953
      %6987 = vst.msk [vmem:[%s417 + $0x98] sm:$0xff] %vm6967, %v6954
      %6988 = vst.msk [vmem:[%s417 + $0xa0] sm:$0xff] %vm6967, %v6955
      %6989 = vst.msk [vmem:[%s417 + $0xa8] sm:$0xff] %vm6967, %v6956
      %6990 = vst.msk [vmem:[%s417 + $0xb0] sm:$0xff] %vm6967, %v6957
      %6991 = vst.msk [vmem:[%s417 + $0xb8] sm:$0xff] %vm6967, %v6958
      %6992 = vst.msk [vmem:[%s417 + $0xc0] sm:$0xff] %vm6967, %v6959
      %6993 = vst.msk [vmem:[%s417 + $0xc8] sm:$0xff] %vm6967, %v6960
      %6994 = vst.msk [vmem:[%s417 + $0xd0] sm:$0xff] %vm6967, %v6961
      %6995 = vst.msk [vmem:[%s417 + $0xd8] sm:$0xff] %vm6967, %v6962
      %6996 = vst.msk [vmem:[%s417 + $0xe0] sm:$0xff] %vm6967, %v6963
      %6997 = vst.msk [vmem:[%s417 + $0xe8] sm:$0xff] %vm6967, %v6964
      %6998 = vst.msk [vmem:[%s417 + $0xf0] sm:$0xff] %vm6967, %v6965
      %6999 = vst.msk [vmem:[%s417 + $0xf8] sm:$0xff] %vm6967, %v6966
      %s7000 = smul.u32 32, %s25
      %p7001 = scmp.lt.s32.totalorder %s7000, 63
      %s7002 = scalar_select %p7001, %s7000, 63
      %s7003 = smul.addr %s7002, 8
      %s7004 = scalar_lea.vmem %s12, %s7003
      // Predicated region
      $region69: #{critic_forward.1} parent=67 // pred_check
        %p7005 = pneg %p300
      $region70: #{critic_forward.1} parent=67 // pred_check_branch
        %7007 = sbr.rel (%p7005) target = $region72
      $region71: #{critic_forward.1} parent=67 // pred_region
        %s7008 = smul.u32 32, %s25
      $region72: #{critic_forward.1} parent=67 // pred_fallthru
        _
    $region68: #{critic_forward.1} parent=5 // pred_fallthru
      _
    %p7009 = scmp.le.s32.totalorder 2, %s20
    // Predicated region
    $region73: #{critic_forward.1} parent=5 // pred_check
      %p7010 = pneg %p7009
    $region74: #{critic_forward.1} parent=5 // pred_check_branch
      %7012 = sbr.rel (%p7010) target = $region76
    $region75: #{critic_forward.1} parent=5 // pred_region
      %s7013 = ssub.s32 %s20, 2
      // Predicated region
      $region77: #{critic_forward.1} parent=75 // pred_check
        %p7014 = pneg %p306
      $region78: #{critic_forward.1} parent=75 // pred_check_branch
        %7016 = sbr.rel (%p7014) target = $region80
      $region79: #{critic_forward.1} parent=75 // pred_region
        %s7017 = smul.u32 32, %s26
        %p7018 = scmp.lt.s32.totalorder %s7017, 63
        %s7019 = scalar_select %p7018, %s7017, 63
        %s7020 = smul.addr %s7019, 8
        %s7021 = scalar_lea.vmem %s12, %s7020
      $region80: #{critic_forward.1} parent=75 // pred_fallthru
        _
    $region76: #{critic_forward.1} parent=5 // pred_fallthru
      _
  $region6: #{critic_forward.1} parent=0 // loop_footer
    %s24 = sadd.s32 1, %s20
  $region7: #{critic_forward.1} parent=0 // loop_footer_branch
    %19 = sbr.rel target = $region3
  $region8: #{critic_forward.1} parent=0 // loop_exit
    _

</llo_original>
